<compile_context>
chip_gen: v5e
topology: v5e:2x2
jax: 0.10.0
libtpu: 0.0.40
codegen_flags: <defaults>
</compile_context>

<pallas_src>
import jax
import jax.numpy as jnp
from jax import lax
from jax.experimental import pallas as pl
from jax.experimental.pallas import tpu as pltpu

# ---- model constants (mirroring the PyTorch globals M, D, B, K) ----
N_NODES = 37486
N_DIR   = 8
N_TAXI  = 10356
M       = 16                      # node embedding dim
D       = 8                       # direction embedding dim
HIDDEN  = 32                      # LSTM hidden size (== global B used by temporal_att)
K_OUT   = 8                       # global K: number of output classes
TAXI_E  = 32
ENC_IN  = M + D + M               # 40
DEC_EMB = ENC_IN                  # 40
DEC_IN  = DEC_EMB + HIDDEN        # 72 (decoder LSTM input = embeddings ++ attention ctx)
FC_IN   = HIDDEN + TAXI_E         # 64
G4      = 4 * HIDDEN              # 128 fused-gate width (one full lane group)

# --- packed weight-slab row offsets (every segment start is a multiple of 8) ---
_R_EW0  = 0                       # enc layer0 W_ih  (ENC_IN, 4H)
_R_EH0  = _R_EW0 + ENC_IN         # 40   enc layer0 W_hh (H, 4H)
_R_EW1  = _R_EH0 + HIDDEN         # 72   enc layer1 W_ih
_R_EH1  = _R_EW1 + HIDDEN         # 104  enc layer1 W_hh
_R_DWE  = _R_EH1 + HIDDEN         # 136  dec layer0 W_ih[:40]  (embedding part)
_R_DWU  = _R_DWE + DEC_EMB        # 176  dec layer0 W_ih[40:]  (attention-ctx part)
_R_DH0  = _R_DWU + HIDDEN         # 208  dec layer0 W_hh
_R_DW1  = _R_DH0 + HIDDEN         # 240  dec layer1 W_ih
_R_DH1  = _R_DW1 + HIDDEN         # 272  dec layer1 W_hh
_R_FCH  = _R_DH1 + HIDDEN         # 304  fc weight, hidden half (padded to 128 lanes)
_R_FCT  = _R_FCH + HIDDEN         # 336  fc weight, taxi   half (padded to 128 lanes)
_R_BIAS = _R_FCT + HIDDEN         # 368  bias rows: enc_b0, enc_b1, dec_b0, dec_b1, fc_b
_W_ROWS = _R_BIAS + 8             # 376


# ----------------------------------------------------------------------------
# Pallas kernel
# ----------------------------------------------------------------------------
def _seq2seq_kernel(enc_in_ref, dec_in_ref, taxi_ref, w_ref, att_ref,
                    out_ref,
                    ep0_buf, ep1_buf, dp0_buf, h0seq_buf, H_buf, z_buf):
    T_enc, Bn, _ = enc_in_ref.shape
    T_dec = dec_in_ref.shape[0]
    Hd = HIDDEN
    f32 = jnp.float32

    def W(off, rows, cols=G4):
        # static sub-slice of the packed weight slab, read next to its matmul use so
        # the big (32,128) operands never sit in vregs across the unrolled loops
        return w_ref[off:off + rows, 0:cols]

    def bias_row(i):
        # pre-broadcast once: broadcast_in_dim is NOT CSE'd across unrolled bodies
        return jnp.broadcast_to(w_ref[_R_BIAS + i, :][None, :], (Bn, G4))

    def lstm_nonlin(gates, c):
        # one whole-vreg sigmoid + one whole-vreg tanh cover all 4 gates
        # (jax.nn.sigmoid lowers to a single logistic EUP op); PyTorch order i,f,g,o
        sg = jax.nn.sigmoid(gates)
        th = jnp.tanh(gates)
        i_g = sg[:, 0 * Hd:1 * Hd]
        f_g = sg[:, 1 * Hd:2 * Hd]
        g_g = th[:, 2 * Hd:3 * Hd]
        o_g = sg[:, 3 * Hd:4 * Hd]
        c_new = f_g * c + i_g * g_g
        h_new = o_g * jnp.tanh(c_new)
        return h_new, c_new

    zero = jnp.zeros((Bn, Hd), f32)

    # ======================= encoder, layer 0 =======================
    # x-side gate projections hoisted OFF the recurrence: T_enc independent matmuls
    enc_b0 = bias_row(0)
    for t in range(T_enc):
        ep0_buf[t] = jnp.dot(enc_in_ref[t], W(_R_EW0, ENC_IN),
                             preferred_element_type=f32) + enc_b0

    def enc0_step(t, carry):
        h0, c0 = carry
        gates = ep0_buf[t] + jnp.dot(h0, W(_R_EH0, Hd), preferred_element_type=f32)
        h0, c0 = lstm_nonlin(gates, c0)
        h0seq_buf[t] = h0
        return (h0, c0)

    h0_f, c0_f = lax.fori_loop(0, T_enc, enc0_step, (zero, zero), unroll=True)

    # ======================= encoder, layer 1 =======================
    # layer-by-layer: layer-1's input projection is again off the serial chain
    enc_b1 = bias_row(1)
    for t in range(T_enc):
        ep1_buf[t] = jnp.dot(h0seq_buf[t], W(_R_EW1, Hd),
                             preferred_element_type=f32) + enc_b1

    def enc1_step(t, carry):
        h1, c1 = carry
        gates = ep1_buf[t] + jnp.dot(h1, W(_R_EH1, Hd), preferred_element_type=f32)
        h1, c1 = lstm_nonlin(gates, c1)
        H_buf[t] = h1                    # enc_output row t == initial attention memory
        return (h1, c1)

    h1_f, c1_f = lax.fori_loop(0, T_enc, enc1_step, (zero, zero), unroll=True)

    # hoisted attention rows; order [h0 | h1 | c0 | c1 | H] matches the reference's
    # cat((h_p, c_p, H[t])) -> transpose -> reshape flattening of temporal_att.fc1
    a_h0 = jnp.broadcast_to(att_ref[0][None, :], (Bn, Hd))
    a_h1 = jnp.broadcast_to(att_ref[1][None, :], (Bn, Hd))
    a_c0 = jnp.broadcast_to(att_ref[2][None, :], (Bn, Hd))
    a_c1 = jnp.broadcast_to(att_ref[3][None, :], (Bn, Hd))
    a_H  = jnp.broadcast_to(att_ref[4][None, :], (Bn, Hd))

    # z_h cache: one batched multiply + lane reduce over the whole memory, instead of
    # recomputing all T_enc rows inside every decoder step
    z_buf[...] = jnp.sum(H_buf[...] * att_ref[4][None, None, :], axis=-1)

    # ======================= decoder =======================
    # embedding part of layer-0's gate projection hoisted off the recurrence
    dec_b0 = bias_row(2)
    for s in range(T_dec):
        dp0_buf[s] = jnp.dot(dec_in_ref[s], W(_R_DWE, DEC_EMB),
                             preferred_element_type=f32) + dec_b0

    dec_b1 = bias_row(3)                                  # broadcast once, reused 5x
    # loop-invariant half of the output head (taxi features + fc bias)
    head_bias = (jnp.dot(taxi_ref[...], W(_R_FCT, Hd, K_OUT), preferred_element_type=f32)
                 + w_ref[_R_BIAS + 4, 0:K_OUT][None, :])  # (B, K)

    def dec_step(s, carry):
        h0, c0, h1, c1 = carry

        # --- temporal attention: softmax over the *batch* axis (as in the reference);
        #     z_hc via elementwise mults + ONE lane reduce, no lane concat.
        #     att_b dropped: a uniform shift cancels under the batch-axis softmax. ---
        hc_dot = h0 * a_h0 + h1 * a_h1 + c0 * a_c0 + c1 * a_c1
        z_hc = jnp.sum(hc_dot, axis=-1)                   # (B,)
        z = z_buf[...] + z_hc[None, :]                    # (T_enc, B)
        z = z - jnp.max(z, axis=1, keepdims=True)
        e = jnp.exp(z)
        attw = e * pl.reciprocal(jnp.sum(e, axis=1, keepdims=True), approx=True)
        u = jnp.sum(attw[:, :, None] * H_buf[...], axis=0)    # (B, H) context

        # --- decoder LSTM layer 0: gates = x_proj[s] + u@Wu + h@Whh ---
        gates0 = (dp0_buf[s]
                  + jnp.dot(u, W(_R_DWU, Hd), preferred_element_type=f32)
                  + jnp.dot(h0, W(_R_DH0, Hd), preferred_element_type=f32))
        h0n, c0n = lstm_nonlin(gates0, c0)

        # --- decoder LSTM layer 1 ---
        gates1 = (jnp.dot(h0n, W(_R_DW1, Hd), preferred_element_type=f32)
                  + jnp.dot(h1, W(_R_DH1, Hd), preferred_element_type=f32)
                  + dec_b1)
        h1n, c1n = lstm_nonlin(gates1, c1)

        # --- sliding memory H = cat(H[1:], dec_out) as a ring buffer ---
        # INVARIANT: exact only because attention is row-order invariant and the
        # overwrite happens after the attention read above; keep it that way.
        row = s % T_enc
        H_buf[row] = h1n
        z_buf[row] = jnp.sum(h1n * a_H, axis=-1)          # keep the z_h cache in sync

        # --- output head: only the hidden half per step, taxi half pre-added ---
        out_ref[s] = jnp.dot(h1n, W(_R_FCH, Hd, K_OUT),
                             preferred_element_type=f32) + head_bias
        return (h0n, c0n, h1n, c1n)

    lax.fori_loop(0, T_dec, dec_step, (h0_f, c0_f, h1_f, c1_f), unroll=True)


# ----------------------------------------------------------------------------
# wrapper
# ----------------------------------------------------------------------------
def _pack_weight_slab(p):
    def pad_lanes(w):
        return jnp.pad(w, ((0, 0), (0, G4 - w.shape[1])))
    bias_rows = jnp.concatenate(
        [p["enc_b0"], p["enc_b1"], p["dec_b0"], p["dec_b1"],
         pad_lanes(p["fc_b"]),
         jnp.zeros((3, G4), jnp.float32)], axis=0)                     # (8, 128)
    slab = jnp.concatenate(
        [p["enc_wih0"], p["enc_whh0"], p["enc_wih1"], p["enc_whh1"],
         p["dec_wih0"][:DEC_EMB], p["dec_wih0"][DEC_EMB:],
         p["dec_whh0"], p["dec_wih1"], p["dec_whh1"],
         pad_lanes(p["fc_w"][:HIDDEN]), pad_lanes(p["fc_w"][HIDDEN:]),
         bias_rows], axis=0)
    assert slab.shape == (_W_ROWS, G4)
    return slab


def seq2seq_pallas(enc_input, dec_input, taxi_emb, p):
    T_enc, Bn, _ = enc_input.shape
    T_dec = dec_input.shape[0]
    wslab = _pack_weight_slab(p)                  # ONE weight DMA instead of ~13
    att_pack = p["att_w"].reshape(5, HIDDEN)      # rows: w_h0, w_h1, w_c0, w_c1, w_H

    return pl.pallas_call(
        _seq2seq_kernel,
        out_shape=jax.ShapeDtypeStruct((T_dec, Bn, K_OUT), jnp.float32),
        # NO grid: single invocation, whole operands VMEM-resident, no per-grid-step
        # bookkeeping and no default double-buffering of read-once inputs.
        scratch_shapes=[
            pltpu.VMEM((T_enc, Bn, G4), jnp.float32),      # enc L0 x-projection
            pltpu.VMEM((T_enc, Bn, G4), jnp.float32),      # enc L1 x-projection
            pltpu.VMEM((T_dec, Bn, G4), jnp.float32),      # dec L0 x-projection
            pltpu.VMEM((T_enc, Bn, HIDDEN), jnp.float32),  # enc L0 output sequence
            pltpu.VMEM((T_enc, Bn, HIDDEN), jnp.float32),  # attention memory ring buf
            pltpu.VMEM((T_enc, Bn), jnp.float32),          # cached z_h rows
        ],
    )(enc_input, dec_input, taxi_emb, wslab, att_pack)


# ----------------------------------------------------------------------------
# glue: deterministic params, one-hot Linear == table gather, synthetic GAT
# ----------------------------------------------------------------------------
def init_params(key):
    def u(k, shape, fan_in):
        bound = 1.0 / jnp.sqrt(jnp.float32(fan_in))
        return jax.random.uniform(k, shape, jnp.float32, -bound, bound)

    ks = jax.random.split(key, 32)
    H = HIDDEN
    p = {}
    p["node_table"] = u(ks[0], (N_NODES, M), N_NODES)     # == node_emb.weight.T
    p["node_bias"]  = u(ks[1], (M,), N_NODES)
    p["dir_table"]  = u(ks[2], (N_DIR, D), N_DIR)
    p["dir_bias"]   = u(ks[3], (D,), N_DIR)
    p["taxi_table"] = u(ks[4], (N_TAXI, TAXI_E), N_TAXI)
    p["taxi_bias"]  = u(ks[5], (TAXI_E,), N_TAXI)
    p["gat_W"]      = u(ks[6], (M, M), M)
    p["gat_a1"]     = u(ks[7], (M,), M)
    p["gat_a2"]     = u(ks[8], (M,), M)
    p["enc_wih0"]   = u(ks[9], (ENC_IN, 4 * H), ENC_IN)
    p["enc_whh0"]   = u(ks[10], (H, 4 * H), H)
    p["enc_b0"]     = u(ks[11], (1, 4 * H), H)            # b_ih + b_hh combined
    p["enc_wih1"]   = u(ks[12], (H, 4 * H), H)
    p["enc_whh1"]   = u(ks[13], (H, 4 * H), H)
    p["enc_b1"]     = u(ks[14], (1, 4 * H), H)
    p["dec_wih0"]   = u(ks[15], (DEC_IN, 4 * H), DEC_IN)
    p["dec_whh0"]   = u(ks[16], (H, 4 * H), H)
    p["dec_b0"]     = u(ks[17], (1, 4 * H), H)
    p["dec_wih1"]   = u(ks[18], (H, 4 * H), H)
    p["dec_whh1"]   = u(ks[19], (H, 4 * H), H)
    p["dec_b1"]     = u(ks[20], (1, 4 * H), H)
    p["att_w"]      = u(ks[21], (1, 5 * H), 5 * H)        # temporal_att.fc1
    p["att_b"]      = u(ks[22], (1, 1), 5 * H)            # unused: no-op under softmax
    p["fc_w"]       = u(ks[23], (FC_IN, K_OUT), FC_IN)
    p["fc_b"]       = u(ks[24], (1, K_OUT), FC_IN)
    return p


def local_spatial_gat(p, node_ids, node_emb):
    # TODO(synk): LocalGAT and the road graph `G` are not defined in the reference
    # source; this is a deterministic single-head GAT stand-in over 4 synthetic
    # neighbors per node (dropout omitted).
    offsets = jnp.array([1, 7, 13, 101], dtype=jnp.int32)
    nbr_ids = (node_ids[..., None] + offsets[None, None, :]) % N_NODES       # (B,S,4)
    h_j = p["node_table"][nbr_ids] + p["node_bias"]                          # (B,S,4,M)
    Wh_c = node_emb @ p["gat_W"]                                             # (B,S,M)
    Wh_j = h_j @ p["gat_W"]                                                  # (B,S,4,M)
    e = jax.nn.leaky_relu((Wh_c @ p["gat_a1"])[..., None] + Wh_j @ p["gat_a2"],
                          negative_slope=0.2)
    attn = jax.nn.softmax(e, axis=-1)
    return jax.nn.elu(jnp.sum(attn[..., None] * Wh_j, axis=2))               # (B,S,M)


def seq2seq_forward(p, inp, num_minbatch, flag):
    # inp: (Batch, S_total, 3) int32 columns = [node_id, dir_id, taxi_id]
    # Only the deterministic teacher-forcing branch is implemented
    # (flag=='train', num_minbatch>=0  =>  random() < 1.05**n is always true).
    # TODO(synk): the scheduled-sampling / 'test' branch needs _get_eid_targetnode's
    # pandas edge table, which is not provided in the reference source.
    assert flag == "train" and num_minbatch >= 0

    node_ids = inp[:, :, 0]
    dir_ids = inp[:, :, 1]
    taxi_ids = inp[:, 0, 2]

    node_emb = p["node_table"][node_ids] + p["node_bias"]      # Linear(one_hot_37486)
    dir_emb = p["dir_table"][dir_ids] + p["dir_bias"]          # Linear(one_hot_8)
    taxi_emb = p["taxi_table"][taxi_ids] + p["taxi_bias"]      # (B, 32)

    wh = local_spatial_gat(p, node_ids, node_emb)              # (B, S, M)

    feat = jnp.concatenate([node_emb, dir_emb, wh], axis=2).astype(jnp.float32)
    enc_input = jnp.transpose(feat[:, :-4, :], (1, 0, 2))      # (T_enc, B, 40)
    dec_input = jnp.transpose(feat[:, -5:, :], (1, 0, 2))      # (5,     B, 40)

    outs = seq2seq_pallas(enc_input, dec_input, taxi_emb, p)   # (5, B, 8)
    return jnp.transpose(outs, (1, 0, 2))                      # (B, 5, 8)


if __name__ == "__main__":
    BATCH = 4
    S_TOTAL = 14   # encoder length 10 (input[:, :-4]), decoder length 5 (input[:, -5:])

    key = jax.random.PRNGKey(0)
    k1, k2, k3 = jax.random.split(key, 3)
    node_ids = jax.random.randint(k1, (BATCH, S_TOTAL), 0, N_NODES, dtype=jnp.int32)
    dir_ids = jax.random.randint(k2, (BATCH, S_TOTAL), 0, N_DIR, dtype=jnp.int32)
    taxi_ids = jax.random.randint(k3, (BATCH,), 0, N_TAXI, dtype=jnp.int32)
    inp = jnp.stack(
        [node_ids, dir_ids, jnp.broadcast_to(taxi_ids[:, None], (BATCH, S_TOTAL))],
        axis=-1)                                               # (B, S, 3)

    params = init_params(jax.random.PRNGKey(42))

    forward = jax.jit(lambda p, x: seq2seq_forward(p, x, num_minbatch=1, flag="train"))
    out = forward(params, inp)
    out = jax.block_until_ready(out)
    assert out.shape == (BATCH, 5, K_OUT)
    assert bool(jnp.all(jnp.isfinite(out)))
    print("KERNEL_OK")
</pallas_src>

<mosaic_0001>
module attributes {stable_mosaic.version = 11 : i64} {
  func.func @_seq2seq_kernel(%arg0: memref<10x4x40xf32, #tpu.memory_space<vmem>>, %arg1: memref<5x4x40xf32, #tpu.memory_space<vmem>>, %arg2: memref<4x32xf32, #tpu.memory_space<vmem>>, %arg3: memref<376x128xf32, #tpu.memory_space<vmem>>, %arg4: memref<5x32xf32, #tpu.memory_space<vmem>>, %arg5: memref<5x4x8xf32, #tpu.memory_space<vmem>>, %arg6: memref<10x4x128xf32, #tpu.memory_space<vmem>>, %arg7: memref<10x4x128xf32, #tpu.memory_space<vmem>>, %arg8: memref<5x4x128xf32, #tpu.memory_space<vmem>>, %arg9: memref<10x4x32xf32, #tpu.memory_space<vmem>>, %arg10: memref<10x4x32xf32, #tpu.memory_space<vmem>>, %arg11: memref<10x4xf32, #tpu.memory_space<vmem>>) attributes {dimension_semantics = [], scalar_prefetch = 0 : i64, scratch_operands = 6 : i64, tpu.core_type = #tpu.core_type<tc>} {
    %cst = arith.constant 0.000000e+00 : f32
    %0 = vector.broadcast %cst : f32 to vector<4x32xf32>
    %c368 = arith.constant 368 : index
    %c0 = arith.constant 0 : index
    %1 = vector.load %arg3[%c368, %c0] : memref<376x128xf32, #tpu.memory_space<vmem>>, vector<1x128xf32>
    %2 = vector.shape_cast %1 : vector<1x128xf32> to vector<128xf32>
    %3 = vector.shape_cast %2 : vector<128xf32> to vector<1x128xf32>
    %4 = vector.shape_cast %3 : vector<1x128xf32> to vector<1x128xf32>
    %5 = vector.broadcast %4 : vector<1x128xf32> to vector<4x128xf32>
    %c0_0 = arith.constant 0 : index
    %c0_1 = arith.constant 0 : index
    %c0_2 = arith.constant 0 : index
    %6 = vector.load %arg0[%c0_0, %c0_1, %c0_2] : memref<10x4x40xf32, #tpu.memory_space<vmem>>, vector<1x4x40xf32>
    %7 = vector.shape_cast %6 : vector<1x4x40xf32> to vector<4x40xf32>
    %c0_3 = arith.constant 0 : index
    %c0_4 = arith.constant 0 : index
    %8 = vector.load %arg3[%c0_3, %c0_4] : memref<376x128xf32, #tpu.memory_space<vmem>>, vector<40x128xf32>
    %cst_5 = arith.constant dense<0.000000e+00> : vector<4x128xf32>
    %9 = tpu.matmul %7, %8, %cst_5 {dimension_numbers = #tpu.dot_dimension_numbers<[1], [0], [0], [1], [0, 0, 1, 1], [], []>} : vector<4x40xf32>, vector<40x128xf32>, vector<4x128xf32> -> vector<4x128xf32>
    %10 = arith.addf %9, %5 : vector<4x128xf32>
    %c0_6 = arith.constant 0 : index
    %c0_7 = arith.constant 0 : index
    %c0_8 = arith.constant 0 : index
    %11 = vector.load %arg6[%c0_6, %c0_7, %c0_8] : memref<10x4x128xf32, #tpu.memory_space<vmem>>, vector<1x4x128xf32>
    %12 = vector.shape_cast %11 : vector<1x4x128xf32> to vector<4x128xf32>
    %13 = vector.shape_cast %10 : vector<4x128xf32> to vector<1x4x128xf32>
    tpu.vector_store %arg6[%c0_6, %c0_7, %c0_8], %13 {strides = array<i32>} : memref<10x4x128xf32, #tpu.memory_space<vmem>>, vector<1x4x128xf32>,
    %c1 = arith.constant 1 : index
    %c0_9 = arith.constant 0 : index
    %c0_10 = arith.constant 0 : index
    %14 = vector.load %arg0[%c1, %c0_9, %c0_10] : memref<10x4x40xf32, #tpu.memory_space<vmem>>, vector<1x4x40xf32>
    %15 = vector.shape_cast %14 : vector<1x4x40xf32> to vector<4x40xf32>
    %c0_11 = arith.constant 0 : index
    %c0_12 = arith.constant 0 : index
    %16 = vector.load %arg3[%c0_11, %c0_12] : memref<376x128xf32, #tpu.memory_space<vmem>>, vector<40x128xf32>
    %cst_13 = arith.constant dense<0.000000e+00> : vector<4x128xf32>
    %17 = tpu.matmul %15, %16, %cst_13 {dimension_numbers = #tpu.dot_dimension_numbers<[1], [0], [0], [1], [0, 0, 1, 1], [], []>} : vector<4x40xf32>, vector<40x128xf32>, vector<4x128xf32> -> vector<4x128xf32>
    %18 = arith.addf %17, %5 : vector<4x128xf32>
    %c1_14 = arith.constant 1 : index
    %c0_15 = arith.constant 0 : index
    %c0_16 = arith.constant 0 : index
    %19 = vector.load %arg6[%c1_14, %c0_15, %c0_16] : memref<10x4x128xf32, #tpu.memory_space<vmem>>, vector<1x4x128xf32>
    %20 = vector.shape_cast %19 : vector<1x4x128xf32> to vector<4x128xf32>
    %21 = vector.shape_cast %18 : vector<4x128xf32> to vector<1x4x128xf32>
    tpu.vector_store %arg6[%c1_14, %c0_15, %c0_16], %21 {strides = array<i32>} : memref<10x4x128xf32, #tpu.memory_space<vmem>>, vector<1x4x128xf32>,
    %c2 = arith.constant 2 : index
    %c0_17 = arith.constant 0 : index
    %c0_18 = arith.constant 0 : index
    %22 = vector.load %arg0[%c2, %c0_17, %c0_18] : memref<10x4x40xf32, #tpu.memory_space<vmem>>, vector<1x4x40xf32>
    %23 = vector.shape_cast %22 : vector<1x4x40xf32> to vector<4x40xf32>
    %c0_19 = arith.constant 0 : index
    %c0_20 = arith.constant 0 : index
    %24 = vector.load %arg3[%c0_19, %c0_20] : memref<376x128xf32, #tpu.memory_space<vmem>>, vector<40x128xf32>
    %cst_21 = arith.constant dense<0.000000e+00> : vector<4x128xf32>
    %25 = tpu.matmul %23, %24, %cst_21 {dimension_numbers = #tpu.dot_dimension_numbers<[1], [0], [0], [1], [0, 0, 1, 1], [], []>} : vector<4x40xf32>, vector<40x128xf32>, vector<4x128xf32> -> vector<4x128xf32>
    %26 = arith.addf %25, %5 : vector<4x128xf32>
    %c2_22 = arith.constant 2 : index
    %c0_23 = arith.constant 0 : index
    %c0_24 = arith.constant 0 : index
    %27 = vector.load %arg6[%c2_22, %c0_23, %c0_24] : memref<10x4x128xf32, #tpu.memory_space<vmem>>, vector<1x4x128xf32>
    %28 = vector.shape_cast %27 : vector<1x4x128xf32> to vector<4x128xf32>
    %29 = vector.shape_cast %26 : vector<4x128xf32> to vector<1x4x128xf32>
    tpu.vector_store %arg6[%c2_22, %c0_23, %c0_24], %29 {strides = array<i32>} : memref<10x4x128xf32, #tpu.memory_space<vmem>>, vector<1x4x128xf32>,
    %c3 = arith.constant 3 : index
    %c0_25 = arith.constant 0 : index
    %c0_26 = arith.constant 0 : index
    %30 = vector.load %arg0[%c3, %c0_25, %c0_26] : memref<10x4x40xf32, #tpu.memory_space<vmem>>, vector<1x4x40xf32>
    %31 = vector.shape_cast %30 : vector<1x4x40xf32> to vector<4x40xf32>
    %c0_27 = arith.constant 0 : index
    %c0_28 = arith.constant 0 : index
    %32 = vector.load %arg3[%c0_27, %c0_28] : memref<376x128xf32, #tpu.memory_space<vmem>>, vector<40x128xf32>
    %cst_29 = arith.constant dense<0.000000e+00> : vector<4x128xf32>
    %33 = tpu.matmul %31, %32, %cst_29 {dimension_numbers = #tpu.dot_dimension_numbers<[1], [0], [0], [1], [0, 0, 1, 1], [], []>} : vector<4x40xf32>, vector<40x128xf32>, vector<4x128xf32> -> vector<4x128xf32>
    %34 = arith.addf %33, %5 : vector<4x128xf32>
    %c3_30 = arith.constant 3 : index
    %c0_31 = arith.constant 0 : index
    %c0_32 = arith.constant 0 : index
    %35 = vector.load %arg6[%c3_30, %c0_31, %c0_32] : memref<10x4x128xf32, #tpu.memory_space<vmem>>, vector<1x4x128xf32>
    %36 = vector.shape_cast %35 : vector<1x4x128xf32> to vector<4x128xf32>
    %37 = vector.shape_cast %34 : vector<4x128xf32> to vector<1x4x128xf32>
    tpu.vector_store %arg6[%c3_30, %c0_31, %c0_32], %37 {strides = array<i32>} : memref<10x4x128xf32, #tpu.memory_space<vmem>>, vector<1x4x128xf32>,
    %c4 = arith.constant 4 : index
    %c0_33 = arith.constant 0 : index
    %c0_34 = arith.constant 0 : index
    %38 = vector.load %arg0[%c4, %c0_33, %c0_34] : memref<10x4x40xf32, #tpu.memory_space<vmem>>, vector<1x4x40xf32>
    %39 = vector.shape_cast %38 : vector<1x4x40xf32> to vector<4x40xf32>
    %c0_35 = arith.constant 0 : index
    %c0_36 = arith.constant 0 : index
    %40 = vector.load %arg3[%c0_35, %c0_36] : memref<376x128xf32, #tpu.memory_space<vmem>>, vector<40x128xf32>
    %cst_37 = arith.constant dense<0.000000e+00> : vector<4x128xf32>
    %41 = tpu.matmul %39, %40, %cst_37 {dimension_numbers = #tpu.dot_dimension_numbers<[1], [0], [0], [1], [0, 0, 1, 1], [], []>} : vector<4x40xf32>, vector<40x128xf32>, vector<4x128xf32> -> vector<4x128xf32>
    %42 = arith.addf %41, %5 : vector<4x128xf32>
    %c4_38 = arith.constant 4 : index
    %c0_39 = arith.constant 0 : index
    %c0_40 = arith.constant 0 : index
    %43 = vector.load %arg6[%c4_38, %c0_39, %c0_40] : memref<10x4x128xf32, #tpu.memory_space<vmem>>, vector<1x4x128xf32>
    %44 = vector.shape_cast %43 : vector<1x4x128xf32> to vector<4x128xf32>
    %45 = vector.shape_cast %42 : vector<4x128xf32> to vector<1x4x128xf32>
    tpu.vector_store %arg6[%c4_38, %c0_39, %c0_40], %45 {strides = array<i32>} : memref<10x4x128xf32, #tpu.memory_space<vmem>>, vector<1x4x128xf32>,
    %c5 = arith.constant 5 : index
    %c0_41 = arith.constant 0 : index
    %c0_42 = arith.constant 0 : index
    %46 = vector.load %arg0[%c5, %c0_41, %c0_42] : memref<10x4x40xf32, #tpu.memory_space<vmem>>, vector<1x4x40xf32>
    %47 = vector.shape_cast %46 : vector<1x4x40xf32> to vector<4x40xf32>
    %c0_43 = arith.constant 0 : index
    %c0_44 = arith.constant 0 : index
    %48 = vector.load %arg3[%c0_43, %c0_44] : memref<376x128xf32, #tpu.memory_space<vmem>>, vector<40x128xf32>
    %cst_45 = arith.constant dense<0.000000e+00> : vector<4x128xf32>
    %49 = tpu.matmul %47, %48, %cst_45 {dimension_numbers = #tpu.dot_dimension_numbers<[1], [0], [0], [1], [0, 0, 1, 1], [], []>} : vector<4x40xf32>, vector<40x128xf32>, vector<4x128xf32> -> vector<4x128xf32>
    %50 = arith.addf %49, %5 : vector<4x128xf32>
    %c5_46 = arith.constant 5 : index
    %c0_47 = arith.constant 0 : index
    %c0_48 = arith.constant 0 : index
    %51 = vector.load %arg6[%c5_46, %c0_47, %c0_48] : memref<10x4x128xf32, #tpu.memory_space<vmem>>, vector<1x4x128xf32>
    %52 = vector.shape_cast %51 : vector<1x4x128xf32> to vector<4x128xf32>
    %53 = vector.shape_cast %50 : vector<4x128xf32> to vector<1x4x128xf32>
    tpu.vector_store %arg6[%c5_46, %c0_47, %c0_48], %53 {strides = array<i32>} : memref<10x4x128xf32, #tpu.memory_space<vmem>>, vector<1x4x128xf32>,
    %c6 = arith.constant 6 : index
    %c0_49 = arith.constant 0 : index
    %c0_50 = arith.constant 0 : index
    %54 = vector.load %arg0[%c6, %c0_49, %c0_50] : memref<10x4x40xf32, #tpu.memory_space<vmem>>, vector<1x4x40xf32>
    %55 = vector.shape_cast %54 : vector<1x4x40xf32> to vector<4x40xf32>
    %c0_51 = arith.constant 0 : index
    %c0_52 = arith.constant 0 : index
    %56 = vector.load %arg3[%c0_51, %c0_52] : memref<376x128xf32, #tpu.memory_space<vmem>>, vector<40x128xf32>
    %cst_53 = arith.constant dense<0.000000e+00> : vector<4x128xf32>
    %57 = tpu.matmul %55, %56, %cst_53 {dimension_numbers = #tpu.dot_dimension_numbers<[1], [0], [0], [1], [0, 0, 1, 1], [], []>} : vector<4x40xf32>, vector<40x128xf32>, vector<4x128xf32> -> vector<4x128xf32>
    %58 = arith.addf %57, %5 : vector<4x128xf32>
    %c6_54 = arith.constant 6 : index
    %c0_55 = arith.constant 0 : index
    %c0_56 = arith.constant 0 : index
    %59 = vector.load %arg6[%c6_54, %c0_55, %c0_56] : memref<10x4x128xf32, #tpu.memory_space<vmem>>, vector<1x4x128xf32>
    %60 = vector.shape_cast %59 : vector<1x4x128xf32> to vector<4x128xf32>
    %61 = vector.shape_cast %58 : vector<4x128xf32> to vector<1x4x128xf32>
    tpu.vector_store %arg6[%c6_54, %c0_55, %c0_56], %61 {strides = array<i32>} : memref<10x4x128xf32, #tpu.memory_space<vmem>>, vector<1x4x128xf32>,
    %c7 = arith.constant 7 : index
    %c0_57 = arith.constant 0 : index
    %c0_58 = arith.constant 0 : index
    %62 = vector.load %arg0[%c7, %c0_57, %c0_58] : memref<10x4x40xf32, #tpu.memory_space<vmem>>, vector<1x4x40xf32>
    %63 = vector.shape_cast %62 : vector<1x4x40xf32> to vector<4x40xf32>
    %c0_59 = arith.constant 0 : index
    %c0_60 = arith.constant 0 : index
    %64 = vector.load %arg3[%c0_59, %c0_60] : memref<376x128xf32, #tpu.memory_space<vmem>>, vector<40x128xf32>
    %cst_61 = arith.constant dense<0.000000e+00> : vector<4x128xf32>
    %65 = tpu.matmul %63, %64, %cst_61 {dimension_numbers = #tpu.dot_dimension_numbers<[1], [0], [0], [1], [0, 0, 1, 1], [], []>} : vector<4x40xf32>, vector<40x128xf32>, vector<4x128xf32> -> vector<4x128xf32>
    %66 = arith.addf %65, %5 : vector<4x128xf32>
    %c7_62 = arith.constant 7 : index
    %c0_63 = arith.constant 0 : index
    %c0_64 = arith.constant 0 : index
    %67 = vector.load %arg6[%c7_62, %c0_63, %c0_64] : memref<10x4x128xf32, #tpu.memory_space<vmem>>, vector<1x4x128xf32>
    %68 = vector.shape_cast %67 : vector<1x4x128xf32> to vector<4x128xf32>
    %69 = vector.shape_cast %66 : vector<4x128xf32> to vector<1x4x128xf32>
    tpu.vector_store %arg6[%c7_62, %c0_63, %c0_64], %69 {strides = array<i32>} : memref<10x4x128xf32, #tpu.memory_space<vmem>>, vector<1x4x128xf32>,
    %c8 = arith.constant 8 : index
    %c0_65 = arith.constant 0 : index
    %c0_66 = arith.constant 0 : index
    %70 = vector.load %arg0[%c8, %c0_65, %c0_66] : memref<10x4x40xf32, #tpu.memory_space<vmem>>, vector<1x4x40xf32>
    %71 = vector.shape_cast %70 : vector<1x4x40xf32> to vector<4x40xf32>
    %c0_67 = arith.constant 0 : index
    %c0_68 = arith.constant 0 : index
    %72 = vector.load %arg3[%c0_67, %c0_68] : memref<376x128xf32, #tpu.memory_space<vmem>>, vector<40x128xf32>
    %cst_69 = arith.constant dense<0.000000e+00> : vector<4x128xf32>
    %73 = tpu.matmul %71, %72, %cst_69 {dimension_numbers = #tpu.dot_dimension_numbers<[1], [0], [0], [1], [0, 0, 1, 1], [], []>} : vector<4x40xf32>, vector<40x128xf32>, vector<4x128xf32> -> vector<4x128xf32>
    %74 = arith.addf %73, %5 : vector<4x128xf32>
    %c8_70 = arith.constant 8 : index
    %c0_71 = arith.constant 0 : index
    %c0_72 = arith.constant 0 : index
    %75 = vector.load %arg6[%c8_70, %c0_71, %c0_72] : memref<10x4x128xf32, #tpu.memory_space<vmem>>, vector<1x4x128xf32>
    %76 = vector.shape_cast %75 : vector<1x4x128xf32> to vector<4x128xf32>
    %77 = vector.shape_cast %74 : vector<4x128xf32> to vector<1x4x128xf32>
    tpu.vector_store %arg6[%c8_70, %c0_71, %c0_72], %77 {strides = array<i32>} : memref<10x4x128xf32, #tpu.memory_space<vmem>>, vector<1x4x128xf32>,
    %c9 = arith.constant 9 : index
    %c0_73 = arith.constant 0 : index
    %c0_74 = arith.constant 0 : index
    %78 = vector.load %arg0[%c9, %c0_73, %c0_74] : memref<10x4x40xf32, #tpu.memory_space<vmem>>, vector<1x4x40xf32>
    %79 = vector.shape_cast %78 : vector<1x4x40xf32> to vector<4x40xf32>
    %c0_75 = arith.constant 0 : index
    %c0_76 = arith.constant 0 : index
    %80 = vector.load %arg3[%c0_75, %c0_76] : memref<376x128xf32, #tpu.memory_space<vmem>>, vector<40x128xf32>
    %cst_77 = arith.constant dense<0.000000e+00> : vector<4x128xf32>
    %81 = tpu.matmul %79, %80, %cst_77 {dimension_numbers = #tpu.dot_dimension_numbers<[1], [0], [0], [1], [0, 0, 1, 1], [], []>} : vector<4x40xf32>, vector<40x128xf32>, vector<4x128xf32> -> vector<4x128xf32>
    %82 = arith.addf %81, %5 : vector<4x128xf32>
    %c9_78 = arith.constant 9 : index
    %c0_79 = arith.constant 0 : index
    %c0_80 = arith.constant 0 : index
    %83 = vector.load %arg6[%c9_78, %c0_79, %c0_80] : memref<10x4x128xf32, #tpu.memory_space<vmem>>, vector<1x4x128xf32>
    %84 = vector.shape_cast %83 : vector<1x4x128xf32> to vector<4x128xf32>
    %85 = vector.shape_cast %82 : vector<4x128xf32> to vector<1x4x128xf32>
    tpu.vector_store %arg6[%c9_78, %c0_79, %c0_80], %85 {strides = array<i32>} : memref<10x4x128xf32, #tpu.memory_space<vmem>>, vector<1x4x128xf32>,
    %c0_i32 = arith.constant 0 : i32
    %86 = arith.index_cast %c0_i32 : i32 to index
    %c0_81 = arith.constant 0 : index
    %c0_82 = arith.constant 0 : index
    %87 = vector.load %arg6[%86, %c0_81, %c0_82] : memref<10x4x128xf32, #tpu.memory_space<vmem>>, vector<1x4x128xf32>
    %88 = vector.shape_cast %87 : vector<1x4x128xf32> to vector<4x128xf32>
    %c40 = arith.constant 40 : index
    %c0_83 = arith.constant 0 : index
    %89 = vector.load %arg3[%c40, %c0_83] : memref<376x128xf32, #tpu.memory_space<vmem>>, vector<32x128xf32>
    %cst_84 = arith.constant dense<0.000000e+00> : vector<4x128xf32>
    %90 = tpu.matmul %0, %89, %cst_84 {dimension_numbers = #tpu.dot_dimension_numbers<[1], [0], [0], [1], [0, 0, 1, 1], [], []>} : vector<4x32xf32>, vector<32x128xf32>, vector<4x128xf32> -> vector<4x128xf32>
    %91 = arith.addf %88, %90 : vector<4x128xf32>
    %92 = arith.negf %91 : vector<4x128xf32>
    %93 = math.exp %92 : vector<4x128xf32>
    %cst_85 = arith.constant 1.000000e+00 : f32
    %94 = vector.broadcast %cst_85 : f32 to vector<4x128xf32>
    %95 = arith.addf %94, %93 : vector<4x128xf32>
    %96 = arith.divf %94, %95 : vector<4x128xf32>
    %97 = math.tanh %91 : vector<4x128xf32>
    %98 = vector.extract_strided_slice %96 {offsets = [0, 0], sizes = [4, 32], strides = [1, 1]} : vector<4x128xf32> to vector<4x32xf32>
    %99 = vector.extract_strided_slice %96 {offsets = [0, 32], sizes = [4, 32], strides = [1, 1]} : vector<4x128xf32> to vector<4x32xf32>
    %100 = vector.extract_strided_slice %97 {offsets = [0, 64], sizes = [4, 32], strides = [1, 1]} : vector<4x128xf32> to vector<4x32xf32>
    %101 = vector.extract_strided_slice %96 {offsets = [0, 96], sizes = [4, 32], strides = [1, 1]} : vector<4x128xf32> to vector<4x32xf32>
    %102 = arith.mulf %99, %0 : vector<4x32xf32>
    %103 = arith.mulf %98, %100 : vector<4x32xf32>
    %104 = arith.addf %102, %103 : vector<4x32xf32>
    %105 = math.tanh %104 : vector<4x32xf32>
    %106 = arith.mulf %101, %105 : vector<4x32xf32>
    %107 = arith.index_cast %c0_i32 : i32 to index
    %c0_86 = arith.constant 0 : index
    %c0_87 = arith.constant 0 : index
    %108 = vector.load %arg9[%107, %c0_86, %c0_87] : memref<10x4x32xf32, #tpu.memory_space<vmem>>, vector<1x4x32xf32>
    %109 = vector.shape_cast %108 : vector<1x4x32xf32> to vector<4x32xf32>
    %110 = vector.shape_cast %106 : vector<4x32xf32> to vector<1x4x32xf32>
    tpu.vector_store %arg9[%107, %c0_86, %c0_87], %110 {strides = array<i32>} : memref<10x4x32xf32, #tpu.memory_space<vmem>>, vector<1x4x32xf32>,
    %c1_i32 = arith.constant 1 : i32
    %111 = arith.index_cast %c1_i32 : i32 to index
    %c0_88 = arith.constant 0 : index
    %c0_89 = arith.constant 0 : index
    %112 = vector.load %arg6[%111, %c0_88, %c0_89] : memref<10x4x128xf32, #tpu.memory_space<vmem>>, vector<1x4x128xf32>
    %113 = vector.shape_cast %112 : vector<1x4x128xf32> to vector<4x128xf32>
    %c40_90 = arith.constant 40 : index
    %c0_91 = arith.constant 0 : index
    %114 = vector.load %arg3[%c40_90, %c0_91] : memref<376x128xf32, #tpu.memory_space<vmem>>, vector<32x128xf32>
    %cst_92 = arith.constant dense<0.000000e+00> : vector<4x128xf32>
    %115 = tpu.matmul %106, %114, %cst_92 {dimension_numbers = #tpu.dot_dimension_numbers<[1], [0], [0], [1], [0, 0, 1, 1], [], []>} : vector<4x32xf32>, vector<32x128xf32>, vector<4x128xf32> -> vector<4x128xf32>
    %116 = arith.addf %113, %115 : vector<4x128xf32>
    %117 = arith.negf %116 : vector<4x128xf32>
    %118 = math.exp %117 : vector<4x128xf32>
    %cst_93 = arith.constant 1.000000e+00 : f32
    %119 = vector.broadcast %cst_93 : f32 to vector<4x128xf32>
    %120 = arith.addf %119, %118 : vector<4x128xf32>
    %121 = arith.divf %119, %120 : vector<4x128xf32>
    %122 = math.tanh %116 : vector<4x128xf32>
    %123 = vector.extract_strided_slice %121 {offsets = [0, 0], sizes = [4, 32], strides = [1, 1]} : vector<4x128xf32> to vector<4x32xf32>
    %124 = vector.extract_strided_slice %121 {offsets = [0, 32], sizes = [4, 32], strides = [1, 1]} : vector<4x128xf32> to vector<4x32xf32>
    %125 = vector.extract_strided_slice %122 {offsets = [0, 64], sizes = [4, 32], strides = [1, 1]} : vector<4x128xf32> to vector<4x32xf32>
    %126 = vector.extract_strided_slice %121 {offsets = [0, 96], sizes = [4, 32], strides = [1, 1]} : vector<4x128xf32> to vector<4x32xf32>
    %127 = arith.mulf %124, %104 : vector<4x32xf32>
    %128 = arith.mulf %123, %125 : vector<4x32xf32>
    %129 = arith.addf %127, %128 : vector<4x32xf32>
    %130 = math.tanh %129 : vector<4x32xf32>
    %131 = arith.mulf %126, %130 : vector<4x32xf32>
    %132 = arith.index_cast %c1_i32 : i32 to index
    %c0_94 = arith.constant 0 : index
    %c0_95 = arith.constant 0 : index
    %133 = vector.load %arg9[%132, %c0_94, %c0_95] : memref<10x4x32xf32, #tpu.memory_space<vmem>>, vector<1x4x32xf32>
    %134 = vector.shape_cast %133 : vector<1x4x32xf32> to vector<4x32xf32>
    %135 = vector.shape_cast %131 : vector<4x32xf32> to vector<1x4x32xf32>
    tpu.vector_store %arg9[%132, %c0_94, %c0_95], %135 {strides = array<i32>} : memref<10x4x32xf32, #tpu.memory_space<vmem>>, vector<1x4x32xf32>,
    %c2_i32 = arith.constant 2 : i32
    %136 = arith.index_cast %c2_i32 : i32 to index
    %c0_96 = arith.constant 0 : index
    %c0_97 = arith.constant 0 : index
    %137 = vector.load %arg6[%136, %c0_96, %c0_97] : memref<10x4x128xf32, #tpu.memory_space<vmem>>, vector<1x4x128xf32>
    %138 = vector.shape_cast %137 : vector<1x4x128xf32> to vector<4x128xf32>
    %c40_98 = arith.constant 40 : index
    %c0_99 = arith.constant 0 : index
    %139 = vector.load %arg3[%c40_98, %c0_99] : memref<376x128xf32, #tpu.memory_space<vmem>>, vector<32x128xf32>
    %cst_100 = arith.constant dense<0.000000e+00> : vector<4x128xf32>
    %140 = tpu.matmul %131, %139, %cst_100 {dimension_numbers = #tpu.dot_dimension_numbers<[1], [0], [0], [1], [0, 0, 1, 1], [], []>} : vector<4x32xf32>, vector<32x128xf32>, vector<4x128xf32> -> vector<4x128xf32>
    %141 = arith.addf %138, %140 : vector<4x128xf32>
    %142 = arith.negf %141 : vector<4x128xf32>
    %143 = math.exp %142 : vector<4x128xf32>
    %cst_101 = arith.constant 1.000000e+00 : f32
    %144 = vector.broadcast %cst_101 : f32 to vector<4x128xf32>
    %145 = arith.addf %144, %143 : vector<4x128xf32>
    %146 = arith.divf %144, %145 : vector<4x128xf32>
    %147 = math.tanh %141 : vector<4x128xf32>
    %148 = vector.extract_strided_slice %146 {offsets = [0, 0], sizes = [4, 32], strides = [1, 1]} : vector<4x128xf32> to vector<4x32xf32>
    %149 = vector.extract_strided_slice %146 {offsets = [0, 32], sizes = [4, 32], strides = [1, 1]} : vector<4x128xf32> to vector<4x32xf32>
    %150 = vector.extract_strided_slice %147 {offsets = [0, 64], sizes = [4, 32], strides = [1, 1]} : vector<4x128xf32> to vector<4x32xf32>
    %151 = vector.extract_strided_slice %146 {offsets = [0, 96], sizes = [4, 32], strides = [1, 1]} : vector<4x128xf32> to vector<4x32xf32>
    %152 = arith.mulf %149, %129 : vector<4x32xf32>
    %153 = arith.mulf %148, %150 : vector<4x32xf32>
    %154 = arith.addf %152, %153 : vector<4x32xf32>
    %155 = math.tanh %154 : vector<4x32xf32>
    %156 = arith.mulf %151, %155 : vector<4x32xf32>
    %157 = arith.index_cast %c2_i32 : i32 to index
    %c0_102 = arith.constant 0 : index
    %c0_103 = arith.constant 0 : index
    %158 = vector.load %arg9[%157, %c0_102, %c0_103] : memref<10x4x32xf32, #tpu.memory_space<vmem>>, vector<1x4x32xf32>
    %159 = vector.shape_cast %158 : vector<1x4x32xf32> to vector<4x32xf32>
    %160 = vector.shape_cast %156 : vector<4x32xf32> to vector<1x4x32xf32>
    tpu.vector_store %arg9[%157, %c0_102, %c0_103], %160 {strides = array<i32>} : memref<10x4x32xf32, #tpu.memory_space<vmem>>, vector<1x4x32xf32>,
    %c3_i32 = arith.constant 3 : i32
    %161 = arith.index_cast %c3_i32 : i32 to index
    %c0_104 = arith.constant 0 : index
    %c0_105 = arith.constant 0 : index
    %162 = vector.load %arg6[%161, %c0_104, %c0_105] : memref<10x4x128xf32, #tpu.memory_space<vmem>>, vector<1x4x128xf32>
    %163 = vector.shape_cast %162 : vector<1x4x128xf32> to vector<4x128xf32>
    %c40_106 = arith.constant 40 : index
    %c0_107 = arith.constant 0 : index
    %164 = vector.load %arg3[%c40_106, %c0_107] : memref<376x128xf32, #tpu.memory_space<vmem>>, vector<32x128xf32>
    %cst_108 = arith.constant dense<0.000000e+00> : vector<4x128xf32>
    %165 = tpu.matmul %156, %164, %cst_108 {dimension_numbers = #tpu.dot_dimension_numbers<[1], [0], [0], [1], [0, 0, 1, 1], [], []>} : vector<4x32xf32>, vector<32x128xf32>, vector<4x128xf32> -> vector<4x128xf32>
    %166 = arith.addf %163, %165 : vector<4x128xf32>
    %167 = arith.negf %166 : vector<4x128xf32>
    %168 = math.exp %167 : vector<4x128xf32>
    %cst_109 = arith.constant 1.000000e+00 : f32
    %169 = vector.broadcast %cst_109 : f32 to vector<4x128xf32>
    %170 = arith.addf %169, %168 : vector<4x128xf32>
    %171 = arith.divf %169, %170 : vector<4x128xf32>
    %172 = math.tanh %166 : vector<4x128xf32>
    %173 = vector.extract_strided_slice %171 {offsets = [0, 0], sizes = [4, 32], strides = [1, 1]} : vector<4x128xf32> to vector<4x32xf32>
    %174 = vector.extract_strided_slice %171 {offsets = [0, 32], sizes = [4, 32], strides = [1, 1]} : vector<4x128xf32> to vector<4x32xf32>
    %175 = vector.extract_strided_slice %172 {offsets = [0, 64], sizes = [4, 32], strides = [1, 1]} : vector<4x128xf32> to vector<4x32xf32>
    %176 = vector.extract_strided_slice %171 {offsets = [0, 96], sizes = [4, 32], strides = [1, 1]} : vector<4x128xf32> to vector<4x32xf32>
    %177 = arith.mulf %174, %154 : vector<4x32xf32>
    %178 = arith.mulf %173, %175 : vector<4x32xf32>
    %179 = arith.addf %177, %178 : vector<4x32xf32>
    %180 = math.tanh %179 : vector<4x32xf32>
    %181 = arith.mulf %176, %180 : vector<4x32xf32>
    %182 = arith.index_cast %c3_i32 : i32 to index
    %c0_110 = arith.constant 0 : index
    %c0_111 = arith.constant 0 : index
    %183 = vector.load %arg9[%182, %c0_110, %c0_111] : memref<10x4x32xf32, #tpu.memory_space<vmem>>, vector<1x4x32xf32>
    %184 = vector.shape_cast %183 : vector<1x4x32xf32> to vector<4x32xf32>
    %185 = vector.shape_cast %181 : vector<4x32xf32> to vector<1x4x32xf32>
    tpu.vector_store %arg9[%182, %c0_110, %c0_111], %185 {strides = array<i32>} : memref<10x4x32xf32, #tpu.memory_space<vmem>>, vector<1x4x32xf32>,
    %c4_i32 = arith.constant 4 : i32
    %186 = arith.index_cast %c4_i32 : i32 to index
    %c0_112 = arith.constant 0 : index
    %c0_113 = arith.constant 0 : index
    %187 = vector.load %arg6[%186, %c0_112, %c0_113] : memref<10x4x128xf32, #tpu.memory_space<vmem>>, vector<1x4x128xf32>
    %188 = vector.shape_cast %187 : vector<1x4x128xf32> to vector<4x128xf32>
    %c40_114 = arith.constant 40 : index
    %c0_115 = arith.constant 0 : index
    %189 = vector.load %arg3[%c40_114, %c0_115] : memref<376x128xf32, #tpu.memory_space<vmem>>, vector<32x128xf32>
    %cst_116 = arith.constant dense<0.000000e+00> : vector<4x128xf32>
    %190 = tpu.matmul %181, %189, %cst_116 {dimension_numbers = #tpu.dot_dimension_numbers<[1], [0], [0], [1], [0, 0, 1, 1], [], []>} : vector<4x32xf32>, vector<32x128xf32>, vector<4x128xf32> -> vector<4x128xf32>
    %191 = arith.addf %188, %190 : vector<4x128xf32>
    %192 = arith.negf %191 : vector<4x128xf32>
    %193 = math.exp %192 : vector<4x128xf32>
    %cst_117 = arith.constant 1.000000e+00 : f32
    %194 = vector.broadcast %cst_117 : f32 to vector<4x128xf32>
    %195 = arith.addf %194, %193 : vector<4x128xf32>
    %196 = arith.divf %194, %195 : vector<4x128xf32>
    %197 = math.tanh %191 : vector<4x128xf32>
    %198 = vector.extract_strided_slice %196 {offsets = [0, 0], sizes = [4, 32], strides = [1, 1]} : vector<4x128xf32> to vector<4x32xf32>
    %199 = vector.extract_strided_slice %196 {offsets = [0, 32], sizes = [4, 32], strides = [1, 1]} : vector<4x128xf32> to vector<4x32xf32>
    %200 = vector.extract_strided_slice %197 {offsets = [0, 64], sizes = [4, 32], strides = [1, 1]} : vector<4x128xf32> to vector<4x32xf32>
    %201 = vector.extract_strided_slice %196 {offsets = [0, 96], sizes = [4, 32], strides = [1, 1]} : vector<4x128xf32> to vector<4x32xf32>
    %202 = arith.mulf %199, %179 : vector<4x32xf32>
    %203 = arith.mulf %198, %200 : vector<4x32xf32>
    %204 = arith.addf %202, %203 : vector<4x32xf32>
    %205 = math.tanh %204 : vector<4x32xf32>
    %206 = arith.mulf %201, %205 : vector<4x32xf32>
    %207 = arith.index_cast %c4_i32 : i32 to index
    %c0_118 = arith.constant 0 : index
    %c0_119 = arith.constant 0 : index
    %208 = vector.load %arg9[%207, %c0_118, %c0_119] : memref<10x4x32xf32, #tpu.memory_space<vmem>>, vector<1x4x32xf32>
    %209 = vector.shape_cast %208 : vector<1x4x32xf32> to vector<4x32xf32>
    %210 = vector.shape_cast %206 : vector<4x32xf32> to vector<1x4x32xf32>
    tpu.vector_store %arg9[%207, %c0_118, %c0_119], %210 {strides = array<i32>} : memref<10x4x32xf32, #tpu.memory_space<vmem>>, vector<1x4x32xf32>,
    %c5_i32 = arith.constant 5 : i32
    %211 = arith.index_cast %c5_i32 : i32 to index
    %c0_120 = arith.constant 0 : index
    %c0_121 = arith.constant 0 : index
    %212 = vector.load %arg6[%211, %c0_120, %c0_121] : memref<10x4x128xf32, #tpu.memory_space<vmem>>, vector<1x4x128xf32>
    %213 = vector.shape_cast %212 : vector<1x4x128xf32> to vector<4x128xf32>
    %c40_122 = arith.constant 40 : index
    %c0_123 = arith.constant 0 : index
    %214 = vector.load %arg3[%c40_122, %c0_123] : memref<376x128xf32, #tpu.memory_space<vmem>>, vector<32x128xf32>
    %cst_124 = arith.constant dense<0.000000e+00> : vector<4x128xf32>
    %215 = tpu.matmul %206, %214, %cst_124 {dimension_numbers = #tpu.dot_dimension_numbers<[1], [0], [0], [1], [0, 0, 1, 1], [], []>} : vector<4x32xf32>, vector<32x128xf32>, vector<4x128xf32> -> vector<4x128xf32>
    %216 = arith.addf %213, %215 : vector<4x128xf32>
    %217 = arith.negf %216 : vector<4x128xf32>
    %218 = math.exp %217 : vector<4x128xf32>
    %cst_125 = arith.constant 1.000000e+00 : f32
    %219 = vector.broadcast %cst_125 : f32 to vector<4x128xf32>
    %220 = arith.addf %219, %218 : vector<4x128xf32>
    %221 = arith.divf %219, %220 : vector<4x128xf32>
    %222 = math.tanh %216 : vector<4x128xf32>
    %223 = vector.extract_strided_slice %221 {offsets = [0, 0], sizes = [4, 32], strides = [1, 1]} : vector<4x128xf32> to vector<4x32xf32>
    %224 = vector.extract_strided_slice %221 {offsets = [0, 32], sizes = [4, 32], strides = [1, 1]} : vector<4x128xf32> to vector<4x32xf32>
    %225 = vector.extract_strided_slice %222 {offsets = [0, 64], sizes = [4, 32], strides = [1, 1]} : vector<4x128xf32> to vector<4x32xf32>
    %226 = vector.extract_strided_slice %221 {offsets = [0, 96], sizes = [4, 32], strides = [1, 1]} : vector<4x128xf32> to vector<4x32xf32>
    %227 = arith.mulf %224, %204 : vector<4x32xf32>
    %228 = arith.mulf %223, %225 : vector<4x32xf32>
    %229 = arith.addf %227, %228 : vector<4x32xf32>
    %230 = math.tanh %229 : vector<4x32xf32>
    %231 = arith.mulf %226, %230 : vector<4x32xf32>
    %232 = arith.index_cast %c5_i32 : i32 to index
    %c0_126 = arith.constant 0 : index
    %c0_127 = arith.constant 0 : index
    %233 = vector.load %arg9[%232, %c0_126, %c0_127] : memref<10x4x32xf32, #tpu.memory_space<vmem>>, vector<1x4x32xf32>
    %234 = vector.shape_cast %233 : vector<1x4x32xf32> to vector<4x32xf32>
    %235 = vector.shape_cast %231 : vector<4x32xf32> to vector<1x4x32xf32>
    tpu.vector_store %arg9[%232, %c0_126, %c0_127], %235 {strides = array<i32>} : memref<10x4x32xf32, #tpu.memory_space<vmem>>, vector<1x4x32xf32>,
    %c6_i32 = arith.constant 6 : i32
    %236 = arith.index_cast %c6_i32 : i32 to index
    %c0_128 = arith.constant 0 : index
    %c0_129 = arith.constant 0 : index
    %237 = vector.load %arg6[%236, %c0_128, %c0_129] : memref<10x4x128xf32, #tpu.memory_space<vmem>>, vector<1x4x128xf32>
    %238 = vector.shape_cast %237 : vector<1x4x128xf32> to vector<4x128xf32>
    %c40_130 = arith.constant 40 : index
    %c0_131 = arith.constant 0 : index
    %239 = vector.load %arg3[%c40_130, %c0_131] : memref<376x128xf32, #tpu.memory_space<vmem>>, vector<32x128xf32>
    %cst_132 = arith.constant dense<0.000000e+00> : vector<4x128xf32>
    %240 = tpu.matmul %231, %239, %cst_132 {dimension_numbers = #tpu.dot_dimension_numbers<[1], [0], [0], [1], [0, 0, 1, 1], [], []>} : vector<4x32xf32>, vector<32x128xf32>, vector<4x128xf32> -> vector<4x128xf32>
    %241 = arith.addf %238, %240 : vector<4x128xf32>
    %242 = arith.negf %241 : vector<4x128xf32>
    %243 = math.exp %242 : vector<4x128xf32>
    %cst_133 = arith.constant 1.000000e+00 : f32
    %244 = vector.broadcast %cst_133 : f32 to vector<4x128xf32>
    %245 = arith.addf %244, %243 : vector<4x128xf32>
    %246 = arith.divf %244, %245 : vector<4x128xf32>
    %247 = math.tanh %241 : vector<4x128xf32>
    %248 = vector.extract_strided_slice %246 {offsets = [0, 0], sizes = [4, 32], strides = [1, 1]} : vector<4x128xf32> to vector<4x32xf32>
    %249 = vector.extract_strided_slice %246 {offsets = [0, 32], sizes = [4, 32], strides = [1, 1]} : vector<4x128xf32> to vector<4x32xf32>
    %250 = vector.extract_strided_slice %247 {offsets = [0, 64], sizes = [4, 32], strides = [1, 1]} : vector<4x128xf32> to vector<4x32xf32>
    %251 = vector.extract_strided_slice %246 {offsets = [0, 96], sizes = [4, 32], strides = [1, 1]} : vector<4x128xf32> to vector<4x32xf32>
    %252 = arith.mulf %249, %229 : vector<4x32xf32>
    %253 = arith.mulf %248, %250 : vector<4x32xf32>
    %254 = arith.addf %252, %253 : vector<4x32xf32>
    %255 = math.tanh %254 : vector<4x32xf32>
    %256 = arith.mulf %251, %255 : vector<4x32xf32>
    %257 = arith.index_cast %c6_i32 : i32 to index
    %c0_134 = arith.constant 0 : index
    %c0_135 = arith.constant 0 : index
    %258 = vector.load %arg9[%257, %c0_134, %c0_135] : memref<10x4x32xf32, #tpu.memory_space<vmem>>, vector<1x4x32xf32>
    %259 = vector.shape_cast %258 : vector<1x4x32xf32> to vector<4x32xf32>
    %260 = vector.shape_cast %256 : vector<4x32xf32> to vector<1x4x32xf32>
    tpu.vector_store %arg9[%257, %c0_134, %c0_135], %260 {strides = array<i32>} : memref<10x4x32xf32, #tpu.memory_space<vmem>>, vector<1x4x32xf32>,
    %c7_i32 = arith.constant 7 : i32
    %261 = arith.index_cast %c7_i32 : i32 to index
    %c0_136 = arith.constant 0 : index
    %c0_137 = arith.constant 0 : index
    %262 = vector.load %arg6[%261, %c0_136, %c0_137] : memref<10x4x128xf32, #tpu.memory_space<vmem>>, vector<1x4x128xf32>
    %263 = vector.shape_cast %262 : vector<1x4x128xf32> to vector<4x128xf32>
    %c40_138 = arith.constant 40 : index
    %c0_139 = arith.constant 0 : index
    %264 = vector.load %arg3[%c40_138, %c0_139] : memref<376x128xf32, #tpu.memory_space<vmem>>, vector<32x128xf32>
    %cst_140 = arith.constant dense<0.000000e+00> : vector<4x128xf32>
    %265 = tpu.matmul %256, %264, %cst_140 {dimension_numbers = #tpu.dot_dimension_numbers<[1], [0], [0], [1], [0, 0, 1, 1], [], []>} : vector<4x32xf32>, vector<32x128xf32>, vector<4x128xf32> -> vector<4x128xf32>
    %266 = arith.addf %263, %265 : vector<4x128xf32>
    %267 = arith.negf %266 : vector<4x128xf32>
    %268 = math.exp %267 : vector<4x128xf32>
    %cst_141 = arith.constant 1.000000e+00 : f32
    %269 = vector.broadcast %cst_141 : f32 to vector<4x128xf32>
    %270 = arith.addf %269, %268 : vector<4x128xf32>
    %271 = arith.divf %269, %270 : vector<4x128xf32>
    %272 = math.tanh %266 : vector<4x128xf32>
    %273 = vector.extract_strided_slice %271 {offsets = [0, 0], sizes = [4, 32], strides = [1, 1]} : vector<4x128xf32> to vector<4x32xf32>
    %274 = vector.extract_strided_slice %271 {offsets = [0, 32], sizes = [4, 32], strides = [1, 1]} : vector<4x128xf32> to vector<4x32xf32>
    %275 = vector.extract_strided_slice %272 {offsets = [0, 64], sizes = [4, 32], strides = [1, 1]} : vector<4x128xf32> to vector<4x32xf32>
    %276 = vector.extract_strided_slice %271 {offsets = [0, 96], sizes = [4, 32], strides = [1, 1]} : vector<4x128xf32> to vector<4x32xf32>
    %277 = arith.mulf %274, %254 : vector<4x32xf32>
    %278 = arith.mulf %273, %275 : vector<4x32xf32>
    %279 = arith.addf %277, %278 : vector<4x32xf32>
    %280 = math.tanh %279 : vector<4x32xf32>
    %281 = arith.mulf %276, %280 : vector<4x32xf32>
    %282 = arith.index_cast %c7_i32 : i32 to index
    %c0_142 = arith.constant 0 : index
    %c0_143 = arith.constant 0 : index
    %283 = vector.load %arg9[%282, %c0_142, %c0_143] : memref<10x4x32xf32, #tpu.memory_space<vmem>>, vector<1x4x32xf32>
    %284 = vector.shape_cast %283 : vector<1x4x32xf32> to vector<4x32xf32>
    %285 = vector.shape_cast %281 : vector<4x32xf32> to vector<1x4x32xf32>
    tpu.vector_store %arg9[%282, %c0_142, %c0_143], %285 {strides = array<i32>} : memref<10x4x32xf32, #tpu.memory_space<vmem>>, vector<1x4x32xf32>,
    %c8_i32 = arith.constant 8 : i32
    %286 = arith.index_cast %c8_i32 : i32 to index
    %c0_144 = arith.constant 0 : index
    %c0_145 = arith.constant 0 : index
    %287 = vector.load %arg6[%286, %c0_144, %c0_145] : memref<10x4x128xf32, #tpu.memory_space<vmem>>, vector<1x4x128xf32>
    %288 = vector.shape_cast %287 : vector<1x4x128xf32> to vector<4x128xf32>
    %c40_146 = arith.constant 40 : index
    %c0_147 = arith.constant 0 : index
    %289 = vector.load %arg3[%c40_146, %c0_147] : memref<376x128xf32, #tpu.memory_space<vmem>>, vector<32x128xf32>
    %cst_148 = arith.constant dense<0.000000e+00> : vector<4x128xf32>
    %290 = tpu.matmul %281, %289, %cst_148 {dimension_numbers = #tpu.dot_dimension_numbers<[1], [0], [0], [1], [0, 0, 1, 1], [], []>} : vector<4x32xf32>, vector<32x128xf32>, vector<4x128xf32> -> vector<4x128xf32>
    %291 = arith.addf %288, %290 : vector<4x128xf32>
    %292 = arith.negf %291 : vector<4x128xf32>
    %293 = math.exp %292 : vector<4x128xf32>
    %cst_149 = arith.constant 1.000000e+00 : f32
    %294 = vector.broadcast %cst_149 : f32 to vector<4x128xf32>
    %295 = arith.addf %294, %293 : vector<4x128xf32>
    %296 = arith.divf %294, %295 : vector<4x128xf32>
    %297 = math.tanh %291 : vector<4x128xf32>
    %298 = vector.extract_strided_slice %296 {offsets = [0, 0], sizes = [4, 32], strides = [1, 1]} : vector<4x128xf32> to vector<4x32xf32>
    %299 = vector.extract_strided_slice %296 {offsets = [0, 32], sizes = [4, 32], strides = [1, 1]} : vector<4x128xf32> to vector<4x32xf32>
    %300 = vector.extract_strided_slice %297 {offsets = [0, 64], sizes = [4, 32], strides = [1, 1]} : vector<4x128xf32> to vector<4x32xf32>
    %301 = vector.extract_strided_slice %296 {offsets = [0, 96], sizes = [4, 32], strides = [1, 1]} : vector<4x128xf32> to vector<4x32xf32>
    %302 = arith.mulf %299, %279 : vector<4x32xf32>
    %303 = arith.mulf %298, %300 : vector<4x32xf32>
    %304 = arith.addf %302, %303 : vector<4x32xf32>
    %305 = math.tanh %304 : vector<4x32xf32>
    %306 = arith.mulf %301, %305 : vector<4x32xf32>
    %307 = arith.index_cast %c8_i32 : i32 to index
    %c0_150 = arith.constant 0 : index
    %c0_151 = arith.constant 0 : index
    %308 = vector.load %arg9[%307, %c0_150, %c0_151] : memref<10x4x32xf32, #tpu.memory_space<vmem>>, vector<1x4x32xf32>
    %309 = vector.shape_cast %308 : vector<1x4x32xf32> to vector<4x32xf32>
    %310 = vector.shape_cast %306 : vector<4x32xf32> to vector<1x4x32xf32>
    tpu.vector_store %arg9[%307, %c0_150, %c0_151], %310 {strides = array<i32>} : memref<10x4x32xf32, #tpu.memory_space<vmem>>, vector<1x4x32xf32>,
    %c9_i32 = arith.constant 9 : i32
    %311 = arith.index_cast %c9_i32 : i32 to index
    %c0_152 = arith.constant 0 : index
    %c0_153 = arith.constant 0 : index
    %312 = vector.load %arg6[%311, %c0_152, %c0_153] : memref<10x4x128xf32, #tpu.memory_space<vmem>>, vector<1x4x128xf32>
    %313 = vector.shape_cast %312 : vector<1x4x128xf32> to vector<4x128xf32>
    %c40_154 = arith.constant 40 : index
    %c0_155 = arith.constant 0 : index
    %314 = vector.load %arg3[%c40_154, %c0_155] : memref<376x128xf32, #tpu.memory_space<vmem>>, vector<32x128xf32>
    %cst_156 = arith.constant dense<0.000000e+00> : vector<4x128xf32>
    %315 = tpu.matmul %306, %314, %cst_156 {dimension_numbers = #tpu.dot_dimension_numbers<[1], [0], [0], [1], [0, 0, 1, 1], [], []>} : vector<4x32xf32>, vector<32x128xf32>, vector<4x128xf32> -> vector<4x128xf32>
    %316 = arith.addf %313, %315 : vector<4x128xf32>
    %317 = arith.negf %316 : vector<4x128xf32>
    %318 = math.exp %317 : vector<4x128xf32>
    %cst_157 = arith.constant 1.000000e+00 : f32
    %319 = vector.broadcast %cst_157 : f32 to vector<4x128xf32>
    %320 = arith.addf %319, %318 : vector<4x128xf32>
    %321 = arith.divf %319, %320 : vector<4x128xf32>
    %322 = math.tanh %316 : vector<4x128xf32>
    %323 = vector.extract_strided_slice %321 {offsets = [0, 0], sizes = [4, 32], strides = [1, 1]} : vector<4x128xf32> to vector<4x32xf32>
    %324 = vector.extract_strided_slice %321 {offsets = [0, 32], sizes = [4, 32], strides = [1, 1]} : vector<4x128xf32> to vector<4x32xf32>
    %325 = vector.extract_strided_slice %322 {offsets = [0, 64], sizes = [4, 32], strides = [1, 1]} : vector<4x128xf32> to vector<4x32xf32>
    %326 = vector.extract_strided_slice %321 {offsets = [0, 96], sizes = [4, 32], strides = [1, 1]} : vector<4x128xf32> to vector<4x32xf32>
    %327 = arith.mulf %324, %304 : vector<4x32xf32>
    %328 = arith.mulf %323, %325 : vector<4x32xf32>
    %329 = arith.addf %327, %328 : vector<4x32xf32>
    %330 = math.tanh %329 : vector<4x32xf32>
    %331 = arith.mulf %326, %330 : vector<4x32xf32>
    %332 = arith.index_cast %c9_i32 : i32 to index
    %c0_158 = arith.constant 0 : index
    %c0_159 = arith.constant 0 : index
    %333 = vector.load %arg9[%332, %c0_158, %c0_159] : memref<10x4x32xf32, #tpu.memory_space<vmem>>, vector<1x4x32xf32>
    %334 = vector.shape_cast %333 : vector<1x4x32xf32> to vector<4x32xf32>
    %335 = vector.shape_cast %331 : vector<4x32xf32> to vector<1x4x32xf32>
    tpu.vector_store %arg9[%332, %c0_158, %c0_159], %335 {strides = array<i32>} : memref<10x4x32xf32, #tpu.memory_space<vmem>>, vector<1x4x32xf32>,
    %c10_i32 = arith.constant 10 : i32
    %c369 = arith.constant 369 : index
    %c0_160 = arith.constant 0 : index
    %336 = vector.load %arg3[%c369, %c0_160] : memref<376x128xf32, #tpu.memory_space<vmem>>, vector<1x128xf32>
    %337 = vector.shape_cast %336 : vector<1x128xf32> to vector<128xf32>
    %338 = vector.shape_cast %337 : vector<128xf32> to vector<1x128xf32>
    %339 = vector.shape_cast %338 : vector<1x128xf32> to vector<1x128xf32>
    %340 = vector.broadcast %339 : vector<1x128xf32> to vector<4x128xf32>
    %c0_161 = arith.constant 0 : index
    %c0_162 = arith.constant 0 : index
    %c0_163 = arith.constant 0 : index
    %341 = vector.load %arg9[%c0_161, %c0_162, %c0_163] : memref<10x4x32xf32, #tpu.memory_space<vmem>>, vector<1x4x32xf32>
    %342 = vector.shape_cast %341 : vector<1x4x32xf32> to vector<4x32xf32>
    %c72 = arith.constant 72 : index
    %c0_164 = arith.constant 0 : index
    %343 = vector.load %arg3[%c72, %c0_164] : memref<376x128xf32, #tpu.memory_space<vmem>>, vector<32x128xf32>
    %cst_165 = arith.constant dense<0.000000e+00> : vector<4x128xf32>
    %344 = tpu.matmul %342, %343, %cst_165 {dimension_numbers = #tpu.dot_dimension_numbers<[1], [0], [0], [1], [0, 0, 1, 1], [], []>} : vector<4x32xf32>, vector<32x128xf32>, vector<4x128xf32> -> vector<4x128xf32>
    %345 = arith.addf %344, %340 : vector<4x128xf32>
    %c0_166 = arith.constant 0 : index
    %c0_167 = arith.constant 0 : index
    %c0_168 = arith.constant 0 : index
    %346 = vector.load %arg7[%c0_166, %c0_167, %c0_168] : memref<10x4x128xf32, #tpu.memory_space<vmem>>, vector<1x4x128xf32>
    %347 = vector.shape_cast %346 : vector<1x4x128xf32> to vector<4x128xf32>
    %348 = vector.shape_cast %345 : vector<4x128xf32> to vector<1x4x128xf32>
    tpu.vector_store %arg7[%c0_166, %c0_167, %c0_168], %348 {strides = array<i32>} : memref<10x4x128xf32, #tpu.memory_space<vmem>>, vector<1x4x128xf32>,
    %c1_169 = arith.constant 1 : index
    %c0_170 = arith.constant 0 : index
    %c0_171 = arith.constant 0 : index
    %349 = vector.load %arg9[%c1_169, %c0_170, %c0_171] : memref<10x4x32xf32, #tpu.memory_space<vmem>>, vector<1x4x32xf32>
    %350 = vector.shape_cast %349 : vector<1x4x32xf32> to vector<4x32xf32>
    %c72_172 = arith.constant 72 : index
    %c0_173 = arith.constant 0 : index
    %351 = vector.load %arg3[%c72_172, %c0_173] : memref<376x128xf32, #tpu.memory_space<vmem>>, vector<32x128xf32>
    %cst_174 = arith.constant dense<0.000000e+00> : vector<4x128xf32>
    %352 = tpu.matmul %350, %351, %cst_174 {dimension_numbers = #tpu.dot_dimension_numbers<[1], [0], [0], [1], [0, 0, 1, 1], [], []>} : vector<4x32xf32>, vector<32x128xf32>, vector<4x128xf32> -> vector<4x128xf32>
    %353 = arith.addf %352, %340 : vector<4x128xf32>
    %c1_175 = arith.constant 1 : index
    %c0_176 = arith.constant 0 : index
    %c0_177 = arith.constant 0 : index
    %354 = vector.load %arg7[%c1_175, %c0_176, %c0_177] : memref<10x4x128xf32, #tpu.memory_space<vmem>>, vector<1x4x128xf32>
    %355 = vector.shape_cast %354 : vector<1x4x128xf32> to vector<4x128xf32>
    %356 = vector.shape_cast %353 : vector<4x128xf32> to vector<1x4x128xf32>
    tpu.vector_store %arg7[%c1_175, %c0_176, %c0_177], %356 {strides = array<i32>} : memref<10x4x128xf32, #tpu.memory_space<vmem>>, vector<1x4x128xf32>,
    %c2_178 = arith.constant 2 : index
    %c0_179 = arith.constant 0 : index
    %c0_180 = arith.constant 0 : index
    %357 = vector.load %arg9[%c2_178, %c0_179, %c0_180] : memref<10x4x32xf32, #tpu.memory_space<vmem>>, vector<1x4x32xf32>
    %358 = vector.shape_cast %357 : vector<1x4x32xf32> to vector<4x32xf32>
    %c72_181 = arith.constant 72 : index
    %c0_182 = arith.constant 0 : index
    %359 = vector.load %arg3[%c72_181, %c0_182] : memref<376x128xf32, #tpu.memory_space<vmem>>, vector<32x128xf32>
    %cst_183 = arith.constant dense<0.000000e+00> : vector<4x128xf32>
    %360 = tpu.matmul %358, %359, %cst_183 {dimension_numbers = #tpu.dot_dimension_numbers<[1], [0], [0], [1], [0, 0, 1, 1], [], []>} : vector<4x32xf32>, vector<32x128xf32>, vector<4x128xf32> -> vector<4x128xf32>
    %361 = arith.addf %360, %340 : vector<4x128xf32>
    %c2_184 = arith.constant 2 : index
    %c0_185 = arith.constant 0 : index
    %c0_186 = arith.constant 0 : index
    %362 = vector.load %arg7[%c2_184, %c0_185, %c0_186] : memref<10x4x128xf32, #tpu.memory_space<vmem>>, vector<1x4x128xf32>
    %363 = vector.shape_cast %362 : vector<1x4x128xf32> to vector<4x128xf32>
    %364 = vector.shape_cast %361 : vector<4x128xf32> to vector<1x4x128xf32>
    tpu.vector_store %arg7[%c2_184, %c0_185, %c0_186], %364 {strides = array<i32>} : memref<10x4x128xf32, #tpu.memory_space<vmem>>, vector<1x4x128xf32>,
    %c3_187 = arith.constant 3 : index
    %c0_188 = arith.constant 0 : index
    %c0_189 = arith.constant 0 : index
    %365 = vector.load %arg9[%c3_187, %c0_188, %c0_189] : memref<10x4x32xf32, #tpu.memory_space<vmem>>, vector<1x4x32xf32>
    %366 = vector.shape_cast %365 : vector<1x4x32xf32> to vector<4x32xf32>
    %c72_190 = arith.constant 72 : index
    %c0_191 = arith.constant 0 : index
    %367 = vector.load %arg3[%c72_190, %c0_191] : memref<376x128xf32, #tpu.memory_space<vmem>>, vector<32x128xf32>
    %cst_192 = arith.constant dense<0.000000e+00> : vector<4x128xf32>
    %368 = tpu.matmul %366, %367, %cst_192 {dimension_numbers = #tpu.dot_dimension_numbers<[1], [0], [0], [1], [0, 0, 1, 1], [], []>} : vector<4x32xf32>, vector<32x128xf32>, vector<4x128xf32> -> vector<4x128xf32>
    %369 = arith.addf %368, %340 : vector<4x128xf32>
    %c3_193 = arith.constant 3 : index
    %c0_194 = arith.constant 0 : index
    %c0_195 = arith.constant 0 : index
    %370 = vector.load %arg7[%c3_193, %c0_194, %c0_195] : memref<10x4x128xf32, #tpu.memory_space<vmem>>, vector<1x4x128xf32>
    %371 = vector.shape_cast %370 : vector<1x4x128xf32> to vector<4x128xf32>
    %372 = vector.shape_cast %369 : vector<4x128xf32> to vector<1x4x128xf32>
    tpu.vector_store %arg7[%c3_193, %c0_194, %c0_195], %372 {strides = array<i32>} : memref<10x4x128xf32, #tpu.memory_space<vmem>>, vector<1x4x128xf32>,
    %c4_196 = arith.constant 4 : index
    %c0_197 = arith.constant 0 : index
    %c0_198 = arith.constant 0 : index
    %373 = vector.load %arg9[%c4_196, %c0_197, %c0_198] : memref<10x4x32xf32, #tpu.memory_space<vmem>>, vector<1x4x32xf32>
    %374 = vector.shape_cast %373 : vector<1x4x32xf32> to vector<4x32xf32>
    %c72_199 = arith.constant 72 : index
    %c0_200 = arith.constant 0 : index
    %375 = vector.load %arg3[%c72_199, %c0_200] : memref<376x128xf32, #tpu.memory_space<vmem>>, vector<32x128xf32>
    %cst_201 = arith.constant dense<0.000000e+00> : vector<4x128xf32>
    %376 = tpu.matmul %374, %375, %cst_201 {dimension_numbers = #tpu.dot_dimension_numbers<[1], [0], [0], [1], [0, 0, 1, 1], [], []>} : vector<4x32xf32>, vector<32x128xf32>, vector<4x128xf32> -> vector<4x128xf32>
    %377 = arith.addf %376, %340 : vector<4x128xf32>
    %c4_202 = arith.constant 4 : index
    %c0_203 = arith.constant 0 : index
    %c0_204 = arith.constant 0 : index
    %378 = vector.load %arg7[%c4_202, %c0_203, %c0_204] : memref<10x4x128xf32, #tpu.memory_space<vmem>>, vector<1x4x128xf32>
    %379 = vector.shape_cast %378 : vector<1x4x128xf32> to vector<4x128xf32>
    %380 = vector.shape_cast %377 : vector<4x128xf32> to vector<1x4x128xf32>
    tpu.vector_store %arg7[%c4_202, %c0_203, %c0_204], %380 {strides = array<i32>} : memref<10x4x128xf32, #tpu.memory_space<vmem>>, vector<1x4x128xf32>,
    %c5_205 = arith.constant 5 : index
    %c0_206 = arith.constant 0 : index
    %c0_207 = arith.constant 0 : index
    %381 = vector.load %arg9[%c5_205, %c0_206, %c0_207] : memref<10x4x32xf32, #tpu.memory_space<vmem>>, vector<1x4x32xf32>
    %382 = vector.shape_cast %381 : vector<1x4x32xf32> to vector<4x32xf32>
    %c72_208 = arith.constant 72 : index
    %c0_209 = arith.constant 0 : index
    %383 = vector.load %arg3[%c72_208, %c0_209] : memref<376x128xf32, #tpu.memory_space<vmem>>, vector<32x128xf32>
    %cst_210 = arith.constant dense<0.000000e+00> : vector<4x128xf32>
    %384 = tpu.matmul %382, %383, %cst_210 {dimension_numbers = #tpu.dot_dimension_numbers<[1], [0], [0], [1], [0, 0, 1, 1], [], []>} : vector<4x32xf32>, vector<32x128xf32>, vector<4x128xf32> -> vector<4x128xf32>
    %385 = arith.addf %384, %340 : vector<4x128xf32>
    %c5_211 = arith.constant 5 : index
    %c0_212 = arith.constant 0 : index
    %c0_213 = arith.constant 0 : index
    %386 = vector.load %arg7[%c5_211, %c0_212, %c0_213] : memref<10x4x128xf32, #tpu.memory_space<vmem>>, vector<1x4x128xf32>
    %387 = vector.shape_cast %386 : vector<1x4x128xf32> to vector<4x128xf32>
    %388 = vector.shape_cast %385 : vector<4x128xf32> to vector<1x4x128xf32>
    tpu.vector_store %arg7[%c5_211, %c0_212, %c0_213], %388 {strides = array<i32>} : memref<10x4x128xf32, #tpu.memory_space<vmem>>, vector<1x4x128xf32>,
    %c6_214 = arith.constant 6 : index
    %c0_215 = arith.constant 0 : index
    %c0_216 = arith.constant 0 : index
    %389 = vector.load %arg9[%c6_214, %c0_215, %c0_216] : memref<10x4x32xf32, #tpu.memory_space<vmem>>, vector<1x4x32xf32>
    %390 = vector.shape_cast %389 : vector<1x4x32xf32> to vector<4x32xf32>
    %c72_217 = arith.constant 72 : index
    %c0_218 = arith.constant 0 : index
    %391 = vector.load %arg3[%c72_217, %c0_218] : memref<376x128xf32, #tpu.memory_space<vmem>>, vector<32x128xf32>
    %cst_219 = arith.constant dense<0.000000e+00> : vector<4x128xf32>
    %392 = tpu.matmul %390, %391, %cst_219 {dimension_numbers = #tpu.dot_dimension_numbers<[1], [0], [0], [1], [0, 0, 1, 1], [], []>} : vector<4x32xf32>, vector<32x128xf32>, vector<4x128xf32> -> vector<4x128xf32>
    %393 = arith.addf %392, %340 : vector<4x128xf32>
    %c6_220 = arith.constant 6 : index
    %c0_221 = arith.constant 0 : index
    %c0_222 = arith.constant 0 : index
    %394 = vector.load %arg7[%c6_220, %c0_221, %c0_222] : memref<10x4x128xf32, #tpu.memory_space<vmem>>, vector<1x4x128xf32>
    %395 = vector.shape_cast %394 : vector<1x4x128xf32> to vector<4x128xf32>
    %396 = vector.shape_cast %393 : vector<4x128xf32> to vector<1x4x128xf32>
    tpu.vector_store %arg7[%c6_220, %c0_221, %c0_222], %396 {strides = array<i32>} : memref<10x4x128xf32, #tpu.memory_space<vmem>>, vector<1x4x128xf32>,
    %c7_223 = arith.constant 7 : index
    %c0_224 = arith.constant 0 : index
    %c0_225 = arith.constant 0 : index
    %397 = vector.load %arg9[%c7_223, %c0_224, %c0_225] : memref<10x4x32xf32, #tpu.memory_space<vmem>>, vector<1x4x32xf32>
    %398 = vector.shape_cast %397 : vector<1x4x32xf32> to vector<4x32xf32>
    %c72_226 = arith.constant 72 : index
    %c0_227 = arith.constant 0 : index
    %399 = vector.load %arg3[%c72_226, %c0_227] : memref<376x128xf32, #tpu.memory_space<vmem>>, vector<32x128xf32>
    %cst_228 = arith.constant dense<0.000000e+00> : vector<4x128xf32>
    %400 = tpu.matmul %398, %399, %cst_228 {dimension_numbers = #tpu.dot_dimension_numbers<[1], [0], [0], [1], [0, 0, 1, 1], [], []>} : vector<4x32xf32>, vector<32x128xf32>, vector<4x128xf32> -> vector<4x128xf32>
    %401 = arith.addf %400, %340 : vector<4x128xf32>
    %c7_229 = arith.constant 7 : index
    %c0_230 = arith.constant 0 : index
    %c0_231 = arith.constant 0 : index
    %402 = vector.load %arg7[%c7_229, %c0_230, %c0_231] : memref<10x4x128xf32, #tpu.memory_space<vmem>>, vector<1x4x128xf32>
    %403 = vector.shape_cast %402 : vector<1x4x128xf32> to vector<4x128xf32>
    %404 = vector.shape_cast %401 : vector<4x128xf32> to vector<1x4x128xf32>
    tpu.vector_store %arg7[%c7_229, %c0_230, %c0_231], %404 {strides = array<i32>} : memref<10x4x128xf32, #tpu.memory_space<vmem>>, vector<1x4x128xf32>,
    %c8_232 = arith.constant 8 : index
    %c0_233 = arith.constant 0 : index
    %c0_234 = arith.constant 0 : index
    %405 = vector.load %arg9[%c8_232, %c0_233, %c0_234] : memref<10x4x32xf32, #tpu.memory_space<vmem>>, vector<1x4x32xf32>
    %406 = vector.shape_cast %405 : vector<1x4x32xf32> to vector<4x32xf32>
    %c72_235 = arith.constant 72 : index
    %c0_236 = arith.constant 0 : index
    %407 = vector.load %arg3[%c72_235, %c0_236] : memref<376x128xf32, #tpu.memory_space<vmem>>, vector<32x128xf32>
    %cst_237 = arith.constant dense<0.000000e+00> : vector<4x128xf32>
    %408 = tpu.matmul %406, %407, %cst_237 {dimension_numbers = #tpu.dot_dimension_numbers<[1], [0], [0], [1], [0, 0, 1, 1], [], []>} : vector<4x32xf32>, vector<32x128xf32>, vector<4x128xf32> -> vector<4x128xf32>
    %409 = arith.addf %408, %340 : vector<4x128xf32>
    %c8_238 = arith.constant 8 : index
    %c0_239 = arith.constant 0 : index
    %c0_240 = arith.constant 0 : index
    %410 = vector.load %arg7[%c8_238, %c0_239, %c0_240] : memref<10x4x128xf32, #tpu.memory_space<vmem>>, vector<1x4x128xf32>
    %411 = vector.shape_cast %410 : vector<1x4x128xf32> to vector<4x128xf32>
    %412 = vector.shape_cast %409 : vector<4x128xf32> to vector<1x4x128xf32>
    tpu.vector_store %arg7[%c8_238, %c0_239, %c0_240], %412 {strides = array<i32>} : memref<10x4x128xf32, #tpu.memory_space<vmem>>, vector<1x4x128xf32>,
    %c9_241 = arith.constant 9 : index
    %c0_242 = arith.constant 0 : index
    %c0_243 = arith.constant 0 : index
    %413 = vector.load %arg9[%c9_241, %c0_242, %c0_243] : memref<10x4x32xf32, #tpu.memory_space<vmem>>, vector<1x4x32xf32>
    %414 = vector.shape_cast %413 : vector<1x4x32xf32> to vector<4x32xf32>
    %c72_244 = arith.constant 72 : index
    %c0_245 = arith.constant 0 : index
    %415 = vector.load %arg3[%c72_244, %c0_245] : memref<376x128xf32, #tpu.memory_space<vmem>>, vector<32x128xf32>
    %cst_246 = arith.constant dense<0.000000e+00> : vector<4x128xf32>
    %416 = tpu.matmul %414, %415, %cst_246 {dimension_numbers = #tpu.dot_dimension_numbers<[1], [0], [0], [1], [0, 0, 1, 1], [], []>} : vector<4x32xf32>, vector<32x128xf32>, vector<4x128xf32> -> vector<4x128xf32>
    %417 = arith.addf %416, %340 : vector<4x128xf32>
    %c9_247 = arith.constant 9 : index
    %c0_248 = arith.constant 0 : index
    %c0_249 = arith.constant 0 : index
    %418 = vector.load %arg7[%c9_247, %c0_248, %c0_249] : memref<10x4x128xf32, #tpu.memory_space<vmem>>, vector<1x4x128xf32>
    %419 = vector.shape_cast %418 : vector<1x4x128xf32> to vector<4x128xf32>
    %420 = vector.shape_cast %417 : vector<4x128xf32> to vector<1x4x128xf32>
    tpu.vector_store %arg7[%c9_247, %c0_248, %c0_249], %420 {strides = array<i32>} : memref<10x4x128xf32, #tpu.memory_space<vmem>>, vector<1x4x128xf32>,
    %c0_i32_250 = arith.constant 0 : i32
    %421 = arith.index_cast %c0_i32_250 : i32 to index
    %c0_251 = arith.constant 0 : index
    %c0_252 = arith.constant 0 : index
    %422 = vector.load %arg7[%421, %c0_251, %c0_252] : memref<10x4x128xf32, #tpu.memory_space<vmem>>, vector<1x4x128xf32>
    %423 = vector.shape_cast %422 : vector<1x4x128xf32> to vector<4x128xf32>
    %c104 = arith.constant 104 : index
    %c0_253 = arith.constant 0 : index
    %424 = vector.load %arg3[%c104, %c0_253] : memref<376x128xf32, #tpu.memory_space<vmem>>, vector<32x128xf32>
    %cst_254 = arith.constant dense<0.000000e+00> : vector<4x128xf32>
    %425 = tpu.matmul %0, %424, %cst_254 {dimension_numbers = #tpu.dot_dimension_numbers<[1], [0], [0], [1], [0, 0, 1, 1], [], []>} : vector<4x32xf32>, vector<32x128xf32>, vector<4x128xf32> -> vector<4x128xf32>
    %426 = arith.addf %423, %425 : vector<4x128xf32>
    %427 = arith.negf %426 : vector<4x128xf32>
    %428 = math.exp %427 : vector<4x128xf32>
    %cst_255 = arith.constant 1.000000e+00 : f32
    %429 = vector.broadcast %cst_255 : f32 to vector<4x128xf32>
    %430 = arith.addf %429, %428 : vector<4x128xf32>
    %431 = arith.divf %429, %430 : vector<4x128xf32>
    %432 = math.tanh %426 : vector<4x128xf32>
    %433 = vector.extract_strided_slice %431 {offsets = [0, 0], sizes = [4, 32], strides = [1, 1]} : vector<4x128xf32> to vector<4x32xf32>
    %434 = vector.extract_strided_slice %431 {offsets = [0, 32], sizes = [4, 32], strides = [1, 1]} : vector<4x128xf32> to vector<4x32xf32>
    %435 = vector.extract_strided_slice %432 {offsets = [0, 64], sizes = [4, 32], strides = [1, 1]} : vector<4x128xf32> to vector<4x32xf32>
    %436 = vector.extract_strided_slice %431 {offsets = [0, 96], sizes = [4, 32], strides = [1, 1]} : vector<4x128xf32> to vector<4x32xf32>
    %437 = arith.mulf %434, %0 : vector<4x32xf32>
    %438 = arith.mulf %433, %435 : vector<4x32xf32>
    %439 = arith.addf %437, %438 : vector<4x32xf32>
    %440 = math.tanh %439 : vector<4x32xf32>
    %441 = arith.mulf %436, %440 : vector<4x32xf32>
    %442 = arith.index_cast %c0_i32_250 : i32 to index
    %c0_256 = arith.constant 0 : index
    %c0_257 = arith.constant 0 : index
    %443 = vector.load %arg10[%442, %c0_256, %c0_257] : memref<10x4x32xf32, #tpu.memory_space<vmem>>, vector<1x4x32xf32>
    %444 = vector.shape_cast %443 : vector<1x4x32xf32> to vector<4x32xf32>
    %445 = vector.shape_cast %441 : vector<4x32xf32> to vector<1x4x32xf32>
    tpu.vector_store %arg10[%442, %c0_256, %c0_257], %445 {strides = array<i32>} : memref<10x4x32xf32, #tpu.memory_space<vmem>>, vector<1x4x32xf32>,
    %c1_i32_258 = arith.constant 1 : i32
    %446 = arith.index_cast %c1_i32_258 : i32 to index
    %c0_259 = arith.constant 0 : index
    %c0_260 = arith.constant 0 : index
    %447 = vector.load %arg7[%446, %c0_259, %c0_260] : memref<10x4x128xf32, #tpu.memory_space<vmem>>, vector<1x4x128xf32>
    %448 = vector.shape_cast %447 : vector<1x4x128xf32> to vector<4x128xf32>
    %c104_261 = arith.constant 104 : index
    %c0_262 = arith.constant 0 : index
    %449 = vector.load %arg3[%c104_261, %c0_262] : memref<376x128xf32, #tpu.memory_space<vmem>>, vector<32x128xf32>
    %cst_263 = arith.constant dense<0.000000e+00> : vector<4x128xf32>
    %450 = tpu.matmul %441, %449, %cst_263 {dimension_numbers = #tpu.dot_dimension_numbers<[1], [0], [0], [1], [0, 0, 1, 1], [], []>} : vector<4x32xf32>, vector<32x128xf32>, vector<4x128xf32> -> vector<4x128xf32>
    %451 = arith.addf %448, %450 : vector<4x128xf32>
    %452 = arith.negf %451 : vector<4x128xf32>
    %453 = math.exp %452 : vector<4x128xf32>
    %cst_264 = arith.constant 1.000000e+00 : f32
    %454 = vector.broadcast %cst_264 : f32 to vector<4x128xf32>
    %455 = arith.addf %454, %453 : vector<4x128xf32>
    %456 = arith.divf %454, %455 : vector<4x128xf32>
    %457 = math.tanh %451 : vector<4x128xf32>
    %458 = vector.extract_strided_slice %456 {offsets = [0, 0], sizes = [4, 32], strides = [1, 1]} : vector<4x128xf32> to vector<4x32xf32>
    %459 = vector.extract_strided_slice %456 {offsets = [0, 32], sizes = [4, 32], strides = [1, 1]} : vector<4x128xf32> to vector<4x32xf32>
    %460 = vector.extract_strided_slice %457 {offsets = [0, 64], sizes = [4, 32], strides = [1, 1]} : vector<4x128xf32> to vector<4x32xf32>
    %461 = vector.extract_strided_slice %456 {offsets = [0, 96], sizes = [4, 32], strides = [1, 1]} : vector<4x128xf32> to vector<4x32xf32>
    %462 = arith.mulf %459, %439 : vector<4x32xf32>
    %463 = arith.mulf %458, %460 : vector<4x32xf32>
    %464 = arith.addf %462, %463 : vector<4x32xf32>
    %465 = math.tanh %464 : vector<4x32xf32>
    %466 = arith.mulf %461, %465 : vector<4x32xf32>
    %467 = arith.index_cast %c1_i32_258 : i32 to index
    %c0_265 = arith.constant 0 : index
    %c0_266 = arith.constant 0 : index
    %468 = vector.load %arg10[%467, %c0_265, %c0_266] : memref<10x4x32xf32, #tpu.memory_space<vmem>>, vector<1x4x32xf32>
    %469 = vector.shape_cast %468 : vector<1x4x32xf32> to vector<4x32xf32>
    %470 = vector.shape_cast %466 : vector<4x32xf32> to vector<1x4x32xf32>
    tpu.vector_store %arg10[%467, %c0_265, %c0_266], %470 {strides = array<i32>} : memref<10x4x32xf32, #tpu.memory_space<vmem>>, vector<1x4x32xf32>,
    %c2_i32_267 = arith.constant 2 : i32
    %471 = arith.index_cast %c2_i32_267 : i32 to index
    %c0_268 = arith.constant 0 : index
    %c0_269 = arith.constant 0 : index
    %472 = vector.load %arg7[%471, %c0_268, %c0_269] : memref<10x4x128xf32, #tpu.memory_space<vmem>>, vector<1x4x128xf32>
    %473 = vector.shape_cast %472 : vector<1x4x128xf32> to vector<4x128xf32>
    %c104_270 = arith.constant 104 : index
    %c0_271 = arith.constant 0 : index
    %474 = vector.load %arg3[%c104_270, %c0_271] : memref<376x128xf32, #tpu.memory_space<vmem>>, vector<32x128xf32>
    %cst_272 = arith.constant dense<0.000000e+00> : vector<4x128xf32>
    %475 = tpu.matmul %466, %474, %cst_272 {dimension_numbers = #tpu.dot_dimension_numbers<[1], [0], [0], [1], [0, 0, 1, 1], [], []>} : vector<4x32xf32>, vector<32x128xf32>, vector<4x128xf32> -> vector<4x128xf32>
    %476 = arith.addf %473, %475 : vector<4x128xf32>
    %477 = arith.negf %476 : vector<4x128xf32>
    %478 = math.exp %477 : vector<4x128xf32>
    %cst_273 = arith.constant 1.000000e+00 : f32
    %479 = vector.broadcast %cst_273 : f32 to vector<4x128xf32>
    %480 = arith.addf %479, %478 : vector<4x128xf32>
    %481 = arith.divf %479, %480 : vector<4x128xf32>
    %482 = math.tanh %476 : vector<4x128xf32>
    %483 = vector.extract_strided_slice %481 {offsets = [0, 0], sizes = [4, 32], strides = [1, 1]} : vector<4x128xf32> to vector<4x32xf32>
    %484 = vector.extract_strided_slice %481 {offsets = [0, 32], sizes = [4, 32], strides = [1, 1]} : vector<4x128xf32> to vector<4x32xf32>
    %485 = vector.extract_strided_slice %482 {offsets = [0, 64], sizes = [4, 32], strides = [1, 1]} : vector<4x128xf32> to vector<4x32xf32>
    %486 = vector.extract_strided_slice %481 {offsets = [0, 96], sizes = [4, 32], strides = [1, 1]} : vector<4x128xf32> to vector<4x32xf32>
    %487 = arith.mulf %484, %464 : vector<4x32xf32>
    %488 = arith.mulf %483, %485 : vector<4x32xf32>
    %489 = arith.addf %487, %488 : vector<4x32xf32>
    %490 = math.tanh %489 : vector<4x32xf32>
    %491 = arith.mulf %486, %490 : vector<4x32xf32>
    %492 = arith.index_cast %c2_i32_267 : i32 to index
    %c0_274 = arith.constant 0 : index
    %c0_275 = arith.constant 0 : index
    %493 = vector.load %arg10[%492, %c0_274, %c0_275] : memref<10x4x32xf32, #tpu.memory_space<vmem>>, vector<1x4x32xf32>
    %494 = vector.shape_cast %493 : vector<1x4x32xf32> to vector<4x32xf32>
    %495 = vector.shape_cast %491 : vector<4x32xf32> to vector<1x4x32xf32>
    tpu.vector_store %arg10[%492, %c0_274, %c0_275], %495 {strides = array<i32>} : memref<10x4x32xf32, #tpu.memory_space<vmem>>, vector<1x4x32xf32>,
    %c3_i32_276 = arith.constant 3 : i32
    %496 = arith.index_cast %c3_i32_276 : i32 to index
    %c0_277 = arith.constant 0 : index
    %c0_278 = arith.constant 0 : index
    %497 = vector.load %arg7[%496, %c0_277, %c0_278] : memref<10x4x128xf32, #tpu.memory_space<vmem>>, vector<1x4x128xf32>
    %498 = vector.shape_cast %497 : vector<1x4x128xf32> to vector<4x128xf32>
    %c104_279 = arith.constant 104 : index
    %c0_280 = arith.constant 0 : index
    %499 = vector.load %arg3[%c104_279, %c0_280] : memref<376x128xf32, #tpu.memory_space<vmem>>, vector<32x128xf32>
    %cst_281 = arith.constant dense<0.000000e+00> : vector<4x128xf32>
    %500 = tpu.matmul %491, %499, %cst_281 {dimension_numbers = #tpu.dot_dimension_numbers<[1], [0], [0], [1], [0, 0, 1, 1], [], []>} : vector<4x32xf32>, vector<32x128xf32>, vector<4x128xf32> -> vector<4x128xf32>
    %501 = arith.addf %498, %500 : vector<4x128xf32>
    %502 = arith.negf %501 : vector<4x128xf32>
    %503 = math.exp %502 : vector<4x128xf32>
    %cst_282 = arith.constant 1.000000e+00 : f32
    %504 = vector.broadcast %cst_282 : f32 to vector<4x128xf32>
    %505 = arith.addf %504, %503 : vector<4x128xf32>
    %506 = arith.divf %504, %505 : vector<4x128xf32>
    %507 = math.tanh %501 : vector<4x128xf32>
    %508 = vector.extract_strided_slice %506 {offsets = [0, 0], sizes = [4, 32], strides = [1, 1]} : vector<4x128xf32> to vector<4x32xf32>
    %509 = vector.extract_strided_slice %506 {offsets = [0, 32], sizes = [4, 32], strides = [1, 1]} : vector<4x128xf32> to vector<4x32xf32>
    %510 = vector.extract_strided_slice %507 {offsets = [0, 64], sizes = [4, 32], strides = [1, 1]} : vector<4x128xf32> to vector<4x32xf32>
    %511 = vector.extract_strided_slice %506 {offsets = [0, 96], sizes = [4, 32], strides = [1, 1]} : vector<4x128xf32> to vector<4x32xf32>
    %512 = arith.mulf %509, %489 : vector<4x32xf32>
    %513 = arith.mulf %508, %510 : vector<4x32xf32>
    %514 = arith.addf %512, %513 : vector<4x32xf32>
    %515 = math.tanh %514 : vector<4x32xf32>
    %516 = arith.mulf %511, %515 : vector<4x32xf32>
    %517 = arith.index_cast %c3_i32_276 : i32 to index
    %c0_283 = arith.constant 0 : index
    %c0_284 = arith.constant 0 : index
    %518 = vector.load %arg10[%517, %c0_283, %c0_284] : memref<10x4x32xf32, #tpu.memory_space<vmem>>, vector<1x4x32xf32>
    %519 = vector.shape_cast %518 : vector<1x4x32xf32> to vector<4x32xf32>
    %520 = vector.shape_cast %516 : vector<4x32xf32> to vector<1x4x32xf32>
    tpu.vector_store %arg10[%517, %c0_283, %c0_284], %520 {strides = array<i32>} : memref<10x4x32xf32, #tpu.memory_space<vmem>>, vector<1x4x32xf32>,
    %c4_i32_285 = arith.constant 4 : i32
    %521 = arith.index_cast %c4_i32_285 : i32 to index
    %c0_286 = arith.constant 0 : index
    %c0_287 = arith.constant 0 : index
    %522 = vector.load %arg7[%521, %c0_286, %c0_287] : memref<10x4x128xf32, #tpu.memory_space<vmem>>, vector<1x4x128xf32>
    %523 = vector.shape_cast %522 : vector<1x4x128xf32> to vector<4x128xf32>
    %c104_288 = arith.constant 104 : index
    %c0_289 = arith.constant 0 : index
    %524 = vector.load %arg3[%c104_288, %c0_289] : memref<376x128xf32, #tpu.memory_space<vmem>>, vector<32x128xf32>
    %cst_290 = arith.constant dense<0.000000e+00> : vector<4x128xf32>
    %525 = tpu.matmul %516, %524, %cst_290 {dimension_numbers = #tpu.dot_dimension_numbers<[1], [0], [0], [1], [0, 0, 1, 1], [], []>} : vector<4x32xf32>, vector<32x128xf32>, vector<4x128xf32> -> vector<4x128xf32>
    %526 = arith.addf %523, %525 : vector<4x128xf32>
    %527 = arith.negf %526 : vector<4x128xf32>
    %528 = math.exp %527 : vector<4x128xf32>
    %cst_291 = arith.constant 1.000000e+00 : f32
    %529 = vector.broadcast %cst_291 : f32 to vector<4x128xf32>
    %530 = arith.addf %529, %528 : vector<4x128xf32>
    %531 = arith.divf %529, %530 : vector<4x128xf32>
    %532 = math.tanh %526 : vector<4x128xf32>
    %533 = vector.extract_strided_slice %531 {offsets = [0, 0], sizes = [4, 32], strides = [1, 1]} : vector<4x128xf32> to vector<4x32xf32>
    %534 = vector.extract_strided_slice %531 {offsets = [0, 32], sizes = [4, 32], strides = [1, 1]} : vector<4x128xf32> to vector<4x32xf32>
    %535 = vector.extract_strided_slice %532 {offsets = [0, 64], sizes = [4, 32], strides = [1, 1]} : vector<4x128xf32> to vector<4x32xf32>
    %536 = vector.extract_strided_slice %531 {offsets = [0, 96], sizes = [4, 32], strides = [1, 1]} : vector<4x128xf32> to vector<4x32xf32>
    %537 = arith.mulf %534, %514 : vector<4x32xf32>
    %538 = arith.mulf %533, %535 : vector<4x32xf32>
    %539 = arith.addf %537, %538 : vector<4x32xf32>
    %540 = math.tanh %539 : vector<4x32xf32>
    %541 = arith.mulf %536, %540 : vector<4x32xf32>
    %542 = arith.index_cast %c4_i32_285 : i32 to index
    %c0_292 = arith.constant 0 : index
    %c0_293 = arith.constant 0 : index
    %543 = vector.load %arg10[%542, %c0_292, %c0_293] : memref<10x4x32xf32, #tpu.memory_space<vmem>>, vector<1x4x32xf32>
    %544 = vector.shape_cast %543 : vector<1x4x32xf32> to vector<4x32xf32>
    %545 = vector.shape_cast %541 : vector<4x32xf32> to vector<1x4x32xf32>
    tpu.vector_store %arg10[%542, %c0_292, %c0_293], %545 {strides = array<i32>} : memref<10x4x32xf32, #tpu.memory_space<vmem>>, vector<1x4x32xf32>,
    %c5_i32_294 = arith.constant 5 : i32
    %546 = arith.index_cast %c5_i32_294 : i32 to index
    %c0_295 = arith.constant 0 : index
    %c0_296 = arith.constant 0 : index
    %547 = vector.load %arg7[%546, %c0_295, %c0_296] : memref<10x4x128xf32, #tpu.memory_space<vmem>>, vector<1x4x128xf32>
    %548 = vector.shape_cast %547 : vector<1x4x128xf32> to vector<4x128xf32>
    %c104_297 = arith.constant 104 : index
    %c0_298 = arith.constant 0 : index
    %549 = vector.load %arg3[%c104_297, %c0_298] : memref<376x128xf32, #tpu.memory_space<vmem>>, vector<32x128xf32>
    %cst_299 = arith.constant dense<0.000000e+00> : vector<4x128xf32>
    %550 = tpu.matmul %541, %549, %cst_299 {dimension_numbers = #tpu.dot_dimension_numbers<[1], [0], [0], [1], [0, 0, 1, 1], [], []>} : vector<4x32xf32>, vector<32x128xf32>, vector<4x128xf32> -> vector<4x128xf32>
    %551 = arith.addf %548, %550 : vector<4x128xf32>
    %552 = arith.negf %551 : vector<4x128xf32>
    %553 = math.exp %552 : vector<4x128xf32>
    %cst_300 = arith.constant 1.000000e+00 : f32
    %554 = vector.broadcast %cst_300 : f32 to vector<4x128xf32>
    %555 = arith.addf %554, %553 : vector<4x128xf32>
    %556 = arith.divf %554, %555 : vector<4x128xf32>
    %557 = math.tanh %551 : vector<4x128xf32>
    %558 = vector.extract_strided_slice %556 {offsets = [0, 0], sizes = [4, 32], strides = [1, 1]} : vector<4x128xf32> to vector<4x32xf32>
    %559 = vector.extract_strided_slice %556 {offsets = [0, 32], sizes = [4, 32], strides = [1, 1]} : vector<4x128xf32> to vector<4x32xf32>
    %560 = vector.extract_strided_slice %557 {offsets = [0, 64], sizes = [4, 32], strides = [1, 1]} : vector<4x128xf32> to vector<4x32xf32>
    %561 = vector.extract_strided_slice %556 {offsets = [0, 96], sizes = [4, 32], strides = [1, 1]} : vector<4x128xf32> to vector<4x32xf32>
    %562 = arith.mulf %559, %539 : vector<4x32xf32>
    %563 = arith.mulf %558, %560 : vector<4x32xf32>
    %564 = arith.addf %562, %563 : vector<4x32xf32>
    %565 = math.tanh %564 : vector<4x32xf32>
    %566 = arith.mulf %561, %565 : vector<4x32xf32>
    %567 = arith.index_cast %c5_i32_294 : i32 to index
    %c0_301 = arith.constant 0 : index
    %c0_302 = arith.constant 0 : index
    %568 = vector.load %arg10[%567, %c0_301, %c0_302] : memref<10x4x32xf32, #tpu.memory_space<vmem>>, vector<1x4x32xf32>
    %569 = vector.shape_cast %568 : vector<1x4x32xf32> to vector<4x32xf32>
    %570 = vector.shape_cast %566 : vector<4x32xf32> to vector<1x4x32xf32>
    tpu.vector_store %arg10[%567, %c0_301, %c0_302], %570 {strides = array<i32>} : memref<10x4x32xf32, #tpu.memory_space<vmem>>, vector<1x4x32xf32>,
    %c6_i32_303 = arith.constant 6 : i32
    %571 = arith.index_cast %c6_i32_303 : i32 to index
    %c0_304 = arith.constant 0 : index
    %c0_305 = arith.constant 0 : index
    %572 = vector.load %arg7[%571, %c0_304, %c0_305] : memref<10x4x128xf32, #tpu.memory_space<vmem>>, vector<1x4x128xf32>
    %573 = vector.shape_cast %572 : vector<1x4x128xf32> to vector<4x128xf32>
    %c104_306 = arith.constant 104 : index
    %c0_307 = arith.constant 0 : index
    %574 = vector.load %arg3[%c104_306, %c0_307] : memref<376x128xf32, #tpu.memory_space<vmem>>, vector<32x128xf32>
    %cst_308 = arith.constant dense<0.000000e+00> : vector<4x128xf32>
    %575 = tpu.matmul %566, %574, %cst_308 {dimension_numbers = #tpu.dot_dimension_numbers<[1], [0], [0], [1], [0, 0, 1, 1], [], []>} : vector<4x32xf32>, vector<32x128xf32>, vector<4x128xf32> -> vector<4x128xf32>
    %576 = arith.addf %573, %575 : vector<4x128xf32>
    %577 = arith.negf %576 : vector<4x128xf32>
    %578 = math.exp %577 : vector<4x128xf32>
    %cst_309 = arith.constant 1.000000e+00 : f32
    %579 = vector.broadcast %cst_309 : f32 to vector<4x128xf32>
    %580 = arith.addf %579, %578 : vector<4x128xf32>
    %581 = arith.divf %579, %580 : vector<4x128xf32>
    %582 = math.tanh %576 : vector<4x128xf32>
    %583 = vector.extract_strided_slice %581 {offsets = [0, 0], sizes = [4, 32], strides = [1, 1]} : vector<4x128xf32> to vector<4x32xf32>
    %584 = vector.extract_strided_slice %581 {offsets = [0, 32], sizes = [4, 32], strides = [1, 1]} : vector<4x128xf32> to vector<4x32xf32>
    %585 = vector.extract_strided_slice %582 {offsets = [0, 64], sizes = [4, 32], strides = [1, 1]} : vector<4x128xf32> to vector<4x32xf32>
    %586 = vector.extract_strided_slice %581 {offsets = [0, 96], sizes = [4, 32], strides = [1, 1]} : vector<4x128xf32> to vector<4x32xf32>
    %587 = arith.mulf %584, %564 : vector<4x32xf32>
    %588 = arith.mulf %583, %585 : vector<4x32xf32>
    %589 = arith.addf %587, %588 : vector<4x32xf32>
    %590 = math.tanh %589 : vector<4x32xf32>
    %591 = arith.mulf %586, %590 : vector<4x32xf32>
    %592 = arith.index_cast %c6_i32_303 : i32 to index
    %c0_310 = arith.constant 0 : index
    %c0_311 = arith.constant 0 : index
    %593 = vector.load %arg10[%592, %c0_310, %c0_311] : memref<10x4x32xf32, #tpu.memory_space<vmem>>, vector<1x4x32xf32>
    %594 = vector.shape_cast %593 : vector<1x4x32xf32> to vector<4x32xf32>
    %595 = vector.shape_cast %591 : vector<4x32xf32> to vector<1x4x32xf32>
    tpu.vector_store %arg10[%592, %c0_310, %c0_311], %595 {strides = array<i32>} : memref<10x4x32xf32, #tpu.memory_space<vmem>>, vector<1x4x32xf32>,
    %c7_i32_312 = arith.constant 7 : i32
    %596 = arith.index_cast %c7_i32_312 : i32 to index
    %c0_313 = arith.constant 0 : index
    %c0_314 = arith.constant 0 : index
    %597 = vector.load %arg7[%596, %c0_313, %c0_314] : memref<10x4x128xf32, #tpu.memory_space<vmem>>, vector<1x4x128xf32>
    %598 = vector.shape_cast %597 : vector<1x4x128xf32> to vector<4x128xf32>
    %c104_315 = arith.constant 104 : index
    %c0_316 = arith.constant 0 : index
    %599 = vector.load %arg3[%c104_315, %c0_316] : memref<376x128xf32, #tpu.memory_space<vmem>>, vector<32x128xf32>
    %cst_317 = arith.constant dense<0.000000e+00> : vector<4x128xf32>
    %600 = tpu.matmul %591, %599, %cst_317 {dimension_numbers = #tpu.dot_dimension_numbers<[1], [0], [0], [1], [0, 0, 1, 1], [], []>} : vector<4x32xf32>, vector<32x128xf32>, vector<4x128xf32> -> vector<4x128xf32>
    %601 = arith.addf %598, %600 : vector<4x128xf32>
    %602 = arith.negf %601 : vector<4x128xf32>
    %603 = math.exp %602 : vector<4x128xf32>
    %cst_318 = arith.constant 1.000000e+00 : f32
    %604 = vector.broadcast %cst_318 : f32 to vector<4x128xf32>
    %605 = arith.addf %604, %603 : vector<4x128xf32>
    %606 = arith.divf %604, %605 : vector<4x128xf32>
    %607 = math.tanh %601 : vector<4x128xf32>
    %608 = vector.extract_strided_slice %606 {offsets = [0, 0], sizes = [4, 32], strides = [1, 1]} : vector<4x128xf32> to vector<4x32xf32>
    %609 = vector.extract_strided_slice %606 {offsets = [0, 32], sizes = [4, 32], strides = [1, 1]} : vector<4x128xf32> to vector<4x32xf32>
    %610 = vector.extract_strided_slice %607 {offsets = [0, 64], sizes = [4, 32], strides = [1, 1]} : vector<4x128xf32> to vector<4x32xf32>
    %611 = vector.extract_strided_slice %606 {offsets = [0, 96], sizes = [4, 32], strides = [1, 1]} : vector<4x128xf32> to vector<4x32xf32>
    %612 = arith.mulf %609, %589 : vector<4x32xf32>
    %613 = arith.mulf %608, %610 : vector<4x32xf32>
    %614 = arith.addf %612, %613 : vector<4x32xf32>
    %615 = math.tanh %614 : vector<4x32xf32>
    %616 = arith.mulf %611, %615 : vector<4x32xf32>
    %617 = arith.index_cast %c7_i32_312 : i32 to index
    %c0_319 = arith.constant 0 : index
    %c0_320 = arith.constant 0 : index
    %618 = vector.load %arg10[%617, %c0_319, %c0_320] : memref<10x4x32xf32, #tpu.memory_space<vmem>>, vector<1x4x32xf32>
    %619 = vector.shape_cast %618 : vector<1x4x32xf32> to vector<4x32xf32>
    %620 = vector.shape_cast %616 : vector<4x32xf32> to vector<1x4x32xf32>
    tpu.vector_store %arg10[%617, %c0_319, %c0_320], %620 {strides = array<i32>} : memref<10x4x32xf32, #tpu.memory_space<vmem>>, vector<1x4x32xf32>,
    %c8_i32_321 = arith.constant 8 : i32
    %621 = arith.index_cast %c8_i32_321 : i32 to index
    %c0_322 = arith.constant 0 : index
    %c0_323 = arith.constant 0 : index
    %622 = vector.load %arg7[%621, %c0_322, %c0_323] : memref<10x4x128xf32, #tpu.memory_space<vmem>>, vector<1x4x128xf32>
    %623 = vector.shape_cast %622 : vector<1x4x128xf32> to vector<4x128xf32>
    %c104_324 = arith.constant 104 : index
    %c0_325 = arith.constant 0 : index
    %624 = vector.load %arg3[%c104_324, %c0_325] : memref<376x128xf32, #tpu.memory_space<vmem>>, vector<32x128xf32>
    %cst_326 = arith.constant dense<0.000000e+00> : vector<4x128xf32>
    %625 = tpu.matmul %616, %624, %cst_326 {dimension_numbers = #tpu.dot_dimension_numbers<[1], [0], [0], [1], [0, 0, 1, 1], [], []>} : vector<4x32xf32>, vector<32x128xf32>, vector<4x128xf32> -> vector<4x128xf32>
    %626 = arith.addf %623, %625 : vector<4x128xf32>
    %627 = arith.negf %626 : vector<4x128xf32>
    %628 = math.exp %627 : vector<4x128xf32>
    %cst_327 = arith.constant 1.000000e+00 : f32
    %629 = vector.broadcast %cst_327 : f32 to vector<4x128xf32>
    %630 = arith.addf %629, %628 : vector<4x128xf32>
    %631 = arith.divf %629, %630 : vector<4x128xf32>
    %632 = math.tanh %626 : vector<4x128xf32>
    %633 = vector.extract_strided_slice %631 {offsets = [0, 0], sizes = [4, 32], strides = [1, 1]} : vector<4x128xf32> to vector<4x32xf32>
    %634 = vector.extract_strided_slice %631 {offsets = [0, 32], sizes = [4, 32], strides = [1, 1]} : vector<4x128xf32> to vector<4x32xf32>
    %635 = vector.extract_strided_slice %632 {offsets = [0, 64], sizes = [4, 32], strides = [1, 1]} : vector<4x128xf32> to vector<4x32xf32>
    %636 = vector.extract_strided_slice %631 {offsets = [0, 96], sizes = [4, 32], strides = [1, 1]} : vector<4x128xf32> to vector<4x32xf32>
    %637 = arith.mulf %634, %614 : vector<4x32xf32>
    %638 = arith.mulf %633, %635 : vector<4x32xf32>
    %639 = arith.addf %637, %638 : vector<4x32xf32>
    %640 = math.tanh %639 : vector<4x32xf32>
    %641 = arith.mulf %636, %640 : vector<4x32xf32>
    %642 = arith.index_cast %c8_i32_321 : i32 to index
    %c0_328 = arith.constant 0 : index
    %c0_329 = arith.constant 0 : index
    %643 = vector.load %arg10[%642, %c0_328, %c0_329] : memref<10x4x32xf32, #tpu.memory_space<vmem>>, vector<1x4x32xf32>
    %644 = vector.shape_cast %643 : vector<1x4x32xf32> to vector<4x32xf32>
    %645 = vector.shape_cast %641 : vector<4x32xf32> to vector<1x4x32xf32>
    tpu.vector_store %arg10[%642, %c0_328, %c0_329], %645 {strides = array<i32>} : memref<10x4x32xf32, #tpu.memory_space<vmem>>, vector<1x4x32xf32>,
    %c9_i32_330 = arith.constant 9 : i32
    %646 = arith.index_cast %c9_i32_330 : i32 to index
    %c0_331 = arith.constant 0 : index
    %c0_332 = arith.constant 0 : index
    %647 = vector.load %arg7[%646, %c0_331, %c0_332] : memref<10x4x128xf32, #tpu.memory_space<vmem>>, vector<1x4x128xf32>
    %648 = vector.shape_cast %647 : vector<1x4x128xf32> to vector<4x128xf32>
    %c104_333 = arith.constant 104 : index
    %c0_334 = arith.constant 0 : index
    %649 = vector.load %arg3[%c104_333, %c0_334] : memref<376x128xf32, #tpu.memory_space<vmem>>, vector<32x128xf32>
    %cst_335 = arith.constant dense<0.000000e+00> : vector<4x128xf32>
    %650 = tpu.matmul %641, %649, %cst_335 {dimension_numbers = #tpu.dot_dimension_numbers<[1], [0], [0], [1], [0, 0, 1, 1], [], []>} : vector<4x32xf32>, vector<32x128xf32>, vector<4x128xf32> -> vector<4x128xf32>
    %651 = arith.addf %648, %650 : vector<4x128xf32>
    %652 = arith.negf %651 : vector<4x128xf32>
    %653 = math.exp %652 : vector<4x128xf32>
    %cst_336 = arith.constant 1.000000e+00 : f32
    %654 = vector.broadcast %cst_336 : f32 to vector<4x128xf32>
    %655 = arith.addf %654, %653 : vector<4x128xf32>
    %656 = arith.divf %654, %655 : vector<4x128xf32>
    %657 = math.tanh %651 : vector<4x128xf32>
    %658 = vector.extract_strided_slice %656 {offsets = [0, 0], sizes = [4, 32], strides = [1, 1]} : vector<4x128xf32> to vector<4x32xf32>
    %659 = vector.extract_strided_slice %656 {offsets = [0, 32], sizes = [4, 32], strides = [1, 1]} : vector<4x128xf32> to vector<4x32xf32>
    %660 = vector.extract_strided_slice %657 {offsets = [0, 64], sizes = [4, 32], strides = [1, 1]} : vector<4x128xf32> to vector<4x32xf32>
    %661 = vector.extract_strided_slice %656 {offsets = [0, 96], sizes = [4, 32], strides = [1, 1]} : vector<4x128xf32> to vector<4x32xf32>
    %662 = arith.mulf %659, %639 : vector<4x32xf32>
    %663 = arith.mulf %658, %660 : vector<4x32xf32>
    %664 = arith.addf %662, %663 : vector<4x32xf32>
    %665 = math.tanh %664 : vector<4x32xf32>
    %666 = arith.mulf %661, %665 : vector<4x32xf32>
    %667 = arith.index_cast %c9_i32_330 : i32 to index
    %c0_337 = arith.constant 0 : index
    %c0_338 = arith.constant 0 : index
    %668 = vector.load %arg10[%667, %c0_337, %c0_338] : memref<10x4x32xf32, #tpu.memory_space<vmem>>, vector<1x4x32xf32>
    %669 = vector.shape_cast %668 : vector<1x4x32xf32> to vector<4x32xf32>
    %670 = vector.shape_cast %666 : vector<4x32xf32> to vector<1x4x32xf32>
    tpu.vector_store %arg10[%667, %c0_337, %c0_338], %670 {strides = array<i32>} : memref<10x4x32xf32, #tpu.memory_space<vmem>>, vector<1x4x32xf32>,
    %c10_i32_339 = arith.constant 10 : i32
    %c0_340 = arith.constant 0 : index
    %c0_341 = arith.constant 0 : index
    %671 = vector.load %arg4[%c0_340, %c0_341] : memref<5x32xf32, #tpu.memory_space<vmem>>, vector<1x32xf32>
    %672 = vector.shape_cast %671 : vector<1x32xf32> to vector<32xf32>
    %673 = vector.shape_cast %672 : vector<32xf32> to vector<1x32xf32>
    %674 = vector.shape_cast %673 : vector<1x32xf32> to vector<1x32xf32>
    %675 = vector.broadcast %674 : vector<1x32xf32> to vector<4x32xf32>
    %c1_342 = arith.constant 1 : index
    %c0_343 = arith.constant 0 : index
    %676 = vector.load %arg4[%c1_342, %c0_343] : memref<5x32xf32, #tpu.memory_space<vmem>>, vector<1x32xf32>
    %677 = vector.shape_cast %676 : vector<1x32xf32> to vector<32xf32>
    %678 = vector.shape_cast %677 : vector<32xf32> to vector<1x32xf32>
    %679 = vector.shape_cast %678 : vector<1x32xf32> to vector<1x32xf32>
    %680 = vector.broadcast %679 : vector<1x32xf32> to vector<4x32xf32>
    %c2_344 = arith.constant 2 : index
    %c0_345 = arith.constant 0 : index
    %681 = vector.load %arg4[%c2_344, %c0_345] : memref<5x32xf32, #tpu.memory_space<vmem>>, vector<1x32xf32>
    %682 = vector.shape_cast %681 : vector<1x32xf32> to vector<32xf32>
    %683 = vector.shape_cast %682 : vector<32xf32> to vector<1x32xf32>
    %684 = vector.shape_cast %683 : vector<1x32xf32> to vector<1x32xf32>
    %685 = vector.broadcast %684 : vector<1x32xf32> to vector<4x32xf32>
    %c3_346 = arith.constant 3 : index
    %c0_347 = arith.constant 0 : index
    %686 = vector.load %arg4[%c3_346, %c0_347] : memref<5x32xf32, #tpu.memory_space<vmem>>, vector<1x32xf32>
    %687 = vector.shape_cast %686 : vector<1x32xf32> to vector<32xf32>
    %688 = vector.shape_cast %687 : vector<32xf32> to vector<1x32xf32>
    %689 = vector.shape_cast %688 : vector<1x32xf32> to vector<1x32xf32>
    %690 = vector.broadcast %689 : vector<1x32xf32> to vector<4x32xf32>
    %c4_348 = arith.constant 4 : index
    %c0_349 = arith.constant 0 : index
    %691 = vector.load %arg4[%c4_348, %c0_349] : memref<5x32xf32, #tpu.memory_space<vmem>>, vector<1x32xf32>
    %692 = vector.shape_cast %691 : vector<1x32xf32> to vector<32xf32>
    %693 = vector.shape_cast %692 : vector<32xf32> to vector<1x32xf32>
    %694 = vector.shape_cast %693 : vector<1x32xf32> to vector<1x32xf32>
    %695 = vector.broadcast %694 : vector<1x32xf32> to vector<4x32xf32>
    %c0_350 = arith.constant 0 : index
    %c0_351 = arith.constant 0 : index
    %c0_352 = arith.constant 0 : index
    %696 = vector.load %arg10[%c0_350, %c0_351, %c0_352] : memref<10x4x32xf32, #tpu.memory_space<vmem>>, vector<10x4x32xf32>
    %c4_353 = arith.constant 4 : index
    %c0_354 = arith.constant 0 : index
    %697 = vector.load %arg4[%c4_353, %c0_354] : memref<5x32xf32, #tpu.memory_space<vmem>>, vector<1x32xf32>
    %698 = vector.shape_cast %697 : vector<1x32xf32> to vector<32xf32>
    %699 = vector.shape_cast %698 : vector<32xf32> to vector<1x1x32xf32>
    %700 = vector.broadcast %699 : vector<1x1x32xf32> to vector<10x4x32xf32>
    %701 = arith.mulf %696, %700 : vector<10x4x32xf32>
    %cst_355 = arith.constant dense<0.000000e+00> : vector<10x4xf32>
    %702 = vector.multi_reduction <add>, %701, %cst_355 [2] : vector<10x4x32xf32> to vector<10x4xf32>
    %c0_356 = arith.constant 0 : index
    %c0_357 = arith.constant 0 : index
    %703 = vector.load %arg11[%c0_356, %c0_357] : memref<10x4xf32, #tpu.memory_space<vmem>>, vector<10x4xf32>
    tpu.vector_store %arg11[%c0_356, %c0_357], %702 {strides = array<i32>} : memref<10x4xf32, #tpu.memory_space<vmem>>, vector<10x4xf32>,
    %c370 = arith.constant 370 : index
    %c0_358 = arith.constant 0 : index
    %704 = vector.load %arg3[%c370, %c0_358] : memref<376x128xf32, #tpu.memory_space<vmem>>, vector<1x128xf32>
    %705 = vector.shape_cast %704 : vector<1x128xf32> to vector<128xf32>
    %706 = vector.shape_cast %705 : vector<128xf32> to vector<1x128xf32>
    %707 = vector.shape_cast %706 : vector<1x128xf32> to vector<1x128xf32>
    %708 = vector.broadcast %707 : vector<1x128xf32> to vector<4x128xf32>
    %c0_359 = arith.constant 0 : index
    %c0_360 = arith.constant 0 : index
    %c0_361 = arith.constant 0 : index
    %709 = vector.load %arg1[%c0_359, %c0_360, %c0_361] : memref<5x4x40xf32, #tpu.memory_space<vmem>>, vector<1x4x40xf32>
    %710 = vector.shape_cast %709 : vector<1x4x40xf32> to vector<4x40xf32>
    %c136 = arith.constant 136 : index
    %c0_362 = arith.constant 0 : index
    %711 = vector.load %arg3[%c136, %c0_362] : memref<376x128xf32, #tpu.memory_space<vmem>>, vector<40x128xf32>
    %cst_363 = arith.constant dense<0.000000e+00> : vector<4x128xf32>
    %712 = tpu.matmul %710, %711, %cst_363 {dimension_numbers = #tpu.dot_dimension_numbers<[1], [0], [0], [1], [0, 0, 1, 1], [], []>} : vector<4x40xf32>, vector<40x128xf32>, vector<4x128xf32> -> vector<4x128xf32>
    %713 = arith.addf %712, %708 : vector<4x128xf32>
    %c0_364 = arith.constant 0 : index
    %c0_365 = arith.constant 0 : index
    %c0_366 = arith.constant 0 : index
    %714 = vector.load %arg8[%c0_364, %c0_365, %c0_366] : memref<5x4x128xf32, #tpu.memory_space<vmem>>, vector<1x4x128xf32>
    %715 = vector.shape_cast %714 : vector<1x4x128xf32> to vector<4x128xf32>
    %716 = vector.shape_cast %713 : vector<4x128xf32> to vector<1x4x128xf32>
    tpu.vector_store %arg8[%c0_364, %c0_365, %c0_366], %716 {strides = array<i32>} : memref<5x4x128xf32, #tpu.memory_space<vmem>>, vector<1x4x128xf32>,
    %c1_367 = arith.constant 1 : index
    %c0_368 = arith.constant 0 : index
    %c0_369 = arith.constant 0 : index
    %717 = vector.load %arg1[%c1_367, %c0_368, %c0_369] : memref<5x4x40xf32, #tpu.memory_space<vmem>>, vector<1x4x40xf32>
    %718 = vector.shape_cast %717 : vector<1x4x40xf32> to vector<4x40xf32>
    %c136_370 = arith.constant 136 : index
    %c0_371 = arith.constant 0 : index
    %719 = vector.load %arg3[%c136_370, %c0_371] : memref<376x128xf32, #tpu.memory_space<vmem>>, vector<40x128xf32>
    %cst_372 = arith.constant dense<0.000000e+00> : vector<4x128xf32>
    %720 = tpu.matmul %718, %719, %cst_372 {dimension_numbers = #tpu.dot_dimension_numbers<[1], [0], [0], [1], [0, 0, 1, 1], [], []>} : vector<4x40xf32>, vector<40x128xf32>, vector<4x128xf32> -> vector<4x128xf32>
    %721 = arith.addf %720, %708 : vector<4x128xf32>
    %c1_373 = arith.constant 1 : index
    %c0_374 = arith.constant 0 : index
    %c0_375 = arith.constant 0 : index
    %722 = vector.load %arg8[%c1_373, %c0_374, %c0_375] : memref<5x4x128xf32, #tpu.memory_space<vmem>>, vector<1x4x128xf32>
    %723 = vector.shape_cast %722 : vector<1x4x128xf32> to vector<4x128xf32>
    %724 = vector.shape_cast %721 : vector<4x128xf32> to vector<1x4x128xf32>
    tpu.vector_store %arg8[%c1_373, %c0_374, %c0_375], %724 {strides = array<i32>} : memref<5x4x128xf32, #tpu.memory_space<vmem>>, vector<1x4x128xf32>,
    %c2_376 = arith.constant 2 : index
    %c0_377 = arith.constant 0 : index
    %c0_378 = arith.constant 0 : index
    %725 = vector.load %arg1[%c2_376, %c0_377, %c0_378] : memref<5x4x40xf32, #tpu.memory_space<vmem>>, vector<1x4x40xf32>
    %726 = vector.shape_cast %725 : vector<1x4x40xf32> to vector<4x40xf32>
    %c136_379 = arith.constant 136 : index
    %c0_380 = arith.constant 0 : index
    %727 = vector.load %arg3[%c136_379, %c0_380] : memref<376x128xf32, #tpu.memory_space<vmem>>, vector<40x128xf32>
    %cst_381 = arith.constant dense<0.000000e+00> : vector<4x128xf32>
    %728 = tpu.matmul %726, %727, %cst_381 {dimension_numbers = #tpu.dot_dimension_numbers<[1], [0], [0], [1], [0, 0, 1, 1], [], []>} : vector<4x40xf32>, vector<40x128xf32>, vector<4x128xf32> -> vector<4x128xf32>
    %729 = arith.addf %728, %708 : vector<4x128xf32>
    %c2_382 = arith.constant 2 : index
    %c0_383 = arith.constant 0 : index
    %c0_384 = arith.constant 0 : index
    %730 = vector.load %arg8[%c2_382, %c0_383, %c0_384] : memref<5x4x128xf32, #tpu.memory_space<vmem>>, vector<1x4x128xf32>
    %731 = vector.shape_cast %730 : vector<1x4x128xf32> to vector<4x128xf32>
    %732 = vector.shape_cast %729 : vector<4x128xf32> to vector<1x4x128xf32>
    tpu.vector_store %arg8[%c2_382, %c0_383, %c0_384], %732 {strides = array<i32>} : memref<5x4x128xf32, #tpu.memory_space<vmem>>, vector<1x4x128xf32>,
    %c3_385 = arith.constant 3 : index
    %c0_386 = arith.constant 0 : index
    %c0_387 = arith.constant 0 : index
    %733 = vector.load %arg1[%c3_385, %c0_386, %c0_387] : memref<5x4x40xf32, #tpu.memory_space<vmem>>, vector<1x4x40xf32>
    %734 = vector.shape_cast %733 : vector<1x4x40xf32> to vector<4x40xf32>
    %c136_388 = arith.constant 136 : index
    %c0_389 = arith.constant 0 : index
    %735 = vector.load %arg3[%c136_388, %c0_389] : memref<376x128xf32, #tpu.memory_space<vmem>>, vector<40x128xf32>
    %cst_390 = arith.constant dense<0.000000e+00> : vector<4x128xf32>
    %736 = tpu.matmul %734, %735, %cst_390 {dimension_numbers = #tpu.dot_dimension_numbers<[1], [0], [0], [1], [0, 0, 1, 1], [], []>} : vector<4x40xf32>, vector<40x128xf32>, vector<4x128xf32> -> vector<4x128xf32>
    %737 = arith.addf %736, %708 : vector<4x128xf32>
    %c3_391 = arith.constant 3 : index
    %c0_392 = arith.constant 0 : index
    %c0_393 = arith.constant 0 : index
    %738 = vector.load %arg8[%c3_391, %c0_392, %c0_393] : memref<5x4x128xf32, #tpu.memory_space<vmem>>, vector<1x4x128xf32>
    %739 = vector.shape_cast %738 : vector<1x4x128xf32> to vector<4x128xf32>
    %740 = vector.shape_cast %737 : vector<4x128xf32> to vector<1x4x128xf32>
    tpu.vector_store %arg8[%c3_391, %c0_392, %c0_393], %740 {strides = array<i32>} : memref<5x4x128xf32, #tpu.memory_space<vmem>>, vector<1x4x128xf32>,
    %c4_394 = arith.constant 4 : index
    %c0_395 = arith.constant 0 : index
    %c0_396 = arith.constant 0 : index
    %741 = vector.load %arg1[%c4_394, %c0_395, %c0_396] : memref<5x4x40xf32, #tpu.memory_space<vmem>>, vector<1x4x40xf32>
    %742 = vector.shape_cast %741 : vector<1x4x40xf32> to vector<4x40xf32>
    %c136_397 = arith.constant 136 : index
    %c0_398 = arith.constant 0 : index
    %743 = vector.load %arg3[%c136_397, %c0_398] : memref<376x128xf32, #tpu.memory_space<vmem>>, vector<40x128xf32>
    %cst_399 = arith.constant dense<0.000000e+00> : vector<4x128xf32>
    %744 = tpu.matmul %742, %743, %cst_399 {dimension_numbers = #tpu.dot_dimension_numbers<[1], [0], [0], [1], [0, 0, 1, 1], [], []>} : vector<4x40xf32>, vector<40x128xf32>, vector<4x128xf32> -> vector<4x128xf32>
    %745 = arith.addf %744, %708 : vector<4x128xf32>
    %c4_400 = arith.constant 4 : index
    %c0_401 = arith.constant 0 : index
    %c0_402 = arith.constant 0 : index
    %746 = vector.load %arg8[%c4_400, %c0_401, %c0_402] : memref<5x4x128xf32, #tpu.memory_space<vmem>>, vector<1x4x128xf32>
    %747 = vector.shape_cast %746 : vector<1x4x128xf32> to vector<4x128xf32>
    %748 = vector.shape_cast %745 : vector<4x128xf32> to vector<1x4x128xf32>
    tpu.vector_store %arg8[%c4_400, %c0_401, %c0_402], %748 {strides = array<i32>} : memref<5x4x128xf32, #tpu.memory_space<vmem>>, vector<1x4x128xf32>,
    %c371 = arith.constant 371 : index
    %c0_403 = arith.constant 0 : index
    %749 = vector.load %arg3[%c371, %c0_403] : memref<376x128xf32, #tpu.memory_space<vmem>>, vector<1x128xf32>
    %750 = vector.shape_cast %749 : vector<1x128xf32> to vector<128xf32>
    %751 = vector.shape_cast %750 : vector<128xf32> to vector<1x128xf32>
    %752 = vector.shape_cast %751 : vector<1x128xf32> to vector<1x128xf32>
    %753 = vector.broadcast %752 : vector<1x128xf32> to vector<4x128xf32>
    %c0_404 = arith.constant 0 : index
    %c0_405 = arith.constant 0 : index
    %754 = vector.load %arg2[%c0_404, %c0_405] : memref<4x32xf32, #tpu.memory_space<vmem>>, vector<4x32xf32>
    %c336 = arith.constant 336 : index
    %c0_406 = arith.constant 0 : index
    %755 = vector.load %arg3[%c336, %c0_406] : memref<376x128xf32, #tpu.memory_space<vmem>>, vector<32x8xf32>
    %cst_407 = arith.constant dense<0.000000e+00> : vector<4x8xf32>
    %756 = tpu.matmul %754, %755, %cst_407 {dimension_numbers = #tpu.dot_dimension_numbers<[1], [0], [0], [1], [0, 0, 1, 1], [], []>} : vector<4x32xf32>, vector<32x8xf32>, vector<4x8xf32> -> vector<4x8xf32>
    %c372 = arith.constant 372 : index
    %c0_408 = arith.constant 0 : index
    %757 = vector.load %arg3[%c372, %c0_408] : memref<376x128xf32, #tpu.memory_space<vmem>>, vector<1x8xf32>
    %758 = vector.shape_cast %757 : vector<1x8xf32> to vector<8xf32>
    %759 = vector.shape_cast %758 : vector<8xf32> to vector<1x8xf32>
    %760 = vector.broadcast %759 : vector<1x8xf32> to vector<4x8xf32>
    %761 = arith.addf %756, %760 : vector<4x8xf32>
    %c0_i32_409 = arith.constant 0 : i32
    %762 = arith.mulf %331, %675 : vector<4x32xf32>
    %763 = arith.mulf %666, %680 : vector<4x32xf32>
    %764 = arith.addf %762, %763 : vector<4x32xf32>
    %765 = arith.mulf %329, %685 : vector<4x32xf32>
    %766 = arith.addf %764, %765 : vector<4x32xf32>
    %767 = arith.mulf %664, %690 : vector<4x32xf32>
    %768 = arith.addf %766, %767 : vector<4x32xf32>
    %cst_410 = arith.constant dense<0.000000e+00> : vector<4xf32>
    %769 = vector.multi_reduction <add>, %768, %cst_410 [1] : vector<4x32xf32> to vector<4xf32>
    %c0_411 = arith.constant 0 : index
    %c0_412 = arith.constant 0 : index
    %770 = vector.load %arg11[%c0_411, %c0_412] : memref<10x4xf32, #tpu.memory_space<vmem>>, vector<10x4xf32>
    %771 = vector.shape_cast %769 : vector<4xf32> to vector<1x4xf32>
    %772 = vector.broadcast %771 : vector<1x4xf32> to vector<10x4xf32>
    %773 = arith.addf %770, %772 : vector<10x4xf32>
    %cst_413 = arith.constant dense<0xFF800000> : vector<10xf32>
    %774 = vector.multi_reduction <maximumf>, %773, %cst_413 [1] : vector<10x4xf32> to vector<10xf32>
    %775 = vector.shape_cast %774 : vector<10xf32> to vector<10x1xf32>
    %776 = vector.broadcast %775 : vector<10x1xf32> to vector<10x4xf32>
    %777 = arith.subf %773, %776 : vector<10x4xf32>
    %778 = math.exp %777 : vector<10x4xf32>
    %cst_414 = arith.constant dense<0.000000e+00> : vector<10xf32>
    %779 = vector.multi_reduction <add>, %778, %cst_414 [1] : vector<10x4xf32> to vector<10xf32>
    %780 = vector.shape_cast %779 : vector<10xf32> to vector<10x1xf32>
    %781 = tpu.reciprocal %780 {approx = true} : vector<10x1xf32> -> vector<10x1xf32>
    %782 = vector.broadcast %781 : vector<10x1xf32> to vector<10x4xf32>
    %783 = arith.mulf %778, %782 : vector<10x4xf32>
    %784 = vector.shape_cast %783 : vector<10x4xf32> to vector<10x4x1xf32>
    %c0_415 = arith.constant 0 : index
    %c0_416 = arith.constant 0 : index
    %c0_417 = arith.constant 0 : index
    %785 = vector.load %arg10[%c0_415, %c0_416, %c0_417] : memref<10x4x32xf32, #tpu.memory_space<vmem>>, vector<10x4x32xf32>
    %786 = vector.broadcast %784 : vector<10x4x1xf32> to vector<10x4x32xf32>
    %787 = arith.mulf %786, %785 : vector<10x4x32xf32>
    %cst_418 = arith.constant dense<0.000000e+00> : vector<4x32xf32>
    %788 = vector.multi_reduction <add>, %787, %cst_418 [0] : vector<10x4x32xf32> to vector<4x32xf32>
    %789 = arith.index_cast %c0_i32_409 : i32 to index
    %c0_419 = arith.constant 0 : index
    %c0_420 = arith.constant 0 : index
    %790 = vector.load %arg8[%789, %c0_419, %c0_420] : memref<5x4x128xf32, #tpu.memory_space<vmem>>, vector<1x4x128xf32>
    %791 = vector.shape_cast %790 : vector<1x4x128xf32> to vector<4x128xf32>
    %c176 = arith.constant 176 : index
    %c0_421 = arith.constant 0 : index
    %792 = vector.load %arg3[%c176, %c0_421] : memref<376x128xf32, #tpu.memory_space<vmem>>, vector<32x128xf32>
    %cst_422 = arith.constant dense<0.000000e+00> : vector<4x128xf32>
    %793 = tpu.matmul %788, %792, %cst_422 {dimension_numbers = #tpu.dot_dimension_numbers<[1], [0], [0], [1], [0, 0, 1, 1], [], []>} : vector<4x32xf32>, vector<32x128xf32>, vector<4x128xf32> -> vector<4x128xf32>
    %794 = arith.addf %791, %793 : vector<4x128xf32>
    %c208 = arith.constant 208 : index
    %c0_423 = arith.constant 0 : index
    %795 = vector.load %arg3[%c208, %c0_423] : memref<376x128xf32, #tpu.memory_space<vmem>>, vector<32x128xf32>
    %cst_424 = arith.constant dense<0.000000e+00> : vector<4x128xf32>
    %796 = tpu.matmul %331, %795, %cst_424 {dimension_numbers = #tpu.dot_dimension_numbers<[1], [0], [0], [1], [0, 0, 1, 1], [], []>} : vector<4x32xf32>, vector<32x128xf32>, vector<4x128xf32> -> vector<4x128xf32>
    %797 = arith.addf %794, %796 : vector<4x128xf32>
    %798 = arith.negf %797 : vector<4x128xf32>
    %799 = math.exp %798 : vector<4x128xf32>
    %cst_425 = arith.constant 1.000000e+00 : f32
    %800 = vector.broadcast %cst_425 : f32 to vector<4x128xf32>
    %801 = arith.addf %800, %799 : vector<4x128xf32>
    %802 = arith.divf %800, %801 : vector<4x128xf32>
    %803 = math.tanh %797 : vector<4x128xf32>
    %804 = vector.extract_strided_slice %802 {offsets = [0, 0], sizes = [4, 32], strides = [1, 1]} : vector<4x128xf32> to vector<4x32xf32>
    %805 = vector.extract_strided_slice %802 {offsets = [0, 32], sizes = [4, 32], strides = [1, 1]} : vector<4x128xf32> to vector<4x32xf32>
    %806 = vector.extract_strided_slice %803 {offsets = [0, 64], sizes = [4, 32], strides = [1, 1]} : vector<4x128xf32> to vector<4x32xf32>
    %807 = vector.extract_strided_slice %802 {offsets = [0, 96], sizes = [4, 32], strides = [1, 1]} : vector<4x128xf32> to vector<4x32xf32>
    %808 = arith.mulf %805, %329 : vector<4x32xf32>
    %809 = arith.mulf %804, %806 : vector<4x32xf32>
    %810 = arith.addf %808, %809 : vector<4x32xf32>
    %811 = math.tanh %810 : vector<4x32xf32>
    %812 = arith.mulf %807, %811 : vector<4x32xf32>
    %c240 = arith.constant 240 : index
    %c0_426 = arith.constant 0 : index
    %813 = vector.load %arg3[%c240, %c0_426] : memref<376x128xf32, #tpu.memory_space<vmem>>, vector<32x128xf32>
    %cst_427 = arith.constant dense<0.000000e+00> : vector<4x128xf32>
    %814 = tpu.matmul %812, %813, %cst_427 {dimension_numbers = #tpu.dot_dimension_numbers<[1], [0], [0], [1], [0, 0, 1, 1], [], []>} : vector<4x32xf32>, vector<32x128xf32>, vector<4x128xf32> -> vector<4x128xf32>
    %c272 = arith.constant 272 : index
    %c0_428 = arith.constant 0 : index
    %815 = vector.load %arg3[%c272, %c0_428] : memref<376x128xf32, #tpu.memory_space<vmem>>, vector<32x128xf32>
    %cst_429 = arith.constant dense<0.000000e+00> : vector<4x128xf32>
    %816 = tpu.matmul %666, %815, %cst_429 {dimension_numbers = #tpu.dot_dimension_numbers<[1], [0], [0], [1], [0, 0, 1, 1], [], []>} : vector<4x32xf32>, vector<32x128xf32>, vector<4x128xf32> -> vector<4x128xf32>
    %817 = arith.addf %814, %816 : vector<4x128xf32>
    %818 = arith.addf %817, %753 : vector<4x128xf32>
    %819 = arith.negf %818 : vector<4x128xf32>
    %820 = math.exp %819 : vector<4x128xf32>
    %cst_430 = arith.constant 1.000000e+00 : f32
    %821 = vector.broadcast %cst_430 : f32 to vector<4x128xf32>
    %822 = arith.addf %821, %820 : vector<4x128xf32>
    %823 = arith.divf %821, %822 : vector<4x128xf32>
    %824 = math.tanh %818 : vector<4x128xf32>
    %825 = vector.extract_strided_slice %823 {offsets = [0, 0], sizes = [4, 32], strides = [1, 1]} : vector<4x128xf32> to vector<4x32xf32>
    %826 = vector.extract_strided_slice %823 {offsets = [0, 32], sizes = [4, 32], strides = [1, 1]} : vector<4x128xf32> to vector<4x32xf32>
    %827 = vector.extract_strided_slice %824 {offsets = [0, 64], sizes = [4, 32], strides = [1, 1]} : vector<4x128xf32> to vector<4x32xf32>
    %828 = vector.extract_strided_slice %823 {offsets = [0, 96], sizes = [4, 32], strides = [1, 1]} : vector<4x128xf32> to vector<4x32xf32>
    %829 = arith.mulf %826, %664 : vector<4x32xf32>
    %830 = arith.mulf %825, %827 : vector<4x32xf32>
    %831 = arith.addf %829, %830 : vector<4x32xf32>
    %832 = math.tanh %831 : vector<4x32xf32>
    %833 = arith.mulf %828, %832 : vector<4x32xf32>
    %c10_i32_431 = arith.constant 10 : i32
    %c0_i32_432 = arith.constant 0 : i32
    %834 = arith.cmpi eq, %c10_i32_431, %c0_i32_432 : i32
    %c1_i32_433 = arith.constant 1 : i32
    %835 = arith.select %834, %c1_i32_433, %c10_i32_431 : i32
    %836 = arith.remsi %c0_i32_409, %835 : i32
    %c0_i32_434 = arith.constant 0 : i32
    %837 = arith.cmpi ne, %836, %c0_i32_434 : i32
    %c0_i32_435 = arith.constant 0 : i32
    %838 = arith.cmpi slt, %836, %c0_i32_435 : i32
    %c0_i32_436 = arith.constant 0 : i32
    %839 = arith.cmpi slt, %835, %c0_i32_436 : i32
    %840 = arith.xori %838, %839 : i1
    %841 = arith.andi %840, %837 : i1
    %842 = arith.addi %836, %835 : i32
    %843 = arith.select %841, %842, %836 : i32
    %844 = arith.index_cast %843 : i32 to index
    %c0_437 = arith.constant 0 : index
    %c0_438 = arith.constant 0 : index
    %845 = vector.load %arg10[%844, %c0_437, %c0_438] : memref<10x4x32xf32, #tpu.memory_space<vmem>>, vector<1x4x32xf32>
    %846 = vector.shape_cast %845 : vector<1x4x32xf32> to vector<4x32xf32>
    %847 = vector.shape_cast %833 : vector<4x32xf32> to vector<1x4x32xf32>
    tpu.vector_store %arg10[%844, %c0_437, %c0_438], %847 {strides = array<i32>} : memref<10x4x32xf32, #tpu.memory_space<vmem>>, vector<1x4x32xf32>,
    %848 = arith.mulf %833, %695 : vector<4x32xf32>
    %cst_439 = arith.constant dense<0.000000e+00> : vector<4xf32>
    %849 = vector.multi_reduction <add>, %848, %cst_439 [1] : vector<4x32xf32> to vector<4xf32>
    %850 = arith.index_cast %843 : i32 to index
    %c0_440 = arith.constant 0 : index
    %851 = vector.load %arg11[%850, %c0_440] : memref<10x4xf32, #tpu.memory_space<vmem>>, vector<1x4xf32>
    %852 = vector.shape_cast %851 : vector<1x4xf32> to vector<4xf32>
    %853 = vector.shape_cast %849 : vector<4xf32> to vector<1x4xf32>
    tpu.vector_store %arg11[%850, %c0_440], %853 {strides = array<i32>} : memref<10x4xf32, #tpu.memory_space<vmem>>, vector<1x4xf32>,
    %c304 = arith.constant 304 : index
    %c0_441 = arith.constant 0 : index
    %854 = vector.load %arg3[%c304, %c0_441] : memref<376x128xf32, #tpu.memory_space<vmem>>, vector<32x8xf32>
    %cst_442 = arith.constant dense<0.000000e+00> : vector<4x8xf32>
    %855 = tpu.matmul %833, %854, %cst_442 {dimension_numbers = #tpu.dot_dimension_numbers<[1], [0], [0], [1], [0, 0, 1, 1], [], []>} : vector<4x32xf32>, vector<32x8xf32>, vector<4x8xf32> -> vector<4x8xf32>
    %856 = arith.addf %855, %761 : vector<4x8xf32>
    %857 = arith.index_cast %c0_i32_409 : i32 to index
    %c0_443 = arith.constant 0 : index
    %c0_444 = arith.constant 0 : index
    %858 = vector.load %arg5[%857, %c0_443, %c0_444] : memref<5x4x8xf32, #tpu.memory_space<vmem>>, vector<1x4x8xf32>
    %859 = vector.shape_cast %858 : vector<1x4x8xf32> to vector<4x8xf32>
    %860 = vector.shape_cast %856 : vector<4x8xf32> to vector<1x4x8xf32>
    tpu.vector_store %arg5[%857, %c0_443, %c0_444], %860 {strides = array<i32>} : memref<5x4x8xf32, #tpu.memory_space<vmem>>, vector<1x4x8xf32>,
    %c1_i32_445 = arith.constant 1 : i32
    %861 = arith.mulf %812, %675 : vector<4x32xf32>
    %862 = arith.mulf %833, %680 : vector<4x32xf32>
    %863 = arith.addf %861, %862 : vector<4x32xf32>
    %864 = arith.mulf %810, %685 : vector<4x32xf32>
    %865 = arith.addf %863, %864 : vector<4x32xf32>
    %866 = arith.mulf %831, %690 : vector<4x32xf32>
    %867 = arith.addf %865, %866 : vector<4x32xf32>
    %cst_446 = arith.constant dense<0.000000e+00> : vector<4xf32>
    %868 = vector.multi_reduction <add>, %867, %cst_446 [1] : vector<4x32xf32> to vector<4xf32>
    %c0_447 = arith.constant 0 : index
    %c0_448 = arith.constant 0 : index
    %869 = vector.load %arg11[%c0_447, %c0_448] : memref<10x4xf32, #tpu.memory_space<vmem>>, vector<10x4xf32>
    %870 = vector.shape_cast %868 : vector<4xf32> to vector<1x4xf32>
    %871 = vector.broadcast %870 : vector<1x4xf32> to vector<10x4xf32>
    %872 = arith.addf %869, %871 : vector<10x4xf32>
    %cst_449 = arith.constant dense<0xFF800000> : vector<10xf32>
    %873 = vector.multi_reduction <maximumf>, %872, %cst_449 [1] : vector<10x4xf32> to vector<10xf32>
    %874 = vector.shape_cast %873 : vector<10xf32> to vector<10x1xf32>
    %875 = vector.broadcast %874 : vector<10x1xf32> to vector<10x4xf32>
    %876 = arith.subf %872, %875 : vector<10x4xf32>
    %877 = math.exp %876 : vector<10x4xf32>
    %cst_450 = arith.constant dense<0.000000e+00> : vector<10xf32>
    %878 = vector.multi_reduction <add>, %877, %cst_450 [1] : vector<10x4xf32> to vector<10xf32>
    %879 = vector.shape_cast %878 : vector<10xf32> to vector<10x1xf32>
    %880 = tpu.reciprocal %879 {approx = true} : vector<10x1xf32> -> vector<10x1xf32>
    %881 = vector.broadcast %880 : vector<10x1xf32> to vector<10x4xf32>
    %882 = arith.mulf %877, %881 : vector<10x4xf32>
    %883 = vector.shape_cast %882 : vector<10x4xf32> to vector<10x4x1xf32>
    %c0_451 = arith.constant 0 : index
    %c0_452 = arith.constant 0 : index
    %c0_453 = arith.constant 0 : index
    %884 = vector.load %arg10[%c0_451, %c0_452, %c0_453] : memref<10x4x32xf32, #tpu.memory_space<vmem>>, vector<10x4x32xf32>
    %885 = vector.broadcast %883 : vector<10x4x1xf32> to vector<10x4x32xf32>
    %886 = arith.mulf %885, %884 : vector<10x4x32xf32>
    %cst_454 = arith.constant dense<0.000000e+00> : vector<4x32xf32>
    %887 = vector.multi_reduction <add>, %886, %cst_454 [0] : vector<10x4x32xf32> to vector<4x32xf32>
    %888 = arith.index_cast %c1_i32_445 : i32 to index
    %c0_455 = arith.constant 0 : index
    %c0_456 = arith.constant 0 : index
    %889 = vector.load %arg8[%888, %c0_455, %c0_456] : memref<5x4x128xf32, #tpu.memory_space<vmem>>, vector<1x4x128xf32>
    %890 = vector.shape_cast %889 : vector<1x4x128xf32> to vector<4x128xf32>
    %c176_457 = arith.constant 176 : index
    %c0_458 = arith.constant 0 : index
    %891 = vector.load %arg3[%c176_457, %c0_458] : memref<376x128xf32, #tpu.memory_space<vmem>>, vector<32x128xf32>
    %cst_459 = arith.constant dense<0.000000e+00> : vector<4x128xf32>
    %892 = tpu.matmul %887, %891, %cst_459 {dimension_numbers = #tpu.dot_dimension_numbers<[1], [0], [0], [1], [0, 0, 1, 1], [], []>} : vector<4x32xf32>, vector<32x128xf32>, vector<4x128xf32> -> vector<4x128xf32>
    %893 = arith.addf %890, %892 : vector<4x128xf32>
    %c208_460 = arith.constant 208 : index
    %c0_461 = arith.constant 0 : index
    %894 = vector.load %arg3[%c208_460, %c0_461] : memref<376x128xf32, #tpu.memory_space<vmem>>, vector<32x128xf32>
    %cst_462 = arith.constant dense<0.000000e+00> : vector<4x128xf32>
    %895 = tpu.matmul %812, %894, %cst_462 {dimension_numbers = #tpu.dot_dimension_numbers<[1], [0], [0], [1], [0, 0, 1, 1], [], []>} : vector<4x32xf32>, vector<32x128xf32>, vector<4x128xf32> -> vector<4x128xf32>
    %896 = arith.addf %893, %895 : vector<4x128xf32>
    %897 = arith.negf %896 : vector<4x128xf32>
    %898 = math.exp %897 : vector<4x128xf32>
    %cst_463 = arith.constant 1.000000e+00 : f32
    %899 = vector.broadcast %cst_463 : f32 to vector<4x128xf32>
    %900 = arith.addf %899, %898 : vector<4x128xf32>
    %901 = arith.divf %899, %900 : vector<4x128xf32>
    %902 = math.tanh %896 : vector<4x128xf32>
    %903 = vector.extract_strided_slice %901 {offsets = [0, 0], sizes = [4, 32], strides = [1, 1]} : vector<4x128xf32> to vector<4x32xf32>
    %904 = vector.extract_strided_slice %901 {offsets = [0, 32], sizes = [4, 32], strides = [1, 1]} : vector<4x128xf32> to vector<4x32xf32>
    %905 = vector.extract_strided_slice %902 {offsets = [0, 64], sizes = [4, 32], strides = [1, 1]} : vector<4x128xf32> to vector<4x32xf32>
    %906 = vector.extract_strided_slice %901 {offsets = [0, 96], sizes = [4, 32], strides = [1, 1]} : vector<4x128xf32> to vector<4x32xf32>
    %907 = arith.mulf %904, %810 : vector<4x32xf32>
    %908 = arith.mulf %903, %905 : vector<4x32xf32>
    %909 = arith.addf %907, %908 : vector<4x32xf32>
    %910 = math.tanh %909 : vector<4x32xf32>
    %911 = arith.mulf %906, %910 : vector<4x32xf32>
    %c240_464 = arith.constant 240 : index
    %c0_465 = arith.constant 0 : index
    %912 = vector.load %arg3[%c240_464, %c0_465] : memref<376x128xf32, #tpu.memory_space<vmem>>, vector<32x128xf32>
    %cst_466 = arith.constant dense<0.000000e+00> : vector<4x128xf32>
    %913 = tpu.matmul %911, %912, %cst_466 {dimension_numbers = #tpu.dot_dimension_numbers<[1], [0], [0], [1], [0, 0, 1, 1], [], []>} : vector<4x32xf32>, vector<32x128xf32>, vector<4x128xf32> -> vector<4x128xf32>
    %c272_467 = arith.constant 272 : index
    %c0_468 = arith.constant 0 : index
    %914 = vector.load %arg3[%c272_467, %c0_468] : memref<376x128xf32, #tpu.memory_space<vmem>>, vector<32x128xf32>
    %cst_469 = arith.constant dense<0.000000e+00> : vector<4x128xf32>
    %915 = tpu.matmul %833, %914, %cst_469 {dimension_numbers = #tpu.dot_dimension_numbers<[1], [0], [0], [1], [0, 0, 1, 1], [], []>} : vector<4x32xf32>, vector<32x128xf32>, vector<4x128xf32> -> vector<4x128xf32>
    %916 = arith.addf %913, %915 : vector<4x128xf32>
    %917 = arith.addf %916, %753 : vector<4x128xf32>
    %918 = arith.negf %917 : vector<4x128xf32>
    %919 = math.exp %918 : vector<4x128xf32>
    %cst_470 = arith.constant 1.000000e+00 : f32
    %920 = vector.broadcast %cst_470 : f32 to vector<4x128xf32>
    %921 = arith.addf %920, %919 : vector<4x128xf32>
    %922 = arith.divf %920, %921 : vector<4x128xf32>
    %923 = math.tanh %917 : vector<4x128xf32>
    %924 = vector.extract_strided_slice %922 {offsets = [0, 0], sizes = [4, 32], strides = [1, 1]} : vector<4x128xf32> to vector<4x32xf32>
    %925 = vector.extract_strided_slice %922 {offsets = [0, 32], sizes = [4, 32], strides = [1, 1]} : vector<4x128xf32> to vector<4x32xf32>
    %926 = vector.extract_strided_slice %923 {offsets = [0, 64], sizes = [4, 32], strides = [1, 1]} : vector<4x128xf32> to vector<4x32xf32>
    %927 = vector.extract_strided_slice %922 {offsets = [0, 96], sizes = [4, 32], strides = [1, 1]} : vector<4x128xf32> to vector<4x32xf32>
    %928 = arith.mulf %925, %831 : vector<4x32xf32>
    %929 = arith.mulf %924, %926 : vector<4x32xf32>
    %930 = arith.addf %928, %929 : vector<4x32xf32>
    %931 = math.tanh %930 : vector<4x32xf32>
    %932 = arith.mulf %927, %931 : vector<4x32xf32>
    %c10_i32_471 = arith.constant 10 : i32
    %c0_i32_472 = arith.constant 0 : i32
    %933 = arith.cmpi eq, %c10_i32_471, %c0_i32_472 : i32
    %c1_i32_473 = arith.constant 1 : i32
    %934 = arith.select %933, %c1_i32_473, %c10_i32_471 : i32
    %935 = arith.remsi %c1_i32_445, %934 : i32
    %c0_i32_474 = arith.constant 0 : i32
    %936 = arith.cmpi ne, %935, %c0_i32_474 : i32
    %c0_i32_475 = arith.constant 0 : i32
    %937 = arith.cmpi slt, %935, %c0_i32_475 : i32
    %c0_i32_476 = arith.constant 0 : i32
    %938 = arith.cmpi slt, %934, %c0_i32_476 : i32
    %939 = arith.xori %937, %938 : i1
    %940 = arith.andi %939, %936 : i1
    %941 = arith.addi %935, %934 : i32
    %942 = arith.select %940, %941, %935 : i32
    %943 = arith.index_cast %942 : i32 to index
    %c0_477 = arith.constant 0 : index
    %c0_478 = arith.constant 0 : index
    %944 = vector.load %arg10[%943, %c0_477, %c0_478] : memref<10x4x32xf32, #tpu.memory_space<vmem>>, vector<1x4x32xf32>
    %945 = vector.shape_cast %944 : vector<1x4x32xf32> to vector<4x32xf32>
    %946 = vector.shape_cast %932 : vector<4x32xf32> to vector<1x4x32xf32>
    tpu.vector_store %arg10[%943, %c0_477, %c0_478], %946 {strides = array<i32>} : memref<10x4x32xf32, #tpu.memory_space<vmem>>, vector<1x4x32xf32>,
    %947 = arith.mulf %932, %695 : vector<4x32xf32>
    %cst_479 = arith.constant dense<0.000000e+00> : vector<4xf32>
    %948 = vector.multi_reduction <add>, %947, %cst_479 [1] : vector<4x32xf32> to vector<4xf32>
    %949 = arith.index_cast %942 : i32 to index
    %c0_480 = arith.constant 0 : index
    %950 = vector.load %arg11[%949, %c0_480] : memref<10x4xf32, #tpu.memory_space<vmem>>, vector<1x4xf32>
    %951 = vector.shape_cast %950 : vector<1x4xf32> to vector<4xf32>
    %952 = vector.shape_cast %948 : vector<4xf32> to vector<1x4xf32>
    tpu.vector_store %arg11[%949, %c0_480], %952 {strides = array<i32>} : memref<10x4xf32, #tpu.memory_space<vmem>>, vector<1x4xf32>,
    %c304_481 = arith.constant 304 : index
    %c0_482 = arith.constant 0 : index
    %953 = vector.load %arg3[%c304_481, %c0_482] : memref<376x128xf32, #tpu.memory_space<vmem>>, vector<32x8xf32>
    %cst_483 = arith.constant dense<0.000000e+00> : vector<4x8xf32>
    %954 = tpu.matmul %932, %953, %cst_483 {dimension_numbers = #tpu.dot_dimension_numbers<[1], [0], [0], [1], [0, 0, 1, 1], [], []>} : vector<4x32xf32>, vector<32x8xf32>, vector<4x8xf32> -> vector<4x8xf32>
    %955 = arith.addf %954, %761 : vector<4x8xf32>
    %956 = arith.index_cast %c1_i32_445 : i32 to index
    %c0_484 = arith.constant 0 : index
    %c0_485 = arith.constant 0 : index
    %957 = vector.load %arg5[%956, %c0_484, %c0_485] : memref<5x4x8xf32, #tpu.memory_space<vmem>>, vector<1x4x8xf32>
    %958 = vector.shape_cast %957 : vector<1x4x8xf32> to vector<4x8xf32>
    %959 = vector.shape_cast %955 : vector<4x8xf32> to vector<1x4x8xf32>
    tpu.vector_store %arg5[%956, %c0_484, %c0_485], %959 {strides = array<i32>} : memref<5x4x8xf32, #tpu.memory_space<vmem>>, vector<1x4x8xf32>,
    %c2_i32_486 = arith.constant 2 : i32
    %960 = arith.mulf %911, %675 : vector<4x32xf32>
    %961 = arith.mulf %932, %680 : vector<4x32xf32>
    %962 = arith.addf %960, %961 : vector<4x32xf32>
    %963 = arith.mulf %909, %685 : vector<4x32xf32>
    %964 = arith.addf %962, %963 : vector<4x32xf32>
    %965 = arith.mulf %930, %690 : vector<4x32xf32>
    %966 = arith.addf %964, %965 : vector<4x32xf32>
    %cst_487 = arith.constant dense<0.000000e+00> : vector<4xf32>
    %967 = vector.multi_reduction <add>, %966, %cst_487 [1] : vector<4x32xf32> to vector<4xf32>
    %c0_488 = arith.constant 0 : index
    %c0_489 = arith.constant 0 : index
    %968 = vector.load %arg11[%c0_488, %c0_489] : memref<10x4xf32, #tpu.memory_space<vmem>>, vector<10x4xf32>
    %969 = vector.shape_cast %967 : vector<4xf32> to vector<1x4xf32>
    %970 = vector.broadcast %969 : vector<1x4xf32> to vector<10x4xf32>
    %971 = arith.addf %968, %970 : vector<10x4xf32>
    %cst_490 = arith.constant dense<0xFF800000> : vector<10xf32>
    %972 = vector.multi_reduction <maximumf>, %971, %cst_490 [1] : vector<10x4xf32> to vector<10xf32>
    %973 = vector.shape_cast %972 : vector<10xf32> to vector<10x1xf32>
    %974 = vector.broadcast %973 : vector<10x1xf32> to vector<10x4xf32>
    %975 = arith.subf %971, %974 : vector<10x4xf32>
    %976 = math.exp %975 : vector<10x4xf32>
    %cst_491 = arith.constant dense<0.000000e+00> : vector<10xf32>
    %977 = vector.multi_reduction <add>, %976, %cst_491 [1] : vector<10x4xf32> to vector<10xf32>
    %978 = vector.shape_cast %977 : vector<10xf32> to vector<10x1xf32>
    %979 = tpu.reciprocal %978 {approx = true} : vector<10x1xf32> -> vector<10x1xf32>
    %980 = vector.broadcast %979 : vector<10x1xf32> to vector<10x4xf32>
    %981 = arith.mulf %976, %980 : vector<10x4xf32>
    %982 = vector.shape_cast %981 : vector<10x4xf32> to vector<10x4x1xf32>
    %c0_492 = arith.constant 0 : index
    %c0_493 = arith.constant 0 : index
    %c0_494 = arith.constant 0 : index
    %983 = vector.load %arg10[%c0_492, %c0_493, %c0_494] : memref<10x4x32xf32, #tpu.memory_space<vmem>>, vector<10x4x32xf32>
    %984 = vector.broadcast %982 : vector<10x4x1xf32> to vector<10x4x32xf32>
    %985 = arith.mulf %984, %983 : vector<10x4x32xf32>
    %cst_495 = arith.constant dense<0.000000e+00> : vector<4x32xf32>
    %986 = vector.multi_reduction <add>, %985, %cst_495 [0] : vector<10x4x32xf32> to vector<4x32xf32>
    %987 = arith.index_cast %c2_i32_486 : i32 to index
    %c0_496 = arith.constant 0 : index
    %c0_497 = arith.constant 0 : index
    %988 = vector.load %arg8[%987, %c0_496, %c0_497] : memref<5x4x128xf32, #tpu.memory_space<vmem>>, vector<1x4x128xf32>
    %989 = vector.shape_cast %988 : vector<1x4x128xf32> to vector<4x128xf32>
    %c176_498 = arith.constant 176 : index
    %c0_499 = arith.constant 0 : index
    %990 = vector.load %arg3[%c176_498, %c0_499] : memref<376x128xf32, #tpu.memory_space<vmem>>, vector<32x128xf32>
    %cst_500 = arith.constant dense<0.000000e+00> : vector<4x128xf32>
    %991 = tpu.matmul %986, %990, %cst_500 {dimension_numbers = #tpu.dot_dimension_numbers<[1], [0], [0], [1], [0, 0, 1, 1], [], []>} : vector<4x32xf32>, vector<32x128xf32>, vector<4x128xf32> -> vector<4x128xf32>
    %992 = arith.addf %989, %991 : vector<4x128xf32>
    %c208_501 = arith.constant 208 : index
    %c0_502 = arith.constant 0 : index
    %993 = vector.load %arg3[%c208_501, %c0_502] : memref<376x128xf32, #tpu.memory_space<vmem>>, vector<32x128xf32>
    %cst_503 = arith.constant dense<0.000000e+00> : vector<4x128xf32>
    %994 = tpu.matmul %911, %993, %cst_503 {dimension_numbers = #tpu.dot_dimension_numbers<[1], [0], [0], [1], [0, 0, 1, 1], [], []>} : vector<4x32xf32>, vector<32x128xf32>, vector<4x128xf32> -> vector<4x128xf32>
    %995 = arith.addf %992, %994 : vector<4x128xf32>
    %996 = arith.negf %995 : vector<4x128xf32>
    %997 = math.exp %996 : vector<4x128xf32>
    %cst_504 = arith.constant 1.000000e+00 : f32
    %998 = vector.broadcast %cst_504 : f32 to vector<4x128xf32>
    %999 = arith.addf %998, %997 : vector<4x128xf32>
    %1000 = arith.divf %998, %999 : vector<4x128xf32>
    %1001 = math.tanh %995 : vector<4x128xf32>
    %1002 = vector.extract_strided_slice %1000 {offsets = [0, 0], sizes = [4, 32], strides = [1, 1]} : vector<4x128xf32> to vector<4x32xf32>
    %1003 = vector.extract_strided_slice %1000 {offsets = [0, 32], sizes = [4, 32], strides = [1, 1]} : vector<4x128xf32> to vector<4x32xf32>
    %1004 = vector.extract_strided_slice %1001 {offsets = [0, 64], sizes = [4, 32], strides = [1, 1]} : vector<4x128xf32> to vector<4x32xf32>
    %1005 = vector.extract_strided_slice %1000 {offsets = [0, 96], sizes = [4, 32], strides = [1, 1]} : vector<4x128xf32> to vector<4x32xf32>
    %1006 = arith.mulf %1003, %909 : vector<4x32xf32>
    %1007 = arith.mulf %1002, %1004 : vector<4x32xf32>
    %1008 = arith.addf %1006, %1007 : vector<4x32xf32>
    %1009 = math.tanh %1008 : vector<4x32xf32>
    %1010 = arith.mulf %1005, %1009 : vector<4x32xf32>
    %c240_505 = arith.constant 240 : index
    %c0_506 = arith.constant 0 : index
    %1011 = vector.load %arg3[%c240_505, %c0_506] : memref<376x128xf32, #tpu.memory_space<vmem>>, vector<32x128xf32>
    %cst_507 = arith.constant dense<0.000000e+00> : vector<4x128xf32>
    %1012 = tpu.matmul %1010, %1011, %cst_507 {dimension_numbers = #tpu.dot_dimension_numbers<[1], [0], [0], [1], [0, 0, 1, 1], [], []>} : vector<4x32xf32>, vector<32x128xf32>, vector<4x128xf32> -> vector<4x128xf32>
    %c272_508 = arith.constant 272 : index
    %c0_509 = arith.constant 0 : index
    %1013 = vector.load %arg3[%c272_508, %c0_509] : memref<376x128xf32, #tpu.memory_space<vmem>>, vector<32x128xf32>
    %cst_510 = arith.constant dense<0.000000e+00> : vector<4x128xf32>
    %1014 = tpu.matmul %932, %1013, %cst_510 {dimension_numbers = #tpu.dot_dimension_numbers<[1], [0], [0], [1], [0, 0, 1, 1], [], []>} : vector<4x32xf32>, vector<32x128xf32>, vector<4x128xf32> -> vector<4x128xf32>
    %1015 = arith.addf %1012, %1014 : vector<4x128xf32>
    %1016 = arith.addf %1015, %753 : vector<4x128xf32>
    %1017 = arith.negf %1016 : vector<4x128xf32>
    %1018 = math.exp %1017 : vector<4x128xf32>
    %cst_511 = arith.constant 1.000000e+00 : f32
    %1019 = vector.broadcast %cst_511 : f32 to vector<4x128xf32>
    %1020 = arith.addf %1019, %1018 : vector<4x128xf32>
    %1021 = arith.divf %1019, %1020 : vector<4x128xf32>
    %1022 = math.tanh %1016 : vector<4x128xf32>
    %1023 = vector.extract_strided_slice %1021 {offsets = [0, 0], sizes = [4, 32], strides = [1, 1]} : vector<4x128xf32> to vector<4x32xf32>
    %1024 = vector.extract_strided_slice %1021 {offsets = [0, 32], sizes = [4, 32], strides = [1, 1]} : vector<4x128xf32> to vector<4x32xf32>
    %1025 = vector.extract_strided_slice %1022 {offsets = [0, 64], sizes = [4, 32], strides = [1, 1]} : vector<4x128xf32> to vector<4x32xf32>
    %1026 = vector.extract_strided_slice %1021 {offsets = [0, 96], sizes = [4, 32], strides = [1, 1]} : vector<4x128xf32> to vector<4x32xf32>
    %1027 = arith.mulf %1024, %930 : vector<4x32xf32>
    %1028 = arith.mulf %1023, %1025 : vector<4x32xf32>
    %1029 = arith.addf %1027, %1028 : vector<4x32xf32>
    %1030 = math.tanh %1029 : vector<4x32xf32>
    %1031 = arith.mulf %1026, %1030 : vector<4x32xf32>
    %c10_i32_512 = arith.constant 10 : i32
    %c0_i32_513 = arith.constant 0 : i32
    %1032 = arith.cmpi eq, %c10_i32_512, %c0_i32_513 : i32
    %c1_i32_514 = arith.constant 1 : i32
    %1033 = arith.select %1032, %c1_i32_514, %c10_i32_512 : i32
    %1034 = arith.remsi %c2_i32_486, %1033 : i32
    %c0_i32_515 = arith.constant 0 : i32
    %1035 = arith.cmpi ne, %1034, %c0_i32_515 : i32
    %c0_i32_516 = arith.constant 0 : i32
    %1036 = arith.cmpi slt, %1034, %c0_i32_516 : i32
    %c0_i32_517 = arith.constant 0 : i32
    %1037 = arith.cmpi slt, %1033, %c0_i32_517 : i32
    %1038 = arith.xori %1036, %1037 : i1
    %1039 = arith.andi %1038, %1035 : i1
    %1040 = arith.addi %1034, %1033 : i32
    %1041 = arith.select %1039, %1040, %1034 : i32
    %1042 = arith.index_cast %1041 : i32 to index
    %c0_518 = arith.constant 0 : index
    %c0_519 = arith.constant 0 : index
    %1043 = vector.load %arg10[%1042, %c0_518, %c0_519] : memref<10x4x32xf32, #tpu.memory_space<vmem>>, vector<1x4x32xf32>
    %1044 = vector.shape_cast %1043 : vector<1x4x32xf32> to vector<4x32xf32>
    %1045 = vector.shape_cast %1031 : vector<4x32xf32> to vector<1x4x32xf32>
    tpu.vector_store %arg10[%1042, %c0_518, %c0_519], %1045 {strides = array<i32>} : memref<10x4x32xf32, #tpu.memory_space<vmem>>, vector<1x4x32xf32>,
    %1046 = arith.mulf %1031, %695 : vector<4x32xf32>
    %cst_520 = arith.constant dense<0.000000e+00> : vector<4xf32>
    %1047 = vector.multi_reduction <add>, %1046, %cst_520 [1] : vector<4x32xf32> to vector<4xf32>
    %1048 = arith.index_cast %1041 : i32 to index
    %c0_521 = arith.constant 0 : index
    %1049 = vector.load %arg11[%1048, %c0_521] : memref<10x4xf32, #tpu.memory_space<vmem>>, vector<1x4xf32>
    %1050 = vector.shape_cast %1049 : vector<1x4xf32> to vector<4xf32>
    %1051 = vector.shape_cast %1047 : vector<4xf32> to vector<1x4xf32>
    tpu.vector_store %arg11[%1048, %c0_521], %1051 {strides = array<i32>} : memref<10x4xf32, #tpu.memory_space<vmem>>, vector<1x4xf32>,
    %c304_522 = arith.constant 304 : index
    %c0_523 = arith.constant 0 : index
    %1052 = vector.load %arg3[%c304_522, %c0_523] : memref<376x128xf32, #tpu.memory_space<vmem>>, vector<32x8xf32>
    %cst_524 = arith.constant dense<0.000000e+00> : vector<4x8xf32>
    %1053 = tpu.matmul %1031, %1052, %cst_524 {dimension_numbers = #tpu.dot_dimension_numbers<[1], [0], [0], [1], [0, 0, 1, 1], [], []>} : vector<4x32xf32>, vector<32x8xf32>, vector<4x8xf32> -> vector<4x8xf32>
    %1054 = arith.addf %1053, %761 : vector<4x8xf32>
    %1055 = arith.index_cast %c2_i32_486 : i32 to index
    %c0_525 = arith.constant 0 : index
    %c0_526 = arith.constant 0 : index
    %1056 = vector.load %arg5[%1055, %c0_525, %c0_526] : memref<5x4x8xf32, #tpu.memory_space<vmem>>, vector<1x4x8xf32>
    %1057 = vector.shape_cast %1056 : vector<1x4x8xf32> to vector<4x8xf32>
    %1058 = vector.shape_cast %1054 : vector<4x8xf32> to vector<1x4x8xf32>
    tpu.vector_store %arg5[%1055, %c0_525, %c0_526], %1058 {strides = array<i32>} : memref<5x4x8xf32, #tpu.memory_space<vmem>>, vector<1x4x8xf32>,
    %c3_i32_527 = arith.constant 3 : i32
    %1059 = arith.mulf %1010, %675 : vector<4x32xf32>
    %1060 = arith.mulf %1031, %680 : vector<4x32xf32>
    %1061 = arith.addf %1059, %1060 : vector<4x32xf32>
    %1062 = arith.mulf %1008, %685 : vector<4x32xf32>
    %1063 = arith.addf %1061, %1062 : vector<4x32xf32>
    %1064 = arith.mulf %1029, %690 : vector<4x32xf32>
    %1065 = arith.addf %1063, %1064 : vector<4x32xf32>
    %cst_528 = arith.constant dense<0.000000e+00> : vector<4xf32>
    %1066 = vector.multi_reduction <add>, %1065, %cst_528 [1] : vector<4x32xf32> to vector<4xf32>
    %c0_529 = arith.constant 0 : index
    %c0_530 = arith.constant 0 : index
    %1067 = vector.load %arg11[%c0_529, %c0_530] : memref<10x4xf32, #tpu.memory_space<vmem>>, vector<10x4xf32>
    %1068 = vector.shape_cast %1066 : vector<4xf32> to vector<1x4xf32>
    %1069 = vector.broadcast %1068 : vector<1x4xf32> to vector<10x4xf32>
    %1070 = arith.addf %1067, %1069 : vector<10x4xf32>
    %cst_531 = arith.constant dense<0xFF800000> : vector<10xf32>
    %1071 = vector.multi_reduction <maximumf>, %1070, %cst_531 [1] : vector<10x4xf32> to vector<10xf32>
    %1072 = vector.shape_cast %1071 : vector<10xf32> to vector<10x1xf32>
    %1073 = vector.broadcast %1072 : vector<10x1xf32> to vector<10x4xf32>
    %1074 = arith.subf %1070, %1073 : vector<10x4xf32>
    %1075 = math.exp %1074 : vector<10x4xf32>
    %cst_532 = arith.constant dense<0.000000e+00> : vector<10xf32>
    %1076 = vector.multi_reduction <add>, %1075, %cst_532 [1] : vector<10x4xf32> to vector<10xf32>
    %1077 = vector.shape_cast %1076 : vector<10xf32> to vector<10x1xf32>
    %1078 = tpu.reciprocal %1077 {approx = true} : vector<10x1xf32> -> vector<10x1xf32>
    %1079 = vector.broadcast %1078 : vector<10x1xf32> to vector<10x4xf32>
    %1080 = arith.mulf %1075, %1079 : vector<10x4xf32>
    %1081 = vector.shape_cast %1080 : vector<10x4xf32> to vector<10x4x1xf32>
    %c0_533 = arith.constant 0 : index
    %c0_534 = arith.constant 0 : index
    %c0_535 = arith.constant 0 : index
    %1082 = vector.load %arg10[%c0_533, %c0_534, %c0_535] : memref<10x4x32xf32, #tpu.memory_space<vmem>>, vector<10x4x32xf32>
    %1083 = vector.broadcast %1081 : vector<10x4x1xf32> to vector<10x4x32xf32>
    %1084 = arith.mulf %1083, %1082 : vector<10x4x32xf32>
    %cst_536 = arith.constant dense<0.000000e+00> : vector<4x32xf32>
    %1085 = vector.multi_reduction <add>, %1084, %cst_536 [0] : vector<10x4x32xf32> to vector<4x32xf32>
    %1086 = arith.index_cast %c3_i32_527 : i32 to index
    %c0_537 = arith.constant 0 : index
    %c0_538 = arith.constant 0 : index
    %1087 = vector.load %arg8[%1086, %c0_537, %c0_538] : memref<5x4x128xf32, #tpu.memory_space<vmem>>, vector<1x4x128xf32>
    %1088 = vector.shape_cast %1087 : vector<1x4x128xf32> to vector<4x128xf32>
    %c176_539 = arith.constant 176 : index
    %c0_540 = arith.constant 0 : index
    %1089 = vector.load %arg3[%c176_539, %c0_540] : memref<376x128xf32, #tpu.memory_space<vmem>>, vector<32x128xf32>
    %cst_541 = arith.constant dense<0.000000e+00> : vector<4x128xf32>
    %1090 = tpu.matmul %1085, %1089, %cst_541 {dimension_numbers = #tpu.dot_dimension_numbers<[1], [0], [0], [1], [0, 0, 1, 1], [], []>} : vector<4x32xf32>, vector<32x128xf32>, vector<4x128xf32> -> vector<4x128xf32>
    %1091 = arith.addf %1088, %1090 : vector<4x128xf32>
    %c208_542 = arith.constant 208 : index
    %c0_543 = arith.constant 0 : index
    %1092 = vector.load %arg3[%c208_542, %c0_543] : memref<376x128xf32, #tpu.memory_space<vmem>>, vector<32x128xf32>
    %cst_544 = arith.constant dense<0.000000e+00> : vector<4x128xf32>
    %1093 = tpu.matmul %1010, %1092, %cst_544 {dimension_numbers = #tpu.dot_dimension_numbers<[1], [0], [0], [1], [0, 0, 1, 1], [], []>} : vector<4x32xf32>, vector<32x128xf32>, vector<4x128xf32> -> vector<4x128xf32>
    %1094 = arith.addf %1091, %1093 : vector<4x128xf32>
    %1095 = arith.negf %1094 : vector<4x128xf32>
    %1096 = math.exp %1095 : vector<4x128xf32>
    %cst_545 = arith.constant 1.000000e+00 : f32
    %1097 = vector.broadcast %cst_545 : f32 to vector<4x128xf32>
    %1098 = arith.addf %1097, %1096 : vector<4x128xf32>
    %1099 = arith.divf %1097, %1098 : vector<4x128xf32>
    %1100 = math.tanh %1094 : vector<4x128xf32>
    %1101 = vector.extract_strided_slice %1099 {offsets = [0, 0], sizes = [4, 32], strides = [1, 1]} : vector<4x128xf32> to vector<4x32xf32>
    %1102 = vector.extract_strided_slice %1099 {offsets = [0, 32], sizes = [4, 32], strides = [1, 1]} : vector<4x128xf32> to vector<4x32xf32>
    %1103 = vector.extract_strided_slice %1100 {offsets = [0, 64], sizes = [4, 32], strides = [1, 1]} : vector<4x128xf32> to vector<4x32xf32>
    %1104 = vector.extract_strided_slice %1099 {offsets = [0, 96], sizes = [4, 32], strides = [1, 1]} : vector<4x128xf32> to vector<4x32xf32>
    %1105 = arith.mulf %1102, %1008 : vector<4x32xf32>
    %1106 = arith.mulf %1101, %1103 : vector<4x32xf32>
    %1107 = arith.addf %1105, %1106 : vector<4x32xf32>
    %1108 = math.tanh %1107 : vector<4x32xf32>
    %1109 = arith.mulf %1104, %1108 : vector<4x32xf32>
    %c240_546 = arith.constant 240 : index
    %c0_547 = arith.constant 0 : index
    %1110 = vector.load %arg3[%c240_546, %c0_547] : memref<376x128xf32, #tpu.memory_space<vmem>>, vector<32x128xf32>
    %cst_548 = arith.constant dense<0.000000e+00> : vector<4x128xf32>
    %1111 = tpu.matmul %1109, %1110, %cst_548 {dimension_numbers = #tpu.dot_dimension_numbers<[1], [0], [0], [1], [0, 0, 1, 1], [], []>} : vector<4x32xf32>, vector<32x128xf32>, vector<4x128xf32> -> vector<4x128xf32>
    %c272_549 = arith.constant 272 : index
    %c0_550 = arith.constant 0 : index
    %1112 = vector.load %arg3[%c272_549, %c0_550] : memref<376x128xf32, #tpu.memory_space<vmem>>, vector<32x128xf32>
    %cst_551 = arith.constant dense<0.000000e+00> : vector<4x128xf32>
    %1113 = tpu.matmul %1031, %1112, %cst_551 {dimension_numbers = #tpu.dot_dimension_numbers<[1], [0], [0], [1], [0, 0, 1, 1], [], []>} : vector<4x32xf32>, vector<32x128xf32>, vector<4x128xf32> -> vector<4x128xf32>
    %1114 = arith.addf %1111, %1113 : vector<4x128xf32>
    %1115 = arith.addf %1114, %753 : vector<4x128xf32>
    %1116 = arith.negf %1115 : vector<4x128xf32>
    %1117 = math.exp %1116 : vector<4x128xf32>
    %cst_552 = arith.constant 1.000000e+00 : f32
    %1118 = vector.broadcast %cst_552 : f32 to vector<4x128xf32>
    %1119 = arith.addf %1118, %1117 : vector<4x128xf32>
    %1120 = arith.divf %1118, %1119 : vector<4x128xf32>
    %1121 = math.tanh %1115 : vector<4x128xf32>
    %1122 = vector.extract_strided_slice %1120 {offsets = [0, 0], sizes = [4, 32], strides = [1, 1]} : vector<4x128xf32> to vector<4x32xf32>
    %1123 = vector.extract_strided_slice %1120 {offsets = [0, 32], sizes = [4, 32], strides = [1, 1]} : vector<4x128xf32> to vector<4x32xf32>
    %1124 = vector.extract_strided_slice %1121 {offsets = [0, 64], sizes = [4, 32], strides = [1, 1]} : vector<4x128xf32> to vector<4x32xf32>
    %1125 = vector.extract_strided_slice %1120 {offsets = [0, 96], sizes = [4, 32], strides = [1, 1]} : vector<4x128xf32> to vector<4x32xf32>
    %1126 = arith.mulf %1123, %1029 : vector<4x32xf32>
    %1127 = arith.mulf %1122, %1124 : vector<4x32xf32>
    %1128 = arith.addf %1126, %1127 : vector<4x32xf32>
    %1129 = math.tanh %1128 : vector<4x32xf32>
    %1130 = arith.mulf %1125, %1129 : vector<4x32xf32>
    %c10_i32_553 = arith.constant 10 : i32
    %c0_i32_554 = arith.constant 0 : i32
    %1131 = arith.cmpi eq, %c10_i32_553, %c0_i32_554 : i32
    %c1_i32_555 = arith.constant 1 : i32
    %1132 = arith.select %1131, %c1_i32_555, %c10_i32_553 : i32
    %1133 = arith.remsi %c3_i32_527, %1132 : i32
    %c0_i32_556 = arith.constant 0 : i32
    %1134 = arith.cmpi ne, %1133, %c0_i32_556 : i32
    %c0_i32_557 = arith.constant 0 : i32
    %1135 = arith.cmpi slt, %1133, %c0_i32_557 : i32
    %c0_i32_558 = arith.constant 0 : i32
    %1136 = arith.cmpi slt, %1132, %c0_i32_558 : i32
    %1137 = arith.xori %1135, %1136 : i1
    %1138 = arith.andi %1137, %1134 : i1
    %1139 = arith.addi %1133, %1132 : i32
    %1140 = arith.select %1138, %1139, %1133 : i32
    %1141 = arith.index_cast %1140 : i32 to index
    %c0_559 = arith.constant 0 : index
    %c0_560 = arith.constant 0 : index
    %1142 = vector.load %arg10[%1141, %c0_559, %c0_560] : memref<10x4x32xf32, #tpu.memory_space<vmem>>, vector<1x4x32xf32>
    %1143 = vector.shape_cast %1142 : vector<1x4x32xf32> to vector<4x32xf32>
    %1144 = vector.shape_cast %1130 : vector<4x32xf32> to vector<1x4x32xf32>
    tpu.vector_store %arg10[%1141, %c0_559, %c0_560], %1144 {strides = array<i32>} : memref<10x4x32xf32, #tpu.memory_space<vmem>>, vector<1x4x32xf32>,
    %1145 = arith.mulf %1130, %695 : vector<4x32xf32>
    %cst_561 = arith.constant dense<0.000000e+00> : vector<4xf32>
    %1146 = vector.multi_reduction <add>, %1145, %cst_561 [1] : vector<4x32xf32> to vector<4xf32>
    %1147 = arith.index_cast %1140 : i32 to index
    %c0_562 = arith.constant 0 : index
    %1148 = vector.load %arg11[%1147, %c0_562] : memref<10x4xf32, #tpu.memory_space<vmem>>, vector<1x4xf32>
    %1149 = vector.shape_cast %1148 : vector<1x4xf32> to vector<4xf32>
    %1150 = vector.shape_cast %1146 : vector<4xf32> to vector<1x4xf32>
    tpu.vector_store %arg11[%1147, %c0_562], %1150 {strides = array<i32>} : memref<10x4xf32, #tpu.memory_space<vmem>>, vector<1x4xf32>,
    %c304_563 = arith.constant 304 : index
    %c0_564 = arith.constant 0 : index
    %1151 = vector.load %arg3[%c304_563, %c0_564] : memref<376x128xf32, #tpu.memory_space<vmem>>, vector<32x8xf32>
    %cst_565 = arith.constant dense<0.000000e+00> : vector<4x8xf32>
    %1152 = tpu.matmul %1130, %1151, %cst_565 {dimension_numbers = #tpu.dot_dimension_numbers<[1], [0], [0], [1], [0, 0, 1, 1], [], []>} : vector<4x32xf32>, vector<32x8xf32>, vector<4x8xf32> -> vector<4x8xf32>
    %1153 = arith.addf %1152, %761 : vector<4x8xf32>
    %1154 = arith.index_cast %c3_i32_527 : i32 to index
    %c0_566 = arith.constant 0 : index
    %c0_567 = arith.constant 0 : index
    %1155 = vector.load %arg5[%1154, %c0_566, %c0_567] : memref<5x4x8xf32, #tpu.memory_space<vmem>>, vector<1x4x8xf32>
    %1156 = vector.shape_cast %1155 : vector<1x4x8xf32> to vector<4x8xf32>
    %1157 = vector.shape_cast %1153 : vector<4x8xf32> to vector<1x4x8xf32>
    tpu.vector_store %arg5[%1154, %c0_566, %c0_567], %1157 {strides = array<i32>} : memref<5x4x8xf32, #tpu.memory_space<vmem>>, vector<1x4x8xf32>,
    %c4_i32_568 = arith.constant 4 : i32
    %1158 = arith.mulf %1109, %675 : vector<4x32xf32>
    %1159 = arith.mulf %1130, %680 : vector<4x32xf32>
    %1160 = arith.addf %1158, %1159 : vector<4x32xf32>
    %1161 = arith.mulf %1107, %685 : vector<4x32xf32>
    %1162 = arith.addf %1160, %1161 : vector<4x32xf32>
    %1163 = arith.mulf %1128, %690 : vector<4x32xf32>
    %1164 = arith.addf %1162, %1163 : vector<4x32xf32>
    %cst_569 = arith.constant dense<0.000000e+00> : vector<4xf32>
    %1165 = vector.multi_reduction <add>, %1164, %cst_569 [1] : vector<4x32xf32> to vector<4xf32>
    %c0_570 = arith.constant 0 : index
    %c0_571 = arith.constant 0 : index
    %1166 = vector.load %arg11[%c0_570, %c0_571] : memref<10x4xf32, #tpu.memory_space<vmem>>, vector<10x4xf32>
    %1167 = vector.shape_cast %1165 : vector<4xf32> to vector<1x4xf32>
    %1168 = vector.broadcast %1167 : vector<1x4xf32> to vector<10x4xf32>
    %1169 = arith.addf %1166, %1168 : vector<10x4xf32>
    %cst_572 = arith.constant dense<0xFF800000> : vector<10xf32>
    %1170 = vector.multi_reduction <maximumf>, %1169, %cst_572 [1] : vector<10x4xf32> to vector<10xf32>
    %1171 = vector.shape_cast %1170 : vector<10xf32> to vector<10x1xf32>
    %1172 = vector.broadcast %1171 : vector<10x1xf32> to vector<10x4xf32>
    %1173 = arith.subf %1169, %1172 : vector<10x4xf32>
    %1174 = math.exp %1173 : vector<10x4xf32>
    %cst_573 = arith.constant dense<0.000000e+00> : vector<10xf32>
    %1175 = vector.multi_reduction <add>, %1174, %cst_573 [1] : vector<10x4xf32> to vector<10xf32>
    %1176 = vector.shape_cast %1175 : vector<10xf32> to vector<10x1xf32>
    %1177 = tpu.reciprocal %1176 {approx = true} : vector<10x1xf32> -> vector<10x1xf32>
    %1178 = vector.broadcast %1177 : vector<10x1xf32> to vector<10x4xf32>
    %1179 = arith.mulf %1174, %1178 : vector<10x4xf32>
    %1180 = vector.shape_cast %1179 : vector<10x4xf32> to vector<10x4x1xf32>
    %c0_574 = arith.constant 0 : index
    %c0_575 = arith.constant 0 : index
    %c0_576 = arith.constant 0 : index
    %1181 = vector.load %arg10[%c0_574, %c0_575, %c0_576] : memref<10x4x32xf32, #tpu.memory_space<vmem>>, vector<10x4x32xf32>
    %1182 = vector.broadcast %1180 : vector<10x4x1xf32> to vector<10x4x32xf32>
    %1183 = arith.mulf %1182, %1181 : vector<10x4x32xf32>
    %cst_577 = arith.constant dense<0.000000e+00> : vector<4x32xf32>
    %1184 = vector.multi_reduction <add>, %1183, %cst_577 [0] : vector<10x4x32xf32> to vector<4x32xf32>
    %1185 = arith.index_cast %c4_i32_568 : i32 to index
    %c0_578 = arith.constant 0 : index
    %c0_579 = arith.constant 0 : index
    %1186 = vector.load %arg8[%1185, %c0_578, %c0_579] : memref<5x4x128xf32, #tpu.memory_space<vmem>>, vector<1x4x128xf32>
    %1187 = vector.shape_cast %1186 : vector<1x4x128xf32> to vector<4x128xf32>
    %c176_580 = arith.constant 176 : index
    %c0_581 = arith.constant 0 : index
    %1188 = vector.load %arg3[%c176_580, %c0_581] : memref<376x128xf32, #tpu.memory_space<vmem>>, vector<32x128xf32>
    %cst_582 = arith.constant dense<0.000000e+00> : vector<4x128xf32>
    %1189 = tpu.matmul %1184, %1188, %cst_582 {dimension_numbers = #tpu.dot_dimension_numbers<[1], [0], [0], [1], [0, 0, 1, 1], [], []>} : vector<4x32xf32>, vector<32x128xf32>, vector<4x128xf32> -> vector<4x128xf32>
    %1190 = arith.addf %1187, %1189 : vector<4x128xf32>
    %c208_583 = arith.constant 208 : index
    %c0_584 = arith.constant 0 : index
    %1191 = vector.load %arg3[%c208_583, %c0_584] : memref<376x128xf32, #tpu.memory_space<vmem>>, vector<32x128xf32>
    %cst_585 = arith.constant dense<0.000000e+00> : vector<4x128xf32>
    %1192 = tpu.matmul %1109, %1191, %cst_585 {dimension_numbers = #tpu.dot_dimension_numbers<[1], [0], [0], [1], [0, 0, 1, 1], [], []>} : vector<4x32xf32>, vector<32x128xf32>, vector<4x128xf32> -> vector<4x128xf32>
    %1193 = arith.addf %1190, %1192 : vector<4x128xf32>
    %1194 = arith.negf %1193 : vector<4x128xf32>
    %1195 = math.exp %1194 : vector<4x128xf32>
    %cst_586 = arith.constant 1.000000e+00 : f32
    %1196 = vector.broadcast %cst_586 : f32 to vector<4x128xf32>
    %1197 = arith.addf %1196, %1195 : vector<4x128xf32>
    %1198 = arith.divf %1196, %1197 : vector<4x128xf32>
    %1199 = math.tanh %1193 : vector<4x128xf32>
    %1200 = vector.extract_strided_slice %1198 {offsets = [0, 0], sizes = [4, 32], strides = [1, 1]} : vector<4x128xf32> to vector<4x32xf32>
    %1201 = vector.extract_strided_slice %1198 {offsets = [0, 32], sizes = [4, 32], strides = [1, 1]} : vector<4x128xf32> to vector<4x32xf32>
    %1202 = vector.extract_strided_slice %1199 {offsets = [0, 64], sizes = [4, 32], strides = [1, 1]} : vector<4x128xf32> to vector<4x32xf32>
    %1203 = vector.extract_strided_slice %1198 {offsets = [0, 96], sizes = [4, 32], strides = [1, 1]} : vector<4x128xf32> to vector<4x32xf32>
    %1204 = arith.mulf %1201, %1107 : vector<4x32xf32>
    %1205 = arith.mulf %1200, %1202 : vector<4x32xf32>
    %1206 = arith.addf %1204, %1205 : vector<4x32xf32>
    %1207 = math.tanh %1206 : vector<4x32xf32>
    %1208 = arith.mulf %1203, %1207 : vector<4x32xf32>
    %c240_587 = arith.constant 240 : index
    %c0_588 = arith.constant 0 : index
    %1209 = vector.load %arg3[%c240_587, %c0_588] : memref<376x128xf32, #tpu.memory_space<vmem>>, vector<32x128xf32>
    %cst_589 = arith.constant dense<0.000000e+00> : vector<4x128xf32>
    %1210 = tpu.matmul %1208, %1209, %cst_589 {dimension_numbers = #tpu.dot_dimension_numbers<[1], [0], [0], [1], [0, 0, 1, 1], [], []>} : vector<4x32xf32>, vector<32x128xf32>, vector<4x128xf32> -> vector<4x128xf32>
    %c272_590 = arith.constant 272 : index
    %c0_591 = arith.constant 0 : index
    %1211 = vector.load %arg3[%c272_590, %c0_591] : memref<376x128xf32, #tpu.memory_space<vmem>>, vector<32x128xf32>
    %cst_592 = arith.constant dense<0.000000e+00> : vector<4x128xf32>
    %1212 = tpu.matmul %1130, %1211, %cst_592 {dimension_numbers = #tpu.dot_dimension_numbers<[1], [0], [0], [1], [0, 0, 1, 1], [], []>} : vector<4x32xf32>, vector<32x128xf32>, vector<4x128xf32> -> vector<4x128xf32>
    %1213 = arith.addf %1210, %1212 : vector<4x128xf32>
    %1214 = arith.addf %1213, %753 : vector<4x128xf32>
    %1215 = arith.negf %1214 : vector<4x128xf32>
    %1216 = math.exp %1215 : vector<4x128xf32>
    %cst_593 = arith.constant 1.000000e+00 : f32
    %1217 = vector.broadcast %cst_593 : f32 to vector<4x128xf32>
    %1218 = arith.addf %1217, %1216 : vector<4x128xf32>
    %1219 = arith.divf %1217, %1218 : vector<4x128xf32>
    %1220 = math.tanh %1214 : vector<4x128xf32>
    %1221 = vector.extract_strided_slice %1219 {offsets = [0, 0], sizes = [4, 32], strides = [1, 1]} : vector<4x128xf32> to vector<4x32xf32>
    %1222 = vector.extract_strided_slice %1219 {offsets = [0, 32], sizes = [4, 32], strides = [1, 1]} : vector<4x128xf32> to vector<4x32xf32>
    %1223 = vector.extract_strided_slice %1220 {offsets = [0, 64], sizes = [4, 32], strides = [1, 1]} : vector<4x128xf32> to vector<4x32xf32>
    %1224 = vector.extract_strided_slice %1219 {offsets = [0, 96], sizes = [4, 32], strides = [1, 1]} : vector<4x128xf32> to vector<4x32xf32>
    %1225 = arith.mulf %1222, %1128 : vector<4x32xf32>
    %1226 = arith.mulf %1221, %1223 : vector<4x32xf32>
    %1227 = arith.addf %1225, %1226 : vector<4x32xf32>
    %1228 = math.tanh %1227 : vector<4x32xf32>
    %1229 = arith.mulf %1224, %1228 : vector<4x32xf32>
    %c10_i32_594 = arith.constant 10 : i32
    %c0_i32_595 = arith.constant 0 : i32
    %1230 = arith.cmpi eq, %c10_i32_594, %c0_i32_595 : i32
    %c1_i32_596 = arith.constant 1 : i32
    %1231 = arith.select %1230, %c1_i32_596, %c10_i32_594 : i32
    %1232 = arith.remsi %c4_i32_568, %1231 : i32
    %c0_i32_597 = arith.constant 0 : i32
    %1233 = arith.cmpi ne, %1232, %c0_i32_597 : i32
    %c0_i32_598 = arith.constant 0 : i32
    %1234 = arith.cmpi slt, %1232, %c0_i32_598 : i32
    %c0_i32_599 = arith.constant 0 : i32
    %1235 = arith.cmpi slt, %1231, %c0_i32_599 : i32
    %1236 = arith.xori %1234, %1235 : i1
    %1237 = arith.andi %1236, %1233 : i1
    %1238 = arith.addi %1232, %1231 : i32
    %1239 = arith.select %1237, %1238, %1232 : i32
    %1240 = arith.index_cast %1239 : i32 to index
    %c0_600 = arith.constant 0 : index
    %c0_601 = arith.constant 0 : index
    %1241 = vector.load %arg10[%1240, %c0_600, %c0_601] : memref<10x4x32xf32, #tpu.memory_space<vmem>>, vector<1x4x32xf32>
    %1242 = vector.shape_cast %1241 : vector<1x4x32xf32> to vector<4x32xf32>
    %1243 = vector.shape_cast %1229 : vector<4x32xf32> to vector<1x4x32xf32>
    tpu.vector_store %arg10[%1240, %c0_600, %c0_601], %1243 {strides = array<i32>} : memref<10x4x32xf32, #tpu.memory_space<vmem>>, vector<1x4x32xf32>,
    %1244 = arith.mulf %1229, %695 : vector<4x32xf32>
    %cst_602 = arith.constant dense<0.000000e+00> : vector<4xf32>
    %1245 = vector.multi_reduction <add>, %1244, %cst_602 [1] : vector<4x32xf32> to vector<4xf32>
    %1246 = arith.index_cast %1239 : i32 to index
    %c0_603 = arith.constant 0 : index
    %1247 = vector.load %arg11[%1246, %c0_603] : memref<10x4xf32, #tpu.memory_space<vmem>>, vector<1x4xf32>
    %1248 = vector.shape_cast %1247 : vector<1x4xf32> to vector<4xf32>
    %1249 = vector.shape_cast %1245 : vector<4xf32> to vector<1x4xf32>
    tpu.vector_store %arg11[%1246, %c0_603], %1249 {strides = array<i32>} : memref<10x4xf32, #tpu.memory_space<vmem>>, vector<1x4xf32>,
    %c304_604 = arith.constant 304 : index
    %c0_605 = arith.constant 0 : index
    %1250 = vector.load %arg3[%c304_604, %c0_605] : memref<376x128xf32, #tpu.memory_space<vmem>>, vector<32x8xf32>
    %cst_606 = arith.constant dense<0.000000e+00> : vector<4x8xf32>
    %1251 = tpu.matmul %1229, %1250, %cst_606 {dimension_numbers = #tpu.dot_dimension_numbers<[1], [0], [0], [1], [0, 0, 1, 1], [], []>} : vector<4x32xf32>, vector<32x8xf32>, vector<4x8xf32> -> vector<4x8xf32>
    %1252 = arith.addf %1251, %761 : vector<4x8xf32>
    %1253 = arith.index_cast %c4_i32_568 : i32 to index
    %c0_607 = arith.constant 0 : index
    %c0_608 = arith.constant 0 : index
    %1254 = vector.load %arg5[%1253, %c0_607, %c0_608] : memref<5x4x8xf32, #tpu.memory_space<vmem>>, vector<1x4x8xf32>
    %1255 = vector.shape_cast %1254 : vector<1x4x8xf32> to vector<4x8xf32>
    %1256 = vector.shape_cast %1252 : vector<4x8xf32> to vector<1x4x8xf32>
    tpu.vector_store %arg5[%1253, %c0_607, %c0_608], %1256 {strides = array<i32>} : memref<5x4x8xf32, #tpu.memory_space<vmem>>, vector<1x4x8xf32>,
    %c5_i32_609 = arith.constant 5 : i32
    return
  }
}

</mosaic_0001>

<llo_original>
// kernel: _lambda_.1
$region0: #{_lambda_.1}
  #allocation0 [shape = 'u32[]', space=smem, size = 0x4, offset = 0x4, fixed_abs, tag = 'smem constant byte address 0x4 - core index']
  #allocation1 [shape = 'u32[72,128]{1,0:T(1,128)}', space=vmem, size = 0x9000, scoped, tag = 'internal scratch']
  #allocation2 [shape = 'f32[10,4,128]{2,1,0:T(4,128)}', space=vmem, size = 0x5000, scoped, tag = 'scratch operand']
  #allocation3 [shape = 'f32[10,4,128]{2,1,0:T(4,128)}', space=vmem, size = 0x5000, scoped, tag = 'scratch operand']
  #allocation4 [shape = 'f32[5,4,128]{2,1,0:T(4,128)}', space=vmem, size = 0x2800, scoped, tag = 'scratch operand']
  #allocation5 [shape = 'f32[10,4,32]{2,1,0:T(4,128)}', space=vmem, size = 0x5000, scoped, tag = 'scratch operand']
  #allocation6 [shape = 'f32[10,4,32]{2,1,0:T(4,128)}', space=vmem, size = 0x5000, scoped, tag = 'scratch operand']
  #allocation7 [shape = 'f32[10,4]{1,0:T(8,128)}', space=vmem, size = 0x2000, scoped, tag = 'scratch operand']
  %s0 = inlined_call_operand.vmem [shape: f32[10,4,40], index: 0, kind: input, shape index: {}]
  %s1 = inlined_call_operand.vmem [shape: f32[5,4,40], index: 1, kind: input, shape index: {}]
  %s2 = inlined_call_operand.vmem [shape: f32[4,32], index: 2, kind: input, shape index: {}]
  %s3 = inlined_call_operand.vmem [shape: f32[376,128], index: 3, kind: input, shape index: {}]
  %s4 = inlined_call_operand.vmem [shape: f32[5,32], index: 4, kind: input, shape index: {}]
  %s5 = inlined_call_operand.hbm [shape: f32[5,4,8], index: 5, kind: output, shape index: {}]
  %s6 = sld [smem:[#allocation0]]
  $region30: #{_lambda_.1} parent=0
    _
  %s8 = ssub.s32 1, %s6
  %s9 = scalar_select 0, %s8, %s6
  $region1: #{_lambda_.1} parent=0
    #allocation8 [shape = 'u8[10240]{0}', space=vmem, size = 0x2800, scoped, tag = 'output window, operand 0, single buffered']
    #allocation9 [shape = 's32[1]{0}', space=sflag, size = 0x4, scoped, tag = 'scoped memory for _lambda_.1']
    %10 = vsyncpa [#allocation9], 0
    // Predicated region
    $region2: #{_lambda_.1} parent=1 // pred_check
      _
    $region3: #{_lambda_.1} parent=1 // pred_check_branch
      %12 = sbr.rel (0) target = $region5
    $region4: #{_lambda_.1} parent=1 // pred_region
      _
    $region5: #{_lambda_.1} parent=1 // pred_fallthru
      _
    // Predicated region
    $region6: #{_lambda_.1} parent=1 // pred_check
      _
    $region7: #{_lambda_.1} parent=1 // pred_check_branch
      %14 = sbr.rel (0) target = $region9
    $region8: #{_lambda_.1} parent=1 // pred_region
      _
    $region9: #{_lambda_.1} parent=1 // pred_fallthru
      _
    // Predicated region
    $region10: #{_lambda_.1} parent=1 // pred_check
      _
    $region11: #{_lambda_.1} parent=1 // pred_check_branch
      %16 = sbr.rel (0) target = $region13
    $region12: #{_lambda_.1} parent=1 // pred_region
      _
    $region13: #{_lambda_.1} parent=1 // pred_fallthru
      _
    // Predicated region
    $region14: #{_lambda_.1} parent=1 // pred_check
      _
    $region15: #{_lambda_.1} parent=1 // pred_check_branch
      %18 = sbr.rel (0) target = $region17
    $region16: #{_lambda_.1} parent=1 // pred_region
      _
    $region17: #{_lambda_.1} parent=1 // pred_fallthru
      _
    // Predicated region
    $region18: #{_lambda_.1} parent=1 // pred_check
      _
    $region19: #{_lambda_.1} parent=1 // pred_check_branch
      %20 = sbr.rel (0) target = $region21
    $region20: #{_lambda_.1} parent=1 // pred_region
      _
    $region21: #{_lambda_.1} parent=1 // pred_fallthru
      _
    %v21 = vld [vmem:[%s3 + $0x170] sm:$0x1]
    %v22 = vperm.slane %v21, 0
    %v23 = vld [vmem:[%s0] sm:$0xf]
    %v24 = vld [vmem:[%s3] sm:$0xff]
    %v25 = vld [vmem:[%s3 + $0x8] sm:$0xff]
    %v26 = vld [vmem:[%s3 + $0x10] sm:$0xff]
    %v27 = vld [vmem:[%s3 + $0x18] sm:$0xff]
    %v28 = vld [vmem:[%s3 + $0x20] sm:$0xff]
    %vm29 = vcmask 326656
    %v31 = vsel %vm29, %v23, 0
    %33 = vmatpush.msra.mxu0 0.0
    %34 = vmatpush.msra.mxu0 0.0
    %35 = vmatpush.msra.mxu0 0.0
    %36 = vmatpush.msra.mxu0 0.0
    %37 = vmatpush.msra.mxu0 0.0
    %38 = vmatpush.msra.mxu0 0.0
    %39 = vmatpush.msra.mxu0 0.0
    %40 = vmatpush.msra.mxu0 0.0
    %41 = vmatpush.msra.mxu0 0.0
    %42 = vmatpush.msra.mxu0 0.0
    %43 = vmatpush.msra.mxu0 0.0
    %44 = vmatpush.msra.mxu0 %v28
    %45 = vmatpush.msra.mxu0 %v27
    %46 = vmatpush.msra.mxu0 %v26
    %47 = vmatpush.msra.mxu0 %v25
    %48 = vmatpush.msra.mxu0 %v24
    %49 = vmatmul.f32.gmra.mxu0 %v31
    %v50 = vpop.f32.mrf.mxu0
    %v51 = vadd.f32 %v22, %v50
    %52 = vdwg.mxu0
    %53 = vst [vmem:[#allocation2] sm:$0xf] %v51
    %s54 = scalar_lea.vmem %s0, 4
    %v55 = vld [vmem:[%s54] sm:$0xf]
    %v56 = vld [vmem:[%s3] sm:$0xff]
    %v57 = vld [vmem:[%s3 + $0x8] sm:$0xff]
    %v58 = vld [vmem:[%s3 + $0x10] sm:$0xff]
    %v59 = vld [vmem:[%s3 + $0x18] sm:$0xff]
    %v60 = vld [vmem:[%s3 + $0x20] sm:$0xff]
    %v62 = vsel %vm29, %v55, 0
    %64 = vmatpush.msra.mxu0 0.0
    %65 = vmatpush.msra.mxu0 0.0
    %66 = vmatpush.msra.mxu0 0.0
    %67 = vmatpush.msra.mxu0 0.0
    %68 = vmatpush.msra.mxu0 0.0
    %69 = vmatpush.msra.mxu0 0.0
    %70 = vmatpush.msra.mxu0 0.0
    %71 = vmatpush.msra.mxu0 0.0
    %72 = vmatpush.msra.mxu0 0.0
    %73 = vmatpush.msra.mxu0 0.0
    %74 = vmatpush.msra.mxu0 0.0
    %75 = vmatpush.msra.mxu0 %v60
    %76 = vmatpush.msra.mxu0 %v59
    %77 = vmatpush.msra.mxu0 %v58
    %78 = vmatpush.msra.mxu0 %v57
    %79 = vmatpush.msra.mxu0 %v56
    %80 = vmatmul.f32.gmra.mxu0 %v62
    %v81 = vpop.f32.mrf.mxu0
    %v82 = vadd.f32 %v22, %v81
    %83 = vdwg.mxu0
    %s84 = scalar_lea.vmem [#allocation2], 4
    %85 = vst [vmem:[%s84] sm:$0xf] %v82
    %s86 = scalar_lea.vmem %s0, 8
    %v87 = vld [vmem:[%s86] sm:$0xf]
    %v88 = vld [vmem:[%s3] sm:$0xff]
    %v89 = vld [vmem:[%s3 + $0x8] sm:$0xff]
    %v90 = vld [vmem:[%s3 + $0x10] sm:$0xff]
    %v91 = vld [vmem:[%s3 + $0x18] sm:$0xff]
    %v92 = vld [vmem:[%s3 + $0x20] sm:$0xff]
    %v94 = vsel %vm29, %v87, 0
    %96 = vmatpush.msra.mxu0 0.0
    %97 = vmatpush.msra.mxu0 0.0
    %98 = vmatpush.msra.mxu0 0.0
    %99 = vmatpush.msra.mxu0 0.0
    %100 = vmatpush.msra.mxu0 0.0
    %101 = vmatpush.msra.mxu0 0.0
    %102 = vmatpush.msra.mxu0 0.0
    %103 = vmatpush.msra.mxu0 0.0
    %104 = vmatpush.msra.mxu0 0.0
    %105 = vmatpush.msra.mxu0 0.0
    %106 = vmatpush.msra.mxu0 0.0
    %107 = vmatpush.msra.mxu0 %v92
    %108 = vmatpush.msra.mxu0 %v91
    %109 = vmatpush.msra.mxu0 %v90
    %110 = vmatpush.msra.mxu0 %v89
    %111 = vmatpush.msra.mxu0 %v88
    %112 = vmatmul.f32.gmra.mxu0 %v94
    %v113 = vpop.f32.mrf.mxu0
    %v114 = vadd.f32 %v22, %v113
    %115 = vdwg.mxu0
    %s116 = scalar_lea.vmem [#allocation2], 8
    %117 = vst [vmem:[%s116] sm:$0xf] %v114
    %s118 = scalar_lea.vmem %s0, 12
    %v119 = vld [vmem:[%s118] sm:$0xf]
    %v120 = vld [vmem:[%s3] sm:$0xff]
    %v121 = vld [vmem:[%s3 + $0x8] sm:$0xff]
    %v122 = vld [vmem:[%s3 + $0x10] sm:$0xff]
    %v123 = vld [vmem:[%s3 + $0x18] sm:$0xff]
    %v124 = vld [vmem:[%s3 + $0x20] sm:$0xff]
    %v126 = vsel %vm29, %v119, 0
    %128 = vmatpush.msra.mxu0 0.0
    %129 = vmatpush.msra.mxu0 0.0
    %130 = vmatpush.msra.mxu0 0.0
    %131 = vmatpush.msra.mxu0 0.0
    %132 = vmatpush.msra.mxu0 0.0
    %133 = vmatpush.msra.mxu0 0.0
    %134 = vmatpush.msra.mxu0 0.0
    %135 = vmatpush.msra.mxu0 0.0
    %136 = vmatpush.msra.mxu0 0.0
    %137 = vmatpush.msra.mxu0 0.0
    %138 = vmatpush.msra.mxu0 0.0
    %139 = vmatpush.msra.mxu0 %v124
    %140 = vmatpush.msra.mxu0 %v123
    %141 = vmatpush.msra.mxu0 %v122
    %142 = vmatpush.msra.mxu0 %v121
    %143 = vmatpush.msra.mxu0 %v120
    %144 = vmatmul.f32.gmra.mxu0 %v126
    %v145 = vpop.f32.mrf.mxu0
    %v146 = vadd.f32 %v22, %v145
    %147 = vdwg.mxu0
    %s148 = scalar_lea.vmem [#allocation2], 12
    %149 = vst [vmem:[%s148] sm:$0xf] %v146
    %s150 = scalar_lea.vmem %s0, 16
    %v151 = vld [vmem:[%s150] sm:$0xf]
    %v152 = vld [vmem:[%s3] sm:$0xff]
    %v153 = vld [vmem:[%s3 + $0x8] sm:$0xff]
    %v154 = vld [vmem:[%s3 + $0x10] sm:$0xff]
    %v155 = vld [vmem:[%s3 + $0x18] sm:$0xff]
    %v156 = vld [vmem:[%s3 + $0x20] sm:$0xff]
    %v158 = vsel %vm29, %v151, 0
    %160 = vmatpush.msra.mxu0 0.0
    %161 = vmatpush.msra.mxu0 0.0
    %162 = vmatpush.msra.mxu0 0.0
    %163 = vmatpush.msra.mxu0 0.0
    %164 = vmatpush.msra.mxu0 0.0
    %165 = vmatpush.msra.mxu0 0.0
    %166 = vmatpush.msra.mxu0 0.0
    %167 = vmatpush.msra.mxu0 0.0
    %168 = vmatpush.msra.mxu0 0.0
    %169 = vmatpush.msra.mxu0 0.0
    %170 = vmatpush.msra.mxu0 0.0
    %171 = vmatpush.msra.mxu0 %v156
    %172 = vmatpush.msra.mxu0 %v155
    %173 = vmatpush.msra.mxu0 %v154
    %174 = vmatpush.msra.mxu0 %v153
    %175 = vmatpush.msra.mxu0 %v152
    %176 = vmatmul.f32.gmra.mxu0 %v158
    %v177 = vpop.f32.mrf.mxu0
    %v178 = vadd.f32 %v22, %v177
    %179 = vdwg.mxu0
    %s180 = scalar_lea.vmem [#allocation2], 16
    %181 = vst [vmem:[%s180] sm:$0xf] %v178
    %s182 = scalar_lea.vmem %s0, 20
    %v183 = vld [vmem:[%s182] sm:$0xf]
    %v184 = vld [vmem:[%s3] sm:$0xff]
    %v185 = vld [vmem:[%s3 + $0x8] sm:$0xff]
    %v186 = vld [vmem:[%s3 + $0x10] sm:$0xff]
    %v187 = vld [vmem:[%s3 + $0x18] sm:$0xff]
    %v188 = vld [vmem:[%s3 + $0x20] sm:$0xff]
    %v190 = vsel %vm29, %v183, 0
    %192 = vmatpush.msra.mxu0 0.0
    %193 = vmatpush.msra.mxu0 0.0
    %194 = vmatpush.msra.mxu0 0.0
    %195 = vmatpush.msra.mxu0 0.0
    %196 = vmatpush.msra.mxu0 0.0
    %197 = vmatpush.msra.mxu0 0.0
    %198 = vmatpush.msra.mxu0 0.0
    %199 = vmatpush.msra.mxu0 0.0
    %200 = vmatpush.msra.mxu0 0.0
    %201 = vmatpush.msra.mxu0 0.0
    %202 = vmatpush.msra.mxu0 0.0
    %203 = vmatpush.msra.mxu0 %v188
    %204 = vmatpush.msra.mxu0 %v187
    %205 = vmatpush.msra.mxu0 %v186
    %206 = vmatpush.msra.mxu0 %v185
    %207 = vmatpush.msra.mxu0 %v184
    %208 = vmatmul.f32.gmra.mxu0 %v190
    %v209 = vpop.f32.mrf.mxu0
    %v210 = vadd.f32 %v22, %v209
    %211 = vdwg.mxu0
    %s212 = scalar_lea.vmem [#allocation2], 20
    %213 = vst [vmem:[%s212] sm:$0xf] %v210
    %s214 = scalar_lea.vmem %s0, 24
    %v215 = vld [vmem:[%s214] sm:$0xf]
    %v216 = vld [vmem:[%s3] sm:$0xff]
    %v217 = vld [vmem:[%s3 + $0x8] sm:$0xff]
    %v218 = vld [vmem:[%s3 + $0x10] sm:$0xff]
    %v219 = vld [vmem:[%s3 + $0x18] sm:$0xff]
    %v220 = vld [vmem:[%s3 + $0x20] sm:$0xff]
    %v222 = vsel %vm29, %v215, 0
    %224 = vmatpush.msra.mxu0 0.0
    %225 = vmatpush.msra.mxu0 0.0
    %226 = vmatpush.msra.mxu0 0.0
    %227 = vmatpush.msra.mxu0 0.0
    %228 = vmatpush.msra.mxu0 0.0
    %229 = vmatpush.msra.mxu0 0.0
    %230 = vmatpush.msra.mxu0 0.0
    %231 = vmatpush.msra.mxu0 0.0
    %232 = vmatpush.msra.mxu0 0.0
    %233 = vmatpush.msra.mxu0 0.0
    %234 = vmatpush.msra.mxu0 0.0
    %235 = vmatpush.msra.mxu0 %v220
    %236 = vmatpush.msra.mxu0 %v219
    %237 = vmatpush.msra.mxu0 %v218
    %238 = vmatpush.msra.mxu0 %v217
    %239 = vmatpush.msra.mxu0 %v216
    %240 = vmatmul.f32.gmra.mxu0 %v222
    %v241 = vpop.f32.mrf.mxu0
    %v242 = vadd.f32 %v22, %v241
    %243 = vdwg.mxu0
    %s244 = scalar_lea.vmem [#allocation2], 24
    %245 = vst [vmem:[%s244] sm:$0xf] %v242
    %s246 = scalar_lea.vmem %s0, 28
    %v247 = vld [vmem:[%s246] sm:$0xf]
    %v248 = vld [vmem:[%s3] sm:$0xff]
    %v249 = vld [vmem:[%s3 + $0x8] sm:$0xff]
    %v250 = vld [vmem:[%s3 + $0x10] sm:$0xff]
    %v251 = vld [vmem:[%s3 + $0x18] sm:$0xff]
    %v252 = vld [vmem:[%s3 + $0x20] sm:$0xff]
    %v254 = vsel %vm29, %v247, 0
    %256 = vmatpush.msra.mxu0 0.0
    %257 = vmatpush.msra.mxu0 0.0
    %258 = vmatpush.msra.mxu0 0.0
    %259 = vmatpush.msra.mxu0 0.0
    %260 = vmatpush.msra.mxu0 0.0
    %261 = vmatpush.msra.mxu0 0.0
    %262 = vmatpush.msra.mxu0 0.0
    %263 = vmatpush.msra.mxu0 0.0
    %264 = vmatpush.msra.mxu0 0.0
    %265 = vmatpush.msra.mxu0 0.0
    %266 = vmatpush.msra.mxu0 0.0
    %267 = vmatpush.msra.mxu0 %v252
    %268 = vmatpush.msra.mxu0 %v251
    %269 = vmatpush.msra.mxu0 %v250
    %270 = vmatpush.msra.mxu0 %v249
    %271 = vmatpush.msra.mxu0 %v248
    %272 = vmatmul.f32.gmra.mxu0 %v254
    %v273 = vpop.f32.mrf.mxu0
    %v274 = vadd.f32 %v22, %v273
    %275 = vdwg.mxu0
    %s276 = scalar_lea.vmem [#allocation2], 28
    %277 = vst [vmem:[%s276] sm:$0xf] %v274
    %s278 = scalar_lea.vmem %s0, 32
    %v279 = vld [vmem:[%s278] sm:$0xf]
    %v280 = vld [vmem:[%s3] sm:$0xff]
    %v281 = vld [vmem:[%s3 + $0x8] sm:$0xff]
    %v282 = vld [vmem:[%s3 + $0x10] sm:$0xff]
    %v283 = vld [vmem:[%s3 + $0x18] sm:$0xff]
    %v284 = vld [vmem:[%s3 + $0x20] sm:$0xff]
    %v286 = vsel %vm29, %v279, 0
    %288 = vmatpush.msra.mxu0 0.0
    %289 = vmatpush.msra.mxu0 0.0
    %290 = vmatpush.msra.mxu0 0.0
    %291 = vmatpush.msra.mxu0 0.0
    %292 = vmatpush.msra.mxu0 0.0
    %293 = vmatpush.msra.mxu0 0.0
    %294 = vmatpush.msra.mxu0 0.0
    %295 = vmatpush.msra.mxu0 0.0
    %296 = vmatpush.msra.mxu0 0.0
    %297 = vmatpush.msra.mxu0 0.0
    %298 = vmatpush.msra.mxu0 0.0
    %299 = vmatpush.msra.mxu0 %v284
    %300 = vmatpush.msra.mxu0 %v283
    %301 = vmatpush.msra.mxu0 %v282
    %302 = vmatpush.msra.mxu0 %v281
    %303 = vmatpush.msra.mxu0 %v280
    %304 = vmatmul.f32.gmra.mxu0 %v286
    %v305 = vpop.f32.mrf.mxu0
    %v306 = vadd.f32 %v22, %v305
    %307 = vdwg.mxu0
    %s308 = scalar_lea.vmem [#allocation2], 32
    %309 = vst [vmem:[%s308] sm:$0xf] %v306
    %s310 = scalar_lea.vmem %s0, 36
    %v311 = vld [vmem:[%s310] sm:$0xf]
    %v312 = vld [vmem:[%s3] sm:$0xff]
    %v313 = vld [vmem:[%s3 + $0x8] sm:$0xff]
    %v314 = vld [vmem:[%s3 + $0x10] sm:$0xff]
    %v315 = vld [vmem:[%s3 + $0x18] sm:$0xff]
    %v316 = vld [vmem:[%s3 + $0x20] sm:$0xff]
    %v318 = vsel %vm29, %v311, 0
    %320 = vmatpush.msra.mxu0 0.0
    %321 = vmatpush.msra.mxu0 0.0
    %322 = vmatpush.msra.mxu0 0.0
    %323 = vmatpush.msra.mxu0 0.0
    %324 = vmatpush.msra.mxu0 0.0
    %325 = vmatpush.msra.mxu0 0.0
    %326 = vmatpush.msra.mxu0 0.0
    %327 = vmatpush.msra.mxu0 0.0
    %328 = vmatpush.msra.mxu0 0.0
    %329 = vmatpush.msra.mxu0 0.0
    %330 = vmatpush.msra.mxu0 0.0
    %331 = vmatpush.msra.mxu0 %v316
    %332 = vmatpush.msra.mxu0 %v315
    %333 = vmatpush.msra.mxu0 %v314
    %334 = vmatpush.msra.mxu0 %v313
    %335 = vmatpush.msra.mxu0 %v312
    %336 = vmatmul.f32.gmra.mxu0 %v318
    %v337 = vpop.f32.mrf.mxu0
    %v338 = vadd.f32 %v22, %v337
    %339 = vdwg.mxu0
    %s340 = scalar_lea.vmem [#allocation2], 36
    %341 = vst [vmem:[%s340] sm:$0xf] %v338
    %v342 = vld [vmem:[#allocation2] sm:$0xf]
    %v343 = vld [vmem:[%s3 + $0x28] sm:$0xff]
    %v344 = vld [vmem:[%s3 + $0x30] sm:$0xff]
    %v345 = vld [vmem:[%s3 + $0x38] sm:$0xff]
    %v346 = vld [vmem:[%s3 + $0x40] sm:$0xff]
    %vm347 = vcmask 261120
    %v349 = vsel %vm347, 0.0, 0
    %351 = vmatpush.msra.mxu0 0.0
    %352 = vmatpush.msra.mxu0 0.0
    %353 = vmatpush.msra.mxu0 0.0
    %354 = vmatpush.msra.mxu0 0.0
    %355 = vmatpush.msra.mxu0 0.0
    %356 = vmatpush.msra.mxu0 0.0
    %357 = vmatpush.msra.mxu0 0.0
    %358 = vmatpush.msra.mxu0 0.0
    %359 = vmatpush.msra.mxu0 0.0
    %360 = vmatpush.msra.mxu0 0.0
    %361 = vmatpush.msra.mxu0 0.0
    %362 = vmatpush.msra.mxu0 0.0
    %363 = vmatpush.msra.mxu0 %v346
    %364 = vmatpush.msra.mxu0 %v345
    %365 = vmatpush.msra.mxu0 %v344
    %366 = vmatpush.msra.mxu0 %v343
    %367 = vmatmul.f32.gmra.mxu0 %v349
    %v368 = vpop.f32.mrf.mxu0
    %v369 = vadd.f32 0.0, %v368
    %370 = vdwg.mxu0
    %v371 = vadd.f32 %v342, %v369
    %v372 = vxor.u32 %v371, 2147483648
    %v373 = vmul.f32 %v372, 1.442695
    %v374 = vpow.pop %v373
    %v375 = vadd.f32 %v374, 1.0
    %v376 = vrcp.pop %v375
    %v377 = vmul.f32 %v375, %v376
    %v378 = vsub.f32 1.0, %v377
    %v379 = vmul.f32 %v376, %v378
    %v380 = vadd.f32 %v376, %v379
    %vm381 = vweird.f32 %v375
    %vm382 = vweird.f32 %v376
    %vm383 = vmor %vm381, %vm382
    %v384 = vsel %vm383, %v376, %v380
    %v385 = vand.u32 2147483647, %v375
    %vm386 = vcmp.eq.f32.partialorder %v385, 8.507059e+37
    %v387 = vand.u32 %v375, 2147483648
    %v388 = vor.u32 1.1754944e-38, %v387
    %v389 = vsel %vm386, %v388, %v384
    %v390 = vmul.f32 1.0, %v389
    %v391 = vtanh.pop %v371
    %v392 = vmul.f32 %v390, 0.0
    %394 = vrot.lane.b32.xlu0 %v391, 64
    %v395 = vpop.permute.xlu0 %394
    %v397 = vmul.f32 %v390, %v395
    %399 = vrot.lane.b32.xlu0 %v397, 32
    %v400 = vpop.permute.xlu0 %399
    %v402 = vadd.f32 %v392, %v400
    %v403 = vtanh.pop %v402
    %405 = vrot.lane.b32.xlu0 %v403, 64
    %v406 = vpop.permute.xlu0 %405
    %v408 = vmul.f32 %v390, %v406
    %410 = vrot.lane.b32.xlu0 %v408, 32
    %v411 = vpop.permute.xlu0 %410
    %vm413 = vcmask 257024
    %414 = vst.msk [vmem:[#allocation5] sm:$0xf] %vm413, %v411
    %v415 = vld [vmem:[%s84] sm:$0xf]
    %v416 = vld [vmem:[%s3 + $0x28] sm:$0xff]
    %v417 = vld [vmem:[%s3 + $0x30] sm:$0xff]
    %v418 = vld [vmem:[%s3 + $0x38] sm:$0xff]
    %v419 = vld [vmem:[%s3 + $0x40] sm:$0xff]
    %v420 = vsel %vm347, %v411, 0
    %422 = vmatpush.msra.mxu0 0.0
    %423 = vmatpush.msra.mxu0 0.0
    %424 = vmatpush.msra.mxu0 0.0
    %425 = vmatpush.msra.mxu0 0.0
    %426 = vmatpush.msra.mxu0 0.0
    %427 = vmatpush.msra.mxu0 0.0
    %428 = vmatpush.msra.mxu0 0.0
    %429 = vmatpush.msra.mxu0 0.0
    %430 = vmatpush.msra.mxu0 0.0
    %431 = vmatpush.msra.mxu0 0.0
    %432 = vmatpush.msra.mxu0 0.0
    %433 = vmatpush.msra.mxu0 0.0
    %434 = vmatpush.msra.mxu0 %v419
    %435 = vmatpush.msra.mxu0 %v418
    %436 = vmatpush.msra.mxu0 %v417
    %437 = vmatpush.msra.mxu0 %v416
    %438 = vmatmul.f32.gmra.mxu0 %v420
    %v439 = vpop.f32.mrf.mxu0
    %v440 = vadd.f32 0.0, %v439
    %441 = vdwg.mxu0
    %v442 = vadd.f32 %v415, %v440
    %v443 = vxor.u32 %v442, 2147483648
    %v444 = vmul.f32 %v443, 1.442695
    %v445 = vpow.pop %v444
    %v446 = vadd.f32 %v445, 1.0
    %v447 = vrcp.pop %v446
    %v448 = vmul.f32 %v446, %v447
    %v449 = vsub.f32 1.0, %v448
    %v450 = vmul.f32 %v447, %v449
    %v451 = vadd.f32 %v447, %v450
    %vm452 = vweird.f32 %v446
    %vm453 = vweird.f32 %v447
    %vm454 = vmor %vm452, %vm453
    %v455 = vsel %vm454, %v447, %v451
    %v456 = vand.u32 2147483647, %v446
    %vm457 = vcmp.eq.f32.partialorder %v456, 8.507059e+37
    %v458 = vand.u32 %v446, 2147483648
    %v459 = vor.u32 1.1754944e-38, %v458
    %v460 = vsel %vm457, %v459, %v455
    %v461 = vmul.f32 1.0, %v460
    %v462 = vtanh.pop %v442
    %v463 = vmul.f32 %v461, %v402
    %465 = vrot.lane.b32.xlu0 %v462, 64
    %v466 = vpop.permute.xlu0 %465
    %v468 = vmul.f32 %v461, %v466
    %470 = vrot.lane.b32.xlu0 %v468, 32
    %v471 = vpop.permute.xlu0 %470
    %v473 = vadd.f32 %v463, %v471
    %v474 = vtanh.pop %v473
    %476 = vrot.lane.b32.xlu0 %v474, 64
    %v477 = vpop.permute.xlu0 %476
    %v479 = vmul.f32 %v461, %v477
    %481 = vrot.lane.b32.xlu0 %v479, 32
    %v482 = vpop.permute.xlu0 %481
    %s484 = scalar_lea.vmem [#allocation5], 4
    %485 = vst.msk [vmem:[%s484] sm:$0xf] %vm413, %v482
    %v486 = vld [vmem:[%s116] sm:$0xf]
    %v487 = vld [vmem:[%s3 + $0x28] sm:$0xff]
    %v488 = vld [vmem:[%s3 + $0x30] sm:$0xff]
    %v489 = vld [vmem:[%s3 + $0x38] sm:$0xff]
    %v490 = vld [vmem:[%s3 + $0x40] sm:$0xff]
    %v491 = vsel %vm347, %v482, 0
    %493 = vmatpush.msra.mxu0 0.0
    %494 = vmatpush.msra.mxu0 0.0
    %495 = vmatpush.msra.mxu0 0.0
    %496 = vmatpush.msra.mxu0 0.0
    %497 = vmatpush.msra.mxu0 0.0
    %498 = vmatpush.msra.mxu0 0.0
    %499 = vmatpush.msra.mxu0 0.0
    %500 = vmatpush.msra.mxu0 0.0
    %501 = vmatpush.msra.mxu0 0.0
    %502 = vmatpush.msra.mxu0 0.0
    %503 = vmatpush.msra.mxu0 0.0
    %504 = vmatpush.msra.mxu0 0.0
    %505 = vmatpush.msra.mxu0 %v490
    %506 = vmatpush.msra.mxu0 %v489
    %507 = vmatpush.msra.mxu0 %v488
    %508 = vmatpush.msra.mxu0 %v487
    %509 = vmatmul.f32.gmra.mxu0 %v491
    %v510 = vpop.f32.mrf.mxu0
    %v511 = vadd.f32 0.0, %v510
    %512 = vdwg.mxu0
    %v513 = vadd.f32 %v486, %v511
    %v514 = vxor.u32 %v513, 2147483648
    %v515 = vmul.f32 %v514, 1.442695
    %v516 = vpow.pop %v515
    %v517 = vadd.f32 %v516, 1.0
    %v518 = vrcp.pop %v517
    %v519 = vmul.f32 %v517, %v518
    %v520 = vsub.f32 1.0, %v519
    %v521 = vmul.f32 %v518, %v520
    %v522 = vadd.f32 %v518, %v521
    %vm523 = vweird.f32 %v517
    %vm524 = vweird.f32 %v518
    %vm525 = vmor %vm523, %vm524
    %v526 = vsel %vm525, %v518, %v522
    %v527 = vand.u32 2147483647, %v517
    %vm528 = vcmp.eq.f32.partialorder %v527, 8.507059e+37
    %v529 = vand.u32 %v517, 2147483648
    %v530 = vor.u32 1.1754944e-38, %v529
    %v531 = vsel %vm528, %v530, %v526
    %v532 = vmul.f32 1.0, %v531
    %v533 = vtanh.pop %v513
    %v534 = vmul.f32 %v532, %v473
    %536 = vrot.lane.b32.xlu0 %v533, 64
    %v537 = vpop.permute.xlu0 %536
    %v539 = vmul.f32 %v532, %v537
    %541 = vrot.lane.b32.xlu0 %v539, 32
    %v542 = vpop.permute.xlu0 %541
    %v544 = vadd.f32 %v534, %v542
    %v545 = vtanh.pop %v544
    %547 = vrot.lane.b32.xlu0 %v545, 64
    %v548 = vpop.permute.xlu0 %547
    %v550 = vmul.f32 %v532, %v548
    %552 = vrot.lane.b32.xlu0 %v550, 32
    %v553 = vpop.permute.xlu0 %552
    %s555 = scalar_lea.vmem [#allocation5], 8
    %556 = vst.msk [vmem:[%s555] sm:$0xf] %vm413, %v553
    %v557 = vld [vmem:[%s148] sm:$0xf]
    %v558 = vld [vmem:[%s3 + $0x28] sm:$0xff]
    %v559 = vld [vmem:[%s3 + $0x30] sm:$0xff]
    %v560 = vld [vmem:[%s3 + $0x38] sm:$0xff]
    %v561 = vld [vmem:[%s3 + $0x40] sm:$0xff]
    %v562 = vsel %vm347, %v553, 0
    %564 = vmatpush.msra.mxu0 0.0
    %565 = vmatpush.msra.mxu0 0.0
    %566 = vmatpush.msra.mxu0 0.0
    %567 = vmatpush.msra.mxu0 0.0
    %568 = vmatpush.msra.mxu0 0.0
    %569 = vmatpush.msra.mxu0 0.0
    %570 = vmatpush.msra.mxu0 0.0
    %571 = vmatpush.msra.mxu0 0.0
    %572 = vmatpush.msra.mxu0 0.0
    %573 = vmatpush.msra.mxu0 0.0
    %574 = vmatpush.msra.mxu0 0.0
    %575 = vmatpush.msra.mxu0 0.0
    %576 = vmatpush.msra.mxu0 %v561
    %577 = vmatpush.msra.mxu0 %v560
    %578 = vmatpush.msra.mxu0 %v559
    %579 = vmatpush.msra.mxu0 %v558
    %580 = vmatmul.f32.gmra.mxu0 %v562
    %v581 = vpop.f32.mrf.mxu0
    %v582 = vadd.f32 0.0, %v581
    %583 = vdwg.mxu0
    %v584 = vadd.f32 %v557, %v582
    %v585 = vxor.u32 %v584, 2147483648
    %v586 = vmul.f32 %v585, 1.442695
    %v587 = vpow.pop %v586
    %v588 = vadd.f32 %v587, 1.0
    %v589 = vrcp.pop %v588
    %v590 = vmul.f32 %v588, %v589
    %v591 = vsub.f32 1.0, %v590
    %v592 = vmul.f32 %v589, %v591
    %v593 = vadd.f32 %v589, %v592
    %vm594 = vweird.f32 %v588
    %vm595 = vweird.f32 %v589
    %vm596 = vmor %vm594, %vm595
    %v597 = vsel %vm596, %v589, %v593
    %v598 = vand.u32 2147483647, %v588
    %vm599 = vcmp.eq.f32.partialorder %v598, 8.507059e+37
    %v600 = vand.u32 %v588, 2147483648
    %v601 = vor.u32 1.1754944e-38, %v600
    %v602 = vsel %vm599, %v601, %v597
    %v603 = vmul.f32 1.0, %v602
    %v604 = vtanh.pop %v584
    %v605 = vmul.f32 %v603, %v544
    %607 = vrot.lane.b32.xlu0 %v604, 64
    %v608 = vpop.permute.xlu0 %607
    %v610 = vmul.f32 %v603, %v608
    %612 = vrot.lane.b32.xlu0 %v610, 32
    %v613 = vpop.permute.xlu0 %612
    %v615 = vadd.f32 %v605, %v613
    %v616 = vtanh.pop %v615
    %618 = vrot.lane.b32.xlu0 %v616, 64
    %v619 = vpop.permute.xlu0 %618
    %v621 = vmul.f32 %v603, %v619
    %623 = vrot.lane.b32.xlu0 %v621, 32
    %v624 = vpop.permute.xlu0 %623
    %s626 = scalar_lea.vmem [#allocation5], 12
    %627 = vst.msk [vmem:[%s626] sm:$0xf] %vm413, %v624
    %v628 = vld [vmem:[%s180] sm:$0xf]
    %v629 = vld [vmem:[%s3 + $0x28] sm:$0xff]
    %v630 = vld [vmem:[%s3 + $0x30] sm:$0xff]
    %v631 = vld [vmem:[%s3 + $0x38] sm:$0xff]
    %v632 = vld [vmem:[%s3 + $0x40] sm:$0xff]
    %v633 = vsel %vm347, %v624, 0
    %635 = vmatpush.msra.mxu0 0.0
    %636 = vmatpush.msra.mxu0 0.0
    %637 = vmatpush.msra.mxu0 0.0
    %638 = vmatpush.msra.mxu0 0.0
    %639 = vmatpush.msra.mxu0 0.0
    %640 = vmatpush.msra.mxu0 0.0
    %641 = vmatpush.msra.mxu0 0.0
    %642 = vmatpush.msra.mxu0 0.0
    %643 = vmatpush.msra.mxu0 0.0
    %644 = vmatpush.msra.mxu0 0.0
    %645 = vmatpush.msra.mxu0 0.0
    %646 = vmatpush.msra.mxu0 0.0
    %647 = vmatpush.msra.mxu0 %v632
    %648 = vmatpush.msra.mxu0 %v631
    %649 = vmatpush.msra.mxu0 %v630
    %650 = vmatpush.msra.mxu0 %v629
    %651 = vmatmul.f32.gmra.mxu0 %v633
    %v652 = vpop.f32.mrf.mxu0
    %v653 = vadd.f32 0.0, %v652
    %654 = vdwg.mxu0
    %v655 = vadd.f32 %v628, %v653
    %v656 = vxor.u32 %v655, 2147483648
    %v657 = vmul.f32 %v656, 1.442695
    %v658 = vpow.pop %v657
    %v659 = vadd.f32 %v658, 1.0
    %v660 = vrcp.pop %v659
    %v661 = vmul.f32 %v659, %v660
    %v662 = vsub.f32 1.0, %v661
    %v663 = vmul.f32 %v660, %v662
    %v664 = vadd.f32 %v660, %v663
    %vm665 = vweird.f32 %v659
    %vm666 = vweird.f32 %v660
    %vm667 = vmor %vm665, %vm666
    %v668 = vsel %vm667, %v660, %v664
    %v669 = vand.u32 2147483647, %v659
    %vm670 = vcmp.eq.f32.partialorder %v669, 8.507059e+37
    %v671 = vand.u32 %v659, 2147483648
    %v672 = vor.u32 1.1754944e-38, %v671
    %v673 = vsel %vm670, %v672, %v668
    %v674 = vmul.f32 1.0, %v673
    %v675 = vtanh.pop %v655
    %v676 = vmul.f32 %v674, %v615
    %678 = vrot.lane.b32.xlu0 %v675, 64
    %v679 = vpop.permute.xlu0 %678
    %v681 = vmul.f32 %v674, %v679
    %683 = vrot.lane.b32.xlu0 %v681, 32
    %v684 = vpop.permute.xlu0 %683
    %v686 = vadd.f32 %v676, %v684
    %v687 = vtanh.pop %v686
    %689 = vrot.lane.b32.xlu0 %v687, 64
    %v690 = vpop.permute.xlu0 %689
    %v692 = vmul.f32 %v674, %v690
    %694 = vrot.lane.b32.xlu0 %v692, 32
    %v695 = vpop.permute.xlu0 %694
    %s697 = scalar_lea.vmem [#allocation5], 16
    %698 = vst.msk [vmem:[%s697] sm:$0xf] %vm413, %v695
    %v699 = vld [vmem:[%s212] sm:$0xf]
    %v700 = vld [vmem:[%s3 + $0x28] sm:$0xff]
    %v701 = vld [vmem:[%s3 + $0x30] sm:$0xff]
    %v702 = vld [vmem:[%s3 + $0x38] sm:$0xff]
    %v703 = vld [vmem:[%s3 + $0x40] sm:$0xff]
    %v704 = vsel %vm347, %v695, 0
    %706 = vmatpush.msra.mxu0 0.0
    %707 = vmatpush.msra.mxu0 0.0
    %708 = vmatpush.msra.mxu0 0.0
    %709 = vmatpush.msra.mxu0 0.0
    %710 = vmatpush.msra.mxu0 0.0
    %711 = vmatpush.msra.mxu0 0.0
    %712 = vmatpush.msra.mxu0 0.0
    %713 = vmatpush.msra.mxu0 0.0
    %714 = vmatpush.msra.mxu0 0.0
    %715 = vmatpush.msra.mxu0 0.0
    %716 = vmatpush.msra.mxu0 0.0
    %717 = vmatpush.msra.mxu0 0.0
    %718 = vmatpush.msra.mxu0 %v703
    %719 = vmatpush.msra.mxu0 %v702
    %720 = vmatpush.msra.mxu0 %v701
    %721 = vmatpush.msra.mxu0 %v700
    %722 = vmatmul.f32.gmra.mxu0 %v704
    %v723 = vpop.f32.mrf.mxu0
    %v724 = vadd.f32 0.0, %v723
    %725 = vdwg.mxu0
    %v726 = vadd.f32 %v699, %v724
    %v727 = vxor.u32 %v726, 2147483648
    %v728 = vmul.f32 %v727, 1.442695
    %v729 = vpow.pop %v728
    %v730 = vadd.f32 %v729, 1.0
    %v731 = vrcp.pop %v730
    %v732 = vmul.f32 %v730, %v731
    %v733 = vsub.f32 1.0, %v732
    %v734 = vmul.f32 %v731, %v733
    %v735 = vadd.f32 %v731, %v734
    %vm736 = vweird.f32 %v730
    %vm737 = vweird.f32 %v731
    %vm738 = vmor %vm736, %vm737
    %v739 = vsel %vm738, %v731, %v735
    %v740 = vand.u32 2147483647, %v730
    %vm741 = vcmp.eq.f32.partialorder %v740, 8.507059e+37
    %v742 = vand.u32 %v730, 2147483648
    %v743 = vor.u32 1.1754944e-38, %v742
    %v744 = vsel %vm741, %v743, %v739
    %v745 = vmul.f32 1.0, %v744
    %v746 = vtanh.pop %v726
    %v747 = vmul.f32 %v745, %v686
    %749 = vrot.lane.b32.xlu0 %v746, 64
    %v750 = vpop.permute.xlu0 %749
    %v752 = vmul.f32 %v745, %v750
    %754 = vrot.lane.b32.xlu0 %v752, 32
    %v755 = vpop.permute.xlu0 %754
    %v757 = vadd.f32 %v747, %v755
    %v758 = vtanh.pop %v757
    %760 = vrot.lane.b32.xlu0 %v758, 64
    %v761 = vpop.permute.xlu0 %760
    %v763 = vmul.f32 %v745, %v761
    %765 = vrot.lane.b32.xlu0 %v763, 32
    %v766 = vpop.permute.xlu0 %765
    %s768 = scalar_lea.vmem [#allocation5], 20
    %769 = vst.msk [vmem:[%s768] sm:$0xf] %vm413, %v766
    %v770 = vld [vmem:[%s244] sm:$0xf]
    %v771 = vld [vmem:[%s3 + $0x28] sm:$0xff]
    %v772 = vld [vmem:[%s3 + $0x30] sm:$0xff]
    %v773 = vld [vmem:[%s3 + $0x38] sm:$0xff]
    %v774 = vld [vmem:[%s3 + $0x40] sm:$0xff]
    %v775 = vsel %vm347, %v766, 0
    %777 = vmatpush.msra.mxu0 0.0
    %778 = vmatpush.msra.mxu0 0.0
    %779 = vmatpush.msra.mxu0 0.0
    %780 = vmatpush.msra.mxu0 0.0
    %781 = vmatpush.msra.mxu0 0.0
    %782 = vmatpush.msra.mxu0 0.0
    %783 = vmatpush.msra.mxu0 0.0
    %784 = vmatpush.msra.mxu0 0.0
    %785 = vmatpush.msra.mxu0 0.0
    %786 = vmatpush.msra.mxu0 0.0
    %787 = vmatpush.msra.mxu0 0.0
    %788 = vmatpush.msra.mxu0 0.0
    %789 = vmatpush.msra.mxu0 %v774
    %790 = vmatpush.msra.mxu0 %v773
    %791 = vmatpush.msra.mxu0 %v772
    %792 = vmatpush.msra.mxu0 %v771
    %793 = vmatmul.f32.gmra.mxu0 %v775
    %v794 = vpop.f32.mrf.mxu0
    %v795 = vadd.f32 0.0, %v794
    %796 = vdwg.mxu0
    %v797 = vadd.f32 %v770, %v795
    %v798 = vxor.u32 %v797, 2147483648
    %v799 = vmul.f32 %v798, 1.442695
    %v800 = vpow.pop %v799
    %v801 = vadd.f32 %v800, 1.0
    %v802 = vrcp.pop %v801
    %v803 = vmul.f32 %v801, %v802
    %v804 = vsub.f32 1.0, %v803
    %v805 = vmul.f32 %v802, %v804
    %v806 = vadd.f32 %v802, %v805
    %vm807 = vweird.f32 %v801
    %vm808 = vweird.f32 %v802
    %vm809 = vmor %vm807, %vm808
    %v810 = vsel %vm809, %v802, %v806
    %v811 = vand.u32 2147483647, %v801
    %vm812 = vcmp.eq.f32.partialorder %v811, 8.507059e+37
    %v813 = vand.u32 %v801, 2147483648
    %v814 = vor.u32 1.1754944e-38, %v813
    %v815 = vsel %vm812, %v814, %v810
    %v816 = vmul.f32 1.0, %v815
    %v817 = vtanh.pop %v797
    %v818 = vmul.f32 %v816, %v757
    %820 = vrot.lane.b32.xlu0 %v817, 64
    %v821 = vpop.permute.xlu0 %820
    %v823 = vmul.f32 %v816, %v821
    %825 = vrot.lane.b32.xlu0 %v823, 32
    %v826 = vpop.permute.xlu0 %825
    %v828 = vadd.f32 %v818, %v826
    %v829 = vtanh.pop %v828
    %831 = vrot.lane.b32.xlu0 %v829, 64
    %v832 = vpop.permute.xlu0 %831
    %v834 = vmul.f32 %v816, %v832
    %836 = vrot.lane.b32.xlu0 %v834, 32
    %v837 = vpop.permute.xlu0 %836
    %s839 = scalar_lea.vmem [#allocation5], 24
    %840 = vst.msk [vmem:[%s839] sm:$0xf] %vm413, %v837
    %v841 = vld [vmem:[%s276] sm:$0xf]
    %v842 = vld [vmem:[%s3 + $0x28] sm:$0xff]
    %v843 = vld [vmem:[%s3 + $0x30] sm:$0xff]
    %v844 = vld [vmem:[%s3 + $0x38] sm:$0xff]
    %v845 = vld [vmem:[%s3 + $0x40] sm:$0xff]
    %v846 = vsel %vm347, %v837, 0
    %848 = vmatpush.msra.mxu0 0.0
    %849 = vmatpush.msra.mxu0 0.0
    %850 = vmatpush.msra.mxu0 0.0
    %851 = vmatpush.msra.mxu0 0.0
    %852 = vmatpush.msra.mxu0 0.0
    %853 = vmatpush.msra.mxu0 0.0
    %854 = vmatpush.msra.mxu0 0.0
    %855 = vmatpush.msra.mxu0 0.0
    %856 = vmatpush.msra.mxu0 0.0
    %857 = vmatpush.msra.mxu0 0.0
    %858 = vmatpush.msra.mxu0 0.0
    %859 = vmatpush.msra.mxu0 0.0
    %860 = vmatpush.msra.mxu0 %v845
    %861 = vmatpush.msra.mxu0 %v844
    %862 = vmatpush.msra.mxu0 %v843
    %863 = vmatpush.msra.mxu0 %v842
    %864 = vmatmul.f32.gmra.mxu0 %v846
    %v865 = vpop.f32.mrf.mxu0
    %v866 = vadd.f32 0.0, %v865
    %867 = vdwg.mxu0
    %v868 = vadd.f32 %v841, %v866
    %v869 = vxor.u32 %v868, 2147483648
    %v870 = vmul.f32 %v869, 1.442695
    %v871 = vpow.pop %v870
    %v872 = vadd.f32 %v871, 1.0
    %v873 = vrcp.pop %v872
    %v874 = vmul.f32 %v872, %v873
    %v875 = vsub.f32 1.0, %v874
    %v876 = vmul.f32 %v873, %v875
    %v877 = vadd.f32 %v873, %v876
    %vm878 = vweird.f32 %v872
    %vm879 = vweird.f32 %v873
    %vm880 = vmor %vm878, %vm879
    %v881 = vsel %vm880, %v873, %v877
    %v882 = vand.u32 2147483647, %v872
    %vm883 = vcmp.eq.f32.partialorder %v882, 8.507059e+37
    %v884 = vand.u32 %v872, 2147483648
    %v885 = vor.u32 1.1754944e-38, %v884
    %v886 = vsel %vm883, %v885, %v881
    %v887 = vmul.f32 1.0, %v886
    %v888 = vtanh.pop %v868
    %v889 = vmul.f32 %v887, %v828
    %891 = vrot.lane.b32.xlu0 %v888, 64
    %v892 = vpop.permute.xlu0 %891
    %v894 = vmul.f32 %v887, %v892
    %896 = vrot.lane.b32.xlu0 %v894, 32
    %v897 = vpop.permute.xlu0 %896
    %v899 = vadd.f32 %v889, %v897
    %v900 = vtanh.pop %v899
    %902 = vrot.lane.b32.xlu0 %v900, 64
    %v903 = vpop.permute.xlu0 %902
    %v905 = vmul.f32 %v887, %v903
    %907 = vrot.lane.b32.xlu0 %v905, 32
    %v908 = vpop.permute.xlu0 %907
    %s910 = scalar_lea.vmem [#allocation5], 28
    %911 = vst.msk [vmem:[%s910] sm:$0xf] %vm413, %v908
    %v912 = vld [vmem:[%s308] sm:$0xf]
    %v913 = vld [vmem:[%s3 + $0x28] sm:$0xff]
    %v914 = vld [vmem:[%s3 + $0x30] sm:$0xff]
    %v915 = vld [vmem:[%s3 + $0x38] sm:$0xff]
    %v916 = vld [vmem:[%s3 + $0x40] sm:$0xff]
    %v917 = vsel %vm347, %v908, 0
    %919 = vmatpush.msra.mxu0 0.0
    %920 = vmatpush.msra.mxu0 0.0
    %921 = vmatpush.msra.mxu0 0.0
    %922 = vmatpush.msra.mxu0 0.0
    %923 = vmatpush.msra.mxu0 0.0
    %924 = vmatpush.msra.mxu0 0.0
    %925 = vmatpush.msra.mxu0 0.0
    %926 = vmatpush.msra.mxu0 0.0
    %927 = vmatpush.msra.mxu0 0.0
    %928 = vmatpush.msra.mxu0 0.0
    %929 = vmatpush.msra.mxu0 0.0
    %930 = vmatpush.msra.mxu0 0.0
    %931 = vmatpush.msra.mxu0 %v916
    %932 = vmatpush.msra.mxu0 %v915
    %933 = vmatpush.msra.mxu0 %v914
    %934 = vmatpush.msra.mxu0 %v913
    %935 = vmatmul.f32.gmra.mxu0 %v917
    %v936 = vpop.f32.mrf.mxu0
    %v937 = vadd.f32 0.0, %v936
    %938 = vdwg.mxu0
    %v939 = vadd.f32 %v912, %v937
    %v940 = vxor.u32 %v939, 2147483648
    %v941 = vmul.f32 %v940, 1.442695
    %v942 = vpow.pop %v941
    %v943 = vadd.f32 %v942, 1.0
    %v944 = vrcp.pop %v943
    %v945 = vmul.f32 %v943, %v944
    %v946 = vsub.f32 1.0, %v945
    %v947 = vmul.f32 %v944, %v946
    %v948 = vadd.f32 %v944, %v947
    %vm949 = vweird.f32 %v943
    %vm950 = vweird.f32 %v944
    %vm951 = vmor %vm949, %vm950
    %v952 = vsel %vm951, %v944, %v948
    %v953 = vand.u32 2147483647, %v943
    %vm954 = vcmp.eq.f32.partialorder %v953, 8.507059e+37
    %v955 = vand.u32 %v943, 2147483648
    %v956 = vor.u32 1.1754944e-38, %v955
    %v957 = vsel %vm954, %v956, %v952
    %v958 = vmul.f32 1.0, %v957
    %v959 = vtanh.pop %v939
    %v960 = vmul.f32 %v958, %v899
    %962 = vrot.lane.b32.xlu0 %v959, 64
    %v963 = vpop.permute.xlu0 %962
    %v965 = vmul.f32 %v958, %v963
    %967 = vrot.lane.b32.xlu0 %v965, 32
    %v968 = vpop.permute.xlu0 %967
    %v970 = vadd.f32 %v960, %v968
    %v971 = vtanh.pop %v970
    %973 = vrot.lane.b32.xlu0 %v971, 64
    %v974 = vpop.permute.xlu0 %973
    %v976 = vmul.f32 %v958, %v974
    %978 = vrot.lane.b32.xlu0 %v976, 32
    %v979 = vpop.permute.xlu0 %978
    %s981 = scalar_lea.vmem [#allocation5], 32
    %982 = vst.msk [vmem:[%s981] sm:$0xf] %vm413, %v979
    %v983 = vld [vmem:[%s340] sm:$0xf]
    %v984 = vld [vmem:[%s3 + $0x28] sm:$0xff]
    %v985 = vld [vmem:[%s3 + $0x30] sm:$0xff]
    %v986 = vld [vmem:[%s3 + $0x38] sm:$0xff]
    %v987 = vld [vmem:[%s3 + $0x40] sm:$0xff]
    %v988 = vsel %vm347, %v979, 0
    %990 = vmatpush.msra.mxu0 0.0
    %991 = vmatpush.msra.mxu0 0.0
    %992 = vmatpush.msra.mxu0 0.0
    %993 = vmatpush.msra.mxu0 0.0
    %994 = vmatpush.msra.mxu0 0.0
    %995 = vmatpush.msra.mxu0 0.0
    %996 = vmatpush.msra.mxu0 0.0
    %997 = vmatpush.msra.mxu0 0.0
    %998 = vmatpush.msra.mxu0 0.0
    %999 = vmatpush.msra.mxu0 0.0
    %1000 = vmatpush.msra.mxu0 0.0
    %1001 = vmatpush.msra.mxu0 0.0
    %1002 = vmatpush.msra.mxu0 %v987
    %1003 = vmatpush.msra.mxu0 %v986
    %1004 = vmatpush.msra.mxu0 %v985
    %1005 = vmatpush.msra.mxu0 %v984
    %1006 = vmatmul.f32.gmra.mxu0 %v988
    %v1007 = vpop.f32.mrf.mxu0
    %v1008 = vadd.f32 0.0, %v1007
    %1009 = vdwg.mxu0
    %v1010 = vadd.f32 %v983, %v1008
    %v1011 = vxor.u32 %v1010, 2147483648
    %v1012 = vmul.f32 %v1011, 1.442695
    %v1013 = vpow.pop %v1012
    %v1014 = vadd.f32 %v1013, 1.0
    %v1015 = vrcp.pop %v1014
    %v1016 = vmul.f32 %v1014, %v1015
    %v1017 = vsub.f32 1.0, %v1016
    %v1018 = vmul.f32 %v1015, %v1017
    %v1019 = vadd.f32 %v1015, %v1018
    %vm1020 = vweird.f32 %v1014
    %vm1021 = vweird.f32 %v1015
    %vm1022 = vmor %vm1020, %vm1021
    %v1023 = vsel %vm1022, %v1015, %v1019
    %v1024 = vand.u32 2147483647, %v1014
    %vm1025 = vcmp.eq.f32.partialorder %v1024, 8.507059e+37
    %v1026 = vand.u32 %v1014, 2147483648
    %v1027 = vor.u32 1.1754944e-38, %v1026
    %v1028 = vsel %vm1025, %v1027, %v1023
    %v1029 = vmul.f32 1.0, %v1028
    %v1030 = vtanh.pop %v1010
    %v1031 = vmul.f32 %v1029, %v970
    %1033 = vrot.lane.b32.xlu0 %v1030, 64
    %v1034 = vpop.permute.xlu0 %1033
    %v1036 = vmul.f32 %v1029, %v1034
    %1038 = vrot.lane.b32.xlu0 %v1036, 32
    %v1039 = vpop.permute.xlu0 %1038
    %v1041 = vadd.f32 %v1031, %v1039
    %v1042 = vtanh.pop %v1041
    %1044 = vrot.lane.b32.xlu0 %v1042, 64
    %v1045 = vpop.permute.xlu0 %1044
    %v1047 = vmul.f32 %v1029, %v1045
    %1049 = vrot.lane.b32.xlu0 %v1047, 32
    %v1050 = vpop.permute.xlu0 %1049
    %s1052 = scalar_lea.vmem [#allocation5], 36
    %1053 = vst.msk [vmem:[%s1052] sm:$0xf] %vm413, %v1050
    %v1054 = vld [vmem:[%s3 + $0x171] sm:$0x1]
    %v1055 = vperm.slane %v1054, 0
    %v1056 = vld [vmem:[#allocation5] sm:$0xf]
    %v1057 = vld [vmem:[%s3 + $0x48] sm:$0xff]
    %v1058 = vld [vmem:[%s3 + $0x50] sm:$0xff]
    %v1059 = vld [vmem:[%s3 + $0x58] sm:$0xff]
    %v1060 = vld [vmem:[%s3 + $0x60] sm:$0xff]
    %v1062 = vsel %vm347, %v1056, 0
    %1064 = vmatpush.msra.mxu0 0.0
    %1065 = vmatpush.msra.mxu0 0.0
    %1066 = vmatpush.msra.mxu0 0.0
    %1067 = vmatpush.msra.mxu0 0.0
    %1068 = vmatpush.msra.mxu0 0.0
    %1069 = vmatpush.msra.mxu0 0.0
    %1070 = vmatpush.msra.mxu0 0.0
    %1071 = vmatpush.msra.mxu0 0.0
    %1072 = vmatpush.msra.mxu0 0.0
    %1073 = vmatpush.msra.mxu0 0.0
    %1074 = vmatpush.msra.mxu0 0.0
    %1075 = vmatpush.msra.mxu0 0.0
    %1076 = vmatpush.msra.mxu0 %v1060
    %1077 = vmatpush.msra.mxu0 %v1059
    %1078 = vmatpush.msra.mxu0 %v1058
    %1079 = vmatpush.msra.mxu0 %v1057
    %1080 = vmatmul.f32.gmra.mxu0 %v1062
    %v1081 = vpop.f32.mrf.mxu0
    %v1082 = vadd.f32 %v1055, %v1081
    %1083 = vdwg.mxu0
    %1084 = vst [vmem:[#allocation3] sm:$0xf] %v1082
    %v1085 = vld [vmem:[%s484] sm:$0xf]
    %v1086 = vld [vmem:[%s3 + $0x48] sm:$0xff]
    %v1087 = vld [vmem:[%s3 + $0x50] sm:$0xff]
    %v1088 = vld [vmem:[%s3 + $0x58] sm:$0xff]
    %v1089 = vld [vmem:[%s3 + $0x60] sm:$0xff]
    %v1091 = vsel %vm347, %v1085, 0
    %1093 = vmatpush.msra.mxu0 0.0
    %1094 = vmatpush.msra.mxu0 0.0
    %1095 = vmatpush.msra.mxu0 0.0
    %1096 = vmatpush.msra.mxu0 0.0
    %1097 = vmatpush.msra.mxu0 0.0
    %1098 = vmatpush.msra.mxu0 0.0
    %1099 = vmatpush.msra.mxu0 0.0
    %1100 = vmatpush.msra.mxu0 0.0
    %1101 = vmatpush.msra.mxu0 0.0
    %1102 = vmatpush.msra.mxu0 0.0
    %1103 = vmatpush.msra.mxu0 0.0
    %1104 = vmatpush.msra.mxu0 0.0
    %1105 = vmatpush.msra.mxu0 %v1089
    %1106 = vmatpush.msra.mxu0 %v1088
    %1107 = vmatpush.msra.mxu0 %v1087
    %1108 = vmatpush.msra.mxu0 %v1086
    %1109 = vmatmul.f32.gmra.mxu0 %v1091
    %v1110 = vpop.f32.mrf.mxu0
    %v1111 = vadd.f32 %v1055, %v1110
    %1112 = vdwg.mxu0
    %s1113 = scalar_lea.vmem [#allocation3], 4
    %1114 = vst [vmem:[%s1113] sm:$0xf] %v1111
    %v1115 = vld [vmem:[%s555] sm:$0xf]
    %v1116 = vld [vmem:[%s3 + $0x48] sm:$0xff]
    %v1117 = vld [vmem:[%s3 + $0x50] sm:$0xff]
    %v1118 = vld [vmem:[%s3 + $0x58] sm:$0xff]
    %v1119 = vld [vmem:[%s3 + $0x60] sm:$0xff]
    %v1121 = vsel %vm347, %v1115, 0
    %1123 = vmatpush.msra.mxu0 0.0
    %1124 = vmatpush.msra.mxu0 0.0
    %1125 = vmatpush.msra.mxu0 0.0
    %1126 = vmatpush.msra.mxu0 0.0
    %1127 = vmatpush.msra.mxu0 0.0
    %1128 = vmatpush.msra.mxu0 0.0
    %1129 = vmatpush.msra.mxu0 0.0
    %1130 = vmatpush.msra.mxu0 0.0
    %1131 = vmatpush.msra.mxu0 0.0
    %1132 = vmatpush.msra.mxu0 0.0
    %1133 = vmatpush.msra.mxu0 0.0
    %1134 = vmatpush.msra.mxu0 0.0
    %1135 = vmatpush.msra.mxu0 %v1119
    %1136 = vmatpush.msra.mxu0 %v1118
    %1137 = vmatpush.msra.mxu0 %v1117
    %1138 = vmatpush.msra.mxu0 %v1116
    %1139 = vmatmul.f32.gmra.mxu0 %v1121
    %v1140 = vpop.f32.mrf.mxu0
    %v1141 = vadd.f32 %v1055, %v1140
    %1142 = vdwg.mxu0
    %s1143 = scalar_lea.vmem [#allocation3], 8
    %1144 = vst [vmem:[%s1143] sm:$0xf] %v1141
    %v1145 = vld [vmem:[%s626] sm:$0xf]
    %v1146 = vld [vmem:[%s3 + $0x48] sm:$0xff]
    %v1147 = vld [vmem:[%s3 + $0x50] sm:$0xff]
    %v1148 = vld [vmem:[%s3 + $0x58] sm:$0xff]
    %v1149 = vld [vmem:[%s3 + $0x60] sm:$0xff]
    %v1151 = vsel %vm347, %v1145, 0
    %1153 = vmatpush.msra.mxu0 0.0
    %1154 = vmatpush.msra.mxu0 0.0
    %1155 = vmatpush.msra.mxu0 0.0
    %1156 = vmatpush.msra.mxu0 0.0
    %1157 = vmatpush.msra.mxu0 0.0
    %1158 = vmatpush.msra.mxu0 0.0
    %1159 = vmatpush.msra.mxu0 0.0
    %1160 = vmatpush.msra.mxu0 0.0
    %1161 = vmatpush.msra.mxu0 0.0
    %1162 = vmatpush.msra.mxu0 0.0
    %1163 = vmatpush.msra.mxu0 0.0
    %1164 = vmatpush.msra.mxu0 0.0
    %1165 = vmatpush.msra.mxu0 %v1149
    %1166 = vmatpush.msra.mxu0 %v1148
    %1167 = vmatpush.msra.mxu0 %v1147
    %1168 = vmatpush.msra.mxu0 %v1146
    %1169 = vmatmul.f32.gmra.mxu0 %v1151
    %v1170 = vpop.f32.mrf.mxu0
    %v1171 = vadd.f32 %v1055, %v1170
    %1172 = vdwg.mxu0
    %s1173 = scalar_lea.vmem [#allocation3], 12
    %1174 = vst [vmem:[%s1173] sm:$0xf] %v1171
    %v1175 = vld [vmem:[%s697] sm:$0xf]
    %v1176 = vld [vmem:[%s3 + $0x48] sm:$0xff]
    %v1177 = vld [vmem:[%s3 + $0x50] sm:$0xff]
    %v1178 = vld [vmem:[%s3 + $0x58] sm:$0xff]
    %v1179 = vld [vmem:[%s3 + $0x60] sm:$0xff]
    %v1181 = vsel %vm347, %v1175, 0
    %1183 = vmatpush.msra.mxu0 0.0
    %1184 = vmatpush.msra.mxu0 0.0
    %1185 = vmatpush.msra.mxu0 0.0
    %1186 = vmatpush.msra.mxu0 0.0
    %1187 = vmatpush.msra.mxu0 0.0
    %1188 = vmatpush.msra.mxu0 0.0
    %1189 = vmatpush.msra.mxu0 0.0
    %1190 = vmatpush.msra.mxu0 0.0
    %1191 = vmatpush.msra.mxu0 0.0
    %1192 = vmatpush.msra.mxu0 0.0
    %1193 = vmatpush.msra.mxu0 0.0
    %1194 = vmatpush.msra.mxu0 0.0
    %1195 = vmatpush.msra.mxu0 %v1179
    %1196 = vmatpush.msra.mxu0 %v1178
    %1197 = vmatpush.msra.mxu0 %v1177
    %1198 = vmatpush.msra.mxu0 %v1176
    %1199 = vmatmul.f32.gmra.mxu0 %v1181
    %v1200 = vpop.f32.mrf.mxu0
    %v1201 = vadd.f32 %v1055, %v1200
    %1202 = vdwg.mxu0
    %s1203 = scalar_lea.vmem [#allocation3], 16
    %1204 = vst [vmem:[%s1203] sm:$0xf] %v1201
    %v1205 = vld [vmem:[%s768] sm:$0xf]
    %v1206 = vld [vmem:[%s3 + $0x48] sm:$0xff]
    %v1207 = vld [vmem:[%s3 + $0x50] sm:$0xff]
    %v1208 = vld [vmem:[%s3 + $0x58] sm:$0xff]
    %v1209 = vld [vmem:[%s3 + $0x60] sm:$0xff]
    %v1211 = vsel %vm347, %v1205, 0
    %1213 = vmatpush.msra.mxu0 0.0
    %1214 = vmatpush.msra.mxu0 0.0
    %1215 = vmatpush.msra.mxu0 0.0
    %1216 = vmatpush.msra.mxu0 0.0
    %1217 = vmatpush.msra.mxu0 0.0
    %1218 = vmatpush.msra.mxu0 0.0
    %1219 = vmatpush.msra.mxu0 0.0
    %1220 = vmatpush.msra.mxu0 0.0
    %1221 = vmatpush.msra.mxu0 0.0
    %1222 = vmatpush.msra.mxu0 0.0
    %1223 = vmatpush.msra.mxu0 0.0
    %1224 = vmatpush.msra.mxu0 0.0
    %1225 = vmatpush.msra.mxu0 %v1209
    %1226 = vmatpush.msra.mxu0 %v1208
    %1227 = vmatpush.msra.mxu0 %v1207
    %1228 = vmatpush.msra.mxu0 %v1206
    %1229 = vmatmul.f32.gmra.mxu0 %v1211
    %v1230 = vpop.f32.mrf.mxu0
    %v1231 = vadd.f32 %v1055, %v1230
    %1232 = vdwg.mxu0
    %s1233 = scalar_lea.vmem [#allocation3], 20
    %1234 = vst [vmem:[%s1233] sm:$0xf] %v1231
    %v1235 = vld [vmem:[%s839] sm:$0xf]
    %v1236 = vld [vmem:[%s3 + $0x48] sm:$0xff]
    %v1237 = vld [vmem:[%s3 + $0x50] sm:$0xff]
    %v1238 = vld [vmem:[%s3 + $0x58] sm:$0xff]
    %v1239 = vld [vmem:[%s3 + $0x60] sm:$0xff]
    %v1241 = vsel %vm347, %v1235, 0
    %1243 = vmatpush.msra.mxu0 0.0
    %1244 = vmatpush.msra.mxu0 0.0
    %1245 = vmatpush.msra.mxu0 0.0
    %1246 = vmatpush.msra.mxu0 0.0
    %1247 = vmatpush.msra.mxu0 0.0
    %1248 = vmatpush.msra.mxu0 0.0
    %1249 = vmatpush.msra.mxu0 0.0
    %1250 = vmatpush.msra.mxu0 0.0
    %1251 = vmatpush.msra.mxu0 0.0
    %1252 = vmatpush.msra.mxu0 0.0
    %1253 = vmatpush.msra.mxu0 0.0
    %1254 = vmatpush.msra.mxu0 0.0
    %1255 = vmatpush.msra.mxu0 %v1239
    %1256 = vmatpush.msra.mxu0 %v1238
    %1257 = vmatpush.msra.mxu0 %v1237
    %1258 = vmatpush.msra.mxu0 %v1236
    %1259 = vmatmul.f32.gmra.mxu0 %v1241
    %v1260 = vpop.f32.mrf.mxu0
    %v1261 = vadd.f32 %v1055, %v1260
    %1262 = vdwg.mxu0
    %s1263 = scalar_lea.vmem [#allocation3], 24
    %1264 = vst [vmem:[%s1263] sm:$0xf] %v1261
    %v1265 = vld [vmem:[%s910] sm:$0xf]
    %v1266 = vld [vmem:[%s3 + $0x48] sm:$0xff]
    %v1267 = vld [vmem:[%s3 + $0x50] sm:$0xff]
    %v1268 = vld [vmem:[%s3 + $0x58] sm:$0xff]
    %v1269 = vld [vmem:[%s3 + $0x60] sm:$0xff]
    %v1271 = vsel %vm347, %v1265, 0
    %1273 = vmatpush.msra.mxu0 0.0
    %1274 = vmatpush.msra.mxu0 0.0
    %1275 = vmatpush.msra.mxu0 0.0
    %1276 = vmatpush.msra.mxu0 0.0
    %1277 = vmatpush.msra.mxu0 0.0
    %1278 = vmatpush.msra.mxu0 0.0
    %1279 = vmatpush.msra.mxu0 0.0
    %1280 = vmatpush.msra.mxu0 0.0
    %1281 = vmatpush.msra.mxu0 0.0
    %1282 = vmatpush.msra.mxu0 0.0
    %1283 = vmatpush.msra.mxu0 0.0
    %1284 = vmatpush.msra.mxu0 0.0
    %1285 = vmatpush.msra.mxu0 %v1269
    %1286 = vmatpush.msra.mxu0 %v1268
    %1287 = vmatpush.msra.mxu0 %v1267
    %1288 = vmatpush.msra.mxu0 %v1266
    %1289 = vmatmul.f32.gmra.mxu0 %v1271
    %v1290 = vpop.f32.mrf.mxu0
    %v1291 = vadd.f32 %v1055, %v1290
    %1292 = vdwg.mxu0
    %s1293 = scalar_lea.vmem [#allocation3], 28
    %1294 = vst [vmem:[%s1293] sm:$0xf] %v1291
    %v1295 = vld [vmem:[%s981] sm:$0xf]
    %v1296 = vld [vmem:[%s3 + $0x48] sm:$0xff]
    %v1297 = vld [vmem:[%s3 + $0x50] sm:$0xff]
    %v1298 = vld [vmem:[%s3 + $0x58] sm:$0xff]
    %v1299 = vld [vmem:[%s3 + $0x60] sm:$0xff]
    %v1301 = vsel %vm347, %v1295, 0
    %1303 = vmatpush.msra.mxu0 0.0
    %1304 = vmatpush.msra.mxu0 0.0
    %1305 = vmatpush.msra.mxu0 0.0
    %1306 = vmatpush.msra.mxu0 0.0
    %1307 = vmatpush.msra.mxu0 0.0
    %1308 = vmatpush.msra.mxu0 0.0
    %1309 = vmatpush.msra.mxu0 0.0
    %1310 = vmatpush.msra.mxu0 0.0
    %1311 = vmatpush.msra.mxu0 0.0
    %1312 = vmatpush.msra.mxu0 0.0
    %1313 = vmatpush.msra.mxu0 0.0
    %1314 = vmatpush.msra.mxu0 0.0
    %1315 = vmatpush.msra.mxu0 %v1299
    %1316 = vmatpush.msra.mxu0 %v1298
    %1317 = vmatpush.msra.mxu0 %v1297
    %1318 = vmatpush.msra.mxu0 %v1296
    %1319 = vmatmul.f32.gmra.mxu0 %v1301
    %v1320 = vpop.f32.mrf.mxu0
    %v1321 = vadd.f32 %v1055, %v1320
    %1322 = vdwg.mxu0
    %s1323 = scalar_lea.vmem [#allocation3], 32
    %1324 = vst [vmem:[%s1323] sm:$0xf] %v1321
    %v1325 = vld [vmem:[%s1052] sm:$0xf]
    %v1326 = vld [vmem:[%s3 + $0x48] sm:$0xff]
    %v1327 = vld [vmem:[%s3 + $0x50] sm:$0xff]
    %v1328 = vld [vmem:[%s3 + $0x58] sm:$0xff]
    %v1329 = vld [vmem:[%s3 + $0x60] sm:$0xff]
    %v1331 = vsel %vm347, %v1325, 0
    %1333 = vmatpush.msra.mxu0 0.0
    %1334 = vmatpush.msra.mxu0 0.0
    %1335 = vmatpush.msra.mxu0 0.0
    %1336 = vmatpush.msra.mxu0 0.0
    %1337 = vmatpush.msra.mxu0 0.0
    %1338 = vmatpush.msra.mxu0 0.0
    %1339 = vmatpush.msra.mxu0 0.0
    %1340 = vmatpush.msra.mxu0 0.0
    %1341 = vmatpush.msra.mxu0 0.0
    %1342 = vmatpush.msra.mxu0 0.0
    %1343 = vmatpush.msra.mxu0 0.0
    %1344 = vmatpush.msra.mxu0 0.0
    %1345 = vmatpush.msra.mxu0 %v1329
    %1346 = vmatpush.msra.mxu0 %v1328
    %1347 = vmatpush.msra.mxu0 %v1327
    %1348 = vmatpush.msra.mxu0 %v1326
    %1349 = vmatmul.f32.gmra.mxu0 %v1331
    %v1350 = vpop.f32.mrf.mxu0
    %v1351 = vadd.f32 %v1055, %v1350
    %1352 = vdwg.mxu0
    %s1353 = scalar_lea.vmem [#allocation3], 36
    %1354 = vst [vmem:[%s1353] sm:$0xf] %v1351
    %v1355 = vld [vmem:[#allocation3] sm:$0xf]
    %v1356 = vld [vmem:[%s3 + $0x68] sm:$0xff]
    %v1357 = vld [vmem:[%s3 + $0x70] sm:$0xff]
    %v1358 = vld [vmem:[%s3 + $0x78] sm:$0xff]
    %v1359 = vld [vmem:[%s3 + $0x80] sm:$0xff]
    %1360 = vmatpush.msra.mxu0 0.0
    %1361 = vmatpush.msra.mxu0 0.0
    %1362 = vmatpush.msra.mxu0 0.0
    %1363 = vmatpush.msra.mxu0 0.0
    %1364 = vmatpush.msra.mxu0 0.0
    %1365 = vmatpush.msra.mxu0 0.0
    %1366 = vmatpush.msra.mxu0 0.0
    %1367 = vmatpush.msra.mxu0 0.0
    %1368 = vmatpush.msra.mxu0 0.0
    %1369 = vmatpush.msra.mxu0 0.0
    %1370 = vmatpush.msra.mxu0 0.0
    %1371 = vmatpush.msra.mxu0 0.0
    %1372 = vmatpush.msra.mxu0 %v1359
    %1373 = vmatpush.msra.mxu0 %v1358
    %1374 = vmatpush.msra.mxu0 %v1357
    %1375 = vmatpush.msra.mxu0 %v1356
    %1376 = vmatmul.f32.gmra.mxu0 %v349
    %v1377 = vpop.f32.mrf.mxu0
    %v1378 = vadd.f32 0.0, %v1377
    %1379 = vdwg.mxu0
    %v1380 = vadd.f32 %v1355, %v1378
    %v1381 = vxor.u32 %v1380, 2147483648
    %v1382 = vmul.f32 %v1381, 1.442695
    %v1383 = vpow.pop %v1382
    %v1384 = vadd.f32 %v1383, 1.0
    %v1385 = vrcp.pop %v1384
    %v1386 = vmul.f32 %v1384, %v1385
    %v1387 = vsub.f32 1.0, %v1386
    %v1388 = vmul.f32 %v1385, %v1387
    %v1389 = vadd.f32 %v1385, %v1388
    %vm1390 = vweird.f32 %v1384
    %vm1391 = vweird.f32 %v1385
    %vm1392 = vmor %vm1390, %vm1391
    %v1393 = vsel %vm1392, %v1385, %v1389
    %v1394 = vand.u32 2147483647, %v1384
    %vm1395 = vcmp.eq.f32.partialorder %v1394, 8.507059e+37
    %v1396 = vand.u32 %v1384, 2147483648
    %v1397 = vor.u32 1.1754944e-38, %v1396
    %v1398 = vsel %vm1395, %v1397, %v1393
    %v1399 = vmul.f32 1.0, %v1398
    %v1400 = vtanh.pop %v1380
    %v1401 = vmul.f32 %v1399, 0.0
    %1403 = vrot.lane.b32.xlu0 %v1400, 64
    %v1404 = vpop.permute.xlu0 %1403
    %v1406 = vmul.f32 %v1399, %v1404
    %1408 = vrot.lane.b32.xlu0 %v1406, 32
    %v1409 = vpop.permute.xlu0 %1408
    %v1411 = vadd.f32 %v1401, %v1409
    %v1412 = vtanh.pop %v1411
    %1414 = vrot.lane.b32.xlu0 %v1412, 64
    %v1415 = vpop.permute.xlu0 %1414
    %v1417 = vmul.f32 %v1399, %v1415
    %1419 = vrot.lane.b32.xlu0 %v1417, 32
    %v1420 = vpop.permute.xlu0 %1419
    %1422 = vst.msk [vmem:[#allocation6] sm:$0xf] %vm413, %v1420
    %v1423 = vld [vmem:[%s1113] sm:$0xf]
    %v1424 = vld [vmem:[%s3 + $0x68] sm:$0xff]
    %v1425 = vld [vmem:[%s3 + $0x70] sm:$0xff]
    %v1426 = vld [vmem:[%s3 + $0x78] sm:$0xff]
    %v1427 = vld [vmem:[%s3 + $0x80] sm:$0xff]
    %v1428 = vsel %vm347, %v1420, 0
    %1430 = vmatpush.msra.mxu0 0.0
    %1431 = vmatpush.msra.mxu0 0.0
    %1432 = vmatpush.msra.mxu0 0.0
    %1433 = vmatpush.msra.mxu0 0.0
    %1434 = vmatpush.msra.mxu0 0.0
    %1435 = vmatpush.msra.mxu0 0.0
    %1436 = vmatpush.msra.mxu0 0.0
    %1437 = vmatpush.msra.mxu0 0.0
    %1438 = vmatpush.msra.mxu0 0.0
    %1439 = vmatpush.msra.mxu0 0.0
    %1440 = vmatpush.msra.mxu0 0.0
    %1441 = vmatpush.msra.mxu0 0.0
    %1442 = vmatpush.msra.mxu0 %v1427
    %1443 = vmatpush.msra.mxu0 %v1426
    %1444 = vmatpush.msra.mxu0 %v1425
    %1445 = vmatpush.msra.mxu0 %v1424
    %1446 = vmatmul.f32.gmra.mxu0 %v1428
    %v1447 = vpop.f32.mrf.mxu0
    %v1448 = vadd.f32 0.0, %v1447
    %1449 = vdwg.mxu0
    %v1450 = vadd.f32 %v1423, %v1448
    %v1451 = vxor.u32 %v1450, 2147483648
    %v1452 = vmul.f32 %v1451, 1.442695
    %v1453 = vpow.pop %v1452
    %v1454 = vadd.f32 %v1453, 1.0
    %v1455 = vrcp.pop %v1454
    %v1456 = vmul.f32 %v1454, %v1455
    %v1457 = vsub.f32 1.0, %v1456
    %v1458 = vmul.f32 %v1455, %v1457
    %v1459 = vadd.f32 %v1455, %v1458
    %vm1460 = vweird.f32 %v1454
    %vm1461 = vweird.f32 %v1455
    %vm1462 = vmor %vm1460, %vm1461
    %v1463 = vsel %vm1462, %v1455, %v1459
    %v1464 = vand.u32 2147483647, %v1454
    %vm1465 = vcmp.eq.f32.partialorder %v1464, 8.507059e+37
    %v1466 = vand.u32 %v1454, 2147483648
    %v1467 = vor.u32 1.1754944e-38, %v1466
    %v1468 = vsel %vm1465, %v1467, %v1463
    %v1469 = vmul.f32 1.0, %v1468
    %v1470 = vtanh.pop %v1450
    %v1471 = vmul.f32 %v1469, %v1411
    %1473 = vrot.lane.b32.xlu0 %v1470, 64
    %v1474 = vpop.permute.xlu0 %1473
    %v1476 = vmul.f32 %v1469, %v1474
    %1478 = vrot.lane.b32.xlu0 %v1476, 32
    %v1479 = vpop.permute.xlu0 %1478
    %v1481 = vadd.f32 %v1471, %v1479
    %v1482 = vtanh.pop %v1481
    %1484 = vrot.lane.b32.xlu0 %v1482, 64
    %v1485 = vpop.permute.xlu0 %1484
    %v1487 = vmul.f32 %v1469, %v1485
    %1489 = vrot.lane.b32.xlu0 %v1487, 32
    %v1490 = vpop.permute.xlu0 %1489
    %s1492 = scalar_lea.vmem [#allocation6], 4
    %1493 = vst.msk [vmem:[%s1492] sm:$0xf] %vm413, %v1490
    %v1494 = vld [vmem:[%s1143] sm:$0xf]
    %v1495 = vld [vmem:[%s3 + $0x68] sm:$0xff]
    %v1496 = vld [vmem:[%s3 + $0x70] sm:$0xff]
    %v1497 = vld [vmem:[%s3 + $0x78] sm:$0xff]
    %v1498 = vld [vmem:[%s3 + $0x80] sm:$0xff]
    %v1499 = vsel %vm347, %v1490, 0
    %1501 = vmatpush.msra.mxu0 0.0
    %1502 = vmatpush.msra.mxu0 0.0
    %1503 = vmatpush.msra.mxu0 0.0
    %1504 = vmatpush.msra.mxu0 0.0
    %1505 = vmatpush.msra.mxu0 0.0
    %1506 = vmatpush.msra.mxu0 0.0
    %1507 = vmatpush.msra.mxu0 0.0
    %1508 = vmatpush.msra.mxu0 0.0
    %1509 = vmatpush.msra.mxu0 0.0
    %1510 = vmatpush.msra.mxu0 0.0
    %1511 = vmatpush.msra.mxu0 0.0
    %1512 = vmatpush.msra.mxu0 0.0
    %1513 = vmatpush.msra.mxu0 %v1498
    %1514 = vmatpush.msra.mxu0 %v1497
    %1515 = vmatpush.msra.mxu0 %v1496
    %1516 = vmatpush.msra.mxu0 %v1495
    %1517 = vmatmul.f32.gmra.mxu0 %v1499
    %v1518 = vpop.f32.mrf.mxu0
    %v1519 = vadd.f32 0.0, %v1518
    %1520 = vdwg.mxu0
    %v1521 = vadd.f32 %v1494, %v1519
    %v1522 = vxor.u32 %v1521, 2147483648
    %v1523 = vmul.f32 %v1522, 1.442695
    %v1524 = vpow.pop %v1523
    %v1525 = vadd.f32 %v1524, 1.0
    %v1526 = vrcp.pop %v1525
    %v1527 = vmul.f32 %v1525, %v1526
    %v1528 = vsub.f32 1.0, %v1527
    %v1529 = vmul.f32 %v1526, %v1528
    %v1530 = vadd.f32 %v1526, %v1529
    %vm1531 = vweird.f32 %v1525
    %vm1532 = vweird.f32 %v1526
    %vm1533 = vmor %vm1531, %vm1532
    %v1534 = vsel %vm1533, %v1526, %v1530
    %v1535 = vand.u32 2147483647, %v1525
    %vm1536 = vcmp.eq.f32.partialorder %v1535, 8.507059e+37
    %v1537 = vand.u32 %v1525, 2147483648
    %v1538 = vor.u32 1.1754944e-38, %v1537
    %v1539 = vsel %vm1536, %v1538, %v1534
    %v1540 = vmul.f32 1.0, %v1539
    %v1541 = vtanh.pop %v1521
    %v1542 = vmul.f32 %v1540, %v1481
    %1544 = vrot.lane.b32.xlu0 %v1541, 64
    %v1545 = vpop.permute.xlu0 %1544
    %v1547 = vmul.f32 %v1540, %v1545
    %1549 = vrot.lane.b32.xlu0 %v1547, 32
    %v1550 = vpop.permute.xlu0 %1549
    %v1552 = vadd.f32 %v1542, %v1550
    %v1553 = vtanh.pop %v1552
    %1555 = vrot.lane.b32.xlu0 %v1553, 64
    %v1556 = vpop.permute.xlu0 %1555
    %v1558 = vmul.f32 %v1540, %v1556
    %1560 = vrot.lane.b32.xlu0 %v1558, 32
    %v1561 = vpop.permute.xlu0 %1560
    %s1563 = scalar_lea.vmem [#allocation6], 8
    %1564 = vst.msk [vmem:[%s1563] sm:$0xf] %vm413, %v1561
    %v1565 = vld [vmem:[%s1173] sm:$0xf]
    %v1566 = vld [vmem:[%s3 + $0x68] sm:$0xff]
    %v1567 = vld [vmem:[%s3 + $0x70] sm:$0xff]
    %v1568 = vld [vmem:[%s3 + $0x78] sm:$0xff]
    %v1569 = vld [vmem:[%s3 + $0x80] sm:$0xff]
    %v1570 = vsel %vm347, %v1561, 0
    %1572 = vmatpush.msra.mxu0 0.0
    %1573 = vmatpush.msra.mxu0 0.0
    %1574 = vmatpush.msra.mxu0 0.0
    %1575 = vmatpush.msra.mxu0 0.0
    %1576 = vmatpush.msra.mxu0 0.0
    %1577 = vmatpush.msra.mxu0 0.0
    %1578 = vmatpush.msra.mxu0 0.0
    %1579 = vmatpush.msra.mxu0 0.0
    %1580 = vmatpush.msra.mxu0 0.0
    %1581 = vmatpush.msra.mxu0 0.0
    %1582 = vmatpush.msra.mxu0 0.0
    %1583 = vmatpush.msra.mxu0 0.0
    %1584 = vmatpush.msra.mxu0 %v1569
    %1585 = vmatpush.msra.mxu0 %v1568
    %1586 = vmatpush.msra.mxu0 %v1567
    %1587 = vmatpush.msra.mxu0 %v1566
    %1588 = vmatmul.f32.gmra.mxu0 %v1570
    %v1589 = vpop.f32.mrf.mxu0
    %v1590 = vadd.f32 0.0, %v1589
    %1591 = vdwg.mxu0
    %v1592 = vadd.f32 %v1565, %v1590
    %v1593 = vxor.u32 %v1592, 2147483648
    %v1594 = vmul.f32 %v1593, 1.442695
    %v1595 = vpow.pop %v1594
    %v1596 = vadd.f32 %v1595, 1.0
    %v1597 = vrcp.pop %v1596
    %v1598 = vmul.f32 %v1596, %v1597
    %v1599 = vsub.f32 1.0, %v1598
    %v1600 = vmul.f32 %v1597, %v1599
    %v1601 = vadd.f32 %v1597, %v1600
    %vm1602 = vweird.f32 %v1596
    %vm1603 = vweird.f32 %v1597
    %vm1604 = vmor %vm1602, %vm1603
    %v1605 = vsel %vm1604, %v1597, %v1601
    %v1606 = vand.u32 2147483647, %v1596
    %vm1607 = vcmp.eq.f32.partialorder %v1606, 8.507059e+37
    %v1608 = vand.u32 %v1596, 2147483648
    %v1609 = vor.u32 1.1754944e-38, %v1608
    %v1610 = vsel %vm1607, %v1609, %v1605
    %v1611 = vmul.f32 1.0, %v1610
    %v1612 = vtanh.pop %v1592
    %v1613 = vmul.f32 %v1611, %v1552
    %1615 = vrot.lane.b32.xlu0 %v1612, 64
    %v1616 = vpop.permute.xlu0 %1615
    %v1618 = vmul.f32 %v1611, %v1616
    %1620 = vrot.lane.b32.xlu0 %v1618, 32
    %v1621 = vpop.permute.xlu0 %1620
    %v1623 = vadd.f32 %v1613, %v1621
    %v1624 = vtanh.pop %v1623
    %1626 = vrot.lane.b32.xlu0 %v1624, 64
    %v1627 = vpop.permute.xlu0 %1626
    %v1629 = vmul.f32 %v1611, %v1627
    %1631 = vrot.lane.b32.xlu0 %v1629, 32
    %v1632 = vpop.permute.xlu0 %1631
    %s1634 = scalar_lea.vmem [#allocation6], 12
    %1635 = vst.msk [vmem:[%s1634] sm:$0xf] %vm413, %v1632
    %v1636 = vld [vmem:[%s1203] sm:$0xf]
    %v1637 = vld [vmem:[%s3 + $0x68] sm:$0xff]
    %v1638 = vld [vmem:[%s3 + $0x70] sm:$0xff]
    %v1639 = vld [vmem:[%s3 + $0x78] sm:$0xff]
    %v1640 = vld [vmem:[%s3 + $0x80] sm:$0xff]
    %v1641 = vsel %vm347, %v1632, 0
    %1643 = vmatpush.msra.mxu0 0.0
    %1644 = vmatpush.msra.mxu0 0.0
    %1645 = vmatpush.msra.mxu0 0.0
    %1646 = vmatpush.msra.mxu0 0.0
    %1647 = vmatpush.msra.mxu0 0.0
    %1648 = vmatpush.msra.mxu0 0.0
    %1649 = vmatpush.msra.mxu0 0.0
    %1650 = vmatpush.msra.mxu0 0.0
    %1651 = vmatpush.msra.mxu0 0.0
    %1652 = vmatpush.msra.mxu0 0.0
    %1653 = vmatpush.msra.mxu0 0.0
    %1654 = vmatpush.msra.mxu0 0.0
    %1655 = vmatpush.msra.mxu0 %v1640
    %1656 = vmatpush.msra.mxu0 %v1639
    %1657 = vmatpush.msra.mxu0 %v1638
    %1658 = vmatpush.msra.mxu0 %v1637
    %1659 = vmatmul.f32.gmra.mxu0 %v1641
    %v1660 = vpop.f32.mrf.mxu0
    %v1661 = vadd.f32 0.0, %v1660
    %1662 = vdwg.mxu0
    %v1663 = vadd.f32 %v1636, %v1661
    %v1664 = vxor.u32 %v1663, 2147483648
    %v1665 = vmul.f32 %v1664, 1.442695
    %v1666 = vpow.pop %v1665
    %v1667 = vadd.f32 %v1666, 1.0
    %v1668 = vrcp.pop %v1667
    %v1669 = vmul.f32 %v1667, %v1668
    %v1670 = vsub.f32 1.0, %v1669
    %v1671 = vmul.f32 %v1668, %v1670
    %v1672 = vadd.f32 %v1668, %v1671
    %vm1673 = vweird.f32 %v1667
    %vm1674 = vweird.f32 %v1668
    %vm1675 = vmor %vm1673, %vm1674
    %v1676 = vsel %vm1675, %v1668, %v1672
    %v1677 = vand.u32 2147483647, %v1667
    %vm1678 = vcmp.eq.f32.partialorder %v1677, 8.507059e+37
    %v1679 = vand.u32 %v1667, 2147483648
    %v1680 = vor.u32 1.1754944e-38, %v1679
    %v1681 = vsel %vm1678, %v1680, %v1676
    %v1682 = vmul.f32 1.0, %v1681
    %v1683 = vtanh.pop %v1663
    %v1684 = vmul.f32 %v1682, %v1623
    %1686 = vrot.lane.b32.xlu0 %v1683, 64
    %v1687 = vpop.permute.xlu0 %1686
    %v1689 = vmul.f32 %v1682, %v1687
    %1691 = vrot.lane.b32.xlu0 %v1689, 32
    %v1692 = vpop.permute.xlu0 %1691
    %v1694 = vadd.f32 %v1684, %v1692
    %v1695 = vtanh.pop %v1694
    %1697 = vrot.lane.b32.xlu0 %v1695, 64
    %v1698 = vpop.permute.xlu0 %1697
    %v1700 = vmul.f32 %v1682, %v1698
    %1702 = vrot.lane.b32.xlu0 %v1700, 32
    %v1703 = vpop.permute.xlu0 %1702
    %s1705 = scalar_lea.vmem [#allocation6], 16
    %1706 = vst.msk [vmem:[%s1705] sm:$0xf] %vm413, %v1703
    %v1707 = vld [vmem:[%s1233] sm:$0xf]
    %v1708 = vld [vmem:[%s3 + $0x68] sm:$0xff]
    %v1709 = vld [vmem:[%s3 + $0x70] sm:$0xff]
    %v1710 = vld [vmem:[%s3 + $0x78] sm:$0xff]
    %v1711 = vld [vmem:[%s3 + $0x80] sm:$0xff]
    %v1712 = vsel %vm347, %v1703, 0
    %1714 = vmatpush.msra.mxu0 0.0
    %1715 = vmatpush.msra.mxu0 0.0
    %1716 = vmatpush.msra.mxu0 0.0
    %1717 = vmatpush.msra.mxu0 0.0
    %1718 = vmatpush.msra.mxu0 0.0
    %1719 = vmatpush.msra.mxu0 0.0
    %1720 = vmatpush.msra.mxu0 0.0
    %1721 = vmatpush.msra.mxu0 0.0
    %1722 = vmatpush.msra.mxu0 0.0
    %1723 = vmatpush.msra.mxu0 0.0
    %1724 = vmatpush.msra.mxu0 0.0
    %1725 = vmatpush.msra.mxu0 0.0
    %1726 = vmatpush.msra.mxu0 %v1711
    %1727 = vmatpush.msra.mxu0 %v1710
    %1728 = vmatpush.msra.mxu0 %v1709
    %1729 = vmatpush.msra.mxu0 %v1708
    %1730 = vmatmul.f32.gmra.mxu0 %v1712
    %v1731 = vpop.f32.mrf.mxu0
    %v1732 = vadd.f32 0.0, %v1731
    %1733 = vdwg.mxu0
    %v1734 = vadd.f32 %v1707, %v1732
    %v1735 = vxor.u32 %v1734, 2147483648
    %v1736 = vmul.f32 %v1735, 1.442695
    %v1737 = vpow.pop %v1736
    %v1738 = vadd.f32 %v1737, 1.0
    %v1739 = vrcp.pop %v1738
    %v1740 = vmul.f32 %v1738, %v1739
    %v1741 = vsub.f32 1.0, %v1740
    %v1742 = vmul.f32 %v1739, %v1741
    %v1743 = vadd.f32 %v1739, %v1742
    %vm1744 = vweird.f32 %v1738
    %vm1745 = vweird.f32 %v1739
    %vm1746 = vmor %vm1744, %vm1745
    %v1747 = vsel %vm1746, %v1739, %v1743
    %v1748 = vand.u32 2147483647, %v1738
    %vm1749 = vcmp.eq.f32.partialorder %v1748, 8.507059e+37
    %v1750 = vand.u32 %v1738, 2147483648
    %v1751 = vor.u32 1.1754944e-38, %v1750
    %v1752 = vsel %vm1749, %v1751, %v1747
    %v1753 = vmul.f32 1.0, %v1752
    %v1754 = vtanh.pop %v1734
    %v1755 = vmul.f32 %v1753, %v1694
    %1757 = vrot.lane.b32.xlu0 %v1754, 64
    %v1758 = vpop.permute.xlu0 %1757
    %v1760 = vmul.f32 %v1753, %v1758
    %1762 = vrot.lane.b32.xlu0 %v1760, 32
    %v1763 = vpop.permute.xlu0 %1762
    %v1765 = vadd.f32 %v1755, %v1763
    %v1766 = vtanh.pop %v1765
    %1768 = vrot.lane.b32.xlu0 %v1766, 64
    %v1769 = vpop.permute.xlu0 %1768
    %v1771 = vmul.f32 %v1753, %v1769
    %1773 = vrot.lane.b32.xlu0 %v1771, 32
    %v1774 = vpop.permute.xlu0 %1773
    %s1776 = scalar_lea.vmem [#allocation6], 20
    %1777 = vst.msk [vmem:[%s1776] sm:$0xf] %vm413, %v1774
    %v1778 = vld [vmem:[%s1263] sm:$0xf]
    %v1779 = vld [vmem:[%s3 + $0x68] sm:$0xff]
    %v1780 = vld [vmem:[%s3 + $0x70] sm:$0xff]
    %v1781 = vld [vmem:[%s3 + $0x78] sm:$0xff]
    %v1782 = vld [vmem:[%s3 + $0x80] sm:$0xff]
    %v1783 = vsel %vm347, %v1774, 0
    %1785 = vmatpush.msra.mxu0 0.0
    %1786 = vmatpush.msra.mxu0 0.0
    %1787 = vmatpush.msra.mxu0 0.0
    %1788 = vmatpush.msra.mxu0 0.0
    %1789 = vmatpush.msra.mxu0 0.0
    %1790 = vmatpush.msra.mxu0 0.0
    %1791 = vmatpush.msra.mxu0 0.0
    %1792 = vmatpush.msra.mxu0 0.0
    %1793 = vmatpush.msra.mxu0 0.0
    %1794 = vmatpush.msra.mxu0 0.0
    %1795 = vmatpush.msra.mxu0 0.0
    %1796 = vmatpush.msra.mxu0 0.0
    %1797 = vmatpush.msra.mxu0 %v1782
    %1798 = vmatpush.msra.mxu0 %v1781
    %1799 = vmatpush.msra.mxu0 %v1780
    %1800 = vmatpush.msra.mxu0 %v1779
    %1801 = vmatmul.f32.gmra.mxu0 %v1783
    %v1802 = vpop.f32.mrf.mxu0
    %v1803 = vadd.f32 0.0, %v1802
    %1804 = vdwg.mxu0
    %v1805 = vadd.f32 %v1778, %v1803
    %v1806 = vxor.u32 %v1805, 2147483648
    %v1807 = vmul.f32 %v1806, 1.442695
    %v1808 = vpow.pop %v1807
    %v1809 = vadd.f32 %v1808, 1.0
    %v1810 = vrcp.pop %v1809
    %v1811 = vmul.f32 %v1809, %v1810
    %v1812 = vsub.f32 1.0, %v1811
    %v1813 = vmul.f32 %v1810, %v1812
    %v1814 = vadd.f32 %v1810, %v1813
    %vm1815 = vweird.f32 %v1809
    %vm1816 = vweird.f32 %v1810
    %vm1817 = vmor %vm1815, %vm1816
    %v1818 = vsel %vm1817, %v1810, %v1814
    %v1819 = vand.u32 2147483647, %v1809
    %vm1820 = vcmp.eq.f32.partialorder %v1819, 8.507059e+37
    %v1821 = vand.u32 %v1809, 2147483648
    %v1822 = vor.u32 1.1754944e-38, %v1821
    %v1823 = vsel %vm1820, %v1822, %v1818
    %v1824 = vmul.f32 1.0, %v1823
    %v1825 = vtanh.pop %v1805
    %v1826 = vmul.f32 %v1824, %v1765
    %1828 = vrot.lane.b32.xlu0 %v1825, 64
    %v1829 = vpop.permute.xlu0 %1828
    %v1831 = vmul.f32 %v1824, %v1829
    %1833 = vrot.lane.b32.xlu0 %v1831, 32
    %v1834 = vpop.permute.xlu0 %1833
    %v1836 = vadd.f32 %v1826, %v1834
    %v1837 = vtanh.pop %v1836
    %1839 = vrot.lane.b32.xlu0 %v1837, 64
    %v1840 = vpop.permute.xlu0 %1839
    %v1842 = vmul.f32 %v1824, %v1840
    %1844 = vrot.lane.b32.xlu0 %v1842, 32
    %v1845 = vpop.permute.xlu0 %1844
    %s1847 = scalar_lea.vmem [#allocation6], 24
    %1848 = vst.msk [vmem:[%s1847] sm:$0xf] %vm413, %v1845
    %v1849 = vld [vmem:[%s1293] sm:$0xf]
    %v1850 = vld [vmem:[%s3 + $0x68] sm:$0xff]
    %v1851 = vld [vmem:[%s3 + $0x70] sm:$0xff]
    %v1852 = vld [vmem:[%s3 + $0x78] sm:$0xff]
    %v1853 = vld [vmem:[%s3 + $0x80] sm:$0xff]
    %v1854 = vsel %vm347, %v1845, 0
    %1856 = vmatpush.msra.mxu0 0.0
    %1857 = vmatpush.msra.mxu0 0.0
    %1858 = vmatpush.msra.mxu0 0.0
    %1859 = vmatpush.msra.mxu0 0.0
    %1860 = vmatpush.msra.mxu0 0.0
    %1861 = vmatpush.msra.mxu0 0.0
    %1862 = vmatpush.msra.mxu0 0.0
    %1863 = vmatpush.msra.mxu0 0.0
    %1864 = vmatpush.msra.mxu0 0.0
    %1865 = vmatpush.msra.mxu0 0.0
    %1866 = vmatpush.msra.mxu0 0.0
    %1867 = vmatpush.msra.mxu0 0.0
    %1868 = vmatpush.msra.mxu0 %v1853
    %1869 = vmatpush.msra.mxu0 %v1852
    %1870 = vmatpush.msra.mxu0 %v1851
    %1871 = vmatpush.msra.mxu0 %v1850
    %1872 = vmatmul.f32.gmra.mxu0 %v1854
    %v1873 = vpop.f32.mrf.mxu0
    %v1874 = vadd.f32 0.0, %v1873
    %1875 = vdwg.mxu0
    %v1876 = vadd.f32 %v1849, %v1874
    %v1877 = vxor.u32 %v1876, 2147483648
    %v1878 = vmul.f32 %v1877, 1.442695
    %v1879 = vpow.pop %v1878
    %v1880 = vadd.f32 %v1879, 1.0
    %v1881 = vrcp.pop %v1880
    %v1882 = vmul.f32 %v1880, %v1881
    %v1883 = vsub.f32 1.0, %v1882
    %v1884 = vmul.f32 %v1881, %v1883
    %v1885 = vadd.f32 %v1881, %v1884
    %vm1886 = vweird.f32 %v1880
    %vm1887 = vweird.f32 %v1881
    %vm1888 = vmor %vm1886, %vm1887
    %v1889 = vsel %vm1888, %v1881, %v1885
    %v1890 = vand.u32 2147483647, %v1880
    %vm1891 = vcmp.eq.f32.partialorder %v1890, 8.507059e+37
    %v1892 = vand.u32 %v1880, 2147483648
    %v1893 = vor.u32 1.1754944e-38, %v1892
    %v1894 = vsel %vm1891, %v1893, %v1889
    %v1895 = vmul.f32 1.0, %v1894
    %v1896 = vtanh.pop %v1876
    %v1897 = vmul.f32 %v1895, %v1836
    %1899 = vrot.lane.b32.xlu0 %v1896, 64
    %v1900 = vpop.permute.xlu0 %1899
    %v1902 = vmul.f32 %v1895, %v1900
    %1904 = vrot.lane.b32.xlu0 %v1902, 32
    %v1905 = vpop.permute.xlu0 %1904
    %v1907 = vadd.f32 %v1897, %v1905
    %v1908 = vtanh.pop %v1907
    %1910 = vrot.lane.b32.xlu0 %v1908, 64
    %v1911 = vpop.permute.xlu0 %1910
    %v1913 = vmul.f32 %v1895, %v1911
    %1915 = vrot.lane.b32.xlu0 %v1913, 32
    %v1916 = vpop.permute.xlu0 %1915
    %s1918 = scalar_lea.vmem [#allocation6], 28
    %1919 = vst.msk [vmem:[%s1918] sm:$0xf] %vm413, %v1916
    %v1920 = vld [vmem:[%s1323] sm:$0xf]
    %v1921 = vld [vmem:[%s3 + $0x68] sm:$0xff]
    %v1922 = vld [vmem:[%s3 + $0x70] sm:$0xff]
    %v1923 = vld [vmem:[%s3 + $0x78] sm:$0xff]
    %v1924 = vld [vmem:[%s3 + $0x80] sm:$0xff]
    %v1925 = vsel %vm347, %v1916, 0
    %1927 = vmatpush.msra.mxu0 0.0
    %1928 = vmatpush.msra.mxu0 0.0
    %1929 = vmatpush.msra.mxu0 0.0
    %1930 = vmatpush.msra.mxu0 0.0
    %1931 = vmatpush.msra.mxu0 0.0
    %1932 = vmatpush.msra.mxu0 0.0
    %1933 = vmatpush.msra.mxu0 0.0
    %1934 = vmatpush.msra.mxu0 0.0
    %1935 = vmatpush.msra.mxu0 0.0
    %1936 = vmatpush.msra.mxu0 0.0
    %1937 = vmatpush.msra.mxu0 0.0
    %1938 = vmatpush.msra.mxu0 0.0
    %1939 = vmatpush.msra.mxu0 %v1924
    %1940 = vmatpush.msra.mxu0 %v1923
    %1941 = vmatpush.msra.mxu0 %v1922
    %1942 = vmatpush.msra.mxu0 %v1921
    %1943 = vmatmul.f32.gmra.mxu0 %v1925
    %v1944 = vpop.f32.mrf.mxu0
    %v1945 = vadd.f32 0.0, %v1944
    %1946 = vdwg.mxu0
    %v1947 = vadd.f32 %v1920, %v1945
    %v1948 = vxor.u32 %v1947, 2147483648
    %v1949 = vmul.f32 %v1948, 1.442695
    %v1950 = vpow.pop %v1949
    %v1951 = vadd.f32 %v1950, 1.0
    %v1952 = vrcp.pop %v1951
    %v1953 = vmul.f32 %v1951, %v1952
    %v1954 = vsub.f32 1.0, %v1953
    %v1955 = vmul.f32 %v1952, %v1954
    %v1956 = vadd.f32 %v1952, %v1955
    %vm1957 = vweird.f32 %v1951
    %vm1958 = vweird.f32 %v1952
    %vm1959 = vmor %vm1957, %vm1958
    %v1960 = vsel %vm1959, %v1952, %v1956
    %v1961 = vand.u32 2147483647, %v1951
    %vm1962 = vcmp.eq.f32.partialorder %v1961, 8.507059e+37
    %v1963 = vand.u32 %v1951, 2147483648
    %v1964 = vor.u32 1.1754944e-38, %v1963
    %v1965 = vsel %vm1962, %v1964, %v1960
    %v1966 = vmul.f32 1.0, %v1965
    %v1967 = vtanh.pop %v1947
    %v1968 = vmul.f32 %v1966, %v1907
    %1970 = vrot.lane.b32.xlu0 %v1967, 64
    %v1971 = vpop.permute.xlu0 %1970
    %v1973 = vmul.f32 %v1966, %v1971
    %1975 = vrot.lane.b32.xlu0 %v1973, 32
    %v1976 = vpop.permute.xlu0 %1975
    %v1978 = vadd.f32 %v1968, %v1976
    %v1979 = vtanh.pop %v1978
    %1981 = vrot.lane.b32.xlu0 %v1979, 64
    %v1982 = vpop.permute.xlu0 %1981
    %v1984 = vmul.f32 %v1966, %v1982
    %1986 = vrot.lane.b32.xlu0 %v1984, 32
    %v1987 = vpop.permute.xlu0 %1986
    %s1989 = scalar_lea.vmem [#allocation6], 32
    %1990 = vst.msk [vmem:[%s1989] sm:$0xf] %vm413, %v1987
    %v1991 = vld [vmem:[%s1353] sm:$0xf]
    %v1992 = vld [vmem:[%s3 + $0x68] sm:$0xff]
    %v1993 = vld [vmem:[%s3 + $0x70] sm:$0xff]
    %v1994 = vld [vmem:[%s3 + $0x78] sm:$0xff]
    %v1995 = vld [vmem:[%s3 + $0x80] sm:$0xff]
    %v1996 = vsel %vm347, %v1987, 0
    %1998 = vmatpush.msra.mxu0 0.0
    %1999 = vmatpush.msra.mxu0 0.0
    %2000 = vmatpush.msra.mxu0 0.0
    %2001 = vmatpush.msra.mxu0 0.0
    %2002 = vmatpush.msra.mxu0 0.0
    %2003 = vmatpush.msra.mxu0 0.0
    %2004 = vmatpush.msra.mxu0 0.0
    %2005 = vmatpush.msra.mxu0 0.0
    %2006 = vmatpush.msra.mxu0 0.0
    %2007 = vmatpush.msra.mxu0 0.0
    %2008 = vmatpush.msra.mxu0 0.0
    %2009 = vmatpush.msra.mxu0 0.0
    %2010 = vmatpush.msra.mxu0 %v1995
    %2011 = vmatpush.msra.mxu0 %v1994
    %2012 = vmatpush.msra.mxu0 %v1993
    %2013 = vmatpush.msra.mxu0 %v1992
    %2014 = vmatmul.f32.gmra.mxu0 %v1996
    %v2015 = vpop.f32.mrf.mxu0
    %v2016 = vadd.f32 0.0, %v2015
    %2017 = vdwg.mxu0
    %v2018 = vadd.f32 %v1991, %v2016
    %v2019 = vxor.u32 %v2018, 2147483648
    %v2020 = vmul.f32 %v2019, 1.442695
    %v2021 = vpow.pop %v2020
    %v2022 = vadd.f32 %v2021, 1.0
    %v2023 = vrcp.pop %v2022
    %v2024 = vmul.f32 %v2022, %v2023
    %v2025 = vsub.f32 1.0, %v2024
    %v2026 = vmul.f32 %v2023, %v2025
    %v2027 = vadd.f32 %v2023, %v2026
    %vm2028 = vweird.f32 %v2022
    %vm2029 = vweird.f32 %v2023
    %vm2030 = vmor %vm2028, %vm2029
    %v2031 = vsel %vm2030, %v2023, %v2027
    %v2032 = vand.u32 2147483647, %v2022
    %vm2033 = vcmp.eq.f32.partialorder %v2032, 8.507059e+37
    %v2034 = vand.u32 %v2022, 2147483648
    %v2035 = vor.u32 1.1754944e-38, %v2034
    %v2036 = vsel %vm2033, %v2035, %v2031
    %v2037 = vmul.f32 1.0, %v2036
    %v2038 = vtanh.pop %v2018
    %v2039 = vmul.f32 %v2037, %v1978
    %2041 = vrot.lane.b32.xlu0 %v2038, 64
    %v2042 = vpop.permute.xlu0 %2041
    %v2044 = vmul.f32 %v2037, %v2042
    %2046 = vrot.lane.b32.xlu0 %v2044, 32
    %v2047 = vpop.permute.xlu0 %2046
    %v2049 = vadd.f32 %v2039, %v2047
    %v2050 = vtanh.pop %v2049
    %2052 = vrot.lane.b32.xlu0 %v2050, 64
    %v2053 = vpop.permute.xlu0 %2052
    %v2055 = vmul.f32 %v2037, %v2053
    %2057 = vrot.lane.b32.xlu0 %v2055, 32
    %v2058 = vpop.permute.xlu0 %2057
    %s2060 = scalar_lea.vmem [#allocation6], 36
    %2061 = vst.msk [vmem:[%s2060] sm:$0xf] %vm413, %v2058
    %v2062 = vld [vmem:[%s4] sm:$0x1]
    %v2063 = vperm.slane %v2062, 0
    %v2064 = vld [vmem:[%s4 + $0x1] sm:$0x1]
    %v2065 = vperm.slane %v2064, 0
    %v2066 = vld [vmem:[%s4 + $0x2] sm:$0x1]
    %v2067 = vperm.slane %v2066, 0
    %v2068 = vld [vmem:[%s4 + $0x3] sm:$0x1]
    %v2069 = vperm.slane %v2068, 0
    %v2070 = vld [vmem:[%s4 + $0x4] sm:$0x1]
    %v2071 = vperm.slane %v2070, 0
    %v2072 = vld [vmem:[#allocation6] sm:$0xf]
    %v2073 = vld [vmem:[#allocation6 + $0x4] sm:$0xf]
    %v2074 = vld [vmem:[#allocation6 + $0x8] sm:$0xf]
    %v2075 = vld [vmem:[#allocation6 + $0xc] sm:$0xf]
    %v2076 = vld [vmem:[#allocation6 + $0x10] sm:$0xf]
    %v2077 = vld [vmem:[#allocation6 + $0x14] sm:$0xf]
    %v2078 = vld [vmem:[#allocation6 + $0x18] sm:$0xf]
    %v2079 = vld [vmem:[#allocation6 + $0x1c] sm:$0xf]
    %v2080 = vld [vmem:[#allocation6 + $0x20] sm:$0xf]
    %v2081 = vld [vmem:[#allocation6 + $0x24] sm:$0xf]
    %v2082 = vmul.f32 %v2072, %v2071
    %v2083 = vmul.f32 %v2073, %v2071
    %v2084 = vmul.f32 %v2074, %v2071
    %v2085 = vmul.f32 %v2075, %v2071
    %v2086 = vmul.f32 %v2076, %v2071
    %v2087 = vmul.f32 %v2077, %v2071
    %v2088 = vmul.f32 %v2078, %v2071
    %v2089 = vmul.f32 %v2079, %v2071
    %v2090 = vmul.f32 %v2080, %v2071
    %v2091 = vmul.f32 %v2081, %v2071
    %v2092 = vsel %vm413, %v2082, 0.0
    %2093 = vadd.xlane.f32.xlu0 %v2092
    %v2094 = vpop.xlane.xlu0 %2093
    %v2095 = vsel %vm413, %v2083, 0.0
    %2096 = vadd.xlane.f32.xlu0 %v2095
    %v2097 = vpop.xlane.xlu0 %2096
    %v2098 = vsel %vm413, %v2084, 0.0
    %2099 = vadd.xlane.f32.xlu0 %v2098
    %v2100 = vpop.xlane.xlu0 %2099
    %v2101 = vsel %vm413, %v2085, 0.0
    %2102 = vadd.xlane.f32.xlu0 %v2101
    %v2103 = vpop.xlane.xlu0 %2102
    %v2104 = vsel %vm413, %v2086, 0.0
    %2105 = vadd.xlane.f32.xlu0 %v2104
    %v2106 = vpop.xlane.xlu0 %2105
    %v2107 = vsel %vm413, %v2087, 0.0
    %2108 = vadd.xlane.f32.xlu0 %v2107
    %v2109 = vpop.xlane.xlu0 %2108
    %v2110 = vsel %vm413, %v2088, 0.0
    %2111 = vadd.xlane.f32.xlu0 %v2110
    %v2112 = vpop.xlane.xlu0 %2111
    %v2113 = vsel %vm413, %v2089, 0.0
    %2114 = vadd.xlane.f32.xlu0 %v2113
    %v2115 = vpop.xlane.xlu0 %2114
    %v2116 = vsel %vm413, %v2090, 0.0
    %2117 = vadd.xlane.f32.xlu0 %v2116
    %v2118 = vpop.xlane.xlu0 %2117
    %v2119 = vsel %vm413, %v2091, 0.0
    %2120 = vadd.xlane.f32.xlu0 %v2119
    %v2121 = vpop.xlane.xlu0 %2120
    %v2132 = vlaneseq
    %v2133 = vand.u32 %v2132, 127
    %v2134 = vperm.slane %v2094, %v2133
    %v2135 = vperm.slane %v2097, %v2133
    %v2136 = vperm.slane %v2100, %v2133
    %v2137 = vperm.slane %v2103, %v2133
    %v2138 = vperm.slane %v2106, %v2133
    %v2139 = vperm.slane %v2109, %v2133
    %v2140 = vperm.slane %v2112, %v2133
    %v2141 = vperm.slane %v2115, %v2133
    %v2142 = vperm.slane %v2118, %v2133
    %v2143 = vperm.slane %v2121, %v2133
    %vm2144 = vcmask 1041409
    %v2145 = vsel %vm2144, %v2135, %v2134
    %vm2146 = vcmask 1042434
    %v2147 = vsel %vm2146, %v2136, %v2145
    %vm2148 = vcmask 1043459
    %v2149 = vsel %vm2148, %v2137, %v2147
    %vm2150 = vcmask 1044484
    %v2151 = vsel %vm2150, %v2138, %v2149
    %vm2152 = vcmask 1045509
    %v2153 = vsel %vm2152, %v2139, %v2151
    %vm2154 = vcmask 1046534
    %v2155 = vsel %vm2154, %v2140, %v2153
    %vm2156 = vcmask 1047559
    %v2157 = vsel %vm2156, %v2141, %v2155
    %v2158 = vsel %vm2144, %v2143, %v2142
    %vm2161 = vcmask 31744
    %2162 = vst.msk [vmem:[#allocation7] sm:$0xff] %vm2161, %v2157
    %vm2163 = vcmask 25600
    %2164 = vst.msk [vmem:[#allocation7 + $0x8] sm:$0x3] %vm2163, %v2158
    %v2165 = vld [vmem:[%s3 + $0x172] sm:$0x1]
    %v2166 = vperm.slane %v2165, 0
    %v2167 = vld [vmem:[%s1] sm:$0xf]
    %v2168 = vld [vmem:[%s3 + $0x88] sm:$0xff]
    %v2169 = vld [vmem:[%s3 + $0x90] sm:$0xff]
    %v2170 = vld [vmem:[%s3 + $0x98] sm:$0xff]
    %v2171 = vld [vmem:[%s3 + $0xa0] sm:$0xff]
    %v2172 = vld [vmem:[%s3 + $0xa8] sm:$0xff]
    %v2174 = vsel %vm29, %v2167, 0
    %2176 = vmatpush.msra.mxu0 0.0
    %2177 = vmatpush.msra.mxu0 0.0
    %2178 = vmatpush.msra.mxu0 0.0
    %2179 = vmatpush.msra.mxu0 0.0
    %2180 = vmatpush.msra.mxu0 0.0
    %2181 = vmatpush.msra.mxu0 0.0
    %2182 = vmatpush.msra.mxu0 0.0
    %2183 = vmatpush.msra.mxu0 0.0
    %2184 = vmatpush.msra.mxu0 0.0
    %2185 = vmatpush.msra.mxu0 0.0
    %2186 = vmatpush.msra.mxu0 0.0
    %2187 = vmatpush.msra.mxu0 %v2172
    %2188 = vmatpush.msra.mxu0 %v2171
    %2189 = vmatpush.msra.mxu0 %v2170
    %2190 = vmatpush.msra.mxu0 %v2169
    %2191 = vmatpush.msra.mxu0 %v2168
    %2192 = vmatmul.f32.gmra.mxu0 %v2174
    %v2193 = vpop.f32.mrf.mxu0
    %v2194 = vadd.f32 %v2166, %v2193
    %2195 = vdwg.mxu0
    %2196 = vst [vmem:[#allocation4] sm:$0xf] %v2194
    %s2197 = scalar_lea.vmem %s1, 4
    %v2198 = vld [vmem:[%s2197] sm:$0xf]
    %v2199 = vld [vmem:[%s3 + $0x88] sm:$0xff]
    %v2200 = vld [vmem:[%s3 + $0x90] sm:$0xff]
    %v2201 = vld [vmem:[%s3 + $0x98] sm:$0xff]
    %v2202 = vld [vmem:[%s3 + $0xa0] sm:$0xff]
    %v2203 = vld [vmem:[%s3 + $0xa8] sm:$0xff]
    %v2205 = vsel %vm29, %v2198, 0
    %2207 = vmatpush.msra.mxu0 0.0
    %2208 = vmatpush.msra.mxu0 0.0
    %2209 = vmatpush.msra.mxu0 0.0
    %2210 = vmatpush.msra.mxu0 0.0
    %2211 = vmatpush.msra.mxu0 0.0
    %2212 = vmatpush.msra.mxu0 0.0
    %2213 = vmatpush.msra.mxu0 0.0
    %2214 = vmatpush.msra.mxu0 0.0
    %2215 = vmatpush.msra.mxu0 0.0
    %2216 = vmatpush.msra.mxu0 0.0
    %2217 = vmatpush.msra.mxu0 0.0
    %2218 = vmatpush.msra.mxu0 %v2203
    %2219 = vmatpush.msra.mxu0 %v2202
    %2220 = vmatpush.msra.mxu0 %v2201
    %2221 = vmatpush.msra.mxu0 %v2200
    %2222 = vmatpush.msra.mxu0 %v2199
    %2223 = vmatmul.f32.gmra.mxu0 %v2205
    %v2224 = vpop.f32.mrf.mxu0
    %v2225 = vadd.f32 %v2166, %v2224
    %2226 = vdwg.mxu0
    %s2227 = scalar_lea.vmem [#allocation4], 4
    %2228 = vst [vmem:[%s2227] sm:$0xf] %v2225
    %s2229 = scalar_lea.vmem %s1, 8
    %v2230 = vld [vmem:[%s2229] sm:$0xf]
    %v2231 = vld [vmem:[%s3 + $0x88] sm:$0xff]
    %v2232 = vld [vmem:[%s3 + $0x90] sm:$0xff]
    %v2233 = vld [vmem:[%s3 + $0x98] sm:$0xff]
    %v2234 = vld [vmem:[%s3 + $0xa0] sm:$0xff]
    %v2235 = vld [vmem:[%s3 + $0xa8] sm:$0xff]
    %v2237 = vsel %vm29, %v2230, 0
    %2239 = vmatpush.msra.mxu0 0.0
    %2240 = vmatpush.msra.mxu0 0.0
    %2241 = vmatpush.msra.mxu0 0.0
    %2242 = vmatpush.msra.mxu0 0.0
    %2243 = vmatpush.msra.mxu0 0.0
    %2244 = vmatpush.msra.mxu0 0.0
    %2245 = vmatpush.msra.mxu0 0.0
    %2246 = vmatpush.msra.mxu0 0.0
    %2247 = vmatpush.msra.mxu0 0.0
    %2248 = vmatpush.msra.mxu0 0.0
    %2249 = vmatpush.msra.mxu0 0.0
    %2250 = vmatpush.msra.mxu0 %v2235
    %2251 = vmatpush.msra.mxu0 %v2234
    %2252 = vmatpush.msra.mxu0 %v2233
    %2253 = vmatpush.msra.mxu0 %v2232
    %2254 = vmatpush.msra.mxu0 %v2231
    %2255 = vmatmul.f32.gmra.mxu0 %v2237
    %v2256 = vpop.f32.mrf.mxu0
    %v2257 = vadd.f32 %v2166, %v2256
    %2258 = vdwg.mxu0
    %s2259 = scalar_lea.vmem [#allocation4], 8
    %2260 = vst [vmem:[%s2259] sm:$0xf] %v2257
    %s2261 = scalar_lea.vmem %s1, 12
    %v2262 = vld [vmem:[%s2261] sm:$0xf]
    %v2263 = vld [vmem:[%s3 + $0x88] sm:$0xff]
    %v2264 = vld [vmem:[%s3 + $0x90] sm:$0xff]
    %v2265 = vld [vmem:[%s3 + $0x98] sm:$0xff]
    %v2266 = vld [vmem:[%s3 + $0xa0] sm:$0xff]
    %v2267 = vld [vmem:[%s3 + $0xa8] sm:$0xff]
    %v2269 = vsel %vm29, %v2262, 0
    %2271 = vmatpush.msra.mxu0 0.0
    %2272 = vmatpush.msra.mxu0 0.0
    %2273 = vmatpush.msra.mxu0 0.0
    %2274 = vmatpush.msra.mxu0 0.0
    %2275 = vmatpush.msra.mxu0 0.0
    %2276 = vmatpush.msra.mxu0 0.0
    %2277 = vmatpush.msra.mxu0 0.0
    %2278 = vmatpush.msra.mxu0 0.0
    %2279 = vmatpush.msra.mxu0 0.0
    %2280 = vmatpush.msra.mxu0 0.0
    %2281 = vmatpush.msra.mxu0 0.0
    %2282 = vmatpush.msra.mxu0 %v2267
    %2283 = vmatpush.msra.mxu0 %v2266
    %2284 = vmatpush.msra.mxu0 %v2265
    %2285 = vmatpush.msra.mxu0 %v2264
    %2286 = vmatpush.msra.mxu0 %v2263
    %2287 = vmatmul.f32.gmra.mxu0 %v2269
    %v2288 = vpop.f32.mrf.mxu0
    %v2289 = vadd.f32 %v2166, %v2288
    %2290 = vdwg.mxu0
    %s2291 = scalar_lea.vmem [#allocation4], 12
    %2292 = vst [vmem:[%s2291] sm:$0xf] %v2289
    %s2293 = scalar_lea.vmem %s1, 16
    %v2294 = vld [vmem:[%s2293] sm:$0xf]
    %v2295 = vld [vmem:[%s3 + $0x88] sm:$0xff]
    %v2296 = vld [vmem:[%s3 + $0x90] sm:$0xff]
    %v2297 = vld [vmem:[%s3 + $0x98] sm:$0xff]
    %v2298 = vld [vmem:[%s3 + $0xa0] sm:$0xff]
    %v2299 = vld [vmem:[%s3 + $0xa8] sm:$0xff]
    %v2301 = vsel %vm29, %v2294, 0
    %2303 = vmatpush.msra.mxu0 0.0
    %2304 = vmatpush.msra.mxu0 0.0
    %2305 = vmatpush.msra.mxu0 0.0
    %2306 = vmatpush.msra.mxu0 0.0
    %2307 = vmatpush.msra.mxu0 0.0
    %2308 = vmatpush.msra.mxu0 0.0
    %2309 = vmatpush.msra.mxu0 0.0
    %2310 = vmatpush.msra.mxu0 0.0
    %2311 = vmatpush.msra.mxu0 0.0
    %2312 = vmatpush.msra.mxu0 0.0
    %2313 = vmatpush.msra.mxu0 0.0
    %2314 = vmatpush.msra.mxu0 %v2299
    %2315 = vmatpush.msra.mxu0 %v2298
    %2316 = vmatpush.msra.mxu0 %v2297
    %2317 = vmatpush.msra.mxu0 %v2296
    %2318 = vmatpush.msra.mxu0 %v2295
    %2319 = vmatmul.f32.gmra.mxu0 %v2301
    %v2320 = vpop.f32.mrf.mxu0
    %v2321 = vadd.f32 %v2166, %v2320
    %2322 = vdwg.mxu0
    %s2323 = scalar_lea.vmem [#allocation4], 16
    %2324 = vst [vmem:[%s2323] sm:$0xf] %v2321
    %v2325 = vld [vmem:[%s3 + $0x173] sm:$0x1]
    %v2326 = vperm.slane %v2325, 0
    %v2327 = vld [vmem:[%s2] sm:$0xf]
    %v2328 = vld [vmem:[%s3 + $0x150] sm:$0xff]
    %v2329 = vld [vmem:[%s3 + $0x158] sm:$0xff]
    %v2330 = vld [vmem:[%s3 + $0x160] sm:$0xff]
    %v2331 = vld [vmem:[%s3 + $0x168] sm:$0xff]
    %v2332 = vld [vmem:[%s3 + $0x174] sm:$0x1]
    %v2333 = vperm.slane %v2332, 0
    %v2335 = vsel %vm347, %v2327, 0
    %2337 = vmatpush.msra.mxu0 0.0
    %2338 = vmatpush.msra.mxu0 0.0
    %2339 = vmatpush.msra.mxu0 0.0
    %2340 = vmatpush.msra.mxu0 0.0
    %2341 = vmatpush.msra.mxu0 0.0
    %2342 = vmatpush.msra.mxu0 0.0
    %2343 = vmatpush.msra.mxu0 0.0
    %2344 = vmatpush.msra.mxu0 0.0
    %2345 = vmatpush.msra.mxu0 0.0
    %2346 = vmatpush.msra.mxu0 0.0
    %2347 = vmatpush.msra.mxu0 0.0
    %2348 = vmatpush.msra.mxu0 0.0
    %2349 = vmatpush.msra.mxu0 %v2331
    %2350 = vmatpush.msra.mxu0 %v2330
    %2351 = vmatpush.msra.mxu0 %v2329
    %2352 = vmatpush.msra.mxu0 %v2328
    %2353 = vmatmul.f32.gmra.mxu0 %v2335
    %v2354 = vpop.f32.mrf.mxu0
    %v2355 = vadd.f32 %v2333, %v2354
    %2356 = vdwg.mxu0
    %2358 = vrot.lane.b32.xlu0 %v2063, 96
    %v2359 = vpop.permute.xlu0 %2358
    %v2361 = vmul.f32 %v1047, %v2359
    %2363 = vrot.lane.b32.xlu0 %v2065, 96
    %v2364 = vpop.permute.xlu0 %2363
    %v2366 = vmul.f32 %v2055, %v2364
    %v2367 = vadd.f32 %v2361, %v2366
    %2369 = vrot.lane.b32.xlu0 %v2067, 32
    %v2370 = vpop.permute.xlu0 %2369
    %v2372 = vmul.f32 %v1041, %v2370
    %2374 = vrot.lane.b32.xlu0 %v2372, 64
    %v2375 = vpop.permute.xlu0 %2374
    %v2377 = vadd.f32 %v2367, %v2375
    %2379 = vrot.lane.b32.xlu0 %v2069, 32
    %v2380 = vpop.permute.xlu0 %2379
    %v2382 = vmul.f32 %v2049, %v2380
    %2384 = vrot.lane.b32.xlu0 %v2382, 64
    %v2385 = vpop.permute.xlu0 %2384
    %v2387 = vadd.f32 %v2377, %v2385
    %2389 = vrot.lane.b32.xlu0 %v2387, 32
    %v2390 = vpop.permute.xlu0 %2389
    %v2392 = vsel %vm413, %v2390, 0.0
    %2393 = vadd.xlane.f32.xlu0 %v2392
    %v2394 = vpop.xlane.xlu0 %2393
    %v2395 = vld [vmem:[#allocation7] sm:$0xff]
    %v2396 = vld [vmem:[#allocation7 + $0x8] sm:$0x3]
    %v2398 = vperm.slane %v2394, %v2133
    %v2399 = vsel %vm2146, %v2398, %v2398
    %v2400 = vsel %vm2148, %v2398, %v2399
    %v2401 = vsel %vm2150, %v2398, %v2400
    %v2402 = vsel %vm2152, %v2398, %v2401
    %v2403 = vsel %vm2154, %v2398, %v2402
    %v2404 = vsel %vm2156, %v2398, %v2403
    %v2407 = vadd.f32 %v2395, %v2404
    %v2408 = vadd.f32 %v2396, %v2398
    %v2409 = vsel %vm2161, %v2407, -inf
    %2410 = vmax.xlane.f32.xlu0 %v2409
    %v2411 = vpop.xlane.xlu0 %2410
    %v2412 = vsel %vm2163, %v2408, -inf
    %2413 = vmax.xlane.f32.xlu0 %v2412
    %v2414 = vpop.xlane.xlu0 %2413
    %v2415 = vsub.f32 %v2407, %v2411
    %v2416 = vsub.f32 %v2408, %v2414
    %v2417 = vmul.f32 %v2415, 1.442695
    %v2418 = vpow.pop %v2417
    %v2419 = vmul.f32 %v2416, 1.442695
    %v2420 = vpow.pop %v2419
    %v2421 = vsel %vm2161, %v2418, 0.0
    %2422 = vadd.xlane.f32.xlu0 %v2421
    %v2423 = vpop.xlane.xlu0 %2422
    %v2424 = vsel %vm2163, %v2420, 0.0
    %2425 = vadd.xlane.f32.xlu0 %v2424
    %v2426 = vpop.xlane.xlu0 %2425
    %v2427 = vrcp.pop %v2423
    %v2428 = vrcp.pop %v2426
    %v2429 = vmul.f32 %v2418, %v2427
    %v2430 = vmul.f32 %v2420, %v2428
    %v2431 = vperm.slane %v2429, 0
    %v2432 = vlaneseq
    %v2433 = vshrl.u32 %v2432, 7
    %2435 = vset.pattern.permute.xlu0 %v2433
    %2436 = vperm.xlu0 %2435, %v2431
    %v2437 = vpop.permute.xlu0 %2436
    %v2438 = vperm.slane %v2429, 1
    %v2439 = vlaneseq
    %v2440 = vshrl.u32 %v2439, 7
    %2442 = vset.pattern.permute.xlu0 %v2440
    %2443 = vperm.xlu0 %2442, %v2438
    %v2444 = vpop.permute.xlu0 %2443
    %v2445 = vperm.slane %v2429, 2
    %v2446 = vlaneseq
    %v2447 = vshrl.u32 %v2446, 7
    %2449 = vset.pattern.permute.xlu0 %v2447
    %2450 = vperm.xlu0 %2449, %v2445
    %v2451 = vpop.permute.xlu0 %2450
    %v2452 = vperm.slane %v2429, 3
    %v2453 = vlaneseq
    %v2454 = vshrl.u32 %v2453, 7
    %2456 = vset.pattern.permute.xlu0 %v2454
    %2457 = vperm.xlu0 %2456, %v2452
    %v2458 = vpop.permute.xlu0 %2457
    %v2459 = vperm.slane %v2429, 4
    %v2460 = vlaneseq
    %v2461 = vshrl.u32 %v2460, 7
    %2463 = vset.pattern.permute.xlu0 %v2461
    %2464 = vperm.xlu0 %2463, %v2459
    %v2465 = vpop.permute.xlu0 %2464
    %v2466 = vperm.slane %v2429, 5
    %v2467 = vlaneseq
    %v2468 = vshrl.u32 %v2467, 7
    %2470 = vset.pattern.permute.xlu0 %v2468
    %2471 = vperm.xlu0 %2470, %v2466
    %v2472 = vpop.permute.xlu0 %2471
    %v2473 = vperm.slane %v2429, 6
    %v2474 = vlaneseq
    %v2475 = vshrl.u32 %v2474, 7
    %2477 = vset.pattern.permute.xlu0 %v2475
    %2478 = vperm.xlu0 %2477, %v2473
    %v2479 = vpop.permute.xlu0 %2478
    %v2480 = vperm.slane %v2429, 7
    %v2481 = vlaneseq
    %v2482 = vshrl.u32 %v2481, 7
    %2484 = vset.pattern.permute.xlu0 %v2482
    %2485 = vperm.xlu0 %2484, %v2480
    %v2486 = vpop.permute.xlu0 %2485
    %v2487 = vperm.slane %v2430, 0
    %v2488 = vlaneseq
    %v2489 = vshrl.u32 %v2488, 7
    %2491 = vset.pattern.permute.xlu0 %v2489
    %2492 = vperm.xlu0 %2491, %v2487
    %v2493 = vpop.permute.xlu0 %2492
    %v2494 = vperm.slane %v2430, 1
    %v2495 = vlaneseq
    %v2496 = vshrl.u32 %v2495, 7
    %2498 = vset.pattern.permute.xlu0 %v2496
    %2499 = vperm.xlu0 %2498, %v2494
    %v2500 = vpop.permute.xlu0 %2499
    %v2501 = vld [vmem:[#allocation6] sm:$0xf]
    %v2502 = vld [vmem:[#allocation6 + $0x4] sm:$0xf]
    %v2503 = vld [vmem:[#allocation6 + $0x8] sm:$0xf]
    %v2504 = vld [vmem:[#allocation6 + $0xc] sm:$0xf]
    %v2505 = vld [vmem:[#allocation6 + $0x10] sm:$0xf]
    %v2506 = vld [vmem:[#allocation6 + $0x14] sm:$0xf]
    %v2507 = vld [vmem:[#allocation6 + $0x18] sm:$0xf]
    %v2508 = vld [vmem:[#allocation6 + $0x1c] sm:$0xf]
    %v2509 = vld [vmem:[#allocation6 + $0x20] sm:$0xf]
    %v2510 = vld [vmem:[#allocation6 + $0x24] sm:$0xf]
    %v2511 = vmul.f32 %v2437, %v2501
    %v2512 = vmul.f32 %v2444, %v2502
    %v2513 = vmul.f32 %v2451, %v2503
    %v2514 = vmul.f32 %v2458, %v2504
    %v2515 = vmul.f32 %v2465, %v2505
    %v2516 = vmul.f32 %v2472, %v2506
    %v2517 = vmul.f32 %v2479, %v2507
    %v2518 = vmul.f32 %v2486, %v2508
    %v2519 = vmul.f32 %v2493, %v2509
    %v2520 = vmul.f32 %v2500, %v2510
    %v2521 = vsel %vm413, %v2511, 0.0
    %v2522 = vsel %vm413, %v2512, 0.0
    %v2523 = vadd.f32 %v2521, %v2522
    %v2524 = vsel %vm413, %v2513, 0.0
    %v2525 = vadd.f32 %v2523, %v2524
    %v2526 = vsel %vm413, %v2514, 0.0
    %v2527 = vadd.f32 %v2525, %v2526
    %v2528 = vsel %vm413, %v2515, 0.0
    %v2529 = vadd.f32 %v2527, %v2528
    %v2530 = vsel %vm413, %v2516, 0.0
    %v2531 = vadd.f32 %v2529, %v2530
    %v2532 = vsel %vm413, %v2517, 0.0
    %v2533 = vadd.f32 %v2531, %v2532
    %v2534 = vsel %vm413, %v2518, 0.0
    %v2535 = vadd.f32 %v2533, %v2534
    %v2536 = vsel %vm413, %v2519, 0.0
    %v2537 = vadd.f32 %v2535, %v2536
    %v2538 = vsel %vm413, %v2520, 0.0
    %v2539 = vadd.f32 %v2537, %v2538
    %v2540 = vld [vmem:[#allocation4] sm:$0xf]
    %v2541 = vld [vmem:[%s3 + $0xb0] sm:$0xff]
    %v2542 = vld [vmem:[%s3 + $0xb8] sm:$0xff]
    %v2543 = vld [vmem:[%s3 + $0xc0] sm:$0xff]
    %v2544 = vld [vmem:[%s3 + $0xc8] sm:$0xff]
    %v2546 = vsel %vm347, %v2539, 0
    %2548 = vmatpush.msra.mxu0 0.0
    %2549 = vmatpush.msra.mxu0 0.0
    %2550 = vmatpush.msra.mxu0 0.0
    %2551 = vmatpush.msra.mxu0 0.0
    %2552 = vmatpush.msra.mxu0 0.0
    %2553 = vmatpush.msra.mxu0 0.0
    %2554 = vmatpush.msra.mxu0 0.0
    %2555 = vmatpush.msra.mxu0 0.0
    %2556 = vmatpush.msra.mxu0 0.0
    %2557 = vmatpush.msra.mxu0 0.0
    %2558 = vmatpush.msra.mxu0 0.0
    %2559 = vmatpush.msra.mxu0 0.0
    %2560 = vmatpush.msra.mxu0 %v2544
    %2561 = vmatpush.msra.mxu0 %v2543
    %2562 = vmatpush.msra.mxu0 %v2542
    %2563 = vmatpush.msra.mxu0 %v2541
    %2564 = vmatmul.f32.gmra.mxu0 %v2546
    %v2565 = vpop.f32.mrf.mxu0
    %v2566 = vadd.f32 0.0, %v2565
    %2567 = vdwg.mxu0
    %v2568 = vadd.f32 %v2540, %v2566
    %v2569 = vld [vmem:[%s3 + $0xd0] sm:$0xff]
    %v2570 = vld [vmem:[%s3 + $0xd8] sm:$0xff]
    %v2571 = vld [vmem:[%s3 + $0xe0] sm:$0xff]
    %v2572 = vld [vmem:[%s3 + $0xe8] sm:$0xff]
    %v2573 = vsel %vm347, %v1050, 0
    %2575 = vmatpush.msra.mxu0 0.0
    %2576 = vmatpush.msra.mxu0 0.0
    %2577 = vmatpush.msra.mxu0 0.0
    %2578 = vmatpush.msra.mxu0 0.0
    %2579 = vmatpush.msra.mxu0 0.0
    %2580 = vmatpush.msra.mxu0 0.0
    %2581 = vmatpush.msra.mxu0 0.0
    %2582 = vmatpush.msra.mxu0 0.0
    %2583 = vmatpush.msra.mxu0 0.0
    %2584 = vmatpush.msra.mxu0 0.0
    %2585 = vmatpush.msra.mxu0 0.0
    %2586 = vmatpush.msra.mxu0 0.0
    %2587 = vmatpush.msra.mxu0 %v2572
    %2588 = vmatpush.msra.mxu0 %v2571
    %2589 = vmatpush.msra.mxu0 %v2570
    %2590 = vmatpush.msra.mxu0 %v2569
    %2591 = vmatmul.f32.gmra.mxu0 %v2573
    %v2592 = vpop.f32.mrf.mxu0
    %v2593 = vadd.f32 0.0, %v2592
    %2594 = vdwg.mxu0
    %v2595 = vadd.f32 %v2568, %v2593
    %v2596 = vxor.u32 %v2595, 2147483648
    %v2597 = vmul.f32 %v2596, 1.442695
    %v2598 = vpow.pop %v2597
    %v2599 = vadd.f32 %v2598, 1.0
    %v2600 = vrcp.pop %v2599
    %v2601 = vmul.f32 %v2599, %v2600
    %v2602 = vsub.f32 1.0, %v2601
    %v2603 = vmul.f32 %v2600, %v2602
    %v2604 = vadd.f32 %v2600, %v2603
    %vm2605 = vweird.f32 %v2599
    %vm2606 = vweird.f32 %v2600
    %vm2607 = vmor %vm2605, %vm2606
    %v2608 = vsel %vm2607, %v2600, %v2604
    %v2609 = vand.u32 2147483647, %v2599
    %vm2610 = vcmp.eq.f32.partialorder %v2609, 8.507059e+37
    %v2611 = vand.u32 %v2599, 2147483648
    %v2612 = vor.u32 1.1754944e-38, %v2611
    %v2613 = vsel %vm2610, %v2612, %v2608
    %v2614 = vmul.f32 1.0, %v2613
    %v2615 = vtanh.pop %v2595
    %v2616 = vmul.f32 %v2614, %v1041
    %2618 = vrot.lane.b32.xlu0 %v2615, 64
    %v2619 = vpop.permute.xlu0 %2618
    %v2621 = vmul.f32 %v2614, %v2619
    %2623 = vrot.lane.b32.xlu0 %v2621, 32
    %v2624 = vpop.permute.xlu0 %2623
    %v2626 = vadd.f32 %v2616, %v2624
    %v2627 = vtanh.pop %v2626
    %2629 = vrot.lane.b32.xlu0 %v2627, 64
    %v2630 = vpop.permute.xlu0 %2629
    %v2632 = vmul.f32 %v2614, %v2630
    %v2633 = vld [vmem:[%s3 + $0xf0] sm:$0xff]
    %v2634 = vld [vmem:[%s3 + $0xf8] sm:$0xff]
    %v2635 = vld [vmem:[%s3 + $0x100] sm:$0xff]
    %v2636 = vld [vmem:[%s3 + $0x108] sm:$0xff]
    %v2637 = vld [vmem:[%s3 + $0x110] sm:$0xff]
    %v2638 = vld [vmem:[%s3 + $0x118] sm:$0xff]
    %v2639 = vld [vmem:[%s3 + $0x120] sm:$0xff]
    %v2640 = vld [vmem:[%s3 + $0x128] sm:$0xff]
    %v2641 = vsel %vm347, %v2058, 0
    %2643 = vmatpush.msra.mxu0 0.0
    %2644 = vmatpush.msra.mxu0 0.0
    %2645 = vmatpush.msra.mxu0 0.0
    %2646 = vmatpush.msra.mxu0 0.0
    %2647 = vmatpush.msra.mxu0 0.0
    %2648 = vmatpush.msra.mxu0 0.0
    %2649 = vmatpush.msra.mxu0 0.0
    %2650 = vmatpush.msra.mxu0 0.0
    %2651 = vmatpush.msra.mxu0 0.0
    %2652 = vmatpush.msra.mxu0 0.0
    %2653 = vmatpush.msra.mxu0 0.0
    %2654 = vmatpush.msra.mxu0 0.0
    %2655 = vmatpush.msra.mxu0 %v2640
    %2656 = vmatpush.msra.mxu0 %v2639
    %2657 = vmatpush.msra.mxu0 %v2638
    %2658 = vmatpush.msra.mxu0 %v2637
    %2659 = vmatmul.f32.gmra.mxu0 %v2641
    %v2660 = vpop.f32.mrf.mxu0
    %v2661 = vadd.f32 0.0, %v2660
    %2662 = vdwg.mxu0
    %2664 = vrot.lane.b32.xlu0 %v2632, 32
    %v2665 = vpop.permute.xlu0 %2664
    %v2666 = vsel %vm347, %v2665, 0
    %2668 = vmatpush.msra.mxu0 0.0
    %2669 = vmatpush.msra.mxu0 0.0
    %2670 = vmatpush.msra.mxu0 0.0
    %2671 = vmatpush.msra.mxu0 0.0
    %2672 = vmatpush.msra.mxu0 0.0
    %2673 = vmatpush.msra.mxu0 0.0
    %2674 = vmatpush.msra.mxu0 0.0
    %2675 = vmatpush.msra.mxu0 0.0
    %2676 = vmatpush.msra.mxu0 0.0
    %2677 = vmatpush.msra.mxu0 0.0
    %2678 = vmatpush.msra.mxu0 0.0
    %2679 = vmatpush.msra.mxu0 0.0
    %2680 = vmatpush.msra.mxu0 %v2636
    %2681 = vmatpush.msra.mxu0 %v2635
    %2682 = vmatpush.msra.mxu0 %v2634
    %2683 = vmatpush.msra.mxu0 %v2633
    %2684 = vmatmul.f32.gmra.mxu0 %v2666
    %v2685 = vpop.f32.mrf.mxu0
    %v2686 = vadd.f32 %v2661, %v2685
    %2687 = vdwg.mxu0
    %v2688 = vadd.f32 %v2686, %v2326
    %v2689 = vxor.u32 %v2688, 2147483648
    %v2690 = vmul.f32 %v2689, 1.442695
    %v2691 = vpow.pop %v2690
    %v2692 = vadd.f32 %v2691, 1.0
    %v2693 = vrcp.pop %v2692
    %v2694 = vmul.f32 %v2692, %v2693
    %v2695 = vsub.f32 1.0, %v2694
    %v2696 = vmul.f32 %v2693, %v2695
    %v2697 = vadd.f32 %v2693, %v2696
    %vm2698 = vweird.f32 %v2692
    %vm2699 = vweird.f32 %v2693
    %vm2700 = vmor %vm2698, %vm2699
    %v2701 = vsel %vm2700, %v2693, %v2697
    %v2702 = vand.u32 2147483647, %v2692
    %vm2703 = vcmp.eq.f32.partialorder %v2702, 8.507059e+37
    %v2704 = vand.u32 %v2692, 2147483648
    %v2705 = vor.u32 1.1754944e-38, %v2704
    %v2706 = vsel %vm2703, %v2705, %v2701
    %v2707 = vmul.f32 1.0, %v2706
    %v2708 = vtanh.pop %v2688
    %v2709 = vmul.f32 %v2707, %v2049
    %2711 = vrot.lane.b32.xlu0 %v2708, 64
    %v2712 = vpop.permute.xlu0 %2711
    %v2714 = vmul.f32 %v2707, %v2712
    %2716 = vrot.lane.b32.xlu0 %v2714, 32
    %v2717 = vpop.permute.xlu0 %2716
    %v2719 = vadd.f32 %v2709, %v2717
    %v2720 = vtanh.pop %v2719
    %2722 = vrot.lane.b32.xlu0 %v2720, 64
    %v2723 = vpop.permute.xlu0 %2722
    %v2725 = vmul.f32 %v2707, %v2723
    %2727 = vrot.lane.b32.xlu0 %v2725, 32
    %v2728 = vpop.permute.xlu0 %2727
    %2730 = vst.msk [vmem:[#allocation6] sm:$0xf] %vm413, %v2728
    %2732 = vrot.lane.b32.xlu0 %v2071, 96
    %v2733 = vpop.permute.xlu0 %2732
    %v2735 = vmul.f32 %v2725, %v2733
    %2737 = vrot.lane.b32.xlu0 %v2735, 32
    %v2738 = vpop.permute.xlu0 %2737
    %v2740 = vsel %vm413, %v2738, 0.0
    %2741 = vadd.xlane.f32.xlu0 %v2740
    %v2742 = vpop.xlane.xlu0 %2741
    %v2744 = vperm.slane %v2742, %v2133
    %vm2746 = vcmask 24576
    %2747 = vst.msk [vmem:[#allocation7] sm:$0x1] %vm2746, %v2744
    %v2748 = vld [vmem:[%s3 + $0x130] sm:$0xff]
    %v2749 = vld [vmem:[%s3 + $0x138] sm:$0xff]
    %v2750 = vld [vmem:[%s3 + $0x140] sm:$0xff]
    %v2751 = vld [vmem:[%s3 + $0x148] sm:$0xff]
    %v2752 = vsel %vm347, %v2728, 0
    %2754 = vmatpush.msra.mxu0 0.0
    %2755 = vmatpush.msra.mxu0 0.0
    %2756 = vmatpush.msra.mxu0 0.0
    %2757 = vmatpush.msra.mxu0 0.0
    %2758 = vmatpush.msra.mxu0 0.0
    %2759 = vmatpush.msra.mxu0 0.0
    %2760 = vmatpush.msra.mxu0 0.0
    %2761 = vmatpush.msra.mxu0 0.0
    %2762 = vmatpush.msra.mxu0 0.0
    %2763 = vmatpush.msra.mxu0 0.0
    %2764 = vmatpush.msra.mxu0 0.0
    %2765 = vmatpush.msra.mxu0 0.0
    %2766 = vmatpush.msra.mxu0 %v2751
    %2767 = vmatpush.msra.mxu0 %v2750
    %2768 = vmatpush.msra.mxu0 %v2749
    %2769 = vmatpush.msra.mxu0 %v2748
    %2770 = vmatmul.f32.gmra.mxu0 %v2752
    %v2771 = vpop.f32.mrf.mxu0
    %v2772 = vadd.f32 %v2355, %v2771
    %2773 = vdwg.mxu0
    %vm2774 = vcmask 60416
    %2775 = vst.msk [vmem:[#allocation8] sm:$0xf] %vm2774, %v2772
    %v2776 = vmul.f32 %v2632, %v2359
    %v2777 = vmul.f32 %v2725, %v2364
    %v2778 = vadd.f32 %v2776, %v2777
    %v2779 = vmul.f32 %v2626, %v2370
    %2781 = vrot.lane.b32.xlu0 %v2779, 64
    %v2782 = vpop.permute.xlu0 %2781
    %v2784 = vadd.f32 %v2778, %v2782
    %v2785 = vmul.f32 %v2719, %v2380
    %2787 = vrot.lane.b32.xlu0 %v2785, 64
    %v2788 = vpop.permute.xlu0 %2787
    %v2790 = vadd.f32 %v2784, %v2788
    %2792 = vrot.lane.b32.xlu0 %v2790, 32
    %v2793 = vpop.permute.xlu0 %2792
    %v2795 = vsel %vm413, %v2793, 0.0
    %2796 = vadd.xlane.f32.xlu0 %v2795
    %v2797 = vpop.xlane.xlu0 %2796
    %v2798 = vld [vmem:[#allocation7] sm:$0xff]
    %v2799 = vld [vmem:[#allocation7 + $0x8] sm:$0x3]
    %v2801 = vperm.slane %v2797, %v2133
    %v2802 = vsel %vm2146, %v2801, %v2801
    %v2803 = vsel %vm2148, %v2801, %v2802
    %v2804 = vsel %vm2150, %v2801, %v2803
    %v2805 = vsel %vm2152, %v2801, %v2804
    %v2806 = vsel %vm2154, %v2801, %v2805
    %v2807 = vsel %vm2156, %v2801, %v2806
    %v2810 = vadd.f32 %v2798, %v2807
    %v2811 = vadd.f32 %v2799, %v2801
    %v2812 = vsel %vm2161, %v2810, -inf
    %2813 = vmax.xlane.f32.xlu0 %v2812
    %v2814 = vpop.xlane.xlu0 %2813
    %v2815 = vsel %vm2163, %v2811, -inf
    %2816 = vmax.xlane.f32.xlu0 %v2815
    %v2817 = vpop.xlane.xlu0 %2816
    %v2818 = vsub.f32 %v2810, %v2814
    %v2819 = vsub.f32 %v2811, %v2817
    %v2820 = vmul.f32 %v2818, 1.442695
    %v2821 = vpow.pop %v2820
    %v2822 = vmul.f32 %v2819, 1.442695
    %v2823 = vpow.pop %v2822
    %v2824 = vsel %vm2161, %v2821, 0.0
    %2825 = vadd.xlane.f32.xlu0 %v2824
    %v2826 = vpop.xlane.xlu0 %2825
    %v2827 = vsel %vm2163, %v2823, 0.0
    %2828 = vadd.xlane.f32.xlu0 %v2827
    %v2829 = vpop.xlane.xlu0 %2828
    %v2830 = vrcp.pop %v2826
    %v2831 = vrcp.pop %v2829
    %v2832 = vmul.f32 %v2821, %v2830
    %v2833 = vmul.f32 %v2823, %v2831
    %v2834 = vperm.slane %v2832, 0
    %v2835 = vlaneseq
    %v2836 = vshrl.u32 %v2835, 7
    %2838 = vset.pattern.permute.xlu0 %v2836
    %2839 = vperm.xlu0 %2838, %v2834
    %v2840 = vpop.permute.xlu0 %2839
    %v2841 = vperm.slane %v2832, 1
    %v2842 = vlaneseq
    %v2843 = vshrl.u32 %v2842, 7
    %2845 = vset.pattern.permute.xlu0 %v2843
    %2846 = vperm.xlu0 %2845, %v2841
    %v2847 = vpop.permute.xlu0 %2846
    %v2848 = vperm.slane %v2832, 2
    %v2849 = vlaneseq
    %v2850 = vshrl.u32 %v2849, 7
    %2852 = vset.pattern.permute.xlu0 %v2850
    %2853 = vperm.xlu0 %2852, %v2848
    %v2854 = vpop.permute.xlu0 %2853
    %v2855 = vperm.slane %v2832, 3
    %v2856 = vlaneseq
    %v2857 = vshrl.u32 %v2856, 7
    %2859 = vset.pattern.permute.xlu0 %v2857
    %2860 = vperm.xlu0 %2859, %v2855
    %v2861 = vpop.permute.xlu0 %2860
    %v2862 = vperm.slane %v2832, 4
    %v2863 = vlaneseq
    %v2864 = vshrl.u32 %v2863, 7
    %2866 = vset.pattern.permute.xlu0 %v2864
    %2867 = vperm.xlu0 %2866, %v2862
    %v2868 = vpop.permute.xlu0 %2867
    %v2869 = vperm.slane %v2832, 5
    %v2870 = vlaneseq
    %v2871 = vshrl.u32 %v2870, 7
    %2873 = vset.pattern.permute.xlu0 %v2871
    %2874 = vperm.xlu0 %2873, %v2869
    %v2875 = vpop.permute.xlu0 %2874
    %v2876 = vperm.slane %v2832, 6
    %v2877 = vlaneseq
    %v2878 = vshrl.u32 %v2877, 7
    %2880 = vset.pattern.permute.xlu0 %v2878
    %2881 = vperm.xlu0 %2880, %v2876
    %v2882 = vpop.permute.xlu0 %2881
    %v2883 = vperm.slane %v2832, 7
    %v2884 = vlaneseq
    %v2885 = vshrl.u32 %v2884, 7
    %2887 = vset.pattern.permute.xlu0 %v2885
    %2888 = vperm.xlu0 %2887, %v2883
    %v2889 = vpop.permute.xlu0 %2888
    %v2890 = vperm.slane %v2833, 0
    %v2891 = vlaneseq
    %v2892 = vshrl.u32 %v2891, 7
    %2894 = vset.pattern.permute.xlu0 %v2892
    %2895 = vperm.xlu0 %2894, %v2890
    %v2896 = vpop.permute.xlu0 %2895
    %v2897 = vperm.slane %v2833, 1
    %v2898 = vlaneseq
    %v2899 = vshrl.u32 %v2898, 7
    %2901 = vset.pattern.permute.xlu0 %v2899
    %2902 = vperm.xlu0 %2901, %v2897
    %v2903 = vpop.permute.xlu0 %2902
    %v2904 = vld [vmem:[#allocation6] sm:$0xf]
    %v2905 = vld [vmem:[#allocation6 + $0x4] sm:$0xf]
    %v2906 = vld [vmem:[#allocation6 + $0x8] sm:$0xf]
    %v2907 = vld [vmem:[#allocation6 + $0xc] sm:$0xf]
    %v2908 = vld [vmem:[#allocation6 + $0x10] sm:$0xf]
    %v2909 = vld [vmem:[#allocation6 + $0x14] sm:$0xf]
    %v2910 = vld [vmem:[#allocation6 + $0x18] sm:$0xf]
    %v2911 = vld [vmem:[#allocation6 + $0x1c] sm:$0xf]
    %v2912 = vld [vmem:[#allocation6 + $0x20] sm:$0xf]
    %v2913 = vld [vmem:[#allocation6 + $0x24] sm:$0xf]
    %v2914 = vmul.f32 %v2840, %v2904
    %v2915 = vmul.f32 %v2847, %v2905
    %v2916 = vmul.f32 %v2854, %v2906
    %v2917 = vmul.f32 %v2861, %v2907
    %v2918 = vmul.f32 %v2868, %v2908
    %v2919 = vmul.f32 %v2875, %v2909
    %v2920 = vmul.f32 %v2882, %v2910
    %v2921 = vmul.f32 %v2889, %v2911
    %v2922 = vmul.f32 %v2896, %v2912
    %v2923 = vmul.f32 %v2903, %v2913
    %v2924 = vsel %vm413, %v2914, 0.0
    %v2925 = vsel %vm413, %v2915, 0.0
    %v2926 = vadd.f32 %v2924, %v2925
    %v2927 = vsel %vm413, %v2916, 0.0
    %v2928 = vadd.f32 %v2926, %v2927
    %v2929 = vsel %vm413, %v2917, 0.0
    %v2930 = vadd.f32 %v2928, %v2929
    %v2931 = vsel %vm413, %v2918, 0.0
    %v2932 = vadd.f32 %v2930, %v2931
    %v2933 = vsel %vm413, %v2919, 0.0
    %v2934 = vadd.f32 %v2932, %v2933
    %v2935 = vsel %vm413, %v2920, 0.0
    %v2936 = vadd.f32 %v2934, %v2935
    %v2937 = vsel %vm413, %v2921, 0.0
    %v2938 = vadd.f32 %v2936, %v2937
    %v2939 = vsel %vm413, %v2922, 0.0
    %v2940 = vadd.f32 %v2938, %v2939
    %v2941 = vsel %vm413, %v2923, 0.0
    %v2942 = vadd.f32 %v2940, %v2941
    %v2943 = vld [vmem:[%s2227] sm:$0xf]
    %v2944 = vld [vmem:[%s3 + $0xb0] sm:$0xff]
    %v2945 = vld [vmem:[%s3 + $0xb8] sm:$0xff]
    %v2946 = vld [vmem:[%s3 + $0xc0] sm:$0xff]
    %v2947 = vld [vmem:[%s3 + $0xc8] sm:$0xff]
    %v2949 = vsel %vm347, %v2942, 0
    %2951 = vmatpush.msra.mxu0 0.0
    %2952 = vmatpush.msra.mxu0 0.0
    %2953 = vmatpush.msra.mxu0 0.0
    %2954 = vmatpush.msra.mxu0 0.0
    %2955 = vmatpush.msra.mxu0 0.0
    %2956 = vmatpush.msra.mxu0 0.0
    %2957 = vmatpush.msra.mxu0 0.0
    %2958 = vmatpush.msra.mxu0 0.0
    %2959 = vmatpush.msra.mxu0 0.0
    %2960 = vmatpush.msra.mxu0 0.0
    %2961 = vmatpush.msra.mxu0 0.0
    %2962 = vmatpush.msra.mxu0 0.0
    %2963 = vmatpush.msra.mxu0 %v2947
    %2964 = vmatpush.msra.mxu0 %v2946
    %2965 = vmatpush.msra.mxu0 %v2945
    %2966 = vmatpush.msra.mxu0 %v2944
    %2967 = vmatmul.f32.gmra.mxu0 %v2949
    %v2968 = vpop.f32.mrf.mxu0
    %v2969 = vadd.f32 0.0, %v2968
    %2970 = vdwg.mxu0
    %v2971 = vadd.f32 %v2943, %v2969
    %v2972 = vld [vmem:[%s3 + $0xd0] sm:$0xff]
    %v2973 = vld [vmem:[%s3 + $0xd8] sm:$0xff]
    %v2974 = vld [vmem:[%s3 + $0xe0] sm:$0xff]
    %v2975 = vld [vmem:[%s3 + $0xe8] sm:$0xff]
    %2976 = vmatpush.msra.mxu0 0.0
    %2977 = vmatpush.msra.mxu0 0.0
    %2978 = vmatpush.msra.mxu0 0.0
    %2979 = vmatpush.msra.mxu0 0.0
    %2980 = vmatpush.msra.mxu0 0.0
    %2981 = vmatpush.msra.mxu0 0.0
    %2982 = vmatpush.msra.mxu0 0.0
    %2983 = vmatpush.msra.mxu0 0.0
    %2984 = vmatpush.msra.mxu0 0.0
    %2985 = vmatpush.msra.mxu0 0.0
    %2986 = vmatpush.msra.mxu0 0.0
    %2987 = vmatpush.msra.mxu0 0.0
    %2988 = vmatpush.msra.mxu0 %v2975
    %2989 = vmatpush.msra.mxu0 %v2974
    %2990 = vmatpush.msra.mxu0 %v2973
    %2991 = vmatpush.msra.mxu0 %v2972
    %2992 = vmatmul.f32.gmra.mxu0 %v2666
    %v2993 = vpop.f32.mrf.mxu0
    %v2994 = vadd.f32 0.0, %v2993
    %2995 = vdwg.mxu0
    %v2996 = vadd.f32 %v2971, %v2994
    %v2997 = vxor.u32 %v2996, 2147483648
    %v2998 = vmul.f32 %v2997, 1.442695
    %v2999 = vpow.pop %v2998
    %v3000 = vadd.f32 %v2999, 1.0
    %v3001 = vrcp.pop %v3000
    %v3002 = vmul.f32 %v3000, %v3001
    %v3003 = vsub.f32 1.0, %v3002
    %v3004 = vmul.f32 %v3001, %v3003
    %v3005 = vadd.f32 %v3001, %v3004
    %vm3006 = vweird.f32 %v3000
    %vm3007 = vweird.f32 %v3001
    %vm3008 = vmor %vm3006, %vm3007
    %v3009 = vsel %vm3008, %v3001, %v3005
    %v3010 = vand.u32 2147483647, %v3000
    %vm3011 = vcmp.eq.f32.partialorder %v3010, 8.507059e+37
    %v3012 = vand.u32 %v3000, 2147483648
    %v3013 = vor.u32 1.1754944e-38, %v3012
    %v3014 = vsel %vm3011, %v3013, %v3009
    %v3015 = vmul.f32 1.0, %v3014
    %v3016 = vtanh.pop %v2996
    %v3017 = vmul.f32 %v3015, %v2626
    %3019 = vrot.lane.b32.xlu0 %v3016, 64
    %v3020 = vpop.permute.xlu0 %3019
    %v3022 = vmul.f32 %v3015, %v3020
    %3024 = vrot.lane.b32.xlu0 %v3022, 32
    %v3025 = vpop.permute.xlu0 %3024
    %v3027 = vadd.f32 %v3017, %v3025
    %v3028 = vtanh.pop %v3027
    %3030 = vrot.lane.b32.xlu0 %v3028, 64
    %v3031 = vpop.permute.xlu0 %3030
    %v3033 = vmul.f32 %v3015, %v3031
    %v3034 = vld [vmem:[%s3 + $0xf0] sm:$0xff]
    %v3035 = vld [vmem:[%s3 + $0xf8] sm:$0xff]
    %v3036 = vld [vmem:[%s3 + $0x100] sm:$0xff]
    %v3037 = vld [vmem:[%s3 + $0x108] sm:$0xff]
    %v3038 = vld [vmem:[%s3 + $0x110] sm:$0xff]
    %v3039 = vld [vmem:[%s3 + $0x118] sm:$0xff]
    %v3040 = vld [vmem:[%s3 + $0x120] sm:$0xff]
    %v3041 = vld [vmem:[%s3 + $0x128] sm:$0xff]
    %3042 = vmatpush.msra.mxu0 0.0
    %3043 = vmatpush.msra.mxu0 0.0
    %3044 = vmatpush.msra.mxu0 0.0
    %3045 = vmatpush.msra.mxu0 0.0
    %3046 = vmatpush.msra.mxu0 0.0
    %3047 = vmatpush.msra.mxu0 0.0
    %3048 = vmatpush.msra.mxu0 0.0
    %3049 = vmatpush.msra.mxu0 0.0
    %3050 = vmatpush.msra.mxu0 0.0
    %3051 = vmatpush.msra.mxu0 0.0
    %3052 = vmatpush.msra.mxu0 0.0
    %3053 = vmatpush.msra.mxu0 0.0
    %3054 = vmatpush.msra.mxu0 %v3041
    %3055 = vmatpush.msra.mxu0 %v3040
    %3056 = vmatpush.msra.mxu0 %v3039
    %3057 = vmatpush.msra.mxu0 %v3038
    %3058 = vmatmul.f32.gmra.mxu0 %v2752
    %v3059 = vpop.f32.mrf.mxu0
    %v3060 = vadd.f32 0.0, %v3059
    %3061 = vdwg.mxu0
    %3063 = vrot.lane.b32.xlu0 %v3033, 32
    %v3064 = vpop.permute.xlu0 %3063
    %v3065 = vsel %vm347, %v3064, 0
    %3067 = vmatpush.msra.mxu0 0.0
    %3068 = vmatpush.msra.mxu0 0.0
    %3069 = vmatpush.msra.mxu0 0.0
    %3070 = vmatpush.msra.mxu0 0.0
    %3071 = vmatpush.msra.mxu0 0.0
    %3072 = vmatpush.msra.mxu0 0.0
    %3073 = vmatpush.msra.mxu0 0.0
    %3074 = vmatpush.msra.mxu0 0.0
    %3075 = vmatpush.msra.mxu0 0.0
    %3076 = vmatpush.msra.mxu0 0.0
    %3077 = vmatpush.msra.mxu0 0.0
    %3078 = vmatpush.msra.mxu0 0.0
    %3079 = vmatpush.msra.mxu0 %v3037
    %3080 = vmatpush.msra.mxu0 %v3036
    %3081 = vmatpush.msra.mxu0 %v3035
    %3082 = vmatpush.msra.mxu0 %v3034
    %3083 = vmatmul.f32.gmra.mxu0 %v3065
    %v3084 = vpop.f32.mrf.mxu0
    %v3085 = vadd.f32 %v3060, %v3084
    %3086 = vdwg.mxu0
    %v3087 = vadd.f32 %v3085, %v2326
    %v3088 = vxor.u32 %v3087, 2147483648
    %v3089 = vmul.f32 %v3088, 1.442695
    %v3090 = vpow.pop %v3089
    %v3091 = vadd.f32 %v3090, 1.0
    %v3092 = vrcp.pop %v3091
    %v3093 = vmul.f32 %v3091, %v3092
    %v3094 = vsub.f32 1.0, %v3093
    %v3095 = vmul.f32 %v3092, %v3094
    %v3096 = vadd.f32 %v3092, %v3095
    %vm3097 = vweird.f32 %v3091
    %vm3098 = vweird.f32 %v3092
    %vm3099 = vmor %vm3097, %vm3098
    %v3100 = vsel %vm3099, %v3092, %v3096
    %v3101 = vand.u32 2147483647, %v3091
    %vm3102 = vcmp.eq.f32.partialorder %v3101, 8.507059e+37
    %v3103 = vand.u32 %v3091, 2147483648
    %v3104 = vor.u32 1.1754944e-38, %v3103
    %v3105 = vsel %vm3102, %v3104, %v3100
    %v3106 = vmul.f32 1.0, %v3105
    %v3107 = vtanh.pop %v3087
    %v3108 = vmul.f32 %v3106, %v2719
    %3110 = vrot.lane.b32.xlu0 %v3107, 64
    %v3111 = vpop.permute.xlu0 %3110
    %v3113 = vmul.f32 %v3106, %v3111
    %3115 = vrot.lane.b32.xlu0 %v3113, 32
    %v3116 = vpop.permute.xlu0 %3115
    %v3118 = vadd.f32 %v3108, %v3116
    %v3119 = vtanh.pop %v3118
    %3121 = vrot.lane.b32.xlu0 %v3119, 64
    %v3122 = vpop.permute.xlu0 %3121
    %v3124 = vmul.f32 %v3106, %v3122
    %3126 = vrot.lane.b32.xlu0 %v3124, 32
    %v3127 = vpop.permute.xlu0 %3126
    %3129 = vst.msk [vmem:[%s1492] sm:$0xf] %vm413, %v3127
    %v3130 = vmul.f32 %v3124, %v2733
    %3132 = vrot.lane.b32.xlu0 %v3130, 32
    %v3133 = vpop.permute.xlu0 %3132
    %v3135 = vsel %vm413, %v3133, 0.0
    %3136 = vadd.xlane.f32.xlu0 %v3135
    %v3137 = vpop.xlane.xlu0 %3136
    %v3139 = vperm.slane %v3137, %v2133
    %3141 = vst.msk [vmem:[#allocation7 + $0x1] sm:$0x1] %vm2746, %v3139
    %v3142 = vld [vmem:[%s3 + $0x130] sm:$0xff]
    %v3143 = vld [vmem:[%s3 + $0x138] sm:$0xff]
    %v3144 = vld [vmem:[%s3 + $0x140] sm:$0xff]
    %v3145 = vld [vmem:[%s3 + $0x148] sm:$0xff]
    %v3146 = vsel %vm347, %v3127, 0
    %3148 = vmatpush.msra.mxu0 0.0
    %3149 = vmatpush.msra.mxu0 0.0
    %3150 = vmatpush.msra.mxu0 0.0
    %3151 = vmatpush.msra.mxu0 0.0
    %3152 = vmatpush.msra.mxu0 0.0
    %3153 = vmatpush.msra.mxu0 0.0
    %3154 = vmatpush.msra.mxu0 0.0
    %3155 = vmatpush.msra.mxu0 0.0
    %3156 = vmatpush.msra.mxu0 0.0
    %3157 = vmatpush.msra.mxu0 0.0
    %3158 = vmatpush.msra.mxu0 0.0
    %3159 = vmatpush.msra.mxu0 0.0
    %3160 = vmatpush.msra.mxu0 %v3145
    %3161 = vmatpush.msra.mxu0 %v3144
    %3162 = vmatpush.msra.mxu0 %v3143
    %3163 = vmatpush.msra.mxu0 %v3142
    %3164 = vmatmul.f32.gmra.mxu0 %v3146
    %v3165 = vpop.f32.mrf.mxu0
    %v3166 = vadd.f32 %v2355, %v3165
    %3167 = vdwg.mxu0
    %s3168 = scalar_lea.vmem [#allocation8], 4
    %3169 = vst.msk [vmem:[%s3168] sm:$0xf] %vm2774, %v3166
    %v3170 = vmul.f32 %v3033, %v2359
    %v3171 = vmul.f32 %v3124, %v2364
    %v3172 = vadd.f32 %v3170, %v3171
    %v3173 = vmul.f32 %v3027, %v2370
    %3175 = vrot.lane.b32.xlu0 %v3173, 64
    %v3176 = vpop.permute.xlu0 %3175
    %v3178 = vadd.f32 %v3172, %v3176
    %v3179 = vmul.f32 %v3118, %v2380
    %3181 = vrot.lane.b32.xlu0 %v3179, 64
    %v3182 = vpop.permute.xlu0 %3181
    %v3184 = vadd.f32 %v3178, %v3182
    %3186 = vrot.lane.b32.xlu0 %v3184, 32
    %v3187 = vpop.permute.xlu0 %3186
    %v3189 = vsel %vm413, %v3187, 0.0
    %3190 = vadd.xlane.f32.xlu0 %v3189
    %v3191 = vpop.xlane.xlu0 %3190
    %v3192 = vld [vmem:[#allocation7] sm:$0xff]
    %v3193 = vld [vmem:[#allocation7 + $0x8] sm:$0x3]
    %v3195 = vperm.slane %v3191, %v2133
    %v3196 = vsel %vm2146, %v3195, %v3195
    %v3197 = vsel %vm2148, %v3195, %v3196
    %v3198 = vsel %vm2150, %v3195, %v3197
    %v3199 = vsel %vm2152, %v3195, %v3198
    %v3200 = vsel %vm2154, %v3195, %v3199
    %v3201 = vsel %vm2156, %v3195, %v3200
    %v3204 = vadd.f32 %v3192, %v3201
    %v3205 = vadd.f32 %v3193, %v3195
    %v3206 = vsel %vm2161, %v3204, -inf
    %3207 = vmax.xlane.f32.xlu0 %v3206
    %v3208 = vpop.xlane.xlu0 %3207
    %v3209 = vsel %vm2163, %v3205, -inf
    %3210 = vmax.xlane.f32.xlu0 %v3209
    %v3211 = vpop.xlane.xlu0 %3210
    %v3212 = vsub.f32 %v3204, %v3208
    %v3213 = vsub.f32 %v3205, %v3211
    %v3214 = vmul.f32 %v3212, 1.442695
    %v3215 = vpow.pop %v3214
    %v3216 = vmul.f32 %v3213, 1.442695
    %v3217 = vpow.pop %v3216
    %v3218 = vsel %vm2161, %v3215, 0.0
    %3219 = vadd.xlane.f32.xlu0 %v3218
    %v3220 = vpop.xlane.xlu0 %3219
    %v3221 = vsel %vm2163, %v3217, 0.0
    %3222 = vadd.xlane.f32.xlu0 %v3221
    %v3223 = vpop.xlane.xlu0 %3222
    %v3224 = vrcp.pop %v3220
    %v3225 = vrcp.pop %v3223
    %v3226 = vmul.f32 %v3215, %v3224
    %v3227 = vmul.f32 %v3217, %v3225
    %v3228 = vperm.slane %v3226, 0
    %v3229 = vlaneseq
    %v3230 = vshrl.u32 %v3229, 7
    %3232 = vset.pattern.permute.xlu0 %v3230
    %3233 = vperm.xlu0 %3232, %v3228
    %v3234 = vpop.permute.xlu0 %3233
    %v3235 = vperm.slane %v3226, 1
    %v3236 = vlaneseq
    %v3237 = vshrl.u32 %v3236, 7
    %3239 = vset.pattern.permute.xlu0 %v3237
    %3240 = vperm.xlu0 %3239, %v3235
    %v3241 = vpop.permute.xlu0 %3240
    %v3242 = vperm.slane %v3226, 2
    %v3243 = vlaneseq
    %v3244 = vshrl.u32 %v3243, 7
    %3246 = vset.pattern.permute.xlu0 %v3244
    %3247 = vperm.xlu0 %3246, %v3242
    %v3248 = vpop.permute.xlu0 %3247
    %v3249 = vperm.slane %v3226, 3
    %v3250 = vlaneseq
    %v3251 = vshrl.u32 %v3250, 7
    %3253 = vset.pattern.permute.xlu0 %v3251
    %3254 = vperm.xlu0 %3253, %v3249
    %v3255 = vpop.permute.xlu0 %3254
    %v3256 = vperm.slane %v3226, 4
    %v3257 = vlaneseq
    %v3258 = vshrl.u32 %v3257, 7
    %3260 = vset.pattern.permute.xlu0 %v3258
    %3261 = vperm.xlu0 %3260, %v3256
    %v3262 = vpop.permute.xlu0 %3261
    %v3263 = vperm.slane %v3226, 5
    %v3264 = vlaneseq
    %v3265 = vshrl.u32 %v3264, 7
    %3267 = vset.pattern.permute.xlu0 %v3265
    %3268 = vperm.xlu0 %3267, %v3263
    %v3269 = vpop.permute.xlu0 %3268
    %v3270 = vperm.slane %v3226, 6
    %v3271 = vlaneseq
    %v3272 = vshrl.u32 %v3271, 7
    %3274 = vset.pattern.permute.xlu0 %v3272
    %3275 = vperm.xlu0 %3274, %v3270
    %v3276 = vpop.permute.xlu0 %3275
    %v3277 = vperm.slane %v3226, 7
    %v3278 = vlaneseq
    %v3279 = vshrl.u32 %v3278, 7
    %3281 = vset.pattern.permute.xlu0 %v3279
    %3282 = vperm.xlu0 %3281, %v3277
    %v3283 = vpop.permute.xlu0 %3282
    %v3284 = vperm.slane %v3227, 0
    %v3285 = vlaneseq
    %v3286 = vshrl.u32 %v3285, 7
    %3288 = vset.pattern.permute.xlu0 %v3286
    %3289 = vperm.xlu0 %3288, %v3284
    %v3290 = vpop.permute.xlu0 %3289
    %v3291 = vperm.slane %v3227, 1
    %v3292 = vlaneseq
    %v3293 = vshrl.u32 %v3292, 7
    %3295 = vset.pattern.permute.xlu0 %v3293
    %3296 = vperm.xlu0 %3295, %v3291
    %v3297 = vpop.permute.xlu0 %3296
    %v3298 = vld [vmem:[#allocation6] sm:$0xf]
    %v3299 = vld [vmem:[#allocation6 + $0x4] sm:$0xf]
    %v3300 = vld [vmem:[#allocation6 + $0x8] sm:$0xf]
    %v3301 = vld [vmem:[#allocation6 + $0xc] sm:$0xf]
    %v3302 = vld [vmem:[#allocation6 + $0x10] sm:$0xf]
    %v3303 = vld [vmem:[#allocation6 + $0x14] sm:$0xf]
    %v3304 = vld [vmem:[#allocation6 + $0x18] sm:$0xf]
    %v3305 = vld [vmem:[#allocation6 + $0x1c] sm:$0xf]
    %v3306 = vld [vmem:[#allocation6 + $0x20] sm:$0xf]
    %v3307 = vld [vmem:[#allocation6 + $0x24] sm:$0xf]
    %v3308 = vmul.f32 %v3234, %v3298
    %v3309 = vmul.f32 %v3241, %v3299
    %v3310 = vmul.f32 %v3248, %v3300
    %v3311 = vmul.f32 %v3255, %v3301
    %v3312 = vmul.f32 %v3262, %v3302
    %v3313 = vmul.f32 %v3269, %v3303
    %v3314 = vmul.f32 %v3276, %v3304
    %v3315 = vmul.f32 %v3283, %v3305
    %v3316 = vmul.f32 %v3290, %v3306
    %v3317 = vmul.f32 %v3297, %v3307
    %v3318 = vsel %vm413, %v3308, 0.0
    %v3319 = vsel %vm413, %v3309, 0.0
    %v3320 = vadd.f32 %v3318, %v3319
    %v3321 = vsel %vm413, %v3310, 0.0
    %v3322 = vadd.f32 %v3320, %v3321
    %v3323 = vsel %vm413, %v3311, 0.0
    %v3324 = vadd.f32 %v3322, %v3323
    %v3325 = vsel %vm413, %v3312, 0.0
    %v3326 = vadd.f32 %v3324, %v3325
    %v3327 = vsel %vm413, %v3313, 0.0
    %v3328 = vadd.f32 %v3326, %v3327
    %v3329 = vsel %vm413, %v3314, 0.0
    %v3330 = vadd.f32 %v3328, %v3329
    %v3331 = vsel %vm413, %v3315, 0.0
    %v3332 = vadd.f32 %v3330, %v3331
    %v3333 = vsel %vm413, %v3316, 0.0
    %v3334 = vadd.f32 %v3332, %v3333
    %v3335 = vsel %vm413, %v3317, 0.0
    %v3336 = vadd.f32 %v3334, %v3335
    %v3337 = vld [vmem:[%s2259] sm:$0xf]
    %v3338 = vld [vmem:[%s3 + $0xb0] sm:$0xff]
    %v3339 = vld [vmem:[%s3 + $0xb8] sm:$0xff]
    %v3340 = vld [vmem:[%s3 + $0xc0] sm:$0xff]
    %v3341 = vld [vmem:[%s3 + $0xc8] sm:$0xff]
    %v3343 = vsel %vm347, %v3336, 0
    %3345 = vmatpush.msra.mxu0 0.0
    %3346 = vmatpush.msra.mxu0 0.0
    %3347 = vmatpush.msra.mxu0 0.0
    %3348 = vmatpush.msra.mxu0 0.0
    %3349 = vmatpush.msra.mxu0 0.0
    %3350 = vmatpush.msra.mxu0 0.0
    %3351 = vmatpush.msra.mxu0 0.0
    %3352 = vmatpush.msra.mxu0 0.0
    %3353 = vmatpush.msra.mxu0 0.0
    %3354 = vmatpush.msra.mxu0 0.0
    %3355 = vmatpush.msra.mxu0 0.0
    %3356 = vmatpush.msra.mxu0 0.0
    %3357 = vmatpush.msra.mxu0 %v3341
    %3358 = vmatpush.msra.mxu0 %v3340
    %3359 = vmatpush.msra.mxu0 %v3339
    %3360 = vmatpush.msra.mxu0 %v3338
    %3361 = vmatmul.f32.gmra.mxu0 %v3343
    %v3362 = vpop.f32.mrf.mxu0
    %v3363 = vadd.f32 0.0, %v3362
    %3364 = vdwg.mxu0
    %v3365 = vadd.f32 %v3337, %v3363
    %v3366 = vld [vmem:[%s3 + $0xd0] sm:$0xff]
    %v3367 = vld [vmem:[%s3 + $0xd8] sm:$0xff]
    %v3368 = vld [vmem:[%s3 + $0xe0] sm:$0xff]
    %v3369 = vld [vmem:[%s3 + $0xe8] sm:$0xff]
    %3370 = vmatpush.msra.mxu0 0.0
    %3371 = vmatpush.msra.mxu0 0.0
    %3372 = vmatpush.msra.mxu0 0.0
    %3373 = vmatpush.msra.mxu0 0.0
    %3374 = vmatpush.msra.mxu0 0.0
    %3375 = vmatpush.msra.mxu0 0.0
    %3376 = vmatpush.msra.mxu0 0.0
    %3377 = vmatpush.msra.mxu0 0.0
    %3378 = vmatpush.msra.mxu0 0.0
    %3379 = vmatpush.msra.mxu0 0.0
    %3380 = vmatpush.msra.mxu0 0.0
    %3381 = vmatpush.msra.mxu0 0.0
    %3382 = vmatpush.msra.mxu0 %v3369
    %3383 = vmatpush.msra.mxu0 %v3368
    %3384 = vmatpush.msra.mxu0 %v3367
    %3385 = vmatpush.msra.mxu0 %v3366
    %3386 = vmatmul.f32.gmra.mxu0 %v3065
    %v3387 = vpop.f32.mrf.mxu0
    %v3388 = vadd.f32 0.0, %v3387
    %3389 = vdwg.mxu0
    %v3390 = vadd.f32 %v3365, %v3388
    %v3391 = vxor.u32 %v3390, 2147483648
    %v3392 = vmul.f32 %v3391, 1.442695
    %v3393 = vpow.pop %v3392
    %v3394 = vadd.f32 %v3393, 1.0
    %v3395 = vrcp.pop %v3394
    %v3396 = vmul.f32 %v3394, %v3395
    %v3397 = vsub.f32 1.0, %v3396
    %v3398 = vmul.f32 %v3395, %v3397
    %v3399 = vadd.f32 %v3395, %v3398
    %vm3400 = vweird.f32 %v3394
    %vm3401 = vweird.f32 %v3395
    %vm3402 = vmor %vm3400, %vm3401
    %v3403 = vsel %vm3402, %v3395, %v3399
    %v3404 = vand.u32 2147483647, %v3394
    %vm3405 = vcmp.eq.f32.partialorder %v3404, 8.507059e+37
    %v3406 = vand.u32 %v3394, 2147483648
    %v3407 = vor.u32 1.1754944e-38, %v3406
    %v3408 = vsel %vm3405, %v3407, %v3403
    %v3409 = vmul.f32 1.0, %v3408
    %v3410 = vtanh.pop %v3390
    %v3411 = vmul.f32 %v3409, %v3027
    %3413 = vrot.lane.b32.xlu0 %v3410, 64
    %v3414 = vpop.permute.xlu0 %3413
    %v3416 = vmul.f32 %v3409, %v3414
    %3418 = vrot.lane.b32.xlu0 %v3416, 32
    %v3419 = vpop.permute.xlu0 %3418
    %v3421 = vadd.f32 %v3411, %v3419
    %v3422 = vtanh.pop %v3421
    %3424 = vrot.lane.b32.xlu0 %v3422, 64
    %v3425 = vpop.permute.xlu0 %3424
    %v3427 = vmul.f32 %v3409, %v3425
    %v3428 = vld [vmem:[%s3 + $0xf0] sm:$0xff]
    %v3429 = vld [vmem:[%s3 + $0xf8] sm:$0xff]
    %v3430 = vld [vmem:[%s3 + $0x100] sm:$0xff]
    %v3431 = vld [vmem:[%s3 + $0x108] sm:$0xff]
    %v3432 = vld [vmem:[%s3 + $0x110] sm:$0xff]
    %v3433 = vld [vmem:[%s3 + $0x118] sm:$0xff]
    %v3434 = vld [vmem:[%s3 + $0x120] sm:$0xff]
    %v3435 = vld [vmem:[%s3 + $0x128] sm:$0xff]
    %3436 = vmatpush.msra.mxu0 0.0
    %3437 = vmatpush.msra.mxu0 0.0
    %3438 = vmatpush.msra.mxu0 0.0
    %3439 = vmatpush.msra.mxu0 0.0
    %3440 = vmatpush.msra.mxu0 0.0
    %3441 = vmatpush.msra.mxu0 0.0
    %3442 = vmatpush.msra.mxu0 0.0
    %3443 = vmatpush.msra.mxu0 0.0
    %3444 = vmatpush.msra.mxu0 0.0
    %3445 = vmatpush.msra.mxu0 0.0
    %3446 = vmatpush.msra.mxu0 0.0
    %3447 = vmatpush.msra.mxu0 0.0
    %3448 = vmatpush.msra.mxu0 %v3435
    %3449 = vmatpush.msra.mxu0 %v3434
    %3450 = vmatpush.msra.mxu0 %v3433
    %3451 = vmatpush.msra.mxu0 %v3432
    %3452 = vmatmul.f32.gmra.mxu0 %v3146
    %v3453 = vpop.f32.mrf.mxu0
    %v3454 = vadd.f32 0.0, %v3453
    %3455 = vdwg.mxu0
    %3457 = vrot.lane.b32.xlu0 %v3427, 32
    %v3458 = vpop.permute.xlu0 %3457
    %v3459 = vsel %vm347, %v3458, 0
    %3461 = vmatpush.msra.mxu0 0.0
    %3462 = vmatpush.msra.mxu0 0.0
    %3463 = vmatpush.msra.mxu0 0.0
    %3464 = vmatpush.msra.mxu0 0.0
    %3465 = vmatpush.msra.mxu0 0.0
    %3466 = vmatpush.msra.mxu0 0.0
    %3467 = vmatpush.msra.mxu0 0.0
    %3468 = vmatpush.msra.mxu0 0.0
    %3469 = vmatpush.msra.mxu0 0.0
    %3470 = vmatpush.msra.mxu0 0.0
    %3471 = vmatpush.msra.mxu0 0.0
    %3472 = vmatpush.msra.mxu0 0.0
    %3473 = vmatpush.msra.mxu0 %v3431
    %3474 = vmatpush.msra.mxu0 %v3430
    %3475 = vmatpush.msra.mxu0 %v3429
    %3476 = vmatpush.msra.mxu0 %v3428
    %3477 = vmatmul.f32.gmra.mxu0 %v3459
    %v3478 = vpop.f32.mrf.mxu0
    %v3479 = vadd.f32 %v3454, %v3478
    %3480 = vdwg.mxu0
    %v3481 = vadd.f32 %v3479, %v2326
    %v3482 = vxor.u32 %v3481, 2147483648
    %v3483 = vmul.f32 %v3482, 1.442695
    %v3484 = vpow.pop %v3483
    %v3485 = vadd.f32 %v3484, 1.0
    %v3486 = vrcp.pop %v3485
    %v3487 = vmul.f32 %v3485, %v3486
    %v3488 = vsub.f32 1.0, %v3487
    %v3489 = vmul.f32 %v3486, %v3488
    %v3490 = vadd.f32 %v3486, %v3489
    %vm3491 = vweird.f32 %v3485
    %vm3492 = vweird.f32 %v3486
    %vm3493 = vmor %vm3491, %vm3492
    %v3494 = vsel %vm3493, %v3486, %v3490
    %v3495 = vand.u32 2147483647, %v3485
    %vm3496 = vcmp.eq.f32.partialorder %v3495, 8.507059e+37
    %v3497 = vand.u32 %v3485, 2147483648
    %v3498 = vor.u32 1.1754944e-38, %v3497
    %v3499 = vsel %vm3496, %v3498, %v3494
    %v3500 = vmul.f32 1.0, %v3499
    %v3501 = vtanh.pop %v3481
    %v3502 = vmul.f32 %v3500, %v3118
    %3504 = vrot.lane.b32.xlu0 %v3501, 64
    %v3505 = vpop.permute.xlu0 %3504
    %v3507 = vmul.f32 %v3500, %v3505
    %3509 = vrot.lane.b32.xlu0 %v3507, 32
    %v3510 = vpop.permute.xlu0 %3509
    %v3512 = vadd.f32 %v3502, %v3510
    %v3513 = vtanh.pop %v3512
    %3515 = vrot.lane.b32.xlu0 %v3513, 64
    %v3516 = vpop.permute.xlu0 %3515
    %v3518 = vmul.f32 %v3500, %v3516
    %3520 = vrot.lane.b32.xlu0 %v3518, 32
    %v3521 = vpop.permute.xlu0 %3520
    %3523 = vst.msk [vmem:[%s1563] sm:$0xf] %vm413, %v3521
    %v3524 = vmul.f32 %v3518, %v2733
    %3526 = vrot.lane.b32.xlu0 %v3524, 32
    %v3527 = vpop.permute.xlu0 %3526
    %v3529 = vsel %vm413, %v3527, 0.0
    %3530 = vadd.xlane.f32.xlu0 %v3529
    %v3531 = vpop.xlane.xlu0 %3530
    %v3533 = vperm.slane %v3531, %v2133
    %3535 = vst.msk [vmem:[#allocation7 + $0x2] sm:$0x1] %vm2746, %v3533
    %v3536 = vld [vmem:[%s3 + $0x130] sm:$0xff]
    %v3537 = vld [vmem:[%s3 + $0x138] sm:$0xff]
    %v3538 = vld [vmem:[%s3 + $0x140] sm:$0xff]
    %v3539 = vld [vmem:[%s3 + $0x148] sm:$0xff]
    %v3540 = vsel %vm347, %v3521, 0
    %3542 = vmatpush.msra.mxu0 0.0
    %3543 = vmatpush.msra.mxu0 0.0
    %3544 = vmatpush.msra.mxu0 0.0
    %3545 = vmatpush.msra.mxu0 0.0
    %3546 = vmatpush.msra.mxu0 0.0
    %3547 = vmatpush.msra.mxu0 0.0
    %3548 = vmatpush.msra.mxu0 0.0
    %3549 = vmatpush.msra.mxu0 0.0
    %3550 = vmatpush.msra.mxu0 0.0
    %3551 = vmatpush.msra.mxu0 0.0
    %3552 = vmatpush.msra.mxu0 0.0
    %3553 = vmatpush.msra.mxu0 0.0
    %3554 = vmatpush.msra.mxu0 %v3539
    %3555 = vmatpush.msra.mxu0 %v3538
    %3556 = vmatpush.msra.mxu0 %v3537
    %3557 = vmatpush.msra.mxu0 %v3536
    %3558 = vmatmul.f32.gmra.mxu0 %v3540
    %v3559 = vpop.f32.mrf.mxu0
    %v3560 = vadd.f32 %v2355, %v3559
    %3561 = vdwg.mxu0
    %s3562 = scalar_lea.vmem [#allocation8], 8
    %3563 = vst.msk [vmem:[%s3562] sm:$0xf] %vm2774, %v3560
    %v3564 = vmul.f32 %v3427, %v2359
    %v3565 = vmul.f32 %v3518, %v2364
    %v3566 = vadd.f32 %v3564, %v3565
    %v3567 = vmul.f32 %v3421, %v2370
    %3569 = vrot.lane.b32.xlu0 %v3567, 64
    %v3570 = vpop.permute.xlu0 %3569
    %v3572 = vadd.f32 %v3566, %v3570
    %v3573 = vmul.f32 %v3512, %v2380
    %3575 = vrot.lane.b32.xlu0 %v3573, 64
    %v3576 = vpop.permute.xlu0 %3575
    %v3578 = vadd.f32 %v3572, %v3576
    %3580 = vrot.lane.b32.xlu0 %v3578, 32
    %v3581 = vpop.permute.xlu0 %3580
    %v3583 = vsel %vm413, %v3581, 0.0
    %3584 = vadd.xlane.f32.xlu0 %v3583
    %v3585 = vpop.xlane.xlu0 %3584
    %v3586 = vld [vmem:[#allocation7] sm:$0xff]
    %v3587 = vld [vmem:[#allocation7 + $0x8] sm:$0x3]
    %v3589 = vperm.slane %v3585, %v2133
    %v3590 = vsel %vm2146, %v3589, %v3589
    %v3591 = vsel %vm2148, %v3589, %v3590
    %v3592 = vsel %vm2150, %v3589, %v3591
    %v3593 = vsel %vm2152, %v3589, %v3592
    %v3594 = vsel %vm2154, %v3589, %v3593
    %v3595 = vsel %vm2156, %v3589, %v3594
    %v3598 = vadd.f32 %v3586, %v3595
    %v3599 = vadd.f32 %v3587, %v3589
    %v3600 = vsel %vm2161, %v3598, -inf
    %3601 = vmax.xlane.f32.xlu0 %v3600
    %v3602 = vpop.xlane.xlu0 %3601
    %v3603 = vsel %vm2163, %v3599, -inf
    %3604 = vmax.xlane.f32.xlu0 %v3603
    %v3605 = vpop.xlane.xlu0 %3604
    %v3606 = vsub.f32 %v3598, %v3602
    %v3607 = vsub.f32 %v3599, %v3605
    %v3608 = vmul.f32 %v3606, 1.442695
    %v3609 = vpow.pop %v3608
    %v3610 = vmul.f32 %v3607, 1.442695
    %v3611 = vpow.pop %v3610
    %v3612 = vsel %vm2161, %v3609, 0.0
    %3613 = vadd.xlane.f32.xlu0 %v3612
    %v3614 = vpop.xlane.xlu0 %3613
    %v3615 = vsel %vm2163, %v3611, 0.0
    %3616 = vadd.xlane.f32.xlu0 %v3615
    %v3617 = vpop.xlane.xlu0 %3616
    %v3618 = vrcp.pop %v3614
    %v3619 = vrcp.pop %v3617
    %v3620 = vmul.f32 %v3609, %v3618
    %v3621 = vmul.f32 %v3611, %v3619
    %v3622 = vperm.slane %v3620, 0
    %v3623 = vlaneseq
    %v3624 = vshrl.u32 %v3623, 7
    %3626 = vset.pattern.permute.xlu0 %v3624
    %3627 = vperm.xlu0 %3626, %v3622
    %v3628 = vpop.permute.xlu0 %3627
    %v3629 = vperm.slane %v3620, 1
    %v3630 = vlaneseq
    %v3631 = vshrl.u32 %v3630, 7
    %3633 = vset.pattern.permute.xlu0 %v3631
    %3634 = vperm.xlu0 %3633, %v3629
    %v3635 = vpop.permute.xlu0 %3634
    %v3636 = vperm.slane %v3620, 2
    %v3637 = vlaneseq
    %v3638 = vshrl.u32 %v3637, 7
    %3640 = vset.pattern.permute.xlu0 %v3638
    %3641 = vperm.xlu0 %3640, %v3636
    %v3642 = vpop.permute.xlu0 %3641
    %v3643 = vperm.slane %v3620, 3
    %v3644 = vlaneseq
    %v3645 = vshrl.u32 %v3644, 7
    %3647 = vset.pattern.permute.xlu0 %v3645
    %3648 = vperm.xlu0 %3647, %v3643
    %v3649 = vpop.permute.xlu0 %3648
    %v3650 = vperm.slane %v3620, 4
    %v3651 = vlaneseq
    %v3652 = vshrl.u32 %v3651, 7
    %3654 = vset.pattern.permute.xlu0 %v3652
    %3655 = vperm.xlu0 %3654, %v3650
    %v3656 = vpop.permute.xlu0 %3655
    %v3657 = vperm.slane %v3620, 5
    %v3658 = vlaneseq
    %v3659 = vshrl.u32 %v3658, 7
    %3661 = vset.pattern.permute.xlu0 %v3659
    %3662 = vperm.xlu0 %3661, %v3657
    %v3663 = vpop.permute.xlu0 %3662
    %v3664 = vperm.slane %v3620, 6
    %v3665 = vlaneseq
    %v3666 = vshrl.u32 %v3665, 7
    %3668 = vset.pattern.permute.xlu0 %v3666
    %3669 = vperm.xlu0 %3668, %v3664
    %v3670 = vpop.permute.xlu0 %3669
    %v3671 = vperm.slane %v3620, 7
    %v3672 = vlaneseq
    %v3673 = vshrl.u32 %v3672, 7
    %3675 = vset.pattern.permute.xlu0 %v3673
    %3676 = vperm.xlu0 %3675, %v3671
    %v3677 = vpop.permute.xlu0 %3676
    %v3678 = vperm.slane %v3621, 0
    %v3679 = vlaneseq
    %v3680 = vshrl.u32 %v3679, 7
    %3682 = vset.pattern.permute.xlu0 %v3680
    %3683 = vperm.xlu0 %3682, %v3678
    %v3684 = vpop.permute.xlu0 %3683
    %v3685 = vperm.slane %v3621, 1
    %v3686 = vlaneseq
    %v3687 = vshrl.u32 %v3686, 7
    %3689 = vset.pattern.permute.xlu0 %v3687
    %3690 = vperm.xlu0 %3689, %v3685
    %v3691 = vpop.permute.xlu0 %3690
    %v3692 = vld [vmem:[#allocation6] sm:$0xf]
    %v3693 = vld [vmem:[#allocation6 + $0x4] sm:$0xf]
    %v3694 = vld [vmem:[#allocation6 + $0x8] sm:$0xf]
    %v3695 = vld [vmem:[#allocation6 + $0xc] sm:$0xf]
    %v3696 = vld [vmem:[#allocation6 + $0x10] sm:$0xf]
    %v3697 = vld [vmem:[#allocation6 + $0x14] sm:$0xf]
    %v3698 = vld [vmem:[#allocation6 + $0x18] sm:$0xf]
    %v3699 = vld [vmem:[#allocation6 + $0x1c] sm:$0xf]
    %v3700 = vld [vmem:[#allocation6 + $0x20] sm:$0xf]
    %v3701 = vld [vmem:[#allocation6 + $0x24] sm:$0xf]
    %v3702 = vmul.f32 %v3628, %v3692
    %v3703 = vmul.f32 %v3635, %v3693
    %v3704 = vmul.f32 %v3642, %v3694
    %v3705 = vmul.f32 %v3649, %v3695
    %v3706 = vmul.f32 %v3656, %v3696
    %v3707 = vmul.f32 %v3663, %v3697
    %v3708 = vmul.f32 %v3670, %v3698
    %v3709 = vmul.f32 %v3677, %v3699
    %v3710 = vmul.f32 %v3684, %v3700
    %v3711 = vmul.f32 %v3691, %v3701
    %v3712 = vsel %vm413, %v3702, 0.0
    %v3713 = vsel %vm413, %v3703, 0.0
    %v3714 = vadd.f32 %v3712, %v3713
    %v3715 = vsel %vm413, %v3704, 0.0
    %v3716 = vadd.f32 %v3714, %v3715
    %v3717 = vsel %vm413, %v3705, 0.0
    %v3718 = vadd.f32 %v3716, %v3717
    %v3719 = vsel %vm413, %v3706, 0.0
    %v3720 = vadd.f32 %v3718, %v3719
    %v3721 = vsel %vm413, %v3707, 0.0
    %v3722 = vadd.f32 %v3720, %v3721
    %v3723 = vsel %vm413, %v3708, 0.0
    %v3724 = vadd.f32 %v3722, %v3723
    %v3725 = vsel %vm413, %v3709, 0.0
    %v3726 = vadd.f32 %v3724, %v3725
    %v3727 = vsel %vm413, %v3710, 0.0
    %v3728 = vadd.f32 %v3726, %v3727
    %v3729 = vsel %vm413, %v3711, 0.0
    %v3730 = vadd.f32 %v3728, %v3729
    %v3731 = vld [vmem:[%s2291] sm:$0xf]
    %v3732 = vld [vmem:[%s3 + $0xb0] sm:$0xff]
    %v3733 = vld [vmem:[%s3 + $0xb8] sm:$0xff]
    %v3734 = vld [vmem:[%s3 + $0xc0] sm:$0xff]
    %v3735 = vld [vmem:[%s3 + $0xc8] sm:$0xff]
    %v3737 = vsel %vm347, %v3730, 0
    %3739 = vmatpush.msra.mxu0 0.0
    %3740 = vmatpush.msra.mxu0 0.0
    %3741 = vmatpush.msra.mxu0 0.0
    %3742 = vmatpush.msra.mxu0 0.0
    %3743 = vmatpush.msra.mxu0 0.0
    %3744 = vmatpush.msra.mxu0 0.0
    %3745 = vmatpush.msra.mxu0 0.0
    %3746 = vmatpush.msra.mxu0 0.0
    %3747 = vmatpush.msra.mxu0 0.0
    %3748 = vmatpush.msra.mxu0 0.0
    %3749 = vmatpush.msra.mxu0 0.0
    %3750 = vmatpush.msra.mxu0 0.0
    %3751 = vmatpush.msra.mxu0 %v3735
    %3752 = vmatpush.msra.mxu0 %v3734
    %3753 = vmatpush.msra.mxu0 %v3733
    %3754 = vmatpush.msra.mxu0 %v3732
    %3755 = vmatmul.f32.gmra.mxu0 %v3737
    %v3756 = vpop.f32.mrf.mxu0
    %v3757 = vadd.f32 0.0, %v3756
    %3758 = vdwg.mxu0
    %v3759 = vadd.f32 %v3731, %v3757
    %v3760 = vld [vmem:[%s3 + $0xd0] sm:$0xff]
    %v3761 = vld [vmem:[%s3 + $0xd8] sm:$0xff]
    %v3762 = vld [vmem:[%s3 + $0xe0] sm:$0xff]
    %v3763 = vld [vmem:[%s3 + $0xe8] sm:$0xff]
    %3764 = vmatpush.msra.mxu0 0.0
    %3765 = vmatpush.msra.mxu0 0.0
    %3766 = vmatpush.msra.mxu0 0.0
    %3767 = vmatpush.msra.mxu0 0.0
    %3768 = vmatpush.msra.mxu0 0.0
    %3769 = vmatpush.msra.mxu0 0.0
    %3770 = vmatpush.msra.mxu0 0.0
    %3771 = vmatpush.msra.mxu0 0.0
    %3772 = vmatpush.msra.mxu0 0.0
    %3773 = vmatpush.msra.mxu0 0.0
    %3774 = vmatpush.msra.mxu0 0.0
    %3775 = vmatpush.msra.mxu0 0.0
    %3776 = vmatpush.msra.mxu0 %v3763
    %3777 = vmatpush.msra.mxu0 %v3762
    %3778 = vmatpush.msra.mxu0 %v3761
    %3779 = vmatpush.msra.mxu0 %v3760
    %3780 = vmatmul.f32.gmra.mxu0 %v3459
    %v3781 = vpop.f32.mrf.mxu0
    %v3782 = vadd.f32 0.0, %v3781
    %3783 = vdwg.mxu0
    %v3784 = vadd.f32 %v3759, %v3782
    %v3785 = vxor.u32 %v3784, 2147483648
    %v3786 = vmul.f32 %v3785, 1.442695
    %v3787 = vpow.pop %v3786
    %v3788 = vadd.f32 %v3787, 1.0
    %v3789 = vrcp.pop %v3788
    %v3790 = vmul.f32 %v3788, %v3789
    %v3791 = vsub.f32 1.0, %v3790
    %v3792 = vmul.f32 %v3789, %v3791
    %v3793 = vadd.f32 %v3789, %v3792
    %vm3794 = vweird.f32 %v3788
    %vm3795 = vweird.f32 %v3789
    %vm3796 = vmor %vm3794, %vm3795
    %v3797 = vsel %vm3796, %v3789, %v3793
    %v3798 = vand.u32 2147483647, %v3788
    %vm3799 = vcmp.eq.f32.partialorder %v3798, 8.507059e+37
    %v3800 = vand.u32 %v3788, 2147483648
    %v3801 = vor.u32 1.1754944e-38, %v3800
    %v3802 = vsel %vm3799, %v3801, %v3797
    %v3803 = vmul.f32 1.0, %v3802
    %v3804 = vtanh.pop %v3784
    %v3805 = vmul.f32 %v3803, %v3421
    %3807 = vrot.lane.b32.xlu0 %v3804, 64
    %v3808 = vpop.permute.xlu0 %3807
    %v3810 = vmul.f32 %v3803, %v3808
    %3812 = vrot.lane.b32.xlu0 %v3810, 32
    %v3813 = vpop.permute.xlu0 %3812
    %v3815 = vadd.f32 %v3805, %v3813
    %v3816 = vtanh.pop %v3815
    %3818 = vrot.lane.b32.xlu0 %v3816, 64
    %v3819 = vpop.permute.xlu0 %3818
    %v3821 = vmul.f32 %v3803, %v3819
    %v3822 = vld [vmem:[%s3 + $0xf0] sm:$0xff]
    %v3823 = vld [vmem:[%s3 + $0xf8] sm:$0xff]
    %v3824 = vld [vmem:[%s3 + $0x100] sm:$0xff]
    %v3825 = vld [vmem:[%s3 + $0x108] sm:$0xff]
    %v3826 = vld [vmem:[%s3 + $0x110] sm:$0xff]
    %v3827 = vld [vmem:[%s3 + $0x118] sm:$0xff]
    %v3828 = vld [vmem:[%s3 + $0x120] sm:$0xff]
    %v3829 = vld [vmem:[%s3 + $0x128] sm:$0xff]
    %3830 = vmatpush.msra.mxu0 0.0
    %3831 = vmatpush.msra.mxu0 0.0
    %3832 = vmatpush.msra.mxu0 0.0
    %3833 = vmatpush.msra.mxu0 0.0
    %3834 = vmatpush.msra.mxu0 0.0
    %3835 = vmatpush.msra.mxu0 0.0
    %3836 = vmatpush.msra.mxu0 0.0
    %3837 = vmatpush.msra.mxu0 0.0
    %3838 = vmatpush.msra.mxu0 0.0
    %3839 = vmatpush.msra.mxu0 0.0
    %3840 = vmatpush.msra.mxu0 0.0
    %3841 = vmatpush.msra.mxu0 0.0
    %3842 = vmatpush.msra.mxu0 %v3829
    %3843 = vmatpush.msra.mxu0 %v3828
    %3844 = vmatpush.msra.mxu0 %v3827
    %3845 = vmatpush.msra.mxu0 %v3826
    %3846 = vmatmul.f32.gmra.mxu0 %v3540
    %v3847 = vpop.f32.mrf.mxu0
    %v3848 = vadd.f32 0.0, %v3847
    %3849 = vdwg.mxu0
    %3851 = vrot.lane.b32.xlu0 %v3821, 32
    %v3852 = vpop.permute.xlu0 %3851
    %v3853 = vsel %vm347, %v3852, 0
    %3855 = vmatpush.msra.mxu0 0.0
    %3856 = vmatpush.msra.mxu0 0.0
    %3857 = vmatpush.msra.mxu0 0.0
    %3858 = vmatpush.msra.mxu0 0.0
    %3859 = vmatpush.msra.mxu0 0.0
    %3860 = vmatpush.msra.mxu0 0.0
    %3861 = vmatpush.msra.mxu0 0.0
    %3862 = vmatpush.msra.mxu0 0.0
    %3863 = vmatpush.msra.mxu0 0.0
    %3864 = vmatpush.msra.mxu0 0.0
    %3865 = vmatpush.msra.mxu0 0.0
    %3866 = vmatpush.msra.mxu0 0.0
    %3867 = vmatpush.msra.mxu0 %v3825
    %3868 = vmatpush.msra.mxu0 %v3824
    %3869 = vmatpush.msra.mxu0 %v3823
    %3870 = vmatpush.msra.mxu0 %v3822
    %3871 = vmatmul.f32.gmra.mxu0 %v3853
    %v3872 = vpop.f32.mrf.mxu0
    %v3873 = vadd.f32 %v3848, %v3872
    %3874 = vdwg.mxu0
    %v3875 = vadd.f32 %v3873, %v2326
    %v3876 = vxor.u32 %v3875, 2147483648
    %v3877 = vmul.f32 %v3876, 1.442695
    %v3878 = vpow.pop %v3877
    %v3879 = vadd.f32 %v3878, 1.0
    %v3880 = vrcp.pop %v3879
    %v3881 = vmul.f32 %v3879, %v3880
    %v3882 = vsub.f32 1.0, %v3881
    %v3883 = vmul.f32 %v3880, %v3882
    %v3884 = vadd.f32 %v3880, %v3883
    %vm3885 = vweird.f32 %v3879
    %vm3886 = vweird.f32 %v3880
    %vm3887 = vmor %vm3885, %vm3886
    %v3888 = vsel %vm3887, %v3880, %v3884
    %v3889 = vand.u32 2147483647, %v3879
    %vm3890 = vcmp.eq.f32.partialorder %v3889, 8.507059e+37
    %v3891 = vand.u32 %v3879, 2147483648
    %v3892 = vor.u32 1.1754944e-38, %v3891
    %v3893 = vsel %vm3890, %v3892, %v3888
    %v3894 = vmul.f32 1.0, %v3893
    %v3895 = vtanh.pop %v3875
    %v3896 = vmul.f32 %v3894, %v3512
    %3898 = vrot.lane.b32.xlu0 %v3895, 64
    %v3899 = vpop.permute.xlu0 %3898
    %v3901 = vmul.f32 %v3894, %v3899
    %3903 = vrot.lane.b32.xlu0 %v3901, 32
    %v3904 = vpop.permute.xlu0 %3903
    %v3906 = vadd.f32 %v3896, %v3904
    %v3907 = vtanh.pop %v3906
    %3909 = vrot.lane.b32.xlu0 %v3907, 64
    %v3910 = vpop.permute.xlu0 %3909
    %v3912 = vmul.f32 %v3894, %v3910
    %3914 = vrot.lane.b32.xlu0 %v3912, 32
    %v3915 = vpop.permute.xlu0 %3914
    %3917 = vst.msk [vmem:[%s1634] sm:$0xf] %vm413, %v3915
    %v3918 = vmul.f32 %v3912, %v2733
    %3920 = vrot.lane.b32.xlu0 %v3918, 32
    %v3921 = vpop.permute.xlu0 %3920
    %v3923 = vsel %vm413, %v3921, 0.0
    %3924 = vadd.xlane.f32.xlu0 %v3923
    %v3925 = vpop.xlane.xlu0 %3924
    %v3927 = vperm.slane %v3925, %v2133
    %3929 = vst.msk [vmem:[#allocation7 + $0x3] sm:$0x1] %vm2746, %v3927
    %v3930 = vld [vmem:[%s3 + $0x130] sm:$0xff]
    %v3931 = vld [vmem:[%s3 + $0x138] sm:$0xff]
    %v3932 = vld [vmem:[%s3 + $0x140] sm:$0xff]
    %v3933 = vld [vmem:[%s3 + $0x148] sm:$0xff]
    %v3934 = vsel %vm347, %v3915, 0
    %3936 = vmatpush.msra.mxu0 0.0
    %3937 = vmatpush.msra.mxu0 0.0
    %3938 = vmatpush.msra.mxu0 0.0
    %3939 = vmatpush.msra.mxu0 0.0
    %3940 = vmatpush.msra.mxu0 0.0
    %3941 = vmatpush.msra.mxu0 0.0
    %3942 = vmatpush.msra.mxu0 0.0
    %3943 = vmatpush.msra.mxu0 0.0
    %3944 = vmatpush.msra.mxu0 0.0
    %3945 = vmatpush.msra.mxu0 0.0
    %3946 = vmatpush.msra.mxu0 0.0
    %3947 = vmatpush.msra.mxu0 0.0
    %3948 = vmatpush.msra.mxu0 %v3933
    %3949 = vmatpush.msra.mxu0 %v3932
    %3950 = vmatpush.msra.mxu0 %v3931
    %3951 = vmatpush.msra.mxu0 %v3930
    %3952 = vmatmul.f32.gmra.mxu0 %v3934
    %v3953 = vpop.f32.mrf.mxu0
    %v3954 = vadd.f32 %v2355, %v3953
    %3955 = vdwg.mxu0
    %s3956 = scalar_lea.vmem [#allocation8], 12
    %3957 = vst.msk [vmem:[%s3956] sm:$0xf] %vm2774, %v3954
    %v3958 = vmul.f32 %v3821, %v2359
    %v3959 = vmul.f32 %v3912, %v2364
    %v3960 = vadd.f32 %v3958, %v3959
    %v3961 = vmul.f32 %v3815, %v2370
    %3963 = vrot.lane.b32.xlu0 %v3961, 64
    %v3964 = vpop.permute.xlu0 %3963
    %v3966 = vadd.f32 %v3960, %v3964
    %v3967 = vmul.f32 %v3906, %v2380
    %3969 = vrot.lane.b32.xlu0 %v3967, 64
    %v3970 = vpop.permute.xlu0 %3969
    %v3972 = vadd.f32 %v3966, %v3970
    %3974 = vrot.lane.b32.xlu0 %v3972, 32
    %v3975 = vpop.permute.xlu0 %3974
    %v3977 = vsel %vm413, %v3975, 0.0
    %3978 = vadd.xlane.f32.xlu0 %v3977
    %v3979 = vpop.xlane.xlu0 %3978
    %v3980 = vld [vmem:[#allocation7] sm:$0xff]
    %v3981 = vld [vmem:[#allocation7 + $0x8] sm:$0x3]
    %v3983 = vperm.slane %v3979, %v2133
    %v3984 = vsel %vm2146, %v3983, %v3983
    %v3985 = vsel %vm2148, %v3983, %v3984
    %v3986 = vsel %vm2150, %v3983, %v3985
    %v3987 = vsel %vm2152, %v3983, %v3986
    %v3988 = vsel %vm2154, %v3983, %v3987
    %v3989 = vsel %vm2156, %v3983, %v3988
    %v3992 = vadd.f32 %v3980, %v3989
    %v3993 = vadd.f32 %v3981, %v3983
    %v3994 = vsel %vm2161, %v3992, -inf
    %3995 = vmax.xlane.f32.xlu0 %v3994
    %v3996 = vpop.xlane.xlu0 %3995
    %v3997 = vsel %vm2163, %v3993, -inf
    %3998 = vmax.xlane.f32.xlu0 %v3997
    %v3999 = vpop.xlane.xlu0 %3998
    %v4000 = vsub.f32 %v3992, %v3996
    %v4001 = vsub.f32 %v3993, %v3999
    %v4002 = vmul.f32 %v4000, 1.442695
    %v4003 = vpow.pop %v4002
    %v4004 = vmul.f32 %v4001, 1.442695
    %v4005 = vpow.pop %v4004
    %v4006 = vsel %vm2161, %v4003, 0.0
    %4007 = vadd.xlane.f32.xlu0 %v4006
    %v4008 = vpop.xlane.xlu0 %4007
    %v4009 = vsel %vm2163, %v4005, 0.0
    %4010 = vadd.xlane.f32.xlu0 %v4009
    %v4011 = vpop.xlane.xlu0 %4010
    %v4012 = vrcp.pop %v4008
    %v4013 = vrcp.pop %v4011
    %v4014 = vmul.f32 %v4003, %v4012
    %v4015 = vmul.f32 %v4005, %v4013
    %v4016 = vperm.slane %v4014, 0
    %v4017 = vlaneseq
    %v4018 = vshrl.u32 %v4017, 7
    %4020 = vset.pattern.permute.xlu0 %v4018
    %4021 = vperm.xlu0 %4020, %v4016
    %v4022 = vpop.permute.xlu0 %4021
    %v4023 = vperm.slane %v4014, 1
    %v4024 = vlaneseq
    %v4025 = vshrl.u32 %v4024, 7
    %4027 = vset.pattern.permute.xlu0 %v4025
    %4028 = vperm.xlu0 %4027, %v4023
    %v4029 = vpop.permute.xlu0 %4028
    %v4030 = vperm.slane %v4014, 2
    %v4031 = vlaneseq
    %v4032 = vshrl.u32 %v4031, 7
    %4034 = vset.pattern.permute.xlu0 %v4032
    %4035 = vperm.xlu0 %4034, %v4030
    %v4036 = vpop.permute.xlu0 %4035
    %v4037 = vperm.slane %v4014, 3
    %v4038 = vlaneseq
    %v4039 = vshrl.u32 %v4038, 7
    %4041 = vset.pattern.permute.xlu0 %v4039
    %4042 = vperm.xlu0 %4041, %v4037
    %v4043 = vpop.permute.xlu0 %4042
    %v4044 = vperm.slane %v4014, 4
    %v4045 = vlaneseq
    %v4046 = vshrl.u32 %v4045, 7
    %4048 = vset.pattern.permute.xlu0 %v4046
    %4049 = vperm.xlu0 %4048, %v4044
    %v4050 = vpop.permute.xlu0 %4049
    %v4051 = vperm.slane %v4014, 5
    %v4052 = vlaneseq
    %v4053 = vshrl.u32 %v4052, 7
    %4055 = vset.pattern.permute.xlu0 %v4053
    %4056 = vperm.xlu0 %4055, %v4051
    %v4057 = vpop.permute.xlu0 %4056
    %v4058 = vperm.slane %v4014, 6
    %v4059 = vlaneseq
    %v4060 = vshrl.u32 %v4059, 7
    %4062 = vset.pattern.permute.xlu0 %v4060
    %4063 = vperm.xlu0 %4062, %v4058
    %v4064 = vpop.permute.xlu0 %4063
    %v4065 = vperm.slane %v4014, 7
    %v4066 = vlaneseq
    %v4067 = vshrl.u32 %v4066, 7
    %4069 = vset.pattern.permute.xlu0 %v4067
    %4070 = vperm.xlu0 %4069, %v4065
    %v4071 = vpop.permute.xlu0 %4070
    %v4072 = vperm.slane %v4015, 0
    %v4073 = vlaneseq
    %v4074 = vshrl.u32 %v4073, 7
    %4076 = vset.pattern.permute.xlu0 %v4074
    %4077 = vperm.xlu0 %4076, %v4072
    %v4078 = vpop.permute.xlu0 %4077
    %v4079 = vperm.slane %v4015, 1
    %v4080 = vlaneseq
    %v4081 = vshrl.u32 %v4080, 7
    %4083 = vset.pattern.permute.xlu0 %v4081
    %4084 = vperm.xlu0 %4083, %v4079
    %v4085 = vpop.permute.xlu0 %4084
    %v4086 = vld [vmem:[#allocation6] sm:$0xf]
    %v4087 = vld [vmem:[#allocation6 + $0x4] sm:$0xf]
    %v4088 = vld [vmem:[#allocation6 + $0x8] sm:$0xf]
    %v4089 = vld [vmem:[#allocation6 + $0xc] sm:$0xf]
    %v4090 = vld [vmem:[#allocation6 + $0x10] sm:$0xf]
    %v4091 = vld [vmem:[#allocation6 + $0x14] sm:$0xf]
    %v4092 = vld [vmem:[#allocation6 + $0x18] sm:$0xf]
    %v4093 = vld [vmem:[#allocation6 + $0x1c] sm:$0xf]
    %v4094 = vld [vmem:[#allocation6 + $0x20] sm:$0xf]
    %v4095 = vld [vmem:[#allocation6 + $0x24] sm:$0xf]
    %v4096 = vmul.f32 %v4022, %v4086
    %v4097 = vmul.f32 %v4029, %v4087
    %v4098 = vmul.f32 %v4036, %v4088
    %v4099 = vmul.f32 %v4043, %v4089
    %v4100 = vmul.f32 %v4050, %v4090
    %v4101 = vmul.f32 %v4057, %v4091
    %v4102 = vmul.f32 %v4064, %v4092
    %v4103 = vmul.f32 %v4071, %v4093
    %v4104 = vmul.f32 %v4078, %v4094
    %v4105 = vmul.f32 %v4085, %v4095
    %v4106 = vsel %vm413, %v4096, 0.0
    %v4107 = vsel %vm413, %v4097, 0.0
    %v4108 = vadd.f32 %v4106, %v4107
    %v4109 = vsel %vm413, %v4098, 0.0
    %v4110 = vadd.f32 %v4108, %v4109
    %v4111 = vsel %vm413, %v4099, 0.0
    %v4112 = vadd.f32 %v4110, %v4111
    %v4113 = vsel %vm413, %v4100, 0.0
    %v4114 = vadd.f32 %v4112, %v4113
    %v4115 = vsel %vm413, %v4101, 0.0
    %v4116 = vadd.f32 %v4114, %v4115
    %v4117 = vsel %vm413, %v4102, 0.0
    %v4118 = vadd.f32 %v4116, %v4117
    %v4119 = vsel %vm413, %v4103, 0.0
    %v4120 = vadd.f32 %v4118, %v4119
    %v4121 = vsel %vm413, %v4104, 0.0
    %v4122 = vadd.f32 %v4120, %v4121
    %v4123 = vsel %vm413, %v4105, 0.0
    %v4124 = vadd.f32 %v4122, %v4123
    %v4125 = vld [vmem:[%s2323] sm:$0xf]
    %v4126 = vld [vmem:[%s3 + $0xb0] sm:$0xff]
    %v4127 = vld [vmem:[%s3 + $0xb8] sm:$0xff]
    %v4128 = vld [vmem:[%s3 + $0xc0] sm:$0xff]
    %v4129 = vld [vmem:[%s3 + $0xc8] sm:$0xff]
    %v4131 = vsel %vm347, %v4124, 0
    %4133 = vmatpush.msra.mxu0 0.0
    %4134 = vmatpush.msra.mxu0 0.0
    %4135 = vmatpush.msra.mxu0 0.0
    %4136 = vmatpush.msra.mxu0 0.0
    %4137 = vmatpush.msra.mxu0 0.0
    %4138 = vmatpush.msra.mxu0 0.0
    %4139 = vmatpush.msra.mxu0 0.0
    %4140 = vmatpush.msra.mxu0 0.0
    %4141 = vmatpush.msra.mxu0 0.0
    %4142 = vmatpush.msra.mxu0 0.0
    %4143 = vmatpush.msra.mxu0 0.0
    %4144 = vmatpush.msra.mxu0 0.0
    %4145 = vmatpush.msra.mxu0 %v4129
    %4146 = vmatpush.msra.mxu0 %v4128
    %4147 = vmatpush.msra.mxu0 %v4127
    %4148 = vmatpush.msra.mxu0 %v4126
    %4149 = vmatmul.f32.gmra.mxu0 %v4131
    %v4150 = vpop.f32.mrf.mxu0
    %v4151 = vadd.f32 0.0, %v4150
    %4152 = vdwg.mxu0
    %v4153 = vadd.f32 %v4125, %v4151
    %v4154 = vld [vmem:[%s3 + $0xd0] sm:$0xff]
    %v4155 = vld [vmem:[%s3 + $0xd8] sm:$0xff]
    %v4156 = vld [vmem:[%s3 + $0xe0] sm:$0xff]
    %v4157 = vld [vmem:[%s3 + $0xe8] sm:$0xff]
    %4158 = vmatpush.msra.mxu0 0.0
    %4159 = vmatpush.msra.mxu0 0.0
    %4160 = vmatpush.msra.mxu0 0.0
    %4161 = vmatpush.msra.mxu0 0.0
    %4162 = vmatpush.msra.mxu0 0.0
    %4163 = vmatpush.msra.mxu0 0.0
    %4164 = vmatpush.msra.mxu0 0.0
    %4165 = vmatpush.msra.mxu0 0.0
    %4166 = vmatpush.msra.mxu0 0.0
    %4167 = vmatpush.msra.mxu0 0.0
    %4168 = vmatpush.msra.mxu0 0.0
    %4169 = vmatpush.msra.mxu0 0.0
    %4170 = vmatpush.msra.mxu0 %v4157
    %4171 = vmatpush.msra.mxu0 %v4156
    %4172 = vmatpush.msra.mxu0 %v4155
    %4173 = vmatpush.msra.mxu0 %v4154
    %4174 = vmatmul.f32.gmra.mxu0 %v3853
    %v4175 = vpop.f32.mrf.mxu0
    %v4176 = vadd.f32 0.0, %v4175
    %4177 = vdwg.mxu0
    %v4178 = vadd.f32 %v4153, %v4176
    %v4179 = vxor.u32 %v4178, 2147483648
    %v4180 = vmul.f32 %v4179, 1.442695
    %v4181 = vpow.pop %v4180
    %v4182 = vadd.f32 %v4181, 1.0
    %v4183 = vrcp.pop %v4182
    %v4184 = vmul.f32 %v4182, %v4183
    %v4185 = vsub.f32 1.0, %v4184
    %v4186 = vmul.f32 %v4183, %v4185
    %v4187 = vadd.f32 %v4183, %v4186
    %vm4188 = vweird.f32 %v4182
    %vm4189 = vweird.f32 %v4183
    %vm4190 = vmor %vm4188, %vm4189
    %v4191 = vsel %vm4190, %v4183, %v4187
    %v4192 = vand.u32 2147483647, %v4182
    %vm4193 = vcmp.eq.f32.partialorder %v4192, 8.507059e+37
    %v4194 = vand.u32 %v4182, 2147483648
    %v4195 = vor.u32 1.1754944e-38, %v4194
    %v4196 = vsel %vm4193, %v4195, %v4191
    %v4197 = vmul.f32 1.0, %v4196
    %v4198 = vtanh.pop %v4178
    %v4199 = vmul.f32 %v4197, %v3815
    %4201 = vrot.lane.b32.xlu0 %v4198, 64
    %v4202 = vpop.permute.xlu0 %4201
    %v4204 = vmul.f32 %v4197, %v4202
    %4206 = vrot.lane.b32.xlu0 %v4204, 32
    %v4207 = vpop.permute.xlu0 %4206
    %v4209 = vadd.f32 %v4199, %v4207
    %v4210 = vtanh.pop %v4209
    %4212 = vrot.lane.b32.xlu0 %v4210, 64
    %v4213 = vpop.permute.xlu0 %4212
    %v4215 = vmul.f32 %v4197, %v4213
    %v4216 = vld [vmem:[%s3 + $0xf0] sm:$0xff]
    %v4217 = vld [vmem:[%s3 + $0xf8] sm:$0xff]
    %v4218 = vld [vmem:[%s3 + $0x100] sm:$0xff]
    %v4219 = vld [vmem:[%s3 + $0x108] sm:$0xff]
    %v4220 = vld [vmem:[%s3 + $0x110] sm:$0xff]
    %v4221 = vld [vmem:[%s3 + $0x118] sm:$0xff]
    %v4222 = vld [vmem:[%s3 + $0x120] sm:$0xff]
    %v4223 = vld [vmem:[%s3 + $0x128] sm:$0xff]
    %4224 = vmatpush.msra.mxu0 0.0
    %4225 = vmatpush.msra.mxu0 0.0
    %4226 = vmatpush.msra.mxu0 0.0
    %4227 = vmatpush.msra.mxu0 0.0
    %4228 = vmatpush.msra.mxu0 0.0
    %4229 = vmatpush.msra.mxu0 0.0
    %4230 = vmatpush.msra.mxu0 0.0
    %4231 = vmatpush.msra.mxu0 0.0
    %4232 = vmatpush.msra.mxu0 0.0
    %4233 = vmatpush.msra.mxu0 0.0
    %4234 = vmatpush.msra.mxu0 0.0
    %4235 = vmatpush.msra.mxu0 0.0
    %4236 = vmatpush.msra.mxu0 %v4223
    %4237 = vmatpush.msra.mxu0 %v4222
    %4238 = vmatpush.msra.mxu0 %v4221
    %4239 = vmatpush.msra.mxu0 %v4220
    %4240 = vmatmul.f32.gmra.mxu0 %v3934
    %v4241 = vpop.f32.mrf.mxu0
    %v4242 = vadd.f32 0.0, %v4241
    %4243 = vdwg.mxu0
    %4245 = vrot.lane.b32.xlu0 %v4215, 32
    %v4246 = vpop.permute.xlu0 %4245
    %v4247 = vsel %vm347, %v4246, 0
    %4249 = vmatpush.msra.mxu0 0.0
    %4250 = vmatpush.msra.mxu0 0.0
    %4251 = vmatpush.msra.mxu0 0.0
    %4252 = vmatpush.msra.mxu0 0.0
    %4253 = vmatpush.msra.mxu0 0.0
    %4254 = vmatpush.msra.mxu0 0.0
    %4255 = vmatpush.msra.mxu0 0.0
    %4256 = vmatpush.msra.mxu0 0.0
    %4257 = vmatpush.msra.mxu0 0.0
    %4258 = vmatpush.msra.mxu0 0.0
    %4259 = vmatpush.msra.mxu0 0.0
    %4260 = vmatpush.msra.mxu0 0.0
    %4261 = vmatpush.msra.mxu0 %v4219
    %4262 = vmatpush.msra.mxu0 %v4218
    %4263 = vmatpush.msra.mxu0 %v4217
    %4264 = vmatpush.msra.mxu0 %v4216
    %4265 = vmatmul.f32.gmra.mxu0 %v4247
    %v4266 = vpop.f32.mrf.mxu0
    %v4267 = vadd.f32 %v4242, %v4266
    %4268 = vdwg.mxu0
    %v4269 = vadd.f32 %v4267, %v2326
    %v4270 = vxor.u32 %v4269, 2147483648
    %v4271 = vmul.f32 %v4270, 1.442695
    %v4272 = vpow.pop %v4271
    %v4273 = vadd.f32 %v4272, 1.0
    %v4274 = vrcp.pop %v4273
    %v4275 = vmul.f32 %v4273, %v4274
    %v4276 = vsub.f32 1.0, %v4275
    %v4277 = vmul.f32 %v4274, %v4276
    %v4278 = vadd.f32 %v4274, %v4277
    %vm4279 = vweird.f32 %v4273
    %vm4280 = vweird.f32 %v4274
    %vm4281 = vmor %vm4279, %vm4280
    %v4282 = vsel %vm4281, %v4274, %v4278
    %v4283 = vand.u32 2147483647, %v4273
    %vm4284 = vcmp.eq.f32.partialorder %v4283, 8.507059e+37
    %v4285 = vand.u32 %v4273, 2147483648
    %v4286 = vor.u32 1.1754944e-38, %v4285
    %v4287 = vsel %vm4284, %v4286, %v4282
    %v4288 = vmul.f32 1.0, %v4287
    %v4289 = vtanh.pop %v4269
    %v4290 = vmul.f32 %v4288, %v3906
    %4292 = vrot.lane.b32.xlu0 %v4289, 64
    %v4293 = vpop.permute.xlu0 %4292
    %v4295 = vmul.f32 %v4288, %v4293
    %4297 = vrot.lane.b32.xlu0 %v4295, 32
    %v4298 = vpop.permute.xlu0 %4297
    %v4300 = vadd.f32 %v4290, %v4298
    %v4301 = vtanh.pop %v4300
    %4303 = vrot.lane.b32.xlu0 %v4301, 64
    %v4304 = vpop.permute.xlu0 %4303
    %v4306 = vmul.f32 %v4288, %v4304
    %4308 = vrot.lane.b32.xlu0 %v4306, 32
    %v4309 = vpop.permute.xlu0 %4308
    %4311 = vst.msk [vmem:[%s1705] sm:$0xf] %vm413, %v4309
    %v4312 = vmul.f32 %v4306, %v2733
    %4314 = vrot.lane.b32.xlu0 %v4312, 32
    %v4315 = vpop.permute.xlu0 %4314
    %v4317 = vsel %vm413, %v4315, 0.0
    %4318 = vadd.xlane.f32.xlu0 %v4317
    %v4319 = vpop.xlane.xlu0 %4318
    %v4321 = vperm.slane %v4319, %v2133
    %4323 = vst.msk [vmem:[#allocation7 + $0x4] sm:$0x1] %vm2746, %v4321
    %v4324 = vld [vmem:[%s3 + $0x130] sm:$0xff]
    %v4325 = vld [vmem:[%s3 + $0x138] sm:$0xff]
    %v4326 = vld [vmem:[%s3 + $0x140] sm:$0xff]
    %v4327 = vld [vmem:[%s3 + $0x148] sm:$0xff]
    %v4328 = vsel %vm347, %v4309, 0
    %4330 = vmatpush.msra.mxu0 0.0
    %4331 = vmatpush.msra.mxu0 0.0
    %4332 = vmatpush.msra.mxu0 0.0
    %4333 = vmatpush.msra.mxu0 0.0
    %4334 = vmatpush.msra.mxu0 0.0
    %4335 = vmatpush.msra.mxu0 0.0
    %4336 = vmatpush.msra.mxu0 0.0
    %4337 = vmatpush.msra.mxu0 0.0
    %4338 = vmatpush.msra.mxu0 0.0
    %4339 = vmatpush.msra.mxu0 0.0
    %4340 = vmatpush.msra.mxu0 0.0
    %4341 = vmatpush.msra.mxu0 0.0
    %4342 = vmatpush.msra.mxu0 %v4327
    %4343 = vmatpush.msra.mxu0 %v4326
    %4344 = vmatpush.msra.mxu0 %v4325
    %4345 = vmatpush.msra.mxu0 %v4324
    %4346 = vmatmul.f32.gmra.mxu0 %v4328
    %v4347 = vpop.f32.mrf.mxu0
    %v4348 = vadd.f32 %v2355, %v4347
    %4349 = vdwg.mxu0
    %s4350 = scalar_lea.vmem [#allocation8], 16
    %4351 = vst.msk [vmem:[%s4350] sm:$0xf] %vm2774, %v4348
    // Predicated region
    $region22: #{_lambda_.1} parent=1 // pred_check
      _
    $region23: #{_lambda_.1} parent=1 // pred_check_branch
      %4353 = sbr.rel (0) target = $region25
    $region24: #{_lambda_.1} parent=1 // pred_region
      %4355 = vsyncadd [#allocation9], 0
      %s4356 = sshll.u32 [#allocation8], 4
      %s4357 = int_to_ptr.vmem [resolvable:$true] %s4356
      %s4358 = sshll.u32 %s5, 4
      %s4359 = int_to_ptr.hbm [resolvable:$true] %s4358
      %4364 = dma.vmem_to_hbm [thread:$0]  %s4357, 320, %s4359, [#allocation9], 64, 64, 4
    $region25: #{_lambda_.1} parent=1 // pred_fallthru
      _
    // Predicated region
    $region26: #{_lambda_.1} parent=1 // pred_check
      _
    $region27: #{_lambda_.1} parent=1 // pred_check_branch
      %4366 = sbr.rel (0) target = $region29
    $region28: #{_lambda_.1} parent=1 // pred_region
      %4368 = dma.done [#allocation9], 320
    $region29: #{_lambda_.1} parent=1 // pred_fallthru
      _
    %4369 = vsyncpa [#allocation9], 1

</llo_original>
